<compile_context>
chip_gen: v5e
topology: v5e:2x2
jax: 0.10.0
libtpu: 0.0.40
codegen_flags: <defaults>
</compile_context>

<pallas_src>
import functools

import numpy as np

import jax
import jax.numpy as jnp
from jax.experimental import pallas as pl
from jax.experimental.pallas import tpu as pltpu


_C = 16                    # in_channels (fixed by x.view(-1, 16, 8, 8) in the module)
_H0 = 8                    # base spatial resolution after the linear layer
_L0 = _H0 * _C             # packed lane width at the 8x8 stage (= 128)
_COUT_PAD = 4              # ct3 output channels padded 3 -> 4 so lanes = 64*4 = 256
_VMEM_LIMIT = 32 * 1024 * 1024


# ---------------------------------------------------------------------------
# In-kernel helpers (operate on VMEM values in the packed layout)
# ---------------------------------------------------------------------------

def _shift_down(x, nb):
    """result[r] = x[r - nb]  (previous spatial row), zero rows at the top."""
    zeros = jnp.zeros((nb, x.shape[1]), x.dtype)
    return jnp.concatenate([zeros, x[:x.shape[0] - nb]], axis=0)


def _shift_up(x, nb):
    """result[r] = x[r + nb]  (next spatial row), zero rows at the bottom."""
    zeros = jnp.zeros((nb, x.shape[1]), x.dtype)
    return jnp.concatenate([x[nb:], zeros], axis=0)


def _residual_banded(x, w3_ref, b3_ref, w1_ref, b1_ref, nb):
    """ReLU -> 3x3 conv -> ReLU -> 1x1 conv on the packed (rows, W*C) layout."""
    xr = jnp.maximum(x, 0.0).astype(jnp.bfloat16)
    taps = (_shift_down(xr, nb), xr, _shift_up(xr, nb))      # kernel rows kh = 0, 1, 2
    h = b3_ref[...]
    for kh in range(3):
        h = h + jnp.dot(taps[kh], w3_ref[kh], preferred_element_type=jnp.float32)
    h = jnp.maximum(h, 0.0).astype(jnp.bfloat16)
    return jnp.dot(h, w1_ref[...], preferred_element_type=jnp.float32) + b1_ref[...]


def _deconv_phase(x_bf16, apair_ref, brow_ref, phase, nb):
    """One output-row-parity plane of ConvTranspose2d(k=4, s=2, p=1)."""
    a_same = apair_ref[0, 0]      # multiplies x[m]
    a_shift = apair_ref[0, 1]     # multiplies x[m-1] (even rows) / x[m+1] (odd rows)
    shifted = jnp.where(phase == 0, _shift_down(x_bf16, nb), _shift_up(x_bf16, nb))
    return (jnp.dot(x_bf16, a_same, preferred_element_type=jnp.float32)
            + jnp.dot(shifted, a_shift, preferred_element_type=jnp.float32)
            + brow_ref[...])


# ---------------------------------------------------------------------------
# Pallas kernels
# ---------------------------------------------------------------------------

def _stage8_ct1_kernel(x_ref, wl_ref, g_ref, bta_ref,
                       r1w3_ref, r1b3_ref, r1w1_ref, r1b1_ref,
                       r2w3_ref, r2b3_ref, r2w1_ref, r2b1_ref,
                       apair_ref, bct_ref, o_ref):
    phase = pl.program_id(0)
    batch = x_ref.shape[0]

    # Linear(bias=False) -> BatchNorm1d (training-mode, biased batch stats) -> ReLU.
    xin = x_ref[...].astype(jnp.bfloat16)
    h = jnp.dot(xin, wl_ref[...], preferred_element_type=jnp.float32)    # (B, 1024)
    mu = jnp.mean(h, axis=0, keepdims=True)
    var = jnp.mean((h - mu) ** 2, axis=0, keepdims=True)
    h = (h - mu) * jax.lax.rsqrt(var + 1e-5) * g_ref[...] + bta_ref[...]
    h = jnp.maximum(h, 0.0)

    # w_lin columns are pre-permuted, so the 8 lane-blocks of h are already the
    # packed NHWC rows -> stack them to (8*B, 128) (row = i*B + b).
    x8 = jnp.concatenate([h[:, i * _L0:(i + 1) * _L0] for i in range(_H0)], axis=0)

    # x = x + residual1(x); x = x + residual2(x)
    x8 = x8 + _residual_banded(x8, r1w3_ref, r1b3_ref, r1w1_ref, r1b1_ref, batch)
    x8 = x8 + _residual_banded(x8, r2w3_ref, r2b3_ref, r2w1_ref, r2b1_ref, batch)

    # F.relu -> conv1 (ConvTranspose2d), one output-row parity plane per grid step.
    z = jnp.maximum(x8, 0.0).astype(jnp.bfloat16)
    out = _deconv_phase(z, apair_ref, bct_ref, phase, batch)
    o_ref[0] = out.astype(o_ref.dtype)


def _ct2_kernel(y_ref, apair_ref, bct_ref, o_ref, *, nb):
    phase = pl.program_id(0)
    y = jnp.maximum(y_ref[...], 0).astype(jnp.bfloat16)      # F.relu before conv2
    out = _deconv_phase(y, apair_ref, bct_ref, phase, nb)
    o_ref[0] = out.astype(o_ref.dtype)


def _res3_ct3_kernel(z_ref, w3_ref, b3_ref, w1_ref, b1_ref,
                     apair_ref, bct_ref, o_ref, *, nb):
    phase = pl.program_id(0)
    z = z_ref[...]
    r3 = _residual_banded(z, w3_ref, b3_ref, w1_ref, b1_ref, nb)   # no skip add
    out = _deconv_phase(r3.astype(jnp.bfloat16), apair_ref, bct_ref, phase, nb)
    o_ref[0] = out.astype(o_ref.dtype)


# ---------------------------------------------------------------------------
# pallas_call wrappers
# ---------------------------------------------------------------------------

def _compiler_params():
    return pltpu.CompilerParams(dimension_semantics=("parallel",),
                                vmem_limit_bytes=_VMEM_LIMIT)


def _stage8_ct1_call(x, p, batch):
    n_in = x.shape[1]
    hidden = _H0 * _H0 * _C
    lout = 2 * _L0
    c2 = lambda ph: (0, 0)
    c3 = lambda ph: (0, 0, 0)
    return pl.pallas_call(
        _stage8_ct1_kernel,
        out_shape=jax.ShapeDtypeStruct((2, _H0 * batch, lout), jnp.bfloat16),
        grid=(2,),
        in_specs=[
            pl.BlockSpec((batch, n_in), c2),
            pl.BlockSpec((n_in, hidden), c2),
            pl.BlockSpec((1, hidden), c2),
            pl.BlockSpec((1, hidden), c2),
            pl.BlockSpec((3, _L0, _L0), c3),
            pl.BlockSpec((1, _L0), c2),
            pl.BlockSpec((_L0, _L0), c2),
            pl.BlockSpec((1, _L0), c2),
            pl.BlockSpec((3, _L0, _L0), c3),
            pl.BlockSpec((1, _L0), c2),
            pl.BlockSpec((_L0, _L0), c2),
            pl.BlockSpec((1, _L0), c2),
            pl.BlockSpec((1, 2, _L0, lout), lambda ph: (ph, 0, 0, 0)),
            pl.BlockSpec((1, lout), c2),
        ],
        out_specs=pl.BlockSpec((1, _H0 * batch, lout), lambda ph: (ph, 0, 0)),
        compiler_params=_compiler_params(),
    )(x, p["w_lin"], p["bn_gamma"], p["bn_beta"],
      p["res1"]["w3band"], p["res1"]["b3row"], p["res1"]["w1diag"], p["res1"]["b1row"],
      p["res2"]["w3band"], p["res2"]["b3row"], p["res2"]["w1diag"], p["res2"]["b1row"],
      p["ct1"]["apair"], p["ct1"]["brow"])


def _ct2_call(y, p, batch):
    rows = 2 * _H0 * batch
    lin = 2 * _L0
    lout = 4 * _L0
    return pl.pallas_call(
        functools.partial(_ct2_kernel, nb=batch),
        out_shape=jax.ShapeDtypeStruct((2, rows, lout), jnp.bfloat16),
        grid=(2,),
        in_specs=[
            pl.BlockSpec((rows, lin), lambda ph: (0, 0)),
            pl.BlockSpec((1, 2, lin, lout), lambda ph: (ph, 0, 0, 0)),
            pl.BlockSpec((1, lout), lambda ph: (0, 0)),
        ],
        out_specs=pl.BlockSpec((1, rows, lout), lambda ph: (ph, 0, 0)),
        compiler_params=_compiler_params(),
    )(y, p["ct2"]["apair"], p["ct2"]["brow"])


def _res3_ct3_call(z, p, batch):
    rows = 4 * _H0 * batch
    lin = 4 * _L0
    lout = 2 * 4 * _H0 * _COUT_PAD
    return pl.pallas_call(
        functools.partial(_res3_ct3_kernel, nb=batch),
        out_shape=jax.ShapeDtypeStruct((2, rows, lout), jnp.float32),
        grid=(2,),
        in_specs=[
            pl.BlockSpec((rows, lin), lambda ph: (0, 0)),
            pl.BlockSpec((3, lin, lin), lambda ph: (0, 0, 0)),
            pl.BlockSpec((1, lin), lambda ph: (0, 0)),
            pl.BlockSpec((lin, lin), lambda ph: (0, 0)),
            pl.BlockSpec((1, lin), lambda ph: (0, 0)),
            pl.BlockSpec((1, 2, lin, lout), lambda ph: (ph, 0, 0, 0)),
            pl.BlockSpec((1, lout), lambda ph: (0, 0)),
        ],
        out_specs=pl.BlockSpec((1, rows, lout), lambda ph: (ph, 0, 0)),
        compiler_params=_compiler_params(),
    )(z, p["res3"]["w3band"], p["res3"]["b3row"], p["res3"]["w1diag"],
      p["res3"]["b1row"], p["ct3"]["apair"], p["ct3"]["brow"])


# ---------------------------------------------------------------------------
# Forward
# ---------------------------------------------------------------------------

def _interleave_rows(o, spatial, batch):
    """(2, spatial*B, L) phase planes -> (2*spatial*B, L) packed rows (i*B + b)."""
    lanes = o.shape[-1]
    return (o.reshape(2, spatial, batch, lanes)
             .transpose(1, 0, 2, 3)
             .reshape(2 * spatial * batch, lanes))


def resnet_decoder_forward(params, x):
    batch = x.shape[0]
    xf = x.reshape(batch, -1)

    o1 = _stage8_ct1_call(xf, params, batch)          # (2, 8B, 256)   8x8 -> 16x16
    y = _interleave_rows(o1, _H0, batch)              # (16B, 256)
    o2 = _ct2_call(y, params, batch)                  # (2, 16B, 512)  16x16 -> 32x32
    z = _interleave_rows(o2, 2 * _H0, batch)          # (32B, 512)
    o3 = _res3_ct3_call(z, params, batch)             # (2, 32B, 256)  32x32 -> 64x64

    # (phase, m, b, ow, cpad) -> NCHW (B, 3, 64, 64)
    o3 = o3.reshape(2, 4 * _H0, batch, 8 * _H0, _COUT_PAD)
    out = o3.transpose(2, 4, 1, 0, 3).reshape(batch, _COUT_PAD, 8 * _H0, 8 * _H0)
    return out[:, :3]


# ---------------------------------------------------------------------------
# Parameters: raw (torch-layout) init + one-time packing into banded matrices
# ---------------------------------------------------------------------------

def init_raw_params(key, n_decoder_input, n_decoder_hidden=1024,
                    in_channels=16, out_channels=3):
    assert in_channels == _C and n_decoder_hidden == _C * _H0 * _H0
    keys = jax.random.split(key, 19)

    def u(k, shape, fan_in):
        bound = 1.0 / np.sqrt(float(fan_in))
        return jax.random.uniform(k, shape, jnp.float32, -bound, bound)

    c = in_channels

    def res(ks):
        return {"w3": u(ks[0], (c, c, 3, 3), c * 9), "b3": u(ks[1], (c,), c * 9),
                "w1": u(ks[2], (c, c, 1, 1), c), "b1": u(ks[3], (c,), c)}

    return {
        # Linear(n_in, 1024, bias=False) stored as (n_in, 1024): y = x @ W
        "w_lin": u(keys[0], (n_decoder_input, n_decoder_hidden), n_decoder_input),
        "bn_gamma": jnp.ones((n_decoder_hidden,), jnp.float32),
        "bn_beta": jnp.zeros((n_decoder_hidden,), jnp.float32),
        "res1": res(keys[1:5]), "res2": res(keys[5:9]), "res3": res(keys[9:13]),
        # ConvTranspose2d weight layout: (in_channels, out_channels, kh, kw)
        "ct1_w": u(keys[13], (c, c, 4, 4), c * 16), "ct1_b": u(keys[14], (c,), c * 16),
        "ct2_w": u(keys[15], (c, c, 4, 4), c * 16), "ct2_b": u(keys[16], (c,), c * 16),
        "ct3_w": u(keys[17], (c, out_channels, 4, 4), c * 16),
        "ct3_b": u(keys[18], (out_channels,), c * 16),
    }


def _banded_conv3x3(w_oihw, width):
    co, ci, _, _ = w_oihw.shape
    w = np.asarray(w_oihw, np.float32)
    mats = np.zeros((3, width * ci, width * co), np.float32)
    for kh in range(3):
        for jo in range(width):
            for kw in range(3):
                j = jo + kw - 1
                if 0 <= j < width:
                    mats[kh, j * ci:(j + 1) * ci, jo * co:(jo + 1) * co] = w[:, :, kh, kw].T
    return jnp.asarray(mats, jnp.bfloat16)


def _blockdiag_conv1x1(w_oihw, width):
    co, ci = w_oihw.shape[:2]
    w = np.asarray(w_oihw, np.float32)[:, :, 0, 0].T          # (ci, co)
    m = np.zeros((width * ci, width * co), np.float32)
    for j in range(width):
        m[j * ci:(j + 1) * ci, j * co:(j + 1) * co] = w
    return jnp.asarray(m, jnp.bfloat16)


def _deconv_phase_pair(w_iohw, width, cpad):
    # output col ow = 2*j + kw - 1 ; even output rows use (kh=1, kh=3 with x[m-1]),
    # odd output rows use (kh=2, kh=0 with x[m+1]).
    ci, co = w_iohw.shape[:2]
    w = np.asarray(w_iohw, np.float32)
    a = np.zeros((4, width * ci, 2 * width * cpad), np.float32)
    for kh in range(4):
        for j in range(width):
            for kw in range(4):
                ow = 2 * j + kw - 1
                if 0 <= ow < 2 * width:
                    a[kh, j * ci:(j + 1) * ci, ow * cpad:ow * cpad + co] = w[:, :, kh, kw]
    pair = np.stack([np.stack([a[1], a[3]]), np.stack([a[2], a[0]])])
    return jnp.asarray(pair, jnp.bfloat16)


def _tile_row(b, width, cpad=None):
    b = np.asarray(b, np.float32)
    if cpad is not None and cpad != b.shape[0]:
        bb = np.zeros((cpad,), np.float32)
        bb[:b.shape[0]] = b
        b = bb
    return jnp.asarray(np.tile(b, width)[None], jnp.float32)


def _nchw_to_packed_perm(c, h, w):
    perm = np.zeros((h * w * c,), np.int64)
    for i in range(h):
        for j in range(w):
            for ch in range(c):
                perm[(i * w + j) * c + ch] = ch * h * w + i * w + j
    return perm


def prepare_params(raw):
    perm = _nchw_to_packed_perm(_C, _H0, _H0)
    w_lin = np.asarray(raw["w_lin"], np.float32)[:, perm]
    gamma = np.asarray(raw["bn_gamma"], np.float32)[perm][None]
    beta = np.asarray(raw["bn_beta"], np.float32)[perm][None]

    def res(r, width):
        return {"w3band": _banded_conv3x3(r["w3"], width),
                "b3row": _tile_row(r["b3"], width),
                "w1diag": _blockdiag_conv1x1(r["w1"], width),
                "b1row": _tile_row(r["b1"], width)}

    return {
        "w_lin": jnp.asarray(w_lin, jnp.bfloat16),
        "bn_gamma": jnp.asarray(gamma, jnp.float32),
        "bn_beta": jnp.asarray(beta, jnp.float32),
        "res1": res(raw["res1"], _H0),
        "res2": res(raw["res2"], _H0),
        "res3": res(raw["res3"], 4 * _H0),
        "ct1": {"apair": _deconv_phase_pair(raw["ct1_w"], _H0, _C),
                "brow": _tile_row(raw["ct1_b"], 2 * _H0)},
        "ct2": {"apair": _deconv_phase_pair(raw["ct2_w"], 2 * _H0, _C),
                "brow": _tile_row(raw["ct2_b"], 4 * _H0)},
        "ct3": {"apair": _deconv_phase_pair(raw["ct3_w"], 4 * _H0, _COUT_PAD),
                "brow": _tile_row(raw["ct3_b"], 8 * _H0, _COUT_PAD)},
    }


# ---------------------------------------------------------------------------
# Independent plain-JAX reference (NCHW/NHWC, f32 activations) for self-check
# ---------------------------------------------------------------------------

def _f32_via_bf16(w):
    return jnp.asarray(w, jnp.float32).astype(jnp.bfloat16).astype(jnp.float32)


def _ref_conv3x3(x, w, b):
    bsz, h, wd, c = x.shape
    xp = jnp.pad(x, ((0, 0), (1, 1), (1, 1), (0, 0)))
    cols = jnp.concatenate([xp[:, i:i + h, j:j + wd, :]
                            for i in range(3) for j in range(3)], axis=-1)
    wmat = jnp.transpose(_f32_via_bf16(w), (2, 3, 1, 0)).reshape(9 * c, -1)
    y = cols.reshape(bsz * h * wd, 9 * c) @ wmat + b
    return y.reshape(bsz, h, wd, -1)


def _ref_conv1x1(x, w, b):
    return x @ _f32_via_bf16(w)[:, :, 0, 0].T + b


def _ref_residual(x, p):
    h = _ref_conv3x3(jax.nn.relu(x), p["w3"], p["b3"])
    return _ref_conv1x1(jax.nn.relu(h), p["w1"], p["b1"])


def _ref_shift(a, d, axis, size):
    if d == 0:
        return a
    pad = [(0, 0)] * a.ndim
    idx = [slice(None)] * a.ndim
    if d > 0:
        pad[axis] = (0, d)
        idx[axis] = slice(d, d + size)
    else:
        pad[axis] = (-d, 0)
        idx[axis] = slice(0, size)
    return jnp.pad(a, pad)[tuple(idx)]


_REF_PHASE_TERMS = {0: ((0, 1), (-1, 3)), 1: ((0, 2), (1, 0))}


def _ref_deconv(x, w, b):
    bsz, h, wd, ci = x.shape
    co = w.shape[1]
    wflat = jnp.transpose(_f32_via_bf16(w), (0, 2, 3, 1)).reshape(ci, 16 * co)
    y = (x.reshape(-1, ci) @ wflat).reshape(bsz, h, wd, 4, 4, co)
    rows = []
    for pp in (0, 1):
        cols = []
        for ss in (0, 1):
            acc = jnp.zeros((bsz, h, wd, co), y.dtype)
            for dh, ki in _REF_PHASE_TERMS[pp]:
                for dw, kj in _REF_PHASE_TERMS[ss]:
                    t = _ref_shift(_ref_shift(y[:, :, :, ki, kj, :], dh, 1, h), dw, 2, wd)
                    acc = acc + t
            cols.append(acc)
        rows.append(jnp.stack(cols, axis=3))
    return jnp.stack(rows, axis=2).reshape(bsz, 2 * h, 2 * wd, co) + b


def reference_forward(raw, x):
    bsz = x.shape[0]
    xq = x.astype(jnp.bfloat16).astype(jnp.float32)
    h = xq.reshape(bsz, -1) @ _f32_via_bf16(raw["w_lin"])
    mu = jnp.mean(h, axis=0, keepdims=True)
    var = jnp.mean((h - mu) ** 2, axis=0, keepdims=True)
    h = jax.nn.relu((h - mu) * jax.lax.rsqrt(var + 1e-5) * raw["bn_gamma"]
                    + raw["bn_beta"])
    xh = jnp.transpose(h.reshape(bsz, _C, _H0, _H0), (0, 2, 3, 1))
    xh = xh + _ref_residual(xh, raw["res1"])
    xh = xh + _ref_residual(xh, raw["res2"])
    xh = _ref_deconv(jax.nn.relu(xh), raw["ct1_w"], raw["ct1_b"])
    xh = _ref_deconv(jax.nn.relu(xh), raw["ct2_w"], raw["ct2_b"])
    xh = _ref_residual(xh, raw["res3"])
    xh = _ref_deconv(xh, raw["ct3_w"], raw["ct3_b"])
    return jnp.transpose(xh, (0, 3, 1, 2))


# ---------------------------------------------------------------------------

if __name__ == "__main__":
    B = 2
    n_decoder_input = 32
    key = jax.random.PRNGKey(0)
    k_param, k_x = jax.random.split(key)

    raw = init_raw_params(k_param, n_decoder_input)
    params = prepare_params(raw)
    x = jax.random.normal(k_x, (B, n_decoder_input), jnp.float32)

    fwd = jax.jit(resnet_decoder_forward)
    out = jax.block_until_ready(fwd(params, x))
    assert out.shape == (B, 3, 64, 64), out.shape
    assert out.dtype == jnp.float32
    assert bool(jnp.isfinite(out).all())

    # Cross-check against an independent plain-JAX formulation (f32 activations,
    # bf16-rounded weights).  bf16 inter-stage activations in the Pallas path give
    # ~1e-2-level deviation, so use a global relative-L2 criterion.
    ref = jax.block_until_ready(jax.jit(reference_forward)(raw, x))
    rel = jnp.sqrt(jnp.sum((out - ref) ** 2)) / (jnp.sqrt(jnp.sum(ref ** 2)) + 1e-12)
    assert float(rel) < 0.1, float(rel)

    print("KERNEL_OK")
</pallas_src>

<mosaic_0001>
module attributes {stable_mosaic.version = 11 : i64} {
  func.func @_stage8_ct1_kernel(%arg0: i32, %arg1: memref<2x32xf32, #tpu.memory_space<vmem>>, %arg2: memref<32x1024xbf16, #tpu.memory_space<vmem>>, %arg3: memref<1x1024xf32, #tpu.memory_space<vmem>>, %arg4: memref<1x1024xf32, #tpu.memory_space<vmem>>, %arg5: memref<3x128x128xbf16, #tpu.memory_space<vmem>>, %arg6: memref<1x128xf32, #tpu.memory_space<vmem>>, %arg7: memref<128x128xbf16, #tpu.memory_space<vmem>>, %arg8: memref<1x128xf32, #tpu.memory_space<vmem>>, %arg9: memref<3x128x128xbf16, #tpu.memory_space<vmem>>, %arg10: memref<1x128xf32, #tpu.memory_space<vmem>>, %arg11: memref<128x128xbf16, #tpu.memory_space<vmem>>, %arg12: memref<1x128xf32, #tpu.memory_space<vmem>>, %arg13: memref<1x2x128x256xbf16, #tpu.memory_space<vmem>>, %arg14: memref<1x256xf32, #tpu.memory_space<vmem>>, %arg15: memref<1x16x256xbf16, #tpu.memory_space<vmem>>) attributes {dimension_semantics = [#tpu.dimension_semantics<parallel>], iteration_bounds = array<i64: 2>, scalar_prefetch = 0 : i64, scratch_operands = 0 : i64, tpu.core_type = #tpu.core_type<tc>, window_params = [{pipeline_mode = #tpu.pipeline_mode<synchronous>, transform_indices = @transform_0, window_bounds = array<i64: 2, 32>}, {pipeline_mode = #tpu.pipeline_mode<synchronous>, transform_indices = @transform_1, window_bounds = array<i64: 32, 1024>}, {pipeline_mode = #tpu.pipeline_mode<synchronous>, transform_indices = @transform_2, window_bounds = array<i64: 1, 1024>}, {pipeline_mode = #tpu.pipeline_mode<synchronous>, transform_indices = @transform_3, window_bounds = array<i64: 1, 1024>}, {pipeline_mode = #tpu.pipeline_mode<synchronous>, transform_indices = @transform_4, window_bounds = array<i64: 3, 128, 128>}, {pipeline_mode = #tpu.pipeline_mode<synchronous>, transform_indices = @transform_5, window_bounds = array<i64: 1, 128>}, {pipeline_mode = #tpu.pipeline_mode<synchronous>, transform_indices = @transform_6, window_bounds = array<i64: 128, 128>}, {pipeline_mode = #tpu.pipeline_mode<synchronous>, transform_indices = @transform_7, window_bounds = array<i64: 1, 128>}, {pipeline_mode = #tpu.pipeline_mode<synchronous>, transform_indices = @transform_8, window_bounds = array<i64: 3, 128, 128>}, {pipeline_mode = #tpu.pipeline_mode<synchronous>, transform_indices = @transform_9, window_bounds = array<i64: 1, 128>}, {pipeline_mode = #tpu.pipeline_mode<synchronous>, transform_indices = @transform_10, window_bounds = array<i64: 128, 128>}, {pipeline_mode = #tpu.pipeline_mode<synchronous>, transform_indices = @transform_11, window_bounds = array<i64: 1, 128>}, {transform_indices = @transform_12, window_bounds = array<i64: 1, 2, 128, 256>}, {pipeline_mode = #tpu.pipeline_mode<synchronous>, transform_indices = @transform_13, window_bounds = array<i64: 1, 256>}, {transform_indices = @transform_14, window_bounds = array<i64: 1, 16, 256>}]} {
    %c0 = arith.constant 0 : index
    %c0_0 = arith.constant 0 : index
    %0 = vector.load %arg1[%c0, %c0_0] : memref<2x32xf32, #tpu.memory_space<vmem>>, vector<2x32xf32>
    %1 = arith.truncf %0 : vector<2x32xf32> to vector<2x32xbf16>
    %c0_1 = arith.constant 0 : index
    %c0_2 = arith.constant 0 : index
    %2 = vector.load %arg2[%c0_1, %c0_2] : memref<32x1024xbf16, #tpu.memory_space<vmem>>, vector<32x1024xbf16>
    %cst = arith.constant dense<0.000000e+00> : vector<2x1024xf32>
    %3 = tpu.matmul %1, %2, %cst {dimension_numbers = #tpu.dot_dimension_numbers<[1], [0], [0], [1], [0, 0, 1, 1], [], []>} : vector<2x32xbf16>, vector<32x1024xbf16>, vector<2x1024xf32> -> vector<2x1024xf32>
    %cst_3 = arith.constant dense<0.000000e+00> : vector<1024xf32>
    %4 = vector.multi_reduction <add>, %3, %cst_3 [0] : vector<2x1024xf32> to vector<1024xf32>
    %5 = vector.shape_cast %4 : vector<1024xf32> to vector<1x1024xf32>
    %cst_4 = arith.constant 2.000000e+00 : f32
    %6 = vector.broadcast %cst_4 : f32 to vector<1x1024xf32>
    %7 = arith.divf %5, %6 : vector<1x1024xf32>
    %8 = vector.broadcast %7 : vector<1x1024xf32> to vector<2x1024xf32>
    %9 = arith.subf %3, %8 : vector<2x1024xf32>
    %10 = arith.mulf %9, %9 : vector<2x1024xf32>
    %cst_5 = arith.constant dense<0.000000e+00> : vector<1024xf32>
    %11 = vector.multi_reduction <add>, %10, %cst_5 [0] : vector<2x1024xf32> to vector<1024xf32>
    %12 = vector.shape_cast %11 : vector<1024xf32> to vector<1x1024xf32>
    %cst_6 = arith.constant 2.000000e+00 : f32
    %13 = vector.broadcast %cst_6 : f32 to vector<1x1024xf32>
    %14 = arith.divf %12, %13 : vector<1x1024xf32>
    %15 = vector.broadcast %7 : vector<1x1024xf32> to vector<2x1024xf32>
    %16 = arith.subf %3, %15 : vector<2x1024xf32>
    %cst_7 = arith.constant 9.99999974E-6 : f32
    %17 = vector.broadcast %cst_7 : f32 to vector<1x1024xf32>
    %18 = arith.addf %14, %17 : vector<1x1024xf32>
    %19 = math.rsqrt %18 : vector<1x1024xf32>
    %20 = vector.broadcast %19 : vector<1x1024xf32> to vector<2x1024xf32>
    %21 = arith.mulf %16, %20 : vector<2x1024xf32>
    %c0_8 = arith.constant 0 : index
    %c0_9 = arith.constant 0 : index
    %22 = vector.load %arg3[%c0_8, %c0_9] : memref<1x1024xf32, #tpu.memory_space<vmem>>, vector<1x1024xf32>
    %23 = vector.broadcast %22 : vector<1x1024xf32> to vector<2x1024xf32>
    %24 = arith.mulf %21, %23 : vector<2x1024xf32>
    %c0_10 = arith.constant 0 : index
    %c0_11 = arith.constant 0 : index
    %25 = vector.load %arg4[%c0_10, %c0_11] : memref<1x1024xf32, #tpu.memory_space<vmem>>, vector<1x1024xf32>
    %26 = vector.broadcast %25 : vector<1x1024xf32> to vector<2x1024xf32>
    %27 = arith.addf %24, %26 : vector<2x1024xf32>
    %cst_12 = arith.constant 0.000000e+00 : f32
    %28 = vector.broadcast %cst_12 : f32 to vector<2x1024xf32>
    %29 = arith.maximumf %27, %28 : vector<2x1024xf32>
    %30 = vector.extract_strided_slice %29 {offsets = [0, 0], sizes = [2, 128], strides = [1, 1]} : vector<2x1024xf32> to vector<2x128xf32>
    %31 = vector.extract_strided_slice %29 {offsets = [0, 128], sizes = [2, 128], strides = [1, 1]} : vector<2x1024xf32> to vector<2x128xf32>
    %32 = vector.extract_strided_slice %29 {offsets = [0, 256], sizes = [2, 128], strides = [1, 1]} : vector<2x1024xf32> to vector<2x128xf32>
    %33 = vector.extract_strided_slice %29 {offsets = [0, 384], sizes = [2, 128], strides = [1, 1]} : vector<2x1024xf32> to vector<2x128xf32>
    %34 = vector.extract_strided_slice %29 {offsets = [0, 512], sizes = [2, 128], strides = [1, 1]} : vector<2x1024xf32> to vector<2x128xf32>
    %35 = vector.extract_strided_slice %29 {offsets = [0, 640], sizes = [2, 128], strides = [1, 1]} : vector<2x1024xf32> to vector<2x128xf32>
    %36 = vector.extract_strided_slice %29 {offsets = [0, 768], sizes = [2, 128], strides = [1, 1]} : vector<2x1024xf32> to vector<2x128xf32>
    %37 = vector.extract_strided_slice %29 {offsets = [0, 896], sizes = [2, 128], strides = [1, 1]} : vector<2x1024xf32> to vector<2x128xf32>
    %38 = tpu.concatenate %30, %31, %32, %33, %34, %35, %36, %37 in 0 : vector<2x128xf32>, vector<2x128xf32>, vector<2x128xf32>, vector<2x128xf32>, vector<2x128xf32>, vector<2x128xf32>, vector<2x128xf32>, vector<2x128xf32> -> vector<16x128xf32>
    %cst_13 = arith.constant 0.000000e+00 : f32
    %39 = vector.broadcast %cst_13 : f32 to vector<16x128xf32>
    %40 = arith.maximumf %38, %39 : vector<16x128xf32>
    %41 = arith.truncf %40 : vector<16x128xf32> to vector<16x128xbf16>
    %cst_14 = arith.constant 0.000000e+00 : bf16
    %42 = vector.broadcast %cst_14 : bf16 to vector<2x128xbf16>
    %43 = vector.extract_strided_slice %41 {offsets = [0, 0], sizes = [14, 128], strides = [1, 1]} : vector<16x128xbf16> to vector<14x128xbf16>
    %44 = tpu.concatenate %42, %43 in 0 : vector<2x128xbf16>, vector<14x128xbf16> -> vector<16x128xbf16>
    %cst_15 = arith.constant 0.000000e+00 : bf16
    %45 = vector.broadcast %cst_15 : bf16 to vector<2x128xbf16>
    %46 = vector.extract_strided_slice %41 {offsets = [2, 0], sizes = [14, 128], strides = [1, 1]} : vector<16x128xbf16> to vector<14x128xbf16>
    %47 = tpu.concatenate %46, %45 in 0 : vector<14x128xbf16>, vector<2x128xbf16> -> vector<16x128xbf16>
    %c0_16 = arith.constant 0 : index
    %c0_17 = arith.constant 0 : index
    %48 = vector.load %arg6[%c0_16, %c0_17] : memref<1x128xf32, #tpu.memory_space<vmem>>, vector<1x128xf32>
    %c0_18 = arith.constant 0 : index
    %c0_19 = arith.constant 0 : index
    %c0_20 = arith.constant 0 : index
    %49 = vector.load %arg5[%c0_18, %c0_19, %c0_20] : memref<3x128x128xbf16, #tpu.memory_space<vmem>>, vector<1x128x128xbf16>
    %50 = vector.shape_cast %49 : vector<1x128x128xbf16> to vector<128x128xbf16>
    %cst_21 = arith.constant dense<0.000000e+00> : vector<16x128xf32>
    %51 = tpu.matmul %44, %50, %cst_21 {dimension_numbers = #tpu.dot_dimension_numbers<[1], [0], [0], [1], [0, 0, 1, 1], [], []>} : vector<16x128xbf16>, vector<128x128xbf16>, vector<16x128xf32> -> vector<16x128xf32>
    %52 = vector.broadcast %48 : vector<1x128xf32> to vector<16x128xf32>
    %53 = arith.addf %52, %51 : vector<16x128xf32>
    %c1 = arith.constant 1 : index
    %c0_22 = arith.constant 0 : index
    %c0_23 = arith.constant 0 : index
    %54 = vector.load %arg5[%c1, %c0_22, %c0_23] : memref<3x128x128xbf16, #tpu.memory_space<vmem>>, vector<1x128x128xbf16>
    %55 = vector.shape_cast %54 : vector<1x128x128xbf16> to vector<128x128xbf16>
    %cst_24 = arith.constant dense<0.000000e+00> : vector<16x128xf32>
    %56 = tpu.matmul %41, %55, %cst_24 {dimension_numbers = #tpu.dot_dimension_numbers<[1], [0], [0], [1], [0, 0, 1, 1], [], []>} : vector<16x128xbf16>, vector<128x128xbf16>, vector<16x128xf32> -> vector<16x128xf32>
    %57 = arith.addf %53, %56 : vector<16x128xf32>
    %c2 = arith.constant 2 : index
    %c0_25 = arith.constant 0 : index
    %c0_26 = arith.constant 0 : index
    %58 = vector.load %arg5[%c2, %c0_25, %c0_26] : memref<3x128x128xbf16, #tpu.memory_space<vmem>>, vector<1x128x128xbf16>
    %59 = vector.shape_cast %58 : vector<1x128x128xbf16> to vector<128x128xbf16>
    %cst_27 = arith.constant dense<0.000000e+00> : vector<16x128xf32>
    %60 = tpu.matmul %47, %59, %cst_27 {dimension_numbers = #tpu.dot_dimension_numbers<[1], [0], [0], [1], [0, 0, 1, 1], [], []>} : vector<16x128xbf16>, vector<128x128xbf16>, vector<16x128xf32> -> vector<16x128xf32>
    %61 = arith.addf %57, %60 : vector<16x128xf32>
    %cst_28 = arith.constant 0.000000e+00 : f32
    %62 = vector.broadcast %cst_28 : f32 to vector<16x128xf32>
    %63 = arith.maximumf %61, %62 : vector<16x128xf32>
    %64 = arith.truncf %63 : vector<16x128xf32> to vector<16x128xbf16>
    %c0_29 = arith.constant 0 : index
    %c0_30 = arith.constant 0 : index
    %65 = vector.load %arg7[%c0_29, %c0_30] : memref<128x128xbf16, #tpu.memory_space<vmem>>, vector<128x128xbf16>
    %cst_31 = arith.constant dense<0.000000e+00> : vector<16x128xf32>
    %66 = tpu.matmul %64, %65, %cst_31 {dimension_numbers = #tpu.dot_dimension_numbers<[1], [0], [0], [1], [0, 0, 1, 1], [], []>} : vector<16x128xbf16>, vector<128x128xbf16>, vector<16x128xf32> -> vector<16x128xf32>
    %c0_32 = arith.constant 0 : index
    %c0_33 = arith.constant 0 : index
    %67 = vector.load %arg8[%c0_32, %c0_33] : memref<1x128xf32, #tpu.memory_space<vmem>>, vector<1x128xf32>
    %68 = vector.broadcast %67 : vector<1x128xf32> to vector<16x128xf32>
    %69 = arith.addf %66, %68 : vector<16x128xf32>
    %70 = arith.addf %38, %69 : vector<16x128xf32>
    %cst_34 = arith.constant 0.000000e+00 : f32
    %71 = vector.broadcast %cst_34 : f32 to vector<16x128xf32>
    %72 = arith.maximumf %70, %71 : vector<16x128xf32>
    %73 = arith.truncf %72 : vector<16x128xf32> to vector<16x128xbf16>
    %cst_35 = arith.constant 0.000000e+00 : bf16
    %74 = vector.broadcast %cst_35 : bf16 to vector<2x128xbf16>
    %75 = vector.extract_strided_slice %73 {offsets = [0, 0], sizes = [14, 128], strides = [1, 1]} : vector<16x128xbf16> to vector<14x128xbf16>
    %76 = tpu.concatenate %74, %75 in 0 : vector<2x128xbf16>, vector<14x128xbf16> -> vector<16x128xbf16>
    %cst_36 = arith.constant 0.000000e+00 : bf16
    %77 = vector.broadcast %cst_36 : bf16 to vector<2x128xbf16>
    %78 = vector.extract_strided_slice %73 {offsets = [2, 0], sizes = [14, 128], strides = [1, 1]} : vector<16x128xbf16> to vector<14x128xbf16>
    %79 = tpu.concatenate %78, %77 in 0 : vector<14x128xbf16>, vector<2x128xbf16> -> vector<16x128xbf16>
    %c0_37 = arith.constant 0 : index
    %c0_38 = arith.constant 0 : index
    %80 = vector.load %arg10[%c0_37, %c0_38] : memref<1x128xf32, #tpu.memory_space<vmem>>, vector<1x128xf32>
    %c0_39 = arith.constant 0 : index
    %c0_40 = arith.constant 0 : index
    %c0_41 = arith.constant 0 : index
    %81 = vector.load %arg9[%c0_39, %c0_40, %c0_41] : memref<3x128x128xbf16, #tpu.memory_space<vmem>>, vector<1x128x128xbf16>
    %82 = vector.shape_cast %81 : vector<1x128x128xbf16> to vector<128x128xbf16>
    %cst_42 = arith.constant dense<0.000000e+00> : vector<16x128xf32>
    %83 = tpu.matmul %76, %82, %cst_42 {dimension_numbers = #tpu.dot_dimension_numbers<[1], [0], [0], [1], [0, 0, 1, 1], [], []>} : vector<16x128xbf16>, vector<128x128xbf16>, vector<16x128xf32> -> vector<16x128xf32>
    %84 = vector.broadcast %80 : vector<1x128xf32> to vector<16x128xf32>
    %85 = arith.addf %84, %83 : vector<16x128xf32>
    %c1_43 = arith.constant 1 : index
    %c0_44 = arith.constant 0 : index
    %c0_45 = arith.constant 0 : index
    %86 = vector.load %arg9[%c1_43, %c0_44, %c0_45] : memref<3x128x128xbf16, #tpu.memory_space<vmem>>, vector<1x128x128xbf16>
    %87 = vector.shape_cast %86 : vector<1x128x128xbf16> to vector<128x128xbf16>
    %cst_46 = arith.constant dense<0.000000e+00> : vector<16x128xf32>
    %88 = tpu.matmul %73, %87, %cst_46 {dimension_numbers = #tpu.dot_dimension_numbers<[1], [0], [0], [1], [0, 0, 1, 1], [], []>} : vector<16x128xbf16>, vector<128x128xbf16>, vector<16x128xf32> -> vector<16x128xf32>
    %89 = arith.addf %85, %88 : vector<16x128xf32>
    %c2_47 = arith.constant 2 : index
    %c0_48 = arith.constant 0 : index
    %c0_49 = arith.constant 0 : index
    %90 = vector.load %arg9[%c2_47, %c0_48, %c0_49] : memref<3x128x128xbf16, #tpu.memory_space<vmem>>, vector<1x128x128xbf16>
    %91 = vector.shape_cast %90 : vector<1x128x128xbf16> to vector<128x128xbf16>
    %cst_50 = arith.constant dense<0.000000e+00> : vector<16x128xf32>
    %92 = tpu.matmul %79, %91, %cst_50 {dimension_numbers = #tpu.dot_dimension_numbers<[1], [0], [0], [1], [0, 0, 1, 1], [], []>} : vector<16x128xbf16>, vector<128x128xbf16>, vector<16x128xf32> -> vector<16x128xf32>
    %93 = arith.addf %89, %92 : vector<16x128xf32>
    %cst_51 = arith.constant 0.000000e+00 : f32
    %94 = vector.broadcast %cst_51 : f32 to vector<16x128xf32>
    %95 = arith.maximumf %93, %94 : vector<16x128xf32>
    %96 = arith.truncf %95 : vector<16x128xf32> to vector<16x128xbf16>
    %c0_52 = arith.constant 0 : index
    %c0_53 = arith.constant 0 : index
    %97 = vector.load %arg11[%c0_52, %c0_53] : memref<128x128xbf16, #tpu.memory_space<vmem>>, vector<128x128xbf16>
    %cst_54 = arith.constant dense<0.000000e+00> : vector<16x128xf32>
    %98 = tpu.matmul %96, %97, %cst_54 {dimension_numbers = #tpu.dot_dimension_numbers<[1], [0], [0], [1], [0, 0, 1, 1], [], []>} : vector<16x128xbf16>, vector<128x128xbf16>, vector<16x128xf32> -> vector<16x128xf32>
    %c0_55 = arith.constant 0 : index
    %c0_56 = arith.constant 0 : index
    %99 = vector.load %arg12[%c0_55, %c0_56] : memref<1x128xf32, #tpu.memory_space<vmem>>, vector<1x128xf32>
    %100 = vector.broadcast %99 : vector<1x128xf32> to vector<16x128xf32>
    %101 = arith.addf %98, %100 : vector<16x128xf32>
    %102 = arith.addf %70, %101 : vector<16x128xf32>
    %cst_57 = arith.constant 0.000000e+00 : f32
    %103 = vector.broadcast %cst_57 : f32 to vector<16x128xf32>
    %104 = arith.maximumf %102, %103 : vector<16x128xf32>
    %105 = arith.truncf %104 : vector<16x128xf32> to vector<16x128xbf16>
    %c0_58 = arith.constant 0 : index
    %c0_59 = arith.constant 0 : index
    %c0_60 = arith.constant 0 : index
    %c0_61 = arith.constant 0 : index
    %106 = vector.load %arg13[%c0_58, %c0_59, %c0_60, %c0_61] : memref<1x2x128x256xbf16, #tpu.memory_space<vmem>>, vector<1x1x128x256xbf16>
    %107 = vector.shape_cast %106 : vector<1x1x128x256xbf16> to vector<128x256xbf16>
    %c0_62 = arith.constant 0 : index
    %c1_63 = arith.constant 1 : index
    %c0_64 = arith.constant 0 : index
    %c0_65 = arith.constant 0 : index
    %108 = vector.load %arg13[%c0_62, %c1_63, %c0_64, %c0_65] : memref<1x2x128x256xbf16, #tpu.memory_space<vmem>>, vector<1x1x128x256xbf16>
    %109 = vector.shape_cast %108 : vector<1x1x128x256xbf16> to vector<128x256xbf16>
    %c0_i32 = arith.constant 0 : i32
    %110 = arith.cmpi eq, %arg0, %c0_i32 : i32
    %cst_66 = arith.constant 0.000000e+00 : bf16
    %111 = vector.broadcast %cst_66 : bf16 to vector<2x128xbf16>
    %112 = vector.extract_strided_slice %105 {offsets = [0, 0], sizes = [14, 128], strides = [1, 1]} : vector<16x128xbf16> to vector<14x128xbf16>
    %113 = tpu.concatenate %111, %112 in 0 : vector<2x128xbf16>, vector<14x128xbf16> -> vector<16x128xbf16>
    %cst_67 = arith.constant 0.000000e+00 : bf16
    %114 = vector.broadcast %cst_67 : bf16 to vector<2x128xbf16>
    %115 = vector.extract_strided_slice %105 {offsets = [2, 0], sizes = [14, 128], strides = [1, 1]} : vector<16x128xbf16> to vector<14x128xbf16>
    %116 = tpu.concatenate %115, %114 in 0 : vector<14x128xbf16>, vector<2x128xbf16> -> vector<16x128xbf16>
    %117 = arith.select %110, %113, %116 : vector<16x128xbf16>
    %cst_68 = arith.constant dense<0.000000e+00> : vector<16x256xf32>
    %118 = tpu.matmul %105, %107, %cst_68 {dimension_numbers = #tpu.dot_dimension_numbers<[1], [0], [0], [1], [0, 0, 1, 1], [], []>} : vector<16x128xbf16>, vector<128x256xbf16>, vector<16x256xf32> -> vector<16x256xf32>
    %cst_69 = arith.constant dense<0.000000e+00> : vector<16x256xf32>
    %119 = tpu.matmul %117, %109, %cst_69 {dimension_numbers = #tpu.dot_dimension_numbers<[1], [0], [0], [1], [0, 0, 1, 1], [], []>} : vector<16x128xbf16>, vector<128x256xbf16>, vector<16x256xf32> -> vector<16x256xf32>
    %120 = arith.addf %118, %119 : vector<16x256xf32>
    %c0_70 = arith.constant 0 : index
    %c0_71 = arith.constant 0 : index
    %121 = vector.load %arg14[%c0_70, %c0_71] : memref<1x256xf32, #tpu.memory_space<vmem>>, vector<1x256xf32>
    %122 = vector.broadcast %121 : vector<1x256xf32> to vector<16x256xf32>
    %123 = arith.addf %120, %122 : vector<16x256xf32>
    %124 = arith.truncf %123 : vector<16x256xf32> to vector<16x256xbf16>
    %c0_72 = arith.constant 0 : index
    %c0_73 = arith.constant 0 : index
    %c0_74 = arith.constant 0 : index
    %125 = vector.load %arg15[%c0_72, %c0_73, %c0_74] : memref<1x16x256xbf16, #tpu.memory_space<vmem>>, vector<1x16x256xbf16>
    %126 = vector.shape_cast %125 : vector<1x16x256xbf16> to vector<16x256xbf16>
    %127 = vector.shape_cast %124 : vector<16x256xbf16> to vector<1x16x256xbf16>
    tpu.vector_store %arg15[%c0_72, %c0_73, %c0_74], %127 {strides = array<i32>} : memref<1x16x256xbf16, #tpu.memory_space<vmem>>, vector<1x16x256xbf16>,
    return
  }
  func.func @transform_0(%arg0: i32) -> (i32, i32) {
    %c0_i32 = arith.constant 0 : i32
    %c0_i32_0 = arith.constant 0 : i32
    %c0_i32_1 = arith.constant 0 : i32
    return %c0_i32, %c0_i32_0 : i32, i32
  }
  func.func @transform_1(%arg0: i32) -> (i32, i32) {
    %c0_i32 = arith.constant 0 : i32
    %c0_i32_0 = arith.constant 0 : i32
    %c0_i32_1 = arith.constant 0 : i32
    return %c0_i32, %c0_i32_0 : i32, i32
  }
  func.func @transform_2(%arg0: i32) -> (i32, i32) {
    %c0_i32 = arith.constant 0 : i32
    %c0_i32_0 = arith.constant 0 : i32
    %c0_i32_1 = arith.constant 0 : i32
    return %c0_i32, %c0_i32_0 : i32, i32
  }
  func.func @transform_3(%arg0: i32) -> (i32, i32) {
    %c0_i32 = arith.constant 0 : i32
    %c0_i32_0 = arith.constant 0 : i32
    %c0_i32_1 = arith.constant 0 : i32
    return %c0_i32, %c0_i32_0 : i32, i32
  }
  func.func @transform_4(%arg0: i32) -> (i32, i32, i32) {
    %c0_i32 = arith.constant 0 : i32
    %c0_i32_0 = arith.constant 0 : i32
    %c0_i32_1 = arith.constant 0 : i32
    %c0_i32_2 = arith.constant 0 : i32
    return %c0_i32, %c0_i32_0, %c0_i32_1 : i32, i32, i32
  }
  func.func @transform_5(%arg0: i32) -> (i32, i32) {
    %c0_i32 = arith.constant 0 : i32
    %c0_i32_0 = arith.constant 0 : i32
    %c0_i32_1 = arith.constant 0 : i32
    return %c0_i32, %c0_i32_0 : i32, i32
  }
  func.func @transform_6(%arg0: i32) -> (i32, i32) {
    %c0_i32 = arith.constant 0 : i32
    %c0_i32_0 = arith.constant 0 : i32
    %c0_i32_1 = arith.constant 0 : i32
    return %c0_i32, %c0_i32_0 : i32, i32
  }
  func.func @transform_7(%arg0: i32) -> (i32, i32) {
    %c0_i32 = arith.constant 0 : i32
    %c0_i32_0 = arith.constant 0 : i32
    %c0_i32_1 = arith.constant 0 : i32
    return %c0_i32, %c0_i32_0 : i32, i32
  }
  func.func @transform_8(%arg0: i32) -> (i32, i32, i32) {
    %c0_i32 = arith.constant 0 : i32
    %c0_i32_0 = arith.constant 0 : i32
    %c0_i32_1 = arith.constant 0 : i32
    %c0_i32_2 = arith.constant 0 : i32
    return %c0_i32, %c0_i32_0, %c0_i32_1 : i32, i32, i32
  }
  func.func @transform_9(%arg0: i32) -> (i32, i32) {
    %c0_i32 = arith.constant 0 : i32
    %c0_i32_0 = arith.constant 0 : i32
    %c0_i32_1 = arith.constant 0 : i32
    return %c0_i32, %c0_i32_0 : i32, i32
  }
  func.func @transform_10(%arg0: i32) -> (i32, i32) {
    %c0_i32 = arith.constant 0 : i32
    %c0_i32_0 = arith.constant 0 : i32
    %c0_i32_1 = arith.constant 0 : i32
    return %c0_i32, %c0_i32_0 : i32, i32
  }
  func.func @transform_11(%arg0: i32) -> (i32, i32) {
    %c0_i32 = arith.constant 0 : i32
    %c0_i32_0 = arith.constant 0 : i32
    %c0_i32_1 = arith.constant 0 : i32
    return %c0_i32, %c0_i32_0 : i32, i32
  }
  func.func @transform_12(%arg0: i32) -> (i32, i32, i32, i32) {
    %c0_i32 = arith.constant 0 : i32
    %c0_i32_0 = arith.constant 0 : i32
    %c0_i32_1 = arith.constant 0 : i32
    %c0_i32_2 = arith.constant 0 : i32
    return %arg0, %c0_i32, %c0_i32_0, %c0_i32_1 : i32, i32, i32, i32
  }
  func.func @transform_13(%arg0: i32) -> (i32, i32) {
    %c0_i32 = arith.constant 0 : i32
    %c0_i32_0 = arith.constant 0 : i32
    %c0_i32_1 = arith.constant 0 : i32
    return %c0_i32, %c0_i32_0 : i32, i32
  }
  func.func @transform_14(%arg0: i32) -> (i32, i32, i32) {
    %c0_i32 = arith.constant 0 : i32
    %c0_i32_0 = arith.constant 0 : i32
    %c0_i32_1 = arith.constant 0 : i32
    return %arg0, %c0_i32, %c0_i32_0 : i32, i32, i32
  }
}

module attributes {stable_mosaic.version = 11 : i64} {
  func.func @_ct2_kernel(%arg0: i32, %arg1: memref<32x256xbf16, #tpu.memory_space<vmem>>, %arg2: memref<1x2x256x512xbf16, #tpu.memory_space<vmem>>, %arg3: memref<1x512xf32, #tpu.memory_space<vmem>>, %arg4: memref<1x32x512xbf16, #tpu.memory_space<vmem>>) attributes {dimension_semantics = [#tpu.dimension_semantics<parallel>], iteration_bounds = array<i64: 2>, scalar_prefetch = 0 : i64, scratch_operands = 0 : i64, tpu.core_type = #tpu.core_type<tc>, window_params = [{pipeline_mode = #tpu.pipeline_mode<synchronous>, transform_indices = @transform_0, window_bounds = array<i64: 32, 256>}, {transform_indices = @transform_1, window_bounds = array<i64: 1, 2, 256, 512>}, {pipeline_mode = #tpu.pipeline_mode<synchronous>, transform_indices = @transform_2, window_bounds = array<i64: 1, 512>}, {transform_indices = @transform_3, window_bounds = array<i64: 1, 32, 512>}]} {
    %c0 = arith.constant 0 : index
    %c0_0 = arith.constant 0 : index
    %0 = vector.load %arg1[%c0, %c0_0] : memref<32x256xbf16, #tpu.memory_space<vmem>>, vector<32x256xbf16>
    %cst = arith.constant 0.000000e+00 : bf16
    %1 = vector.broadcast %cst : bf16 to vector<32x256xbf16>
    %2 = arith.maximumf %0, %1 : vector<32x256xbf16>
    %c0_1 = arith.constant 0 : index
    %c0_2 = arith.constant 0 : index
    %c0_3 = arith.constant 0 : index
    %c0_4 = arith.constant 0 : index
    %3 = vector.load %arg2[%c0_1, %c0_2, %c0_3, %c0_4] : memref<1x2x256x512xbf16, #tpu.memory_space<vmem>>, vector<1x1x256x512xbf16>
    %4 = vector.shape_cast %3 : vector<1x1x256x512xbf16> to vector<256x512xbf16>
    %c0_5 = arith.constant 0 : index
    %c1 = arith.constant 1 : index
    %c0_6 = arith.constant 0 : index
    %c0_7 = arith.constant 0 : index
    %5 = vector.load %arg2[%c0_5, %c1, %c0_6, %c0_7] : memref<1x2x256x512xbf16, #tpu.memory_space<vmem>>, vector<1x1x256x512xbf16>
    %6 = vector.shape_cast %5 : vector<1x1x256x512xbf16> to vector<256x512xbf16>
    %c0_i32 = arith.constant 0 : i32
    %7 = arith.cmpi eq, %arg0, %c0_i32 : i32
    %cst_8 = arith.constant 0.000000e+00 : bf16
    %8 = vector.broadcast %cst_8 : bf16 to vector<2x256xbf16>
    %9 = vector.extract_strided_slice %2 {offsets = [0, 0], sizes = [30, 256], strides = [1, 1]} : vector<32x256xbf16> to vector<30x256xbf16>
    %10 = tpu.concatenate %8, %9 in 0 : vector<2x256xbf16>, vector<30x256xbf16> -> vector<32x256xbf16>
    %cst_9 = arith.constant 0.000000e+00 : bf16
    %11 = vector.broadcast %cst_9 : bf16 to vector<2x256xbf16>
    %12 = vector.extract_strided_slice %2 {offsets = [2, 0], sizes = [30, 256], strides = [1, 1]} : vector<32x256xbf16> to vector<30x256xbf16>
    %13 = tpu.concatenate %12, %11 in 0 : vector<30x256xbf16>, vector<2x256xbf16> -> vector<32x256xbf16>
    %14 = arith.select %7, %10, %13 : vector<32x256xbf16>
    %cst_10 = arith.constant dense<0.000000e+00> : vector<32x512xf32>
    %15 = tpu.matmul %2, %4, %cst_10 {dimension_numbers = #tpu.dot_dimension_numbers<[1], [0], [0], [1], [0, 0, 1, 1], [], []>} : vector<32x256xbf16>, vector<256x512xbf16>, vector<32x512xf32> -> vector<32x512xf32>
    %cst_11 = arith.constant dense<0.000000e+00> : vector<32x512xf32>
    %16 = tpu.matmul %14, %6, %cst_11 {dimension_numbers = #tpu.dot_dimension_numbers<[1], [0], [0], [1], [0, 0, 1, 1], [], []>} : vector<32x256xbf16>, vector<256x512xbf16>, vector<32x512xf32> -> vector<32x512xf32>
    %17 = arith.addf %15, %16 : vector<32x512xf32>
    %c0_12 = arith.constant 0 : index
    %c0_13 = arith.constant 0 : index
    %18 = vector.load %arg3[%c0_12, %c0_13] : memref<1x512xf32, #tpu.memory_space<vmem>>, vector<1x512xf32>
    %19 = vector.broadcast %18 : vector<1x512xf32> to vector<32x512xf32>
    %20 = arith.addf %17, %19 : vector<32x512xf32>
    %21 = arith.truncf %20 : vector<32x512xf32> to vector<32x512xbf16>
    %c0_14 = arith.constant 0 : index
    %c0_15 = arith.constant 0 : index
    %c0_16 = arith.constant 0 : index
    %22 = vector.load %arg4[%c0_14, %c0_15, %c0_16] : memref<1x32x512xbf16, #tpu.memory_space<vmem>>, vector<1x32x512xbf16>
    %23 = vector.shape_cast %22 : vector<1x32x512xbf16> to vector<32x512xbf16>
    %24 = vector.shape_cast %21 : vector<32x512xbf16> to vector<1x32x512xbf16>
    tpu.vector_store %arg4[%c0_14, %c0_15, %c0_16], %24 {strides = array<i32>} : memref<1x32x512xbf16, #tpu.memory_space<vmem>>, vector<1x32x512xbf16>,
    return
  }
  func.func @transform_0(%arg0: i32) -> (i32, i32) {
    %c0_i32 = arith.constant 0 : i32
    %c0_i32_0 = arith.constant 0 : i32
    %c0_i32_1 = arith.constant 0 : i32
    return %c0_i32, %c0_i32_0 : i32, i32
  }
  func.func @transform_1(%arg0: i32) -> (i32, i32, i32, i32) {
    %c0_i32 = arith.constant 0 : i32
    %c0_i32_0 = arith.constant 0 : i32
    %c0_i32_1 = arith.constant 0 : i32
    %c0_i32_2 = arith.constant 0 : i32
    return %arg0, %c0_i32, %c0_i32_0, %c0_i32_1 : i32, i32, i32, i32
  }
  func.func @transform_2(%arg0: i32) -> (i32, i32) {
    %c0_i32 = arith.constant 0 : i32
    %c0_i32_0 = arith.constant 0 : i32
    %c0_i32_1 = arith.constant 0 : i32
    return %c0_i32, %c0_i32_0 : i32, i32
  }
  func.func @transform_3(%arg0: i32) -> (i32, i32, i32) {
    %c0_i32 = arith.constant 0 : i32
    %c0_i32_0 = arith.constant 0 : i32
    %c0_i32_1 = arith.constant 0 : i32
    return %arg0, %c0_i32, %c0_i32_0 : i32, i32, i32
  }
}

module attributes {stable_mosaic.version = 11 : i64} {
  func.func @_res3_ct3_kernel(%arg0: i32, %arg1: memref<64x512xbf16, #tpu.memory_space<vmem>>, %arg2: memref<3x512x512xbf16, #tpu.memory_space<vmem>>, %arg3: memref<1x512xf32, #tpu.memory_space<vmem>>, %arg4: memref<512x512xbf16, #tpu.memory_space<vmem>>, %arg5: memref<1x512xf32, #tpu.memory_space<vmem>>, %arg6: memref<1x2x512x256xbf16, #tpu.memory_space<vmem>>, %arg7: memref<1x256xf32, #tpu.memory_space<vmem>>, %arg8: memref<1x64x256xf32, #tpu.memory_space<vmem>>) attributes {dimension_semantics = [#tpu.dimension_semantics<parallel>], iteration_bounds = array<i64: 2>, scalar_prefetch = 0 : i64, scratch_operands = 0 : i64, tpu.core_type = #tpu.core_type<tc>, window_params = [{pipeline_mode = #tpu.pipeline_mode<synchronous>, transform_indices = @transform_0, window_bounds = array<i64: 64, 512>}, {pipeline_mode = #tpu.pipeline_mode<synchronous>, transform_indices = @transform_1, window_bounds = array<i64: 3, 512, 512>}, {pipeline_mode = #tpu.pipeline_mode<synchronous>, transform_indices = @transform_2, window_bounds = array<i64: 1, 512>}, {pipeline_mode = #tpu.pipeline_mode<synchronous>, transform_indices = @transform_3, window_bounds = array<i64: 512, 512>}, {pipeline_mode = #tpu.pipeline_mode<synchronous>, transform_indices = @transform_4, window_bounds = array<i64: 1, 512>}, {transform_indices = @transform_5, window_bounds = array<i64: 1, 2, 512, 256>}, {pipeline_mode = #tpu.pipeline_mode<synchronous>, transform_indices = @transform_6, window_bounds = array<i64: 1, 256>}, {transform_indices = @transform_7, window_bounds = array<i64: 1, 64, 256>}]} {
    %c0 = arith.constant 0 : index
    %c0_0 = arith.constant 0 : index
    %0 = vector.load %arg1[%c0, %c0_0] : memref<64x512xbf16, #tpu.memory_space<vmem>>, vector<64x512xbf16>
    %cst = arith.constant 0.000000e+00 : bf16
    %1 = vector.broadcast %cst : bf16 to vector<64x512xbf16>
    %2 = arith.maximumf %0, %1 : vector<64x512xbf16>
    %cst_1 = arith.constant 0.000000e+00 : bf16
    %3 = vector.broadcast %cst_1 : bf16 to vector<2x512xbf16>
    %4 = vector.extract_strided_slice %2 {offsets = [0, 0], sizes = [62, 512], strides = [1, 1]} : vector<64x512xbf16> to vector<62x512xbf16>
    %5 = tpu.concatenate %3, %4 in 0 : vector<2x512xbf16>, vector<62x512xbf16> -> vector<64x512xbf16>
    %cst_2 = arith.constant 0.000000e+00 : bf16
    %6 = vector.broadcast %cst_2 : bf16 to vector<2x512xbf16>
    %7 = vector.extract_strided_slice %2 {offsets = [2, 0], sizes = [62, 512], strides = [1, 1]} : vector<64x512xbf16> to vector<62x512xbf16>
    %8 = tpu.concatenate %7, %6 in 0 : vector<62x512xbf16>, vector<2x512xbf16> -> vector<64x512xbf16>
    %c0_3 = arith.constant 0 : index
    %c0_4 = arith.constant 0 : index
    %9 = vector.load %arg3[%c0_3, %c0_4] : memref<1x512xf32, #tpu.memory_space<vmem>>, vector<1x512xf32>
    %c0_5 = arith.constant 0 : index
    %c0_6 = arith.constant 0 : index
    %c0_7 = arith.constant 0 : index
    %10 = vector.load %arg2[%c0_5, %c0_6, %c0_7] : memref<3x512x512xbf16, #tpu.memory_space<vmem>>, vector<1x512x512xbf16>
    %11 = vector.shape_cast %10 : vector<1x512x512xbf16> to vector<512x512xbf16>
    %cst_8 = arith.constant dense<0.000000e+00> : vector<64x512xf32>
    %12 = tpu.matmul %5, %11, %cst_8 {dimension_numbers = #tpu.dot_dimension_numbers<[1], [0], [0], [1], [0, 0, 1, 1], [], []>} : vector<64x512xbf16>, vector<512x512xbf16>, vector<64x512xf32> -> vector<64x512xf32>
    %13 = vector.broadcast %9 : vector<1x512xf32> to vector<64x512xf32>
    %14 = arith.addf %13, %12 : vector<64x512xf32>
    %c1 = arith.constant 1 : index
    %c0_9 = arith.constant 0 : index
    %c0_10 = arith.constant 0 : index
    %15 = vector.load %arg2[%c1, %c0_9, %c0_10] : memref<3x512x512xbf16, #tpu.memory_space<vmem>>, vector<1x512x512xbf16>
    %16 = vector.shape_cast %15 : vector<1x512x512xbf16> to vector<512x512xbf16>
    %cst_11 = arith.constant dense<0.000000e+00> : vector<64x512xf32>
    %17 = tpu.matmul %2, %16, %cst_11 {dimension_numbers = #tpu.dot_dimension_numbers<[1], [0], [0], [1], [0, 0, 1, 1], [], []>} : vector<64x512xbf16>, vector<512x512xbf16>, vector<64x512xf32> -> vector<64x512xf32>
    %18 = arith.addf %14, %17 : vector<64x512xf32>
    %c2 = arith.constant 2 : index
    %c0_12 = arith.constant 0 : index
    %c0_13 = arith.constant 0 : index
    %19 = vector.load %arg2[%c2, %c0_12, %c0_13] : memref<3x512x512xbf16, #tpu.memory_space<vmem>>, vector<1x512x512xbf16>
    %20 = vector.shape_cast %19 : vector<1x512x512xbf16> to vector<512x512xbf16>
    %cst_14 = arith.constant dense<0.000000e+00> : vector<64x512xf32>
    %21 = tpu.matmul %8, %20, %cst_14 {dimension_numbers = #tpu.dot_dimension_numbers<[1], [0], [0], [1], [0, 0, 1, 1], [], []>} : vector<64x512xbf16>, vector<512x512xbf16>, vector<64x512xf32> -> vector<64x512xf32>
    %22 = arith.addf %18, %21 : vector<64x512xf32>
    %cst_15 = arith.constant 0.000000e+00 : f32
    %23 = vector.broadcast %cst_15 : f32 to vector<64x512xf32>
    %24 = arith.maximumf %22, %23 : vector<64x512xf32>
    %25 = arith.truncf %24 : vector<64x512xf32> to vector<64x512xbf16>
    %c0_16 = arith.constant 0 : index
    %c0_17 = arith.constant 0 : index
    %26 = vector.load %arg4[%c0_16, %c0_17] : memref<512x512xbf16, #tpu.memory_space<vmem>>, vector<512x512xbf16>
    %cst_18 = arith.constant dense<0.000000e+00> : vector<64x512xf32>
    %27 = tpu.matmul %25, %26, %cst_18 {dimension_numbers = #tpu.dot_dimension_numbers<[1], [0], [0], [1], [0, 0, 1, 1], [], []>} : vector<64x512xbf16>, vector<512x512xbf16>, vector<64x512xf32> -> vector<64x512xf32>
    %c0_19 = arith.constant 0 : index
    %c0_20 = arith.constant 0 : index
    %28 = vector.load %arg5[%c0_19, %c0_20] : memref<1x512xf32, #tpu.memory_space<vmem>>, vector<1x512xf32>
    %29 = vector.broadcast %28 : vector<1x512xf32> to vector<64x512xf32>
    %30 = arith.addf %27, %29 : vector<64x512xf32>
    %31 = arith.truncf %30 : vector<64x512xf32> to vector<64x512xbf16>
    %c0_21 = arith.constant 0 : index
    %c0_22 = arith.constant 0 : index
    %c0_23 = arith.constant 0 : index
    %c0_24 = arith.constant 0 : index
    %32 = vector.load %arg6[%c0_21, %c0_22, %c0_23, %c0_24] : memref<1x2x512x256xbf16, #tpu.memory_space<vmem>>, vector<1x1x512x256xbf16>
    %33 = vector.shape_cast %32 : vector<1x1x512x256xbf16> to vector<512x256xbf16>
    %c0_25 = arith.constant 0 : index
    %c1_26 = arith.constant 1 : index
    %c0_27 = arith.constant 0 : index
    %c0_28 = arith.constant 0 : index
    %34 = vector.load %arg6[%c0_25, %c1_26, %c0_27, %c0_28] : memref<1x2x512x256xbf16, #tpu.memory_space<vmem>>, vector<1x1x512x256xbf16>
    %35 = vector.shape_cast %34 : vector<1x1x512x256xbf16> to vector<512x256xbf16>
    %c0_i32 = arith.constant 0 : i32
    %36 = arith.cmpi eq, %arg0, %c0_i32 : i32
    %cst_29 = arith.constant 0.000000e+00 : bf16
    %37 = vector.broadcast %cst_29 : bf16 to vector<2x512xbf16>
    %38 = vector.extract_strided_slice %31 {offsets = [0, 0], sizes = [62, 512], strides = [1, 1]} : vector<64x512xbf16> to vector<62x512xbf16>
    %39 = tpu.concatenate %37, %38 in 0 : vector<2x512xbf16>, vector<62x512xbf16> -> vector<64x512xbf16>
    %cst_30 = arith.constant 0.000000e+00 : bf16
    %40 = vector.broadcast %cst_30 : bf16 to vector<2x512xbf16>
    %41 = vector.extract_strided_slice %31 {offsets = [2, 0], sizes = [62, 512], strides = [1, 1]} : vector<64x512xbf16> to vector<62x512xbf16>
    %42 = tpu.concatenate %41, %40 in 0 : vector<62x512xbf16>, vector<2x512xbf16> -> vector<64x512xbf16>
    %43 = arith.select %36, %39, %42 : vector<64x512xbf16>
    %cst_31 = arith.constant dense<0.000000e+00> : vector<64x256xf32>
    %44 = tpu.matmul %31, %33, %cst_31 {dimension_numbers = #tpu.dot_dimension_numbers<[1], [0], [0], [1], [0, 0, 1, 1], [], []>} : vector<64x512xbf16>, vector<512x256xbf16>, vector<64x256xf32> -> vector<64x256xf32>
    %cst_32 = arith.constant dense<0.000000e+00> : vector<64x256xf32>
    %45 = tpu.matmul %43, %35, %cst_32 {dimension_numbers = #tpu.dot_dimension_numbers<[1], [0], [0], [1], [0, 0, 1, 1], [], []>} : vector<64x512xbf16>, vector<512x256xbf16>, vector<64x256xf32> -> vector<64x256xf32>
    %46 = arith.addf %44, %45 : vector<64x256xf32>
    %c0_33 = arith.constant 0 : index
    %c0_34 = arith.constant 0 : index
    %47 = vector.load %arg7[%c0_33, %c0_34] : memref<1x256xf32, #tpu.memory_space<vmem>>, vector<1x256xf32>
    %48 = vector.broadcast %47 : vector<1x256xf32> to vector<64x256xf32>
    %49 = arith.addf %46, %48 : vector<64x256xf32>
    %c0_35 = arith.constant 0 : index
    %c0_36 = arith.constant 0 : index
    %c0_37 = arith.constant 0 : index
    %50 = vector.load %arg8[%c0_35, %c0_36, %c0_37] : memref<1x64x256xf32, #tpu.memory_space<vmem>>, vector<1x64x256xf32>
    %51 = vector.shape_cast %50 : vector<1x64x256xf32> to vector<64x256xf32>
    %52 = vector.shape_cast %49 : vector<64x256xf32> to vector<1x64x256xf32>
    tpu.vector_store %arg8[%c0_35, %c0_36, %c0_37], %52 {strides = array<i32>} : memref<1x64x256xf32, #tpu.memory_space<vmem>>, vector<1x64x256xf32>,
    return
  }
  func.func @transform_0(%arg0: i32) -> (i32, i32) {
    %c0_i32 = arith.constant 0 : i32
    %c0_i32_0 = arith.constant 0 : i32
    %c0_i32_1 = arith.constant 0 : i32
    return %c0_i32, %c0_i32_0 : i32, i32
  }
  func.func @transform_1(%arg0: i32) -> (i32, i32, i32) {
    %c0_i32 = arith.constant 0 : i32
    %c0_i32_0 = arith.constant 0 : i32
    %c0_i32_1 = arith.constant 0 : i32
    %c0_i32_2 = arith.constant 0 : i32
    return %c0_i32, %c0_i32_0, %c0_i32_1 : i32, i32, i32
  }
  func.func @transform_2(%arg0: i32) -> (i32, i32) {
    %c0_i32 = arith.constant 0 : i32
    %c0_i32_0 = arith.constant 0 : i32
    %c0_i32_1 = arith.constant 0 : i32
    return %c0_i32, %c0_i32_0 : i32, i32
  }
  func.func @transform_3(%arg0: i32) -> (i32, i32) {
    %c0_i32 = arith.constant 0 : i32
    %c0_i32_0 = arith.constant 0 : i32
    %c0_i32_1 = arith.constant 0 : i32
    return %c0_i32, %c0_i32_0 : i32, i32
  }
  func.func @transform_4(%arg0: i32) -> (i32, i32) {
    %c0_i32 = arith.constant 0 : i32
    %c0_i32_0 = arith.constant 0 : i32
    %c0_i32_1 = arith.constant 0 : i32
    return %c0_i32, %c0_i32_0 : i32, i32
  }
  func.func @transform_5(%arg0: i32) -> (i32, i32, i32, i32) {
    %c0_i32 = arith.constant 0 : i32
    %c0_i32_0 = arith.constant 0 : i32
    %c0_i32_1 = arith.constant 0 : i32
    %c0_i32_2 = arith.constant 0 : i32
    return %arg0, %c0_i32, %c0_i32_0, %c0_i32_1 : i32, i32, i32, i32
  }
  func.func @transform_6(%arg0: i32) -> (i32, i32) {
    %c0_i32 = arith.constant 0 : i32
    %c0_i32_0 = arith.constant 0 : i32
    %c0_i32_1 = arith.constant 0 : i32
    return %c0_i32, %c0_i32_0 : i32, i32
  }
  func.func @transform_7(%arg0: i32) -> (i32, i32, i32) {
    %c0_i32 = arith.constant 0 : i32
    %c0_i32_0 = arith.constant 0 : i32
    %c0_i32_1 = arith.constant 0 : i32
    return %arg0, %c0_i32, %c0_i32_0 : i32, i32, i32
  }
}

</mosaic_0001>

<llo_original>
// kernel: resnet_decoder_forward.4
$region0: #{resnet_decoder_forward.4}
  #allocation0 [shape = 'u32[]', space=smem, size = 0x4, offset = 0x4, fixed_abs, tag = 'smem constant byte address 0x4 - core index']
  #allocation1 [shape = 'u32[72,128]{1,0:T(1,128)}', space=vmem, size = 0x9000, scoped, tag = 'internal scratch']
  %s0 = inlined_call_operand.vmem [shape: bf16[32,256], index: 0, kind: input, shape index: {}]
  %s1 = inlined_call_operand.hbm [shape: bf16[2,2,256,512], index: 1, kind: input, shape index: {}]
  %s2 = inlined_call_operand.hbm [shape: f32[1,512], index: 2, kind: input, shape index: {}]
  %s3 = inlined_call_operand.vmem [shape: bf16[2,32,512], index: 3, kind: output, shape index: {}]
  %s4 = sld [smem:[#allocation0]]
  $region53: #{resnet_decoder_forward.4} parent=0
    _
  %s6 = ssub.s32 1, %s4
  %s7 = scalar_select 0, %s6, %s4
  $region1: #{resnet_decoder_forward.4} parent=0
    #allocation2 [shape = 'u8[1048576]{0}', space=vmem, size = 0x100000, scoped, tag = 'input window, operand 1']
    #allocation3 [shape = 's32[2]{0}', space=sflag, size = 0x8, scoped, tag = 'scoped memory for resnet_decoder_forward.4']
    #allocation4 [shape = 'u8[2048]{0}', space=vmem, size = 0x800, scoped, tag = 'input window, operand 2, single buffered']
    #allocation5 [shape = 's32[1]{0}', space=sflag, size = 0x4, scoped, tag = 'scoped memory for resnet_decoder_forward.4']
    %8 = vsyncpa [#allocation3], 0
    %s9 = scalar_lea.sflag [#allocation3], 1
    %10 = vsyncpa %s9, 0
    %11 = vsyncpa [#allocation5], 0
    loop: start=0, step=1, limit=4
    $region2: #{resnet_decoder_forward.4} parent=1 // loop_pre_header
      _
    $region3: #{resnet_decoder_forward.4} parent=1 // loop_header
      %s13 = sphi 0, %s17
      %p14 = scmp.ge.s32.totalorder %s13, 4
      %s21 = sphi 0, %s21
      %s23 = sphi 0, %s21
      %s24 = sphi 0, %s23
      %s38 = sphi 0, %s24
      %s44 = sphi 0, %s46
      %s47 = sphi 0, %s44
      %s48 = sphi 0, %s47
      %s64 = sphi 0, %s48
      %s68 = sphi 0, %s68
      %s70 = sphi 0, %s68
      %s71 = sphi 0, %s70
      %s85 = sphi 0, %s71
      %s91 = sphi 0, %s93
      %s94 = sphi 0, %s91
      %s95 = sphi 0, %s94
      %s111 = sphi 0, %s95
    $region4: #{resnet_decoder_forward.4} parent=1 // loop_header_branch
      %16 = sbr.rel (%p14) target = $region8
    $region5: #{resnet_decoder_forward.4} parent=1 // loop_body
      %s18 = ssub.s32 %s13, 1
      %s19 = ssub.s32 %s13, 2
      %s20 = sadd.s32 %s13, 1
      %s22 = sadd.s32 %s21, 1
      %p25 = scmp.eq.s32.totalorder %s13, 1
      %p26 = scmp.ne.s32.totalorder %s21, %s23
      %p27 = scmp.eq.s32.totalorder %s13, 0
      %p28 = por %p26, %p27
      %p29 = scmp.ne.s32.totalorder %s21, %s23
      %p30 = scmp.eq.s32.totalorder %s18, 1
      %p31 = por %p29, %p30
      %p32 = scmp.ne.s32.totalorder %s23, %s24
      %p33 = scmp.eq.s32.totalorder %s18, 0
      %p34 = por %p32, %p33
      %p35 = scmp.ne.s32.totalorder %s23, %s24
      %p36 = scmp.eq.s32.totalorder %s19, 1
      %p37 = por %p35, %p36
      %p39 = scmp.ne.s32.totalorder %s24, %s38
      %p40 = scmp.eq.s32.totalorder %s19, 0
      %p41 = por %p39, %p40
      %s42 = ssub.s32 %s13, %s20
      %p43 = scmp.eq.s32.totalorder %s42, 0
      %s45 = sadd.s32 %s44, 1
      %s46 = scalar_select %p43, %s44, %s45
      %p49 = pneg %p43
      %p50 = scmp.eq.s32.totalorder %s13, 1
      %p51 = por %p49, %p50
      %p52 = scmp.ne.s32.totalorder %s44, %s47
      %p53 = scmp.eq.s32.totalorder %s13, 0
      %p54 = por %p52, %p53
      %p55 = scmp.ne.s32.totalorder %s44, %s47
      %p56 = scmp.eq.s32.totalorder %s18, 1
      %p57 = por %p55, %p56
      %p58 = scmp.ne.s32.totalorder %s47, %s48
      %p59 = scmp.eq.s32.totalorder %s18, 0
      %p60 = por %p58, %p59
      %p61 = scmp.ne.s32.totalorder %s47, %s48
      %p62 = scmp.eq.s32.totalorder %s19, 1
      %p63 = por %p61, %p62
      %p65 = scmp.ne.s32.totalorder %s48, %s64
      %p66 = scmp.eq.s32.totalorder %s19, 0
      %p67 = por %p65, %p66
      %s69 = sadd.s32 %s68, 1
      %p72 = scmp.eq.s32.totalorder %s13, 1
      %p73 = scmp.ne.s32.totalorder %s68, %s70
      %p74 = scmp.eq.s32.totalorder %s13, 0
      %p75 = por %p73, %p74
      %p76 = scmp.ne.s32.totalorder %s68, %s70
      %p77 = scmp.eq.s32.totalorder %s18, 1
      %p78 = por %p76, %p77
      %p79 = scmp.ne.s32.totalorder %s70, %s71
      %p80 = scmp.eq.s32.totalorder %s18, 0
      %p81 = por %p79, %p80
      %p82 = scmp.ne.s32.totalorder %s70, %s71
      %p83 = scmp.eq.s32.totalorder %s19, 1
      %p84 = por %p82, %p83
      %p86 = scmp.ne.s32.totalorder %s71, %s85
      %p87 = scmp.eq.s32.totalorder %s19, 0
      %p88 = por %p86, %p87
      %s89 = ssub.s32 %s13, %s20
      %p90 = scmp.eq.s32.totalorder %s89, 0
      %s92 = sadd.s32 %s91, 1
      %s93 = scalar_select %p90, %s91, %s92
      %p96 = pneg %p90
      %p97 = scmp.eq.s32.totalorder %s13, 1
      %p98 = por %p96, %p97
      %p99 = scmp.ne.s32.totalorder %s91, %s94
      %p100 = scmp.eq.s32.totalorder %s13, 0
      %p101 = por %p99, %p100
      %p102 = scmp.ne.s32.totalorder %s91, %s94
      %p103 = scmp.eq.s32.totalorder %s18, 1
      %p104 = por %p102, %p103
      %p105 = scmp.ne.s32.totalorder %s94, %s95
      %p106 = scmp.eq.s32.totalorder %s18, 0
      %p107 = por %p105, %p106
      %p108 = scmp.ne.s32.totalorder %s94, %s95
      %p109 = scmp.eq.s32.totalorder %s19, 1
      %p110 = por %p108, %p109
      %p112 = scmp.ne.s32.totalorder %s95, %s111
      %p113 = scmp.eq.s32.totalorder %s19, 0
      %p114 = por %p112, %p113
      %p115 = scmp.le.s32.totalorder 1, %s13
      %p116 = scmp.lt.s32.totalorder %s13, 3
      %p117 = pnand %p115, %p116
      %p118 = pneg %p117
      // Predicated region
      $region9: #{resnet_decoder_forward.4} parent=5 // pred_check
        _
      $region10: #{resnet_decoder_forward.4} parent=5 // pred_check_branch
        %120 = sbr.rel (%p117) target = $region12
      $region11: #{resnet_decoder_forward.4} parent=5 // pred_region
        %s121 = ssub.s32 %s13, 1
        // Predicated region
        $region13: #{resnet_decoder_forward.4} parent=11 // pred_check
          %p122 = pneg %p34
        $region14: #{resnet_decoder_forward.4} parent=11 // pred_check_branch
          %124 = sbr.rel (%p122) target = $region16
        $region15: #{resnet_decoder_forward.4} parent=11 // pred_region
          _
        $region16: #{resnet_decoder_forward.4} parent=11 // pred_fallthru
          _
        // Predicated region
        $region17: #{resnet_decoder_forward.4} parent=11 // pred_check
          %p125 = pneg %p81
        $region18: #{resnet_decoder_forward.4} parent=11 // pred_check_branch
          %127 = sbr.rel (%p125) target = $region20
        $region19: #{resnet_decoder_forward.4} parent=11 // pred_region
          %129 = vsyncadd [#allocation5], 0
          %s131 = sshll.u32 %s2, 4
          %s132 = int_to_ptr.hbm [resolvable:$true] %s131
          %s133 = sshll.u32 [#allocation4], 4
          %s134 = int_to_ptr.vmem [resolvable:$true] %s133
          %136 = dma.hbm_to_vmem [thread:$0]  %s132, 64, %s134, [#allocation5]
        $region20: #{resnet_decoder_forward.4} parent=11 // pred_fallthru
          _
      $region12: #{resnet_decoder_forward.4} parent=5 // pred_fallthru
        _
      %p137 = scmp.lt.s32.totalorder %s13, 2
      // Predicated region
      $region21: #{resnet_decoder_forward.4} parent=5 // pred_check
        %p138 = pneg %p137
      $region22: #{resnet_decoder_forward.4} parent=5 // pred_check_branch
        %140 = sbr.rel (%p138) target = $region24
      $region23: #{resnet_decoder_forward.4} parent=5 // pred_region
        // Predicated region
        $region25: #{resnet_decoder_forward.4} parent=23 // pred_check
          %p141 = pneg %p54
        $region26: #{resnet_decoder_forward.4} parent=23 // pred_check_branch
          %143 = sbr.rel (%p141) target = $region28
        $region27: #{resnet_decoder_forward.4} parent=23 // pred_region
          %s144 = sand.u32 %s44, 1
          %s145 = scalar_lea.sflag [#allocation3], %s144
          %s146 = sand.u32 %s44, 1
          %s147 = smul.addr %s146, 1024
          %s148 = scalar_lea.vmem [#allocation2], %s147
          %150 = vsyncadd %s145, 0
          %s151 = smul.addr %s13, 256
          %s152 = smul.addr %s151, 4
          %s153 = scalar_lea.hbm %s1, %s152
          %s154 = sshll.u32 %s153, 4
          %s155 = int_to_ptr.hbm [resolvable:$true] %s154
          %s156 = sshll.u32 %s148, 4
          %s157 = int_to_ptr.vmem [resolvable:$true] %s156
          %162 = dma.hbm_to_vmem [thread:$0]  %s155, 16384, %s157, %s145, 256, 256, 16
        $region28: #{resnet_decoder_forward.4} parent=23 // pred_fallthru
          _
      $region24: #{resnet_decoder_forward.4} parent=5 // pred_fallthru
        _
      %p163 = scmp.le.s32.totalorder 1, %s13
      %p164 = scmp.lt.s32.totalorder %s13, 3
      %p165 = pnand %p163, %p164
      %p166 = pneg %p165
      // Predicated region
      $region29: #{resnet_decoder_forward.4} parent=5 // pred_check
        _
      $region30: #{resnet_decoder_forward.4} parent=5 // pred_check_branch
        %168 = sbr.rel (%p165) target = $region32
      $region31: #{resnet_decoder_forward.4} parent=5 // pred_region
        %s169 = ssub.s32 %s13, 1
        %s170 = sand.u32 %s47, 1
        %s171 = scalar_lea.sflag [#allocation3], %s170
        %s172 = sand.u32 %s47, 1
        %s173 = smul.addr %s172, 1024
        %s174 = scalar_lea.vmem [#allocation2], %s173
        // Predicated region
        $region33: #{resnet_decoder_forward.4} parent=31 // pred_check
          %p175 = pneg %p60
        $region34: #{resnet_decoder_forward.4} parent=31 // pred_check_branch
          %177 = sbr.rel (%p175) target = $region36
        $region35: #{resnet_decoder_forward.4} parent=31 // pred_region
          %179 = dma.done %s171, 16384
        $region36: #{resnet_decoder_forward.4} parent=31 // pred_fallthru
          _
        // Predicated region
        $region37: #{resnet_decoder_forward.4} parent=31 // pred_check
          %p180 = pneg %p81
        $region38: #{resnet_decoder_forward.4} parent=31 // pred_check_branch
          %182 = sbr.rel (%p180) target = $region40
        $region39: #{resnet_decoder_forward.4} parent=31 // pred_region
          %184 = dma.done [#allocation5], 64
        $region40: #{resnet_decoder_forward.4} parent=31 // pred_fallthru
          _
        %p185 = pneg %p34
        %p186 = pneg %p31
        %s187 = sand.u32 %s47, 1
        %s188 = scalar_lea.sflag [#allocation3], %s187
        %s189 = sand.u32 %s47, 1
        %s190 = smul.addr %s189, 1024
        %s191 = scalar_lea.vmem [#allocation2], %s190
        %p192 = pneg %p60
        %p193 = pneg %p57
        %p194 = pneg %p81
        %p195 = pneg %p78
        %p196 = pneg %p107
        %p197 = pneg %p104
        %p198 = scmp.lt.s32.totalorder %s18, 1
        %s199 = scalar_select %p198, %s18, 1
        %s200 = smul.addr %s199, 16
        %s201 = smul.addr %s200, 4
        %s202 = scalar_lea.vmem %s3, %s201
        %p203 = scmp.lt.s32.totalorder %s18, 1
        %s204 = scalar_select %p203, %s18, 1
        %s205 = smul.addr %s204, 16
        %s206 = smul.addr %s205, 4
        %s207 = scalar_lea.vmem %s3, %s206
        %v209 = vld [vmem:[%s0] sm:$0xff]
        %v210 = vld [vmem:[%s0 + $0x8] sm:$0xff]
        %v211 = vld [vmem:[%s0 + $0x10] sm:$0xff]
        %v212 = vld [vmem:[%s0 + $0x18] sm:$0xff]
        %v213 = vunpack.c.l.bf16 %v209
        %v214 = vunpack.c.h.bf16 %v209
        %v215 = vunpack.c.l.bf16 %v210
        %v216 = vunpack.c.h.bf16 %v210
        %v217 = vunpack.c.l.bf16 %v211
        %v218 = vunpack.c.h.bf16 %v211
        %v219 = vunpack.c.l.bf16 %v212
        %v220 = vunpack.c.h.bf16 %v212
        %v221 = vmax.f32 %v213, 0.0
        %v222 = vmax.f32 %v214, 0.0
        %v223 = vmax.f32 %v215, 0.0
        %v224 = vmax.f32 %v216, 0.0
        %v225 = vmax.f32 %v217, 0.0
        %v226 = vmax.f32 %v218, 0.0
        %v227 = vmax.f32 %v219, 0.0
        %v228 = vmax.f32 %v220, 0.0
        %v229 = vpack.c.bf16 %v222, %v221
        %v230 = vpack.c.bf16 %v224, %v223
        %v231 = vpack.c.bf16 %v226, %v225
        %v232 = vpack.c.bf16 %v228, %v227
        %v233 = vld [vmem:[%s174] sm:$0xff]
        %v234 = vld [vmem:[%s174 + $0x8] sm:$0xff]
        %v235 = vld [vmem:[%s174 + $0x10] sm:$0xff]
        %v236 = vld [vmem:[%s174 + $0x18] sm:$0xff]
        %v237 = vld [vmem:[%s174 + $0x20] sm:$0xff]
        %v238 = vld [vmem:[%s174 + $0x28] sm:$0xff]
        %v239 = vld [vmem:[%s174 + $0x30] sm:$0xff]
        %v240 = vld [vmem:[%s174 + $0x38] sm:$0xff]
        %v241 = vld [vmem:[%s174 + $0x40] sm:$0xff]
        %v242 = vld [vmem:[%s174 + $0x48] sm:$0xff]
        %v243 = vld [vmem:[%s174 + $0x50] sm:$0xff]
        %v244 = vld [vmem:[%s174 + $0x58] sm:$0xff]
        %v245 = vld [vmem:[%s174 + $0x60] sm:$0xff]
        %v246 = vld [vmem:[%s174 + $0x68] sm:$0xff]
        %v247 = vld [vmem:[%s174 + $0x70] sm:$0xff]
        %v248 = vld [vmem:[%s174 + $0x78] sm:$0xff]
        %v249 = vld [vmem:[%s174 + $0x80] sm:$0xff]
        %v250 = vld [vmem:[%s174 + $0x88] sm:$0xff]
        %v251 = vld [vmem:[%s174 + $0x90] sm:$0xff]
        %v252 = vld [vmem:[%s174 + $0x98] sm:$0xff]
        %v253 = vld [vmem:[%s174 + $0xa0] sm:$0xff]
        %v254 = vld [vmem:[%s174 + $0xa8] sm:$0xff]
        %v255 = vld [vmem:[%s174 + $0xb0] sm:$0xff]
        %v256 = vld [vmem:[%s174 + $0xb8] sm:$0xff]
        %v257 = vld [vmem:[%s174 + $0xc0] sm:$0xff]
        %v258 = vld [vmem:[%s174 + $0xc8] sm:$0xff]
        %v259 = vld [vmem:[%s174 + $0xd0] sm:$0xff]
        %v260 = vld [vmem:[%s174 + $0xd8] sm:$0xff]
        %v261 = vld [vmem:[%s174 + $0xe0] sm:$0xff]
        %v262 = vld [vmem:[%s174 + $0xe8] sm:$0xff]
        %v263 = vld [vmem:[%s174 + $0xf0] sm:$0xff]
        %v264 = vld [vmem:[%s174 + $0xf8] sm:$0xff]
        %v265 = vld [vmem:[%s174 + $0x100] sm:$0xff]
        %v266 = vld [vmem:[%s174 + $0x108] sm:$0xff]
        %v267 = vld [vmem:[%s174 + $0x110] sm:$0xff]
        %v268 = vld [vmem:[%s174 + $0x118] sm:$0xff]
        %v269 = vld [vmem:[%s174 + $0x120] sm:$0xff]
        %v270 = vld [vmem:[%s174 + $0x128] sm:$0xff]
        %v271 = vld [vmem:[%s174 + $0x130] sm:$0xff]
        %v272 = vld [vmem:[%s174 + $0x138] sm:$0xff]
        %v273 = vld [vmem:[%s174 + $0x140] sm:$0xff]
        %v274 = vld [vmem:[%s174 + $0x148] sm:$0xff]
        %v275 = vld [vmem:[%s174 + $0x150] sm:$0xff]
        %v276 = vld [vmem:[%s174 + $0x158] sm:$0xff]
        %v277 = vld [vmem:[%s174 + $0x160] sm:$0xff]
        %v278 = vld [vmem:[%s174 + $0x168] sm:$0xff]
        %v279 = vld [vmem:[%s174 + $0x170] sm:$0xff]
        %v280 = vld [vmem:[%s174 + $0x178] sm:$0xff]
        %v281 = vld [vmem:[%s174 + $0x180] sm:$0xff]
        %v282 = vld [vmem:[%s174 + $0x188] sm:$0xff]
        %v283 = vld [vmem:[%s174 + $0x190] sm:$0xff]
        %v284 = vld [vmem:[%s174 + $0x198] sm:$0xff]
        %v285 = vld [vmem:[%s174 + $0x1a0] sm:$0xff]
        %v286 = vld [vmem:[%s174 + $0x1a8] sm:$0xff]
        %v287 = vld [vmem:[%s174 + $0x1b0] sm:$0xff]
        %v288 = vld [vmem:[%s174 + $0x1b8] sm:$0xff]
        %v289 = vld [vmem:[%s174 + $0x1c0] sm:$0xff]
        %v290 = vld [vmem:[%s174 + $0x1c8] sm:$0xff]
        %v291 = vld [vmem:[%s174 + $0x1d0] sm:$0xff]
        %v292 = vld [vmem:[%s174 + $0x1d8] sm:$0xff]
        %v293 = vld [vmem:[%s174 + $0x1e0] sm:$0xff]
        %v294 = vld [vmem:[%s174 + $0x1e8] sm:$0xff]
        %v295 = vld [vmem:[%s174 + $0x1f0] sm:$0xff]
        %v296 = vld [vmem:[%s174 + $0x1f8] sm:$0xff]
        %s297 = scalar_lea.vmem %s174, 512 [#allocation2]
        %v298 = vld [vmem:[%s297] sm:$0xff]
        %v299 = vld [vmem:[%s297 + $0x8] sm:$0xff]
        %v300 = vld [vmem:[%s297 + $0x10] sm:$0xff]
        %v301 = vld [vmem:[%s297 + $0x18] sm:$0xff]
        %v302 = vld [vmem:[%s297 + $0x20] sm:$0xff]
        %v303 = vld [vmem:[%s297 + $0x28] sm:$0xff]
        %v304 = vld [vmem:[%s297 + $0x30] sm:$0xff]
        %v305 = vld [vmem:[%s297 + $0x38] sm:$0xff]
        %v306 = vld [vmem:[%s297 + $0x40] sm:$0xff]
        %v307 = vld [vmem:[%s297 + $0x48] sm:$0xff]
        %v308 = vld [vmem:[%s297 + $0x50] sm:$0xff]
        %v309 = vld [vmem:[%s297 + $0x58] sm:$0xff]
        %v310 = vld [vmem:[%s297 + $0x60] sm:$0xff]
        %v311 = vld [vmem:[%s297 + $0x68] sm:$0xff]
        %v312 = vld [vmem:[%s297 + $0x70] sm:$0xff]
        %v313 = vld [vmem:[%s297 + $0x78] sm:$0xff]
        %v314 = vld [vmem:[%s297 + $0x80] sm:$0xff]
        %v315 = vld [vmem:[%s297 + $0x88] sm:$0xff]
        %v316 = vld [vmem:[%s297 + $0x90] sm:$0xff]
        %v317 = vld [vmem:[%s297 + $0x98] sm:$0xff]
        %v318 = vld [vmem:[%s297 + $0xa0] sm:$0xff]
        %v319 = vld [vmem:[%s297 + $0xa8] sm:$0xff]
        %v320 = vld [vmem:[%s297 + $0xb0] sm:$0xff]
        %v321 = vld [vmem:[%s297 + $0xb8] sm:$0xff]
        %v322 = vld [vmem:[%s297 + $0xc0] sm:$0xff]
        %v323 = vld [vmem:[%s297 + $0xc8] sm:$0xff]
        %v324 = vld [vmem:[%s297 + $0xd0] sm:$0xff]
        %v325 = vld [vmem:[%s297 + $0xd8] sm:$0xff]
        %v326 = vld [vmem:[%s297 + $0xe0] sm:$0xff]
        %v327 = vld [vmem:[%s297 + $0xe8] sm:$0xff]
        %v328 = vld [vmem:[%s297 + $0xf0] sm:$0xff]
        %v329 = vld [vmem:[%s297 + $0xf8] sm:$0xff]
        %v330 = vld [vmem:[%s297 + $0x100] sm:$0xff]
        %v331 = vld [vmem:[%s297 + $0x108] sm:$0xff]
        %v332 = vld [vmem:[%s297 + $0x110] sm:$0xff]
        %v333 = vld [vmem:[%s297 + $0x118] sm:$0xff]
        %v334 = vld [vmem:[%s297 + $0x120] sm:$0xff]
        %v335 = vld [vmem:[%s297 + $0x128] sm:$0xff]
        %v336 = vld [vmem:[%s297 + $0x130] sm:$0xff]
        %v337 = vld [vmem:[%s297 + $0x138] sm:$0xff]
        %v338 = vld [vmem:[%s297 + $0x140] sm:$0xff]
        %v339 = vld [vmem:[%s297 + $0x148] sm:$0xff]
        %v340 = vld [vmem:[%s297 + $0x150] sm:$0xff]
        %v341 = vld [vmem:[%s297 + $0x158] sm:$0xff]
        %v342 = vld [vmem:[%s297 + $0x160] sm:$0xff]
        %v343 = vld [vmem:[%s297 + $0x168] sm:$0xff]
        %v344 = vld [vmem:[%s297 + $0x170] sm:$0xff]
        %v345 = vld [vmem:[%s297 + $0x178] sm:$0xff]
        %v346 = vld [vmem:[%s297 + $0x180] sm:$0xff]
        %v347 = vld [vmem:[%s297 + $0x188] sm:$0xff]
        %v348 = vld [vmem:[%s297 + $0x190] sm:$0xff]
        %v349 = vld [vmem:[%s297 + $0x198] sm:$0xff]
        %v350 = vld [vmem:[%s297 + $0x1a0] sm:$0xff]
        %v351 = vld [vmem:[%s297 + $0x1a8] sm:$0xff]
        %v352 = vld [vmem:[%s297 + $0x1b0] sm:$0xff]
        %v353 = vld [vmem:[%s297 + $0x1b8] sm:$0xff]
        %v354 = vld [vmem:[%s297 + $0x1c0] sm:$0xff]
        %v355 = vld [vmem:[%s297 + $0x1c8] sm:$0xff]
        %v356 = vld [vmem:[%s297 + $0x1d0] sm:$0xff]
        %v357 = vld [vmem:[%s297 + $0x1d8] sm:$0xff]
        %v358 = vld [vmem:[%s297 + $0x1e0] sm:$0xff]
        %v359 = vld [vmem:[%s297 + $0x1e8] sm:$0xff]
        %v360 = vld [vmem:[%s297 + $0x1f0] sm:$0xff]
        %v361 = vld [vmem:[%s297 + $0x1f8] sm:$0xff]
        %p362 = scmp.eq.s32.totalorder %s18, 0
        %v367 = vunpack.c.l.b16 %v229
        %v368 = vunpack.c.h.b16 %v229
        %v369 = vunpack.c.l.b16 %v230
        %v370 = vunpack.c.h.b16 %v230
        %v371 = vunpack.c.l.b16 %v231
        %v372 = vunpack.c.h.b16 %v231
        %v373 = vunpack.c.l.b16 %v232
        %v374 = vunpack.c.h.b16 %v232
        %v375 = vpack.c.b16 %v369, %v367
        %v376 = vpack.c.b16 %v370, %v368
        %v377 = vpack.c.b16 %v373, %v371
        %v378 = vpack.c.b16 %v374, %v372
        %vm379 = vcmask 1040384
        %v380 = vrot.slane %v375, 7
        %v381 = vrot.slane %v376, 7
        %v382 = vrot.slane %v377, 7
        %v383 = vsel %vm379, %v380, %v382
        %v384 = vrot.slane %v378, 7
        %v385 = vsel %vm379, %v381, %v384
        %vm388 = vcmask 1040384
        %v391 = vsel %vm388, 0, %v380
        %v394 = vsel %vm388, 0, %v381
        %vm396 = vcmask 1046528
        %v397 = vrot.slane %v375, 1
        %v398 = vrot.slane %v377, 1
        %v399 = vsel %vm396, %v397, %v398
        %v400 = vrot.slane %v376, 1
        %v401 = vrot.slane %v378, 1
        %v402 = vsel %vm396, %v400, %v401
        %vm405 = vcmask 1046528
        %v407 = vsel %vm405, %v398, 0
        %v410 = vsel %vm405, %v401, 0
        %s412 = scalar_select %p362, 1, 0
        %v413 = vstv %s412
        %vm414 = vcmp.eq.s32.totalorder %v413, 1
        %v415 = vsel %vm414, %v391, %v399
        %v416 = vsel %vm414, %v394, %v402
        %v417 = vsel %vm414, %v383, %v407
        %v418 = vsel %vm414, %v385, %v410
        %v483 = vunpack.c.l.b16 %v298
        %v484 = vunpack.c.h.b16 %v298
        %v485 = vunpack.c.l.b16 %v299
        %v486 = vunpack.c.h.b16 %v299
        %v487 = vunpack.c.l.b16 %v300
        %v488 = vunpack.c.h.b16 %v300
        %v489 = vunpack.c.l.b16 %v301
        %v490 = vunpack.c.h.b16 %v301
        %v491 = vunpack.c.l.b16 %v302
        %v492 = vunpack.c.h.b16 %v302
        %v493 = vunpack.c.l.b16 %v303
        %v494 = vunpack.c.h.b16 %v303
        %v495 = vunpack.c.l.b16 %v304
        %v496 = vunpack.c.h.b16 %v304
        %v497 = vunpack.c.l.b16 %v305
        %v498 = vunpack.c.h.b16 %v305
        %v499 = vunpack.c.l.b16 %v306
        %v500 = vunpack.c.h.b16 %v306
        %v501 = vunpack.c.l.b16 %v307
        %v502 = vunpack.c.h.b16 %v307
        %v503 = vunpack.c.l.b16 %v308
        %v504 = vunpack.c.h.b16 %v308
        %v505 = vunpack.c.l.b16 %v309
        %v506 = vunpack.c.h.b16 %v309
        %v507 = vunpack.c.l.b16 %v310
        %v508 = vunpack.c.h.b16 %v310
        %v509 = vunpack.c.l.b16 %v311
        %v510 = vunpack.c.h.b16 %v311
        %v511 = vunpack.c.l.b16 %v312
        %v512 = vunpack.c.h.b16 %v312
        %v513 = vunpack.c.l.b16 %v313
        %v514 = vunpack.c.h.b16 %v313
        %v515 = vunpack.c.l.b16 %v314
        %v516 = vunpack.c.h.b16 %v314
        %v517 = vunpack.c.l.b16 %v315
        %v518 = vunpack.c.h.b16 %v315
        %v519 = vunpack.c.l.b16 %v316
        %v520 = vunpack.c.h.b16 %v316
        %v521 = vunpack.c.l.b16 %v317
        %v522 = vunpack.c.h.b16 %v317
        %v523 = vunpack.c.l.b16 %v318
        %v524 = vunpack.c.h.b16 %v318
        %v525 = vunpack.c.l.b16 %v319
        %v526 = vunpack.c.h.b16 %v319
        %v527 = vunpack.c.l.b16 %v320
        %v528 = vunpack.c.h.b16 %v320
        %v529 = vunpack.c.l.b16 %v321
        %v530 = vunpack.c.h.b16 %v321
        %v531 = vunpack.c.l.b16 %v322
        %v532 = vunpack.c.h.b16 %v322
        %v533 = vunpack.c.l.b16 %v323
        %v534 = vunpack.c.h.b16 %v323
        %v535 = vunpack.c.l.b16 %v324
        %v536 = vunpack.c.h.b16 %v324
        %v537 = vunpack.c.l.b16 %v325
        %v538 = vunpack.c.h.b16 %v325
        %v539 = vunpack.c.l.b16 %v326
        %v540 = vunpack.c.h.b16 %v326
        %v541 = vunpack.c.l.b16 %v327
        %v542 = vunpack.c.h.b16 %v327
        %v543 = vunpack.c.l.b16 %v328
        %v544 = vunpack.c.h.b16 %v328
        %v545 = vunpack.c.l.b16 %v329
        %v546 = vunpack.c.h.b16 %v329
        %v547 = vunpack.c.l.b16 %v330
        %v548 = vunpack.c.h.b16 %v330
        %v549 = vunpack.c.l.b16 %v331
        %v550 = vunpack.c.h.b16 %v331
        %v551 = vunpack.c.l.b16 %v332
        %v552 = vunpack.c.h.b16 %v332
        %v553 = vunpack.c.l.b16 %v333
        %v554 = vunpack.c.h.b16 %v333
        %v555 = vunpack.c.l.b16 %v334
        %v556 = vunpack.c.h.b16 %v334
        %v557 = vunpack.c.l.b16 %v335
        %v558 = vunpack.c.h.b16 %v335
        %v559 = vunpack.c.l.b16 %v336
        %v560 = vunpack.c.h.b16 %v336
        %v561 = vunpack.c.l.b16 %v337
        %v562 = vunpack.c.h.b16 %v337
        %v563 = vunpack.c.l.b16 %v338
        %v564 = vunpack.c.h.b16 %v338
        %v565 = vunpack.c.l.b16 %v339
        %v566 = vunpack.c.h.b16 %v339
        %v567 = vunpack.c.l.b16 %v340
        %v568 = vunpack.c.h.b16 %v340
        %v569 = vunpack.c.l.b16 %v341
        %v570 = vunpack.c.h.b16 %v341
        %v571 = vunpack.c.l.b16 %v342
        %v572 = vunpack.c.h.b16 %v342
        %v573 = vunpack.c.l.b16 %v343
        %v574 = vunpack.c.h.b16 %v343
        %v575 = vunpack.c.l.b16 %v344
        %v576 = vunpack.c.h.b16 %v344
        %v577 = vunpack.c.l.b16 %v345
        %v578 = vunpack.c.h.b16 %v345
        %v579 = vunpack.c.l.b16 %v346
        %v580 = vunpack.c.h.b16 %v346
        %v581 = vunpack.c.l.b16 %v347
        %v582 = vunpack.c.h.b16 %v347
        %v583 = vunpack.c.l.b16 %v348
        %v584 = vunpack.c.h.b16 %v348
        %v585 = vunpack.c.l.b16 %v349
        %v586 = vunpack.c.h.b16 %v349
        %v587 = vunpack.c.l.b16 %v350
        %v588 = vunpack.c.h.b16 %v350
        %v589 = vunpack.c.l.b16 %v351
        %v590 = vunpack.c.h.b16 %v351
        %v591 = vunpack.c.l.b16 %v352
        %v592 = vunpack.c.h.b16 %v352
        %v593 = vunpack.c.l.b16 %v353
        %v594 = vunpack.c.h.b16 %v353
        %v595 = vunpack.c.l.b16 %v354
        %v596 = vunpack.c.h.b16 %v354
        %v597 = vunpack.c.l.b16 %v355
        %v598 = vunpack.c.h.b16 %v355
        %v599 = vunpack.c.l.b16 %v356
        %v600 = vunpack.c.h.b16 %v356
        %v601 = vunpack.c.l.b16 %v357
        %v602 = vunpack.c.h.b16 %v357
        %v603 = vunpack.c.l.b16 %v358
        %v604 = vunpack.c.h.b16 %v358
        %v605 = vunpack.c.l.b16 %v359
        %v606 = vunpack.c.h.b16 %v359
        %v607 = vunpack.c.l.b16 %v360
        %v608 = vunpack.c.h.b16 %v360
        %v609 = vunpack.c.l.b16 %v361
        %v610 = vunpack.c.h.b16 %v361
        %v611 = vpack.c.b16 %v487, %v483
        %v612 = vpack.c.b16 %v488, %v484
        %v613 = vpack.c.b16 %v489, %v485
        %v614 = vpack.c.b16 %v490, %v486
        %v615 = vpack.c.b16 %v495, %v491
        %v616 = vpack.c.b16 %v496, %v492
        %v617 = vpack.c.b16 %v497, %v493
        %v618 = vpack.c.b16 %v498, %v494
        %v619 = vpack.c.b16 %v503, %v499
        %v620 = vpack.c.b16 %v504, %v500
        %v621 = vpack.c.b16 %v505, %v501
        %v622 = vpack.c.b16 %v506, %v502
        %v623 = vpack.c.b16 %v511, %v507
        %v624 = vpack.c.b16 %v512, %v508
        %v625 = vpack.c.b16 %v513, %v509
        %v626 = vpack.c.b16 %v514, %v510
        %v627 = vpack.c.b16 %v519, %v515
        %v628 = vpack.c.b16 %v520, %v516
        %v629 = vpack.c.b16 %v521, %v517
        %v630 = vpack.c.b16 %v522, %v518
        %v631 = vpack.c.b16 %v527, %v523
        %v632 = vpack.c.b16 %v528, %v524
        %v633 = vpack.c.b16 %v529, %v525
        %v634 = vpack.c.b16 %v530, %v526
        %v635 = vpack.c.b16 %v535, %v531
        %v636 = vpack.c.b16 %v536, %v532
        %v637 = vpack.c.b16 %v537, %v533
        %v638 = vpack.c.b16 %v538, %v534
        %v639 = vpack.c.b16 %v543, %v539
        %v640 = vpack.c.b16 %v544, %v540
        %v641 = vpack.c.b16 %v545, %v541
        %v642 = vpack.c.b16 %v546, %v542
        %v643 = vpack.c.b16 %v551, %v547
        %v644 = vpack.c.b16 %v552, %v548
        %v645 = vpack.c.b16 %v553, %v549
        %v646 = vpack.c.b16 %v554, %v550
        %v647 = vpack.c.b16 %v559, %v555
        %v648 = vpack.c.b16 %v560, %v556
        %v649 = vpack.c.b16 %v561, %v557
        %v650 = vpack.c.b16 %v562, %v558
        %v651 = vpack.c.b16 %v567, %v563
        %v652 = vpack.c.b16 %v568, %v564
        %v653 = vpack.c.b16 %v569, %v565
        %v654 = vpack.c.b16 %v570, %v566
        %v655 = vpack.c.b16 %v575, %v571
        %v656 = vpack.c.b16 %v576, %v572
        %v657 = vpack.c.b16 %v577, %v573
        %v658 = vpack.c.b16 %v578, %v574
        %v659 = vpack.c.b16 %v583, %v579
        %v660 = vpack.c.b16 %v584, %v580
        %v661 = vpack.c.b16 %v585, %v581
        %v662 = vpack.c.b16 %v586, %v582
        %v663 = vpack.c.b16 %v591, %v587
        %v664 = vpack.c.b16 %v592, %v588
        %v665 = vpack.c.b16 %v593, %v589
        %v666 = vpack.c.b16 %v594, %v590
        %v667 = vpack.c.b16 %v599, %v595
        %v668 = vpack.c.b16 %v600, %v596
        %v669 = vpack.c.b16 %v601, %v597
        %v670 = vpack.c.b16 %v602, %v598
        %v671 = vpack.c.b16 %v607, %v603
        %v672 = vpack.c.b16 %v608, %v604
        %v673 = vpack.c.b16 %v609, %v605
        %v674 = vpack.c.b16 %v610, %v606
        %739 = vmatpush.bf16.msra.mxu0 %v639
        %740 = vmatpush.bf16.msra.mxu0 %v635
        %741 = vmatpush.bf16.msra.mxu0 %v631
        %742 = vmatpush.bf16.msra.mxu0 %v627
        %743 = vmatpush.bf16.msra.mxu0 %v623
        %744 = vmatpush.bf16.msra.mxu0 %v619
        %745 = vmatpush.bf16.msra.mxu0 %v615
        %746 = vmatpush.bf16.msra.mxu0 %v611
        %747 = vmatmul.bf16.gmra.mxu0 %v415
        %v748 = vpop.f32.mrf.mxu0
        %v749 = vadd.f32 0.0, %v748
        %v750 = vpop.f32.mrf.mxu0
        %v751 = vadd.f32 0.0, %v750
        %752 = vmatmul.bf16.gmra.mxu0 %v417
        %v753 = vpop.f32.mrf.mxu0
        %v754 = vadd.f32 0.0, %v753
        %v755 = vpop.f32.mrf.mxu0
        %v756 = vadd.f32 0.0, %v755
        %757 = vdwg.mxu0
        %758 = vmatpush.bf16.msra.mxu0 %v671
        %759 = vmatpush.bf16.msra.mxu0 %v667
        %760 = vmatpush.bf16.msra.mxu0 %v663
        %761 = vmatpush.bf16.msra.mxu0 %v659
        %762 = vmatpush.bf16.msra.mxu0 %v655
        %763 = vmatpush.bf16.msra.mxu0 %v651
        %764 = vmatpush.bf16.msra.mxu0 %v647
        %765 = vmatpush.bf16.msra.mxu0 %v643
        %766 = vmatmul.bf16.gmra.mxu0 %v416
        %v767 = vpop.f32.mrf.mxu0
        %v768 = vadd.f32 %v749, %v767
        %v769 = vpop.f32.mrf.mxu0
        %v770 = vadd.f32 %v751, %v769
        %771 = vmatmul.bf16.gmra.mxu0 %v418
        %v772 = vpop.f32.mrf.mxu0
        %v773 = vadd.f32 %v754, %v772
        %v774 = vpop.f32.mrf.mxu0
        %v775 = vadd.f32 %v756, %v774
        %776 = vdwg.mxu0
        %777 = vmatpush.bf16.msra.mxu0 %v640
        %778 = vmatpush.bf16.msra.mxu0 %v636
        %779 = vmatpush.bf16.msra.mxu0 %v632
        %780 = vmatpush.bf16.msra.mxu0 %v628
        %781 = vmatpush.bf16.msra.mxu0 %v624
        %782 = vmatpush.bf16.msra.mxu0 %v620
        %783 = vmatpush.bf16.msra.mxu0 %v616
        %784 = vmatpush.bf16.msra.mxu0 %v612
        %785 = vmatmul.bf16.gmra.mxu0 %v415
        %v786 = vpop.f32.mrf.mxu0
        %v787 = vadd.f32 0.0, %v786
        %v788 = vpop.f32.mrf.mxu0
        %v789 = vadd.f32 0.0, %v788
        %790 = vmatmul.bf16.gmra.mxu0 %v417
        %v791 = vpop.f32.mrf.mxu0
        %v792 = vadd.f32 0.0, %v791
        %v793 = vpop.f32.mrf.mxu0
        %v794 = vadd.f32 0.0, %v793
        %795 = vdwg.mxu0
        %796 = vmatpush.bf16.msra.mxu0 %v672
        %797 = vmatpush.bf16.msra.mxu0 %v668
        %798 = vmatpush.bf16.msra.mxu0 %v664
        %799 = vmatpush.bf16.msra.mxu0 %v660
        %800 = vmatpush.bf16.msra.mxu0 %v656
        %801 = vmatpush.bf16.msra.mxu0 %v652
        %802 = vmatpush.bf16.msra.mxu0 %v648
        %803 = vmatpush.bf16.msra.mxu0 %v644
        %804 = vmatmul.bf16.gmra.mxu0 %v416
        %v805 = vpop.f32.mrf.mxu0
        %v806 = vadd.f32 %v787, %v805
        %v807 = vpop.f32.mrf.mxu0
        %v808 = vadd.f32 %v789, %v807
        %809 = vmatmul.bf16.gmra.mxu0 %v418
        %v810 = vpop.f32.mrf.mxu0
        %v811 = vadd.f32 %v792, %v810
        %v812 = vpop.f32.mrf.mxu0
        %v813 = vadd.f32 %v794, %v812
        %814 = vdwg.mxu0
        %815 = vmatpush.bf16.msra.mxu0 %v641
        %816 = vmatpush.bf16.msra.mxu0 %v637
        %817 = vmatpush.bf16.msra.mxu0 %v633
        %818 = vmatpush.bf16.msra.mxu0 %v629
        %819 = vmatpush.bf16.msra.mxu0 %v625
        %820 = vmatpush.bf16.msra.mxu0 %v621
        %821 = vmatpush.bf16.msra.mxu0 %v617
        %822 = vmatpush.bf16.msra.mxu0 %v613
        %823 = vmatmul.bf16.gmra.mxu0 %v415
        %v824 = vpop.f32.mrf.mxu0
        %v825 = vadd.f32 0.0, %v824
        %v826 = vpop.f32.mrf.mxu0
        %v827 = vadd.f32 0.0, %v826
        %828 = vmatmul.bf16.gmra.mxu0 %v417
        %v829 = vpop.f32.mrf.mxu0
        %v830 = vadd.f32 0.0, %v829
        %v831 = vpop.f32.mrf.mxu0
        %v832 = vadd.f32 0.0, %v831
        %833 = vdwg.mxu0
        %834 = vmatpush.bf16.msra.mxu0 %v673
        %835 = vmatpush.bf16.msra.mxu0 %v669
        %836 = vmatpush.bf16.msra.mxu0 %v665
        %837 = vmatpush.bf16.msra.mxu0 %v661
        %838 = vmatpush.bf16.msra.mxu0 %v657
        %839 = vmatpush.bf16.msra.mxu0 %v653
        %840 = vmatpush.bf16.msra.mxu0 %v649
        %841 = vmatpush.bf16.msra.mxu0 %v645
        %842 = vmatmul.bf16.gmra.mxu0 %v416
        %v843 = vpop.f32.mrf.mxu0
        %v844 = vadd.f32 %v825, %v843
        %v845 = vpop.f32.mrf.mxu0
        %v846 = vadd.f32 %v827, %v845
        %847 = vmatmul.bf16.gmra.mxu0 %v418
        %v848 = vpop.f32.mrf.mxu0
        %v849 = vadd.f32 %v830, %v848
        %v850 = vpop.f32.mrf.mxu0
        %v851 = vadd.f32 %v832, %v850
        %852 = vdwg.mxu0
        %853 = vmatpush.bf16.msra.mxu0 %v642
        %854 = vmatpush.bf16.msra.mxu0 %v638
        %855 = vmatpush.bf16.msra.mxu0 %v634
        %856 = vmatpush.bf16.msra.mxu0 %v630
        %857 = vmatpush.bf16.msra.mxu0 %v626
        %858 = vmatpush.bf16.msra.mxu0 %v622
        %859 = vmatpush.bf16.msra.mxu0 %v618
        %860 = vmatpush.bf16.msra.mxu0 %v614
        %861 = vmatmul.bf16.gmra.mxu0 %v415
        %v862 = vpop.f32.mrf.mxu0
        %v863 = vadd.f32 0.0, %v862
        %v864 = vpop.f32.mrf.mxu0
        %v865 = vadd.f32 0.0, %v864
        %866 = vmatmul.bf16.gmra.mxu0 %v417
        %v867 = vpop.f32.mrf.mxu0
        %v868 = vadd.f32 0.0, %v867
        %v869 = vpop.f32.mrf.mxu0
        %v870 = vadd.f32 0.0, %v869
        %871 = vdwg.mxu0
        %872 = vmatpush.bf16.msra.mxu0 %v674
        %873 = vmatpush.bf16.msra.mxu0 %v670
        %874 = vmatpush.bf16.msra.mxu0 %v666
        %875 = vmatpush.bf16.msra.mxu0 %v662
        %876 = vmatpush.bf16.msra.mxu0 %v658
        %877 = vmatpush.bf16.msra.mxu0 %v654
        %878 = vmatpush.bf16.msra.mxu0 %v650
        %879 = vmatpush.bf16.msra.mxu0 %v646
        %880 = vmatmul.bf16.gmra.mxu0 %v416
        %v881 = vpop.f32.mrf.mxu0
        %v882 = vadd.f32 %v863, %v881
        %v883 = vpop.f32.mrf.mxu0
        %v884 = vadd.f32 %v865, %v883
        %885 = vmatmul.bf16.gmra.mxu0 %v418
        %v886 = vpop.f32.mrf.mxu0
        %v887 = vadd.f32 %v868, %v886
        %v888 = vpop.f32.mrf.mxu0
        %v889 = vadd.f32 %v870, %v888
        %890 = vdwg.mxu0
        %v959 = vunpack.c.l.b16 %v233
        %v960 = vunpack.c.h.b16 %v233
        %v961 = vunpack.c.l.b16 %v234
        %v962 = vunpack.c.h.b16 %v234
        %v963 = vunpack.c.l.b16 %v235
        %v964 = vunpack.c.h.b16 %v235
        %v965 = vunpack.c.l.b16 %v236
        %v966 = vunpack.c.h.b16 %v236
        %v967 = vunpack.c.l.b16 %v237
        %v968 = vunpack.c.h.b16 %v237
        %v969 = vunpack.c.l.b16 %v238
        %v970 = vunpack.c.h.b16 %v238
        %v971 = vunpack.c.l.b16 %v239
        %v972 = vunpack.c.h.b16 %v239
        %v973 = vunpack.c.l.b16 %v240
        %v974 = vunpack.c.h.b16 %v240
        %v975 = vunpack.c.l.b16 %v241
        %v976 = vunpack.c.h.b16 %v241
        %v977 = vunpack.c.l.b16 %v242
        %v978 = vunpack.c.h.b16 %v242
        %v979 = vunpack.c.l.b16 %v243
        %v980 = vunpack.c.h.b16 %v243
        %v981 = vunpack.c.l.b16 %v244
        %v982 = vunpack.c.h.b16 %v244
        %v983 = vunpack.c.l.b16 %v245
        %v984 = vunpack.c.h.b16 %v245
        %v985 = vunpack.c.l.b16 %v246
        %v986 = vunpack.c.h.b16 %v246
        %v987 = vunpack.c.l.b16 %v247
        %v988 = vunpack.c.h.b16 %v247
        %v989 = vunpack.c.l.b16 %v248
        %v990 = vunpack.c.h.b16 %v248
        %v991 = vunpack.c.l.b16 %v249
        %v992 = vunpack.c.h.b16 %v249
        %v993 = vunpack.c.l.b16 %v250
        %v994 = vunpack.c.h.b16 %v250
        %v995 = vunpack.c.l.b16 %v251
        %v996 = vunpack.c.h.b16 %v251
        %v997 = vunpack.c.l.b16 %v252
        %v998 = vunpack.c.h.b16 %v252
        %v999 = vunpack.c.l.b16 %v253
        %v1000 = vunpack.c.h.b16 %v253
        %v1001 = vunpack.c.l.b16 %v254
        %v1002 = vunpack.c.h.b16 %v254
        %v1003 = vunpack.c.l.b16 %v255
        %v1004 = vunpack.c.h.b16 %v255
        %v1005 = vunpack.c.l.b16 %v256
        %v1006 = vunpack.c.h.b16 %v256
        %v1007 = vunpack.c.l.b16 %v257
        %v1008 = vunpack.c.h.b16 %v257
        %v1009 = vunpack.c.l.b16 %v258
        %v1010 = vunpack.c.h.b16 %v258
        %v1011 = vunpack.c.l.b16 %v259
        %v1012 = vunpack.c.h.b16 %v259
        %v1013 = vunpack.c.l.b16 %v260
        %v1014 = vunpack.c.h.b16 %v260
        %v1015 = vunpack.c.l.b16 %v261
        %v1016 = vunpack.c.h.b16 %v261
        %v1017 = vunpack.c.l.b16 %v262
        %v1018 = vunpack.c.h.b16 %v262
        %v1019 = vunpack.c.l.b16 %v263
        %v1020 = vunpack.c.h.b16 %v263
        %v1021 = vunpack.c.l.b16 %v264
        %v1022 = vunpack.c.h.b16 %v264
        %v1023 = vunpack.c.l.b16 %v265
        %v1024 = vunpack.c.h.b16 %v265
        %v1025 = vunpack.c.l.b16 %v266
        %v1026 = vunpack.c.h.b16 %v266
        %v1027 = vunpack.c.l.b16 %v267
        %v1028 = vunpack.c.h.b16 %v267
        %v1029 = vunpack.c.l.b16 %v268
        %v1030 = vunpack.c.h.b16 %v268
        %v1031 = vunpack.c.l.b16 %v269
        %v1032 = vunpack.c.h.b16 %v269
        %v1033 = vunpack.c.l.b16 %v270
        %v1034 = vunpack.c.h.b16 %v270
        %v1035 = vunpack.c.l.b16 %v271
        %v1036 = vunpack.c.h.b16 %v271
        %v1037 = vunpack.c.l.b16 %v272
        %v1038 = vunpack.c.h.b16 %v272
        %v1039 = vunpack.c.l.b16 %v273
        %v1040 = vunpack.c.h.b16 %v273
        %v1041 = vunpack.c.l.b16 %v274
        %v1042 = vunpack.c.h.b16 %v274
        %v1043 = vunpack.c.l.b16 %v275
        %v1044 = vunpack.c.h.b16 %v275
        %v1045 = vunpack.c.l.b16 %v276
        %v1046 = vunpack.c.h.b16 %v276
        %v1047 = vunpack.c.l.b16 %v277
        %v1048 = vunpack.c.h.b16 %v277
        %v1049 = vunpack.c.l.b16 %v278
        %v1050 = vunpack.c.h.b16 %v278
        %v1051 = vunpack.c.l.b16 %v279
        %v1052 = vunpack.c.h.b16 %v279
        %v1053 = vunpack.c.l.b16 %v280
        %v1054 = vunpack.c.h.b16 %v280
        %v1055 = vunpack.c.l.b16 %v281
        %v1056 = vunpack.c.h.b16 %v281
        %v1057 = vunpack.c.l.b16 %v282
        %v1058 = vunpack.c.h.b16 %v282
        %v1059 = vunpack.c.l.b16 %v283
        %v1060 = vunpack.c.h.b16 %v283
        %v1061 = vunpack.c.l.b16 %v284
        %v1062 = vunpack.c.h.b16 %v284
        %v1063 = vunpack.c.l.b16 %v285
        %v1064 = vunpack.c.h.b16 %v285
        %v1065 = vunpack.c.l.b16 %v286
        %v1066 = vunpack.c.h.b16 %v286
        %v1067 = vunpack.c.l.b16 %v287
        %v1068 = vunpack.c.h.b16 %v287
        %v1069 = vunpack.c.l.b16 %v288
        %v1070 = vunpack.c.h.b16 %v288
        %v1071 = vunpack.c.l.b16 %v289
        %v1072 = vunpack.c.h.b16 %v289
        %v1073 = vunpack.c.l.b16 %v290
        %v1074 = vunpack.c.h.b16 %v290
        %v1075 = vunpack.c.l.b16 %v291
        %v1076 = vunpack.c.h.b16 %v291
        %v1077 = vunpack.c.l.b16 %v292
        %v1078 = vunpack.c.h.b16 %v292
        %v1079 = vunpack.c.l.b16 %v293
        %v1080 = vunpack.c.h.b16 %v293
        %v1081 = vunpack.c.l.b16 %v294
        %v1082 = vunpack.c.h.b16 %v294
        %v1083 = vunpack.c.l.b16 %v295
        %v1084 = vunpack.c.h.b16 %v295
        %v1085 = vunpack.c.l.b16 %v296
        %v1086 = vunpack.c.h.b16 %v296
        %v1087 = vpack.c.b16 %v963, %v959
        %v1088 = vpack.c.b16 %v964, %v960
        %v1089 = vpack.c.b16 %v965, %v961
        %v1090 = vpack.c.b16 %v966, %v962
        %v1091 = vpack.c.b16 %v971, %v967
        %v1092 = vpack.c.b16 %v972, %v968
        %v1093 = vpack.c.b16 %v973, %v969
        %v1094 = vpack.c.b16 %v974, %v970
        %v1095 = vpack.c.b16 %v979, %v975
        %v1096 = vpack.c.b16 %v980, %v976
        %v1097 = vpack.c.b16 %v981, %v977
        %v1098 = vpack.c.b16 %v982, %v978
        %v1099 = vpack.c.b16 %v987, %v983
        %v1100 = vpack.c.b16 %v988, %v984
        %v1101 = vpack.c.b16 %v989, %v985
        %v1102 = vpack.c.b16 %v990, %v986
        %v1103 = vpack.c.b16 %v995, %v991
        %v1104 = vpack.c.b16 %v996, %v992
        %v1105 = vpack.c.b16 %v997, %v993
        %v1106 = vpack.c.b16 %v998, %v994
        %v1107 = vpack.c.b16 %v1003, %v999
        %v1108 = vpack.c.b16 %v1004, %v1000
        %v1109 = vpack.c.b16 %v1005, %v1001
        %v1110 = vpack.c.b16 %v1006, %v1002
        %v1111 = vpack.c.b16 %v1011, %v1007
        %v1112 = vpack.c.b16 %v1012, %v1008
        %v1113 = vpack.c.b16 %v1013, %v1009
        %v1114 = vpack.c.b16 %v1014, %v1010
        %v1115 = vpack.c.b16 %v1019, %v1015
        %v1116 = vpack.c.b16 %v1020, %v1016
        %v1117 = vpack.c.b16 %v1021, %v1017
        %v1118 = vpack.c.b16 %v1022, %v1018
        %v1119 = vpack.c.b16 %v1027, %v1023
        %v1120 = vpack.c.b16 %v1028, %v1024
        %v1121 = vpack.c.b16 %v1029, %v1025
        %v1122 = vpack.c.b16 %v1030, %v1026
        %v1123 = vpack.c.b16 %v1035, %v1031
        %v1124 = vpack.c.b16 %v1036, %v1032
        %v1125 = vpack.c.b16 %v1037, %v1033
        %v1126 = vpack.c.b16 %v1038, %v1034
        %v1127 = vpack.c.b16 %v1043, %v1039
        %v1128 = vpack.c.b16 %v1044, %v1040
        %v1129 = vpack.c.b16 %v1045, %v1041
        %v1130 = vpack.c.b16 %v1046, %v1042
        %v1131 = vpack.c.b16 %v1051, %v1047
        %v1132 = vpack.c.b16 %v1052, %v1048
        %v1133 = vpack.c.b16 %v1053, %v1049
        %v1134 = vpack.c.b16 %v1054, %v1050
        %v1135 = vpack.c.b16 %v1059, %v1055
        %v1136 = vpack.c.b16 %v1060, %v1056
        %v1137 = vpack.c.b16 %v1061, %v1057
        %v1138 = vpack.c.b16 %v1062, %v1058
        %v1139 = vpack.c.b16 %v1067, %v1063
        %v1140 = vpack.c.b16 %v1068, %v1064
        %v1141 = vpack.c.b16 %v1069, %v1065
        %v1142 = vpack.c.b16 %v1070, %v1066
        %v1143 = vpack.c.b16 %v1075, %v1071
        %v1144 = vpack.c.b16 %v1076, %v1072
        %v1145 = vpack.c.b16 %v1077, %v1073
        %v1146 = vpack.c.b16 %v1078, %v1074
        %v1147 = vpack.c.b16 %v1083, %v1079
        %v1148 = vpack.c.b16 %v1084, %v1080
        %v1149 = vpack.c.b16 %v1085, %v1081
        %v1150 = vpack.c.b16 %v1086, %v1082
        %1215 = vmatpush.bf16.msra.mxu0 %v1115
        %1216 = vmatpush.bf16.msra.mxu0 %v1111
        %1217 = vmatpush.bf16.msra.mxu0 %v1107
        %1218 = vmatpush.bf16.msra.mxu0 %v1103
        %1219 = vmatpush.bf16.msra.mxu0 %v1099
        %1220 = vmatpush.bf16.msra.mxu0 %v1095
        %1221 = vmatpush.bf16.msra.mxu0 %v1091
        %1222 = vmatpush.bf16.msra.mxu0 %v1087
        %1223 = vmatmul.bf16.gmra.mxu0 %v375
        %v1224 = vpop.f32.mrf.mxu0
        %v1225 = vadd.f32 %v768, %v1224
        %v1226 = vpop.f32.mrf.mxu0
        %v1227 = vadd.f32 %v770, %v1226
        %1228 = vmatmul.bf16.gmra.mxu0 %v377
        %v1229 = vpop.f32.mrf.mxu0
        %v1230 = vadd.f32 %v773, %v1229
        %v1231 = vpop.f32.mrf.mxu0
        %v1232 = vadd.f32 %v775, %v1231
        %1233 = vdwg.mxu0
        %1234 = vmatpush.bf16.msra.mxu0 %v1147
        %1235 = vmatpush.bf16.msra.mxu0 %v1143
        %1236 = vmatpush.bf16.msra.mxu0 %v1139
        %1237 = vmatpush.bf16.msra.mxu0 %v1135
        %1238 = vmatpush.bf16.msra.mxu0 %v1131
        %1239 = vmatpush.bf16.msra.mxu0 %v1127
        %1240 = vmatpush.bf16.msra.mxu0 %v1123
        %1241 = vmatpush.bf16.msra.mxu0 %v1119
        %1242 = vmatmul.bf16.gmra.mxu0 %v376
        %v1243 = vpop.f32.mrf.mxu0
        %v1244 = vadd.f32 %v1225, %v1243
        %v1245 = vpop.f32.mrf.mxu0
        %v1246 = vadd.f32 %v1227, %v1245
        %1247 = vmatmul.bf16.gmra.mxu0 %v378
        %v1248 = vpop.f32.mrf.mxu0
        %v1249 = vadd.f32 %v1230, %v1248
        %v1250 = vpop.f32.mrf.mxu0
        %v1251 = vadd.f32 %v1232, %v1250
        %1252 = vdwg.mxu0
        %1253 = vmatpush.bf16.msra.mxu0 %v1116
        %1254 = vmatpush.bf16.msra.mxu0 %v1112
        %1255 = vmatpush.bf16.msra.mxu0 %v1108
        %1256 = vmatpush.bf16.msra.mxu0 %v1104
        %1257 = vmatpush.bf16.msra.mxu0 %v1100
        %1258 = vmatpush.bf16.msra.mxu0 %v1096
        %1259 = vmatpush.bf16.msra.mxu0 %v1092
        %1260 = vmatpush.bf16.msra.mxu0 %v1088
        %1261 = vmatmul.bf16.gmra.mxu0 %v375
        %v1262 = vpop.f32.mrf.mxu0
        %v1263 = vadd.f32 %v806, %v1262
        %v1264 = vpop.f32.mrf.mxu0
        %v1265 = vadd.f32 %v808, %v1264
        %1266 = vmatmul.bf16.gmra.mxu0 %v377
        %v1267 = vpop.f32.mrf.mxu0
        %v1268 = vadd.f32 %v811, %v1267
        %v1269 = vpop.f32.mrf.mxu0
        %v1270 = vadd.f32 %v813, %v1269
        %1271 = vdwg.mxu0
        %1272 = vmatpush.bf16.msra.mxu0 %v1148
        %1273 = vmatpush.bf16.msra.mxu0 %v1144
        %1274 = vmatpush.bf16.msra.mxu0 %v1140
        %1275 = vmatpush.bf16.msra.mxu0 %v1136
        %1276 = vmatpush.bf16.msra.mxu0 %v1132
        %1277 = vmatpush.bf16.msra.mxu0 %v1128
        %1278 = vmatpush.bf16.msra.mxu0 %v1124
        %1279 = vmatpush.bf16.msra.mxu0 %v1120
        %1280 = vmatmul.bf16.gmra.mxu0 %v376
        %v1281 = vpop.f32.mrf.mxu0
        %v1282 = vadd.f32 %v1263, %v1281
        %v1283 = vpop.f32.mrf.mxu0
        %v1284 = vadd.f32 %v1265, %v1283
        %1285 = vmatmul.bf16.gmra.mxu0 %v378
        %v1286 = vpop.f32.mrf.mxu0
        %v1287 = vadd.f32 %v1268, %v1286
        %v1288 = vpop.f32.mrf.mxu0
        %v1289 = vadd.f32 %v1270, %v1288
        %1290 = vdwg.mxu0
        %1291 = vmatpush.bf16.msra.mxu0 %v1117
        %1292 = vmatpush.bf16.msra.mxu0 %v1113
        %1293 = vmatpush.bf16.msra.mxu0 %v1109
        %1294 = vmatpush.bf16.msra.mxu0 %v1105
        %1295 = vmatpush.bf16.msra.mxu0 %v1101
        %1296 = vmatpush.bf16.msra.mxu0 %v1097
        %1297 = vmatpush.bf16.msra.mxu0 %v1093
        %1298 = vmatpush.bf16.msra.mxu0 %v1089
        %1299 = vmatmul.bf16.gmra.mxu0 %v375
        %v1300 = vpop.f32.mrf.mxu0
        %v1301 = vadd.f32 %v844, %v1300
        %v1302 = vpop.f32.mrf.mxu0
        %v1303 = vadd.f32 %v846, %v1302
        %1304 = vmatmul.bf16.gmra.mxu0 %v377
        %v1305 = vpop.f32.mrf.mxu0
        %v1306 = vadd.f32 %v849, %v1305
        %v1307 = vpop.f32.mrf.mxu0
        %v1308 = vadd.f32 %v851, %v1307
        %1309 = vdwg.mxu0
        %1310 = vmatpush.bf16.msra.mxu0 %v1149
        %1311 = vmatpush.bf16.msra.mxu0 %v1145
        %1312 = vmatpush.bf16.msra.mxu0 %v1141
        %1313 = vmatpush.bf16.msra.mxu0 %v1137
        %1314 = vmatpush.bf16.msra.mxu0 %v1133
        %1315 = vmatpush.bf16.msra.mxu0 %v1129
        %1316 = vmatpush.bf16.msra.mxu0 %v1125
        %1317 = vmatpush.bf16.msra.mxu0 %v1121
        %1318 = vmatmul.bf16.gmra.mxu0 %v376
        %v1319 = vpop.f32.mrf.mxu0
        %v1320 = vadd.f32 %v1301, %v1319
        %v1321 = vpop.f32.mrf.mxu0
        %v1322 = vadd.f32 %v1303, %v1321
        %1323 = vmatmul.bf16.gmra.mxu0 %v378
        %v1324 = vpop.f32.mrf.mxu0
        %v1325 = vadd.f32 %v1306, %v1324
        %v1326 = vpop.f32.mrf.mxu0
        %v1327 = vadd.f32 %v1308, %v1326
        %1328 = vdwg.mxu0
        %1329 = vmatpush.bf16.msra.mxu0 %v1118
        %1330 = vmatpush.bf16.msra.mxu0 %v1114
        %1331 = vmatpush.bf16.msra.mxu0 %v1110
        %1332 = vmatpush.bf16.msra.mxu0 %v1106
        %1333 = vmatpush.bf16.msra.mxu0 %v1102
        %1334 = vmatpush.bf16.msra.mxu0 %v1098
        %1335 = vmatpush.bf16.msra.mxu0 %v1094
        %1336 = vmatpush.bf16.msra.mxu0 %v1090
        %1337 = vmatmul.bf16.gmra.mxu0 %v375
        %v1338 = vpop.f32.mrf.mxu0
        %v1339 = vadd.f32 %v882, %v1338
        %v1340 = vpop.f32.mrf.mxu0
        %v1341 = vadd.f32 %v884, %v1340
        %1342 = vmatmul.bf16.gmra.mxu0 %v377
        %v1343 = vpop.f32.mrf.mxu0
        %v1344 = vadd.f32 %v887, %v1343
        %v1345 = vpop.f32.mrf.mxu0
        %v1346 = vadd.f32 %v889, %v1345
        %1347 = vdwg.mxu0
        %1348 = vmatpush.bf16.msra.mxu0 %v1150
        %1349 = vmatpush.bf16.msra.mxu0 %v1146
        %1350 = vmatpush.bf16.msra.mxu0 %v1142
        %1351 = vmatpush.bf16.msra.mxu0 %v1138
        %1352 = vmatpush.bf16.msra.mxu0 %v1134
        %1353 = vmatpush.bf16.msra.mxu0 %v1130
        %1354 = vmatpush.bf16.msra.mxu0 %v1126
        %1355 = vmatpush.bf16.msra.mxu0 %v1122
        %1356 = vmatmul.bf16.gmra.mxu0 %v376
        %v1357 = vpop.f32.mrf.mxu0
        %v1358 = vadd.f32 %v1339, %v1357
        %v1359 = vpop.f32.mrf.mxu0
        %v1360 = vadd.f32 %v1341, %v1359
        %1361 = vmatmul.bf16.gmra.mxu0 %v378
        %v1362 = vpop.f32.mrf.mxu0
        %v1363 = vadd.f32 %v1344, %v1362
        %v1364 = vpop.f32.mrf.mxu0
        %v1365 = vadd.f32 %v1346, %v1364
        %1366 = vdwg.mxu0
        %v1367 = vld [vmem:[#allocation4] sm:$0xf]
        %v1369 = vperm.slane %v1367, 0
        %v1370 = vperm.slane %v1367, 1
        %v1371 = vperm.slane %v1367, 2
        %v1372 = vperm.slane %v1367, 3
        %v1377 = vadd.f32 %v1244, %v1369
        %v1378 = vadd.f32 %v1282, %v1370
        %v1379 = vadd.f32 %v1320, %v1371
        %v1380 = vadd.f32 %v1358, %v1372
        %v1381 = vadd.f32 %v1246, %v1369
        %v1382 = vadd.f32 %v1284, %v1370
        %v1383 = vadd.f32 %v1322, %v1371
        %v1384 = vadd.f32 %v1360, %v1372
        %v1385 = vadd.f32 %v1249, %v1369
        %v1386 = vadd.f32 %v1287, %v1370
        %v1387 = vadd.f32 %v1325, %v1371
        %v1388 = vadd.f32 %v1363, %v1372
        %v1389 = vadd.f32 %v1251, %v1369
        %v1390 = vadd.f32 %v1289, %v1370
        %v1391 = vadd.f32 %v1327, %v1371
        %v1392 = vadd.f32 %v1365, %v1372
        %v1393 = vpack.c.bf16 %v1378, %v1377
        %v1394 = vpack.c.bf16 %v1380, %v1379
        %v1395 = vpack.c.bf16 %v1382, %v1381
        %v1396 = vpack.c.bf16 %v1384, %v1383
        %v1397 = vpack.c.bf16 %v1386, %v1385
        %v1398 = vpack.c.bf16 %v1388, %v1387
        %v1399 = vpack.c.bf16 %v1390, %v1389
        %v1400 = vpack.c.bf16 %v1392, %v1391
        %1401 = vst [vmem:[%s207] sm:$0xff] %v1393
        %1402 = vst [vmem:[%s207 + $0x8] sm:$0xff] %v1394
        %1403 = vst [vmem:[%s207 + $0x10] sm:$0xff] %v1395
        %1404 = vst [vmem:[%s207 + $0x18] sm:$0xff] %v1396
        %1405 = vst [vmem:[%s207 + $0x20] sm:$0xff] %v1397
        %1406 = vst [vmem:[%s207 + $0x28] sm:$0xff] %v1398
        %1407 = vst [vmem:[%s207 + $0x30] sm:$0xff] %v1399
        %1408 = vst [vmem:[%s207 + $0x38] sm:$0xff] %v1400
        %p1409 = scmp.lt.s32.totalorder %s18, 1
        %s1410 = scalar_select %p1409, %s18, 1
        %s1411 = smul.addr %s1410, 16
        %s1412 = smul.addr %s1411, 4
        %s1413 = scalar_lea.vmem %s3, %s1412
        // Predicated region
        $region41: #{resnet_decoder_forward.4} parent=31 // pred_check
          %p1414 = pneg %p104
        $region42: #{resnet_decoder_forward.4} parent=31 // pred_check_branch
          %1416 = sbr.rel (%p1414) target = $region44
        $region43: #{resnet_decoder_forward.4} parent=31 // pred_region
          _
        $region44: #{resnet_decoder_forward.4} parent=31 // pred_fallthru
          _
      $region32: #{resnet_decoder_forward.4} parent=5 // pred_fallthru
        _
      %p1417 = scmp.le.s32.totalorder 2, %s13
      // Predicated region
      $region45: #{resnet_decoder_forward.4} parent=5 // pred_check
        %p1418 = pneg %p1417
      $region46: #{resnet_decoder_forward.4} parent=5 // pred_check_branch
        %1420 = sbr.rel (%p1418) target = $region48
      $region47: #{resnet_decoder_forward.4} parent=5 // pred_region
        %s1421 = ssub.s32 %s13, 2
        // Predicated region
        $region49: #{resnet_decoder_forward.4} parent=47 // pred_check
          %p1422 = pneg %p110
        $region50: #{resnet_decoder_forward.4} parent=47 // pred_check_branch
          %1424 = sbr.rel (%p1422) target = $region52
        $region51: #{resnet_decoder_forward.4} parent=47 // pred_region
          %p1425 = scmp.lt.s32.totalorder %s19, 1
          %s1426 = scalar_select %p1425, %s19, 1
          %s1427 = smul.addr %s1426, 16
          %s1428 = smul.addr %s1427, 4
          %s1429 = scalar_lea.vmem %s3, %s1428
        $region52: #{resnet_decoder_forward.4} parent=47 // pred_fallthru
          _
      $region48: #{resnet_decoder_forward.4} parent=5 // pred_fallthru
        _
    $region6: #{resnet_decoder_forward.4} parent=1 // loop_footer
      %s17 = sadd.s32 1, %s13
    $region7: #{resnet_decoder_forward.4} parent=1 // loop_footer_branch
      %12 = sbr.rel target = $region3
    $region8: #{resnet_decoder_forward.4} parent=1 // loop_exit
      _
    %1430 = vsyncpa [#allocation3], 1
    %s1431 = scalar_lea.sflag [#allocation3], 1
    %1432 = vsyncpa %s1431, 1
    %1433 = vsyncpa [#allocation5], 1

// kernel: resnet_decoder_forward.3
$region0: #{resnet_decoder_forward.3}
  #allocation0 [shape = 'u32[]', space=smem, size = 0x4, offset = 0x4, fixed_abs, tag = 'smem constant byte address 0x4 - core index']
  #allocation1 [shape = 'u32[72,128]{1,0:T(1,128)}', space=vmem, size = 0x9000, scoped, tag = 'internal scratch']
  %s0 = inlined_call_operand.hbm [shape: f32[2,32], index: 0, kind: input, shape index: {}]
  %s1 = inlined_call_operand.hbm [shape: bf16[32,1024], index: 1, kind: input, shape index: {}]
  %s2 = inlined_call_operand.hbm [shape: f32[1,1024], index: 2, kind: input, shape index: {}]
  %s3 = inlined_call_operand.hbm [shape: f32[1,1024], index: 3, kind: input, shape index: {}]
  %s4 = inlined_call_operand.hbm [shape: bf16[3,128,128], index: 4, kind: input, shape index: {}]
  %s5 = inlined_call_operand.hbm [shape: f32[1,128], index: 5, kind: input, shape index: {}]
  %s6 = inlined_call_operand.hbm [shape: bf16[128,128], index: 6, kind: input, shape index: {}]
  %s7 = inlined_call_operand.hbm [shape: f32[1,128], index: 7, kind: input, shape index: {}]
  %s8 = inlined_call_operand.hbm [shape: bf16[3,128,128], index: 8, kind: input, shape index: {}]
  %s9 = inlined_call_operand.hbm [shape: f32[1,128], index: 9, kind: input, shape index: {}]
  %s10 = inlined_call_operand.hbm [shape: bf16[128,128], index: 10, kind: input, shape index: {}]
  %s11 = inlined_call_operand.hbm [shape: f32[1,128], index: 11, kind: input, shape index: {}]
  %s12 = inlined_call_operand.hbm [shape: bf16[2,2,128,256], index: 12, kind: input, shape index: {}]
  %s13 = inlined_call_operand.hbm [shape: f32[1,256], index: 13, kind: input, shape index: {}]
  %s14 = inlined_call_operand.vmem [shape: bf16[2,16,256], index: 14, kind: output, shape index: {}]
  %s15 = sld [smem:[#allocation0]]
  $region145: #{resnet_decoder_forward.3} parent=0
    _
  %s17 = ssub.s32 1, %s15
  %s18 = scalar_select 0, %s17, %s15
  $region1: #{resnet_decoder_forward.3} parent=0
    #allocation2 [shape = 'u8[1024]{0}', space=vmem, size = 0x400, scoped, tag = 'input window, operand 0, single buffered']
    #allocation3 [shape = 's32[2]{0}', space=sflag, size = 0x8, scoped, tag = 'scoped memory for resnet_decoder_forward.3']
    #allocation4 [shape = 'u8[65536]{0}', space=vmem, size = 0x10000, scoped, tag = 'input window, operand 1, single buffered']
    #allocation5 [shape = 's32[1]{0}', space=sflag, size = 0x4, scoped, tag = 'scoped memory for resnet_decoder_forward.3']
    #allocation6 [shape = 'u8[4096]{0}', space=vmem, size = 0x1000, scoped, tag = 'input window, operand 2, single buffered']
    #allocation7 [shape = 'u8[4096]{0}', space=vmem, size = 0x1000, scoped, tag = 'input window, operand 3, single buffered']
    #allocation8 [shape = 's32[1]{0}', space=sflag, size = 0x4, scoped, tag = 'scoped memory for resnet_decoder_forward.3']
    #allocation9 [shape = 'u8[98304]{0}', space=vmem, size = 0x18000, scoped, tag = 'input window, operand 4, single buffered']
    #allocation10 [shape = 'u8[512]{0}', space=vmem, size = 0x400, scoped, tag = 'input window, operand 5, single buffered']
    #allocation11 [shape = 's32[1]{0}', space=sflag, size = 0x4, scoped, tag = 'scoped memory for resnet_decoder_forward.3']
    #allocation12 [shape = 'u8[32768]{0}', space=vmem, size = 0x8000, scoped, tag = 'input window, operand 6, single buffered']
    #allocation13 [shape = 'u8[512]{0}', space=vmem, size = 0x400, scoped, tag = 'input window, operand 7, single buffered']
    #allocation14 [shape = 's32[1]{0}', space=sflag, size = 0x4, scoped, tag = 'scoped memory for resnet_decoder_forward.3']
    #allocation15 [shape = 'u8[98304]{0}', space=vmem, size = 0x18000, scoped, tag = 'input window, operand 8, single buffered']
    #allocation16 [shape = 'u8[512]{0}', space=vmem, size = 0x400, scoped, tag = 'input window, operand 9, single buffered']
    #allocation17 [shape = 's32[1]{0}', space=sflag, size = 0x4, scoped, tag = 'scoped memory for resnet_decoder_forward.3']
    #allocation18 [shape = 'u8[32768]{0}', space=vmem, size = 0x8000, scoped, tag = 'input window, operand 10, single buffered']
    #allocation19 [shape = 'u8[512]{0}', space=vmem, size = 0x400, scoped, tag = 'input window, operand 11, single buffered']
    #allocation20 [shape = 's32[1]{0}', space=sflag, size = 0x4, scoped, tag = 'scoped memory for resnet_decoder_forward.3']
    #allocation21 [shape = 'u8[262144]{0}', space=vmem, size = 0x40000, scoped, tag = 'input window, operand 12']
    #allocation22 [shape = 'u8[1024]{0}', space=vmem, size = 0x400, scoped, tag = 'input window, operand 13, single buffered']
    %19 = vsyncpa [#allocation3], 0
    %20 = vsyncpa [#allocation5], 0
    %21 = vsyncpa [#allocation8], 0
    %22 = vsyncpa [#allocation11], 0
    %23 = vsyncpa [#allocation14], 0
    %24 = vsyncpa [#allocation17], 0
    %25 = vsyncpa [#allocation20], 0
    loop: start=0, step=1, limit=4
    $region2: #{resnet_decoder_forward.3} parent=1 // loop_pre_header
      _
    $region3: #{resnet_decoder_forward.3} parent=1 // loop_header
      %s27 = sphi 0, %s31
      %p28 = scmp.ge.s32.totalorder %s27, 4
      %s35 = sphi 0, %s35
      %s37 = sphi 0, %s35
      %s38 = sphi 0, %s37
      %s52 = sphi 0, %s38
      %s56 = sphi 0, %s56
      %s58 = sphi 0, %s56
      %s59 = sphi 0, %s58
      %s73 = sphi 0, %s59
      %s77 = sphi 0, %s77
      %s79 = sphi 0, %s77
      %s80 = sphi 0, %s79
      %s94 = sphi 0, %s80
      %s98 = sphi 0, %s98
      %s100 = sphi 0, %s98
      %s101 = sphi 0, %s100
      %s115 = sphi 0, %s101
      %s119 = sphi 0, %s119
      %s121 = sphi 0, %s119
      %s122 = sphi 0, %s121
      %s136 = sphi 0, %s122
      %s140 = sphi 0, %s140
      %s142 = sphi 0, %s140
      %s143 = sphi 0, %s142
      %s157 = sphi 0, %s143
      %s161 = sphi 0, %s161
      %s163 = sphi 0, %s161
      %s164 = sphi 0, %s163
      %s178 = sphi 0, %s164
      %s182 = sphi 0, %s182
      %s184 = sphi 0, %s182
      %s185 = sphi 0, %s184
      %s199 = sphi 0, %s185
      %s203 = sphi 0, %s203
      %s205 = sphi 0, %s203
      %s206 = sphi 0, %s205
      %s220 = sphi 0, %s206
      %s224 = sphi 0, %s224
      %s226 = sphi 0, %s224
      %s227 = sphi 0, %s226
      %s241 = sphi 0, %s227
      %s245 = sphi 0, %s245
      %s247 = sphi 0, %s245
      %s248 = sphi 0, %s247
      %s262 = sphi 0, %s248
      %s266 = sphi 0, %s266
      %s268 = sphi 0, %s266
      %s269 = sphi 0, %s268
      %s283 = sphi 0, %s269
      %s289 = sphi 0, %s291
      %s292 = sphi 0, %s289
      %s293 = sphi 0, %s292
      %s309 = sphi 0, %s293
      %s313 = sphi 0, %s313
      %s315 = sphi 0, %s313
      %s316 = sphi 0, %s315
      %s330 = sphi 0, %s316
      %s336 = sphi 0, %s338
      %s339 = sphi 0, %s336
      %s340 = sphi 0, %s339
      %s356 = sphi 0, %s340
    $region4: #{resnet_decoder_forward.3} parent=1 // loop_header_branch
      %30 = sbr.rel (%p28) target = $region8
    $region5: #{resnet_decoder_forward.3} parent=1 // loop_body
      %s32 = ssub.s32 %s27, 1
      %s33 = ssub.s32 %s27, 2
      %s34 = sadd.s32 %s27, 1
      %s36 = sadd.s32 %s35, 1
      %p39 = scmp.eq.s32.totalorder %s27, 1
      %p40 = scmp.ne.s32.totalorder %s35, %s37
      %p41 = scmp.eq.s32.totalorder %s27, 0
      %p42 = por %p40, %p41
      %p43 = scmp.ne.s32.totalorder %s35, %s37
      %p44 = scmp.eq.s32.totalorder %s32, 1
      %p45 = por %p43, %p44
      %p46 = scmp.ne.s32.totalorder %s37, %s38
      %p47 = scmp.eq.s32.totalorder %s32, 0
      %p48 = por %p46, %p47
      %p49 = scmp.ne.s32.totalorder %s37, %s38
      %p50 = scmp.eq.s32.totalorder %s33, 1
      %p51 = por %p49, %p50
      %p53 = scmp.ne.s32.totalorder %s38, %s52
      %p54 = scmp.eq.s32.totalorder %s33, 0
      %p55 = por %p53, %p54
      %s57 = sadd.s32 %s56, 1
      %p60 = scmp.eq.s32.totalorder %s27, 1
      %p61 = scmp.ne.s32.totalorder %s56, %s58
      %p62 = scmp.eq.s32.totalorder %s27, 0
      %p63 = por %p61, %p62
      %p64 = scmp.ne.s32.totalorder %s56, %s58
      %p65 = scmp.eq.s32.totalorder %s32, 1
      %p66 = por %p64, %p65
      %p67 = scmp.ne.s32.totalorder %s58, %s59
      %p68 = scmp.eq.s32.totalorder %s32, 0
      %p69 = por %p67, %p68
      %p70 = scmp.ne.s32.totalorder %s58, %s59
      %p71 = scmp.eq.s32.totalorder %s33, 1
      %p72 = por %p70, %p71
      %p74 = scmp.ne.s32.totalorder %s59, %s73
      %p75 = scmp.eq.s32.totalorder %s33, 0
      %p76 = por %p74, %p75
      %s78 = sadd.s32 %s77, 1
      %p81 = scmp.eq.s32.totalorder %s27, 1
      %p82 = scmp.ne.s32.totalorder %s77, %s79
      %p83 = scmp.eq.s32.totalorder %s27, 0
      %p84 = por %p82, %p83
      %p85 = scmp.ne.s32.totalorder %s77, %s79
      %p86 = scmp.eq.s32.totalorder %s32, 1
      %p87 = por %p85, %p86
      %p88 = scmp.ne.s32.totalorder %s79, %s80
      %p89 = scmp.eq.s32.totalorder %s32, 0
      %p90 = por %p88, %p89
      %p91 = scmp.ne.s32.totalorder %s79, %s80
      %p92 = scmp.eq.s32.totalorder %s33, 1
      %p93 = por %p91, %p92
      %p95 = scmp.ne.s32.totalorder %s80, %s94
      %p96 = scmp.eq.s32.totalorder %s33, 0
      %p97 = por %p95, %p96
      %s99 = sadd.s32 %s98, 1
      %p102 = scmp.eq.s32.totalorder %s27, 1
      %p103 = scmp.ne.s32.totalorder %s98, %s100
      %p104 = scmp.eq.s32.totalorder %s27, 0
      %p105 = por %p103, %p104
      %p106 = scmp.ne.s32.totalorder %s98, %s100
      %p107 = scmp.eq.s32.totalorder %s32, 1
      %p108 = por %p106, %p107
      %p109 = scmp.ne.s32.totalorder %s100, %s101
      %p110 = scmp.eq.s32.totalorder %s32, 0
      %p111 = por %p109, %p110
      %p112 = scmp.ne.s32.totalorder %s100, %s101
      %p113 = scmp.eq.s32.totalorder %s33, 1
      %p114 = por %p112, %p113
      %p116 = scmp.ne.s32.totalorder %s101, %s115
      %p117 = scmp.eq.s32.totalorder %s33, 0
      %p118 = por %p116, %p117
      %s120 = sadd.s32 %s119, 1
      %p123 = scmp.eq.s32.totalorder %s27, 1
      %p124 = scmp.ne.s32.totalorder %s119, %s121
      %p125 = scmp.eq.s32.totalorder %s27, 0
      %p126 = por %p124, %p125
      %p127 = scmp.ne.s32.totalorder %s119, %s121
      %p128 = scmp.eq.s32.totalorder %s32, 1
      %p129 = por %p127, %p128
      %p130 = scmp.ne.s32.totalorder %s121, %s122
      %p131 = scmp.eq.s32.totalorder %s32, 0
      %p132 = por %p130, %p131
      %p133 = scmp.ne.s32.totalorder %s121, %s122
      %p134 = scmp.eq.s32.totalorder %s33, 1
      %p135 = por %p133, %p134
      %p137 = scmp.ne.s32.totalorder %s122, %s136
      %p138 = scmp.eq.s32.totalorder %s33, 0
      %p139 = por %p137, %p138
      %s141 = sadd.s32 %s140, 1
      %p144 = scmp.eq.s32.totalorder %s27, 1
      %p145 = scmp.ne.s32.totalorder %s140, %s142
      %p146 = scmp.eq.s32.totalorder %s27, 0
      %p147 = por %p145, %p146
      %p148 = scmp.ne.s32.totalorder %s140, %s142
      %p149 = scmp.eq.s32.totalorder %s32, 1
      %p150 = por %p148, %p149
      %p151 = scmp.ne.s32.totalorder %s142, %s143
      %p152 = scmp.eq.s32.totalorder %s32, 0
      %p153 = por %p151, %p152
      %p154 = scmp.ne.s32.totalorder %s142, %s143
      %p155 = scmp.eq.s32.totalorder %s33, 1
      %p156 = por %p154, %p155
      %p158 = scmp.ne.s32.totalorder %s143, %s157
      %p159 = scmp.eq.s32.totalorder %s33, 0
      %p160 = por %p158, %p159
      %s162 = sadd.s32 %s161, 1
      %p165 = scmp.eq.s32.totalorder %s27, 1
      %p166 = scmp.ne.s32.totalorder %s161, %s163
      %p167 = scmp.eq.s32.totalorder %s27, 0
      %p168 = por %p166, %p167
      %p169 = scmp.ne.s32.totalorder %s161, %s163
      %p170 = scmp.eq.s32.totalorder %s32, 1
      %p171 = por %p169, %p170
      %p172 = scmp.ne.s32.totalorder %s163, %s164
      %p173 = scmp.eq.s32.totalorder %s32, 0
      %p174 = por %p172, %p173
      %p175 = scmp.ne.s32.totalorder %s163, %s164
      %p176 = scmp.eq.s32.totalorder %s33, 1
      %p177 = por %p175, %p176
      %p179 = scmp.ne.s32.totalorder %s164, %s178
      %p180 = scmp.eq.s32.totalorder %s33, 0
      %p181 = por %p179, %p180
      %s183 = sadd.s32 %s182, 1
      %p186 = scmp.eq.s32.totalorder %s27, 1
      %p187 = scmp.ne.s32.totalorder %s182, %s184
      %p188 = scmp.eq.s32.totalorder %s27, 0
      %p189 = por %p187, %p188
      %p190 = scmp.ne.s32.totalorder %s182, %s184
      %p191 = scmp.eq.s32.totalorder %s32, 1
      %p192 = por %p190, %p191
      %p193 = scmp.ne.s32.totalorder %s184, %s185
      %p194 = scmp.eq.s32.totalorder %s32, 0
      %p195 = por %p193, %p194
      %p196 = scmp.ne.s32.totalorder %s184, %s185
      %p197 = scmp.eq.s32.totalorder %s33, 1
      %p198 = por %p196, %p197
      %p200 = scmp.ne.s32.totalorder %s185, %s199
      %p201 = scmp.eq.s32.totalorder %s33, 0
      %p202 = por %p200, %p201
      %s204 = sadd.s32 %s203, 1
      %p207 = scmp.eq.s32.totalorder %s27, 1
      %p208 = scmp.ne.s32.totalorder %s203, %s205
      %p209 = scmp.eq.s32.totalorder %s27, 0
      %p210 = por %p208, %p209
      %p211 = scmp.ne.s32.totalorder %s203, %s205
      %p212 = scmp.eq.s32.totalorder %s32, 1
      %p213 = por %p211, %p212
      %p214 = scmp.ne.s32.totalorder %s205, %s206
      %p215 = scmp.eq.s32.totalorder %s32, 0
      %p216 = por %p214, %p215
      %p217 = scmp.ne.s32.totalorder %s205, %s206
      %p218 = scmp.eq.s32.totalorder %s33, 1
      %p219 = por %p217, %p218
      %p221 = scmp.ne.s32.totalorder %s206, %s220
      %p222 = scmp.eq.s32.totalorder %s33, 0
      %p223 = por %p221, %p222
      %s225 = sadd.s32 %s224, 1
      %p228 = scmp.eq.s32.totalorder %s27, 1
      %p229 = scmp.ne.s32.totalorder %s224, %s226
      %p230 = scmp.eq.s32.totalorder %s27, 0
      %p231 = por %p229, %p230
      %p232 = scmp.ne.s32.totalorder %s224, %s226
      %p233 = scmp.eq.s32.totalorder %s32, 1
      %p234 = por %p232, %p233
      %p235 = scmp.ne.s32.totalorder %s226, %s227
      %p236 = scmp.eq.s32.totalorder %s32, 0
      %p237 = por %p235, %p236
      %p238 = scmp.ne.s32.totalorder %s226, %s227
      %p239 = scmp.eq.s32.totalorder %s33, 1
      %p240 = por %p238, %p239
      %p242 = scmp.ne.s32.totalorder %s227, %s241
      %p243 = scmp.eq.s32.totalorder %s33, 0
      %p244 = por %p242, %p243
      %s246 = sadd.s32 %s245, 1
      %p249 = scmp.eq.s32.totalorder %s27, 1
      %p250 = scmp.ne.s32.totalorder %s245, %s247
      %p251 = scmp.eq.s32.totalorder %s27, 0
      %p252 = por %p250, %p251
      %p253 = scmp.ne.s32.totalorder %s245, %s247
      %p254 = scmp.eq.s32.totalorder %s32, 1
      %p255 = por %p253, %p254
      %p256 = scmp.ne.s32.totalorder %s247, %s248
      %p257 = scmp.eq.s32.totalorder %s32, 0
      %p258 = por %p256, %p257
      %p259 = scmp.ne.s32.totalorder %s247, %s248
      %p260 = scmp.eq.s32.totalorder %s33, 1
      %p261 = por %p259, %p260
      %p263 = scmp.ne.s32.totalorder %s248, %s262
      %p264 = scmp.eq.s32.totalorder %s33, 0
      %p265 = por %p263, %p264
      %s267 = sadd.s32 %s266, 1
      %p270 = scmp.eq.s32.totalorder %s27, 1
      %p271 = scmp.ne.s32.totalorder %s266, %s268
      %p272 = scmp.eq.s32.totalorder %s27, 0
      %p273 = por %p271, %p272
      %p274 = scmp.ne.s32.totalorder %s266, %s268
      %p275 = scmp.eq.s32.totalorder %s32, 1
      %p276 = por %p274, %p275
      %p277 = scmp.ne.s32.totalorder %s268, %s269
      %p278 = scmp.eq.s32.totalorder %s32, 0
      %p279 = por %p277, %p278
      %p280 = scmp.ne.s32.totalorder %s268, %s269
      %p281 = scmp.eq.s32.totalorder %s33, 1
      %p282 = por %p280, %p281
      %p284 = scmp.ne.s32.totalorder %s269, %s283
      %p285 = scmp.eq.s32.totalorder %s33, 0
      %p286 = por %p284, %p285
      %s287 = ssub.s32 %s27, %s34
      %p288 = scmp.eq.s32.totalorder %s287, 0
      %s290 = sadd.s32 %s289, 1
      %s291 = scalar_select %p288, %s289, %s290
      %p294 = pneg %p288
      %p295 = scmp.eq.s32.totalorder %s27, 1
      %p296 = por %p294, %p295
      %p297 = scmp.ne.s32.totalorder %s289, %s292
      %p298 = scmp.eq.s32.totalorder %s27, 0
      %p299 = por %p297, %p298
      %p300 = scmp.ne.s32.totalorder %s289, %s292
      %p301 = scmp.eq.s32.totalorder %s32, 1
      %p302 = por %p300, %p301
      %p303 = scmp.ne.s32.totalorder %s292, %s293
      %p304 = scmp.eq.s32.totalorder %s32, 0
      %p305 = por %p303, %p304
      %p306 = scmp.ne.s32.totalorder %s292, %s293
      %p307 = scmp.eq.s32.totalorder %s33, 1
      %p308 = por %p306, %p307
      %p310 = scmp.ne.s32.totalorder %s293, %s309
      %p311 = scmp.eq.s32.totalorder %s33, 0
      %p312 = por %p310, %p311
      %s314 = sadd.s32 %s313, 1
      %p317 = scmp.eq.s32.totalorder %s27, 1
      %p318 = scmp.ne.s32.totalorder %s313, %s315
      %p319 = scmp.eq.s32.totalorder %s27, 0
      %p320 = por %p318, %p319
      %p321 = scmp.ne.s32.totalorder %s313, %s315
      %p322 = scmp.eq.s32.totalorder %s32, 1
      %p323 = por %p321, %p322
      %p324 = scmp.ne.s32.totalorder %s315, %s316
      %p325 = scmp.eq.s32.totalorder %s32, 0
      %p326 = por %p324, %p325
      %p327 = scmp.ne.s32.totalorder %s315, %s316
      %p328 = scmp.eq.s32.totalorder %s33, 1
      %p329 = por %p327, %p328
      %p331 = scmp.ne.s32.totalorder %s316, %s330
      %p332 = scmp.eq.s32.totalorder %s33, 0
      %p333 = por %p331, %p332
      %s334 = ssub.s32 %s27, %s34
      %p335 = scmp.eq.s32.totalorder %s334, 0
      %s337 = sadd.s32 %s336, 1
      %s338 = scalar_select %p335, %s336, %s337
      %p341 = pneg %p335
      %p342 = scmp.eq.s32.totalorder %s27, 1
      %p343 = por %p341, %p342
      %p344 = scmp.ne.s32.totalorder %s336, %s339
      %p345 = scmp.eq.s32.totalorder %s27, 0
      %p346 = por %p344, %p345
      %p347 = scmp.ne.s32.totalorder %s336, %s339
      %p348 = scmp.eq.s32.totalorder %s32, 1
      %p349 = por %p347, %p348
      %p350 = scmp.ne.s32.totalorder %s339, %s340
      %p351 = scmp.eq.s32.totalorder %s32, 0
      %p352 = por %p350, %p351
      %p353 = scmp.ne.s32.totalorder %s339, %s340
      %p354 = scmp.eq.s32.totalorder %s33, 1
      %p355 = por %p353, %p354
      %p357 = scmp.ne.s32.totalorder %s340, %s356
      %p358 = scmp.eq.s32.totalorder %s33, 0
      %p359 = por %p357, %p358
      %p360 = scmp.le.s32.totalorder 1, %s27
      %p361 = scmp.lt.s32.totalorder %s27, 3
      %p362 = pnand %p360, %p361
      %p363 = pneg %p362
      // Predicated region
      $region9: #{resnet_decoder_forward.3} parent=5 // pred_check
        _
      $region10: #{resnet_decoder_forward.3} parent=5 // pred_check_branch
        %365 = sbr.rel (%p362) target = $region12
      $region11: #{resnet_decoder_forward.3} parent=5 // pred_region
        %s366 = ssub.s32 %s27, 1
        // Predicated region
        $region13: #{resnet_decoder_forward.3} parent=11 // pred_check
          %p367 = pneg %p48
        $region14: #{resnet_decoder_forward.3} parent=11 // pred_check_branch
          %369 = sbr.rel (%p367) target = $region16
        $region15: #{resnet_decoder_forward.3} parent=11 // pred_region
          %371 = vsyncadd [#allocation3], 0
          %s373 = sshll.u32 %s0, 4
          %s374 = int_to_ptr.hbm [resolvable:$true] %s373
          %s375 = sshll.u32 [#allocation2], 4
          %s376 = int_to_ptr.vmem [resolvable:$true] %s375
          %378 = dma.hbm_to_vmem [thread:$0]  %s374, 32, %s376, [#allocation3]
        $region16: #{resnet_decoder_forward.3} parent=11 // pred_fallthru
          _
        // Predicated region
        $region17: #{resnet_decoder_forward.3} parent=11 // pred_check
          %p379 = pneg %p69
        $region18: #{resnet_decoder_forward.3} parent=11 // pred_check_branch
          %381 = sbr.rel (%p379) target = $region20
        $region19: #{resnet_decoder_forward.3} parent=11 // pred_region
          %383 = vsyncadd [#allocation5], 0
          %s384 = sshll.u32 %s1, 4
          %s385 = int_to_ptr.hbm [resolvable:$true] %s384
          %s386 = sshll.u32 [#allocation4], 4
          %s387 = int_to_ptr.vmem [resolvable:$true] %s386
          %392 = dma.hbm_to_vmem [thread:$0]  %s385, 2048, %s387, [#allocation5], 512, 512, 32
        $region20: #{resnet_decoder_forward.3} parent=11 // pred_fallthru
          _
        // Predicated region
        $region21: #{resnet_decoder_forward.3} parent=11 // pred_check
          %p393 = pneg %p90
        $region22: #{resnet_decoder_forward.3} parent=11 // pred_check_branch
          %395 = sbr.rel (%p393) target = $region24
        $region23: #{resnet_decoder_forward.3} parent=11 // pred_region
          %397 = vsyncadd [#allocation5], 0
          %s399 = sshll.u32 %s2, 4
          %s400 = int_to_ptr.hbm [resolvable:$true] %s399
          %s401 = sshll.u32 [#allocation6], 4
          %s402 = int_to_ptr.vmem [resolvable:$true] %s401
          %404 = dma.hbm_to_vmem [thread:$0]  %s400, 128, %s402, [#allocation5]
        $region24: #{resnet_decoder_forward.3} parent=11 // pred_fallthru
          _
        // Predicated region
        $region25: #{resnet_decoder_forward.3} parent=11 // pred_check
          %p405 = pneg %p111
        $region26: #{resnet_decoder_forward.3} parent=11 // pred_check_branch
          %407 = sbr.rel (%p405) target = $region28
        $region27: #{resnet_decoder_forward.3} parent=11 // pred_region
          %409 = vsyncadd [#allocation8], 0
          %s411 = sshll.u32 %s3, 4
          %s412 = int_to_ptr.hbm [resolvable:$true] %s411
          %s413 = sshll.u32 [#allocation7], 4
          %s414 = int_to_ptr.vmem [resolvable:$true] %s413
          %416 = dma.hbm_to_vmem [thread:$0]  %s412, 128, %s414, [#allocation8]
        $region28: #{resnet_decoder_forward.3} parent=11 // pred_fallthru
          _
        // Predicated region
        $region29: #{resnet_decoder_forward.3} parent=11 // pred_check
          %p417 = pneg %p132
        $region30: #{resnet_decoder_forward.3} parent=11 // pred_check_branch
          %419 = sbr.rel (%p417) target = $region32
        $region31: #{resnet_decoder_forward.3} parent=11 // pred_region
          %421 = vsyncadd [#allocation8], 0
          %s422 = sshll.u32 %s4, 4
          %s423 = int_to_ptr.hbm [resolvable:$true] %s422
          %s424 = sshll.u32 [#allocation9], 4
          %s425 = int_to_ptr.vmem [resolvable:$true] %s424
          %430 = dma.hbm_to_vmem [thread:$0]  %s423, 3072, %s425, [#allocation8], 64, 64, 4
        $region32: #{resnet_decoder_forward.3} parent=11 // pred_fallthru
          _
        // Predicated region
        $region33: #{resnet_decoder_forward.3} parent=11 // pred_check
          %p431 = pneg %p153
        $region34: #{resnet_decoder_forward.3} parent=11 // pred_check_branch
          %433 = sbr.rel (%p431) target = $region36
        $region35: #{resnet_decoder_forward.3} parent=11 // pred_region
          %435 = vsyncadd [#allocation11], 0
          %s437 = sshll.u32 %s5, 4
          %s438 = int_to_ptr.hbm [resolvable:$true] %s437
          %s439 = sshll.u32 [#allocation10], 4
          %s440 = int_to_ptr.vmem [resolvable:$true] %s439
          %442 = dma.hbm_to_vmem [thread:$0]  %s438, 16, %s440, [#allocation11]
        $region36: #{resnet_decoder_forward.3} parent=11 // pred_fallthru
          _
        // Predicated region
        $region37: #{resnet_decoder_forward.3} parent=11 // pred_check
          %p443 = pneg %p174
        $region38: #{resnet_decoder_forward.3} parent=11 // pred_check_branch
          %445 = sbr.rel (%p443) target = $region40
        $region39: #{resnet_decoder_forward.3} parent=11 // pred_region
          %447 = vsyncadd [#allocation11], 0
          %s448 = sshll.u32 %s6, 4
          %s449 = int_to_ptr.hbm [resolvable:$true] %s448
          %s450 = sshll.u32 [#allocation12], 4
          %s451 = int_to_ptr.vmem [resolvable:$true] %s450
          %456 = dma.hbm_to_vmem [thread:$0]  %s449, 1024, %s451, [#allocation11], 64, 64, 4
        $region40: #{resnet_decoder_forward.3} parent=11 // pred_fallthru
          _
        // Predicated region
        $region41: #{resnet_decoder_forward.3} parent=11 // pred_check
          %p457 = pneg %p195
        $region42: #{resnet_decoder_forward.3} parent=11 // pred_check_branch
          %459 = sbr.rel (%p457) target = $region44
        $region43: #{resnet_decoder_forward.3} parent=11 // pred_region
          %461 = vsyncadd [#allocation14], 0
          %s463 = sshll.u32 %s7, 4
          %s464 = int_to_ptr.hbm [resolvable:$true] %s463
          %s465 = sshll.u32 [#allocation13], 4
          %s466 = int_to_ptr.vmem [resolvable:$true] %s465
          %468 = dma.hbm_to_vmem [thread:$0]  %s464, 16, %s466, [#allocation14]
        $region44: #{resnet_decoder_forward.3} parent=11 // pred_fallthru
          _
        // Predicated region
        $region45: #{resnet_decoder_forward.3} parent=11 // pred_check
          %p469 = pneg %p216
        $region46: #{resnet_decoder_forward.3} parent=11 // pred_check_branch
          %471 = sbr.rel (%p469) target = $region48
        $region47: #{resnet_decoder_forward.3} parent=11 // pred_region
          %473 = vsyncadd [#allocation14], 0
          %s474 = sshll.u32 %s8, 4
          %s475 = int_to_ptr.hbm [resolvable:$true] %s474
          %s476 = sshll.u32 [#allocation15], 4
          %s477 = int_to_ptr.vmem [resolvable:$true] %s476
          %482 = dma.hbm_to_vmem [thread:$0]  %s475, 3072, %s477, [#allocation14], 64, 64, 4
        $region48: #{resnet_decoder_forward.3} parent=11 // pred_fallthru
          _
        // Predicated region
        $region49: #{resnet_decoder_forward.3} parent=11 // pred_check
          %p483 = pneg %p237
        $region50: #{resnet_decoder_forward.3} parent=11 // pred_check_branch
          %485 = sbr.rel (%p483) target = $region52
        $region51: #{resnet_decoder_forward.3} parent=11 // pred_region
          %487 = vsyncadd [#allocation17], 0
          %s489 = sshll.u32 %s9, 4
          %s490 = int_to_ptr.hbm [resolvable:$true] %s489
          %s491 = sshll.u32 [#allocation16], 4
          %s492 = int_to_ptr.vmem [resolvable:$true] %s491
          %494 = dma.hbm_to_vmem [thread:$0]  %s490, 16, %s492, [#allocation17]
        $region52: #{resnet_decoder_forward.3} parent=11 // pred_fallthru
          _
        // Predicated region
        $region53: #{resnet_decoder_forward.3} parent=11 // pred_check
          %p495 = pneg %p258
        $region54: #{resnet_decoder_forward.3} parent=11 // pred_check_branch
          %497 = sbr.rel (%p495) target = $region56
        $region55: #{resnet_decoder_forward.3} parent=11 // pred_region
          %499 = vsyncadd [#allocation17], 0
          %s500 = sshll.u32 %s10, 4
          %s501 = int_to_ptr.hbm [resolvable:$true] %s500
          %s502 = sshll.u32 [#allocation18], 4
          %s503 = int_to_ptr.vmem [resolvable:$true] %s502
          %508 = dma.hbm_to_vmem [thread:$0]  %s501, 1024, %s503, [#allocation17], 64, 64, 4
        $region56: #{resnet_decoder_forward.3} parent=11 // pred_fallthru
          _
        // Predicated region
        $region57: #{resnet_decoder_forward.3} parent=11 // pred_check
          %p509 = pneg %p279
        $region58: #{resnet_decoder_forward.3} parent=11 // pred_check_branch
          %511 = sbr.rel (%p509) target = $region60
        $region59: #{resnet_decoder_forward.3} parent=11 // pred_region
          %513 = vsyncadd [#allocation20], 0
          %s515 = sshll.u32 %s11, 4
          %s516 = int_to_ptr.hbm [resolvable:$true] %s515
          %s517 = sshll.u32 [#allocation19], 4
          %s518 = int_to_ptr.vmem [resolvable:$true] %s517
          %520 = dma.hbm_to_vmem [thread:$0]  %s516, 16, %s518, [#allocation20]
        $region60: #{resnet_decoder_forward.3} parent=11 // pred_fallthru
          _
        // Predicated region
        $region61: #{resnet_decoder_forward.3} parent=11 // pred_check
          %p521 = pneg %p326
        $region62: #{resnet_decoder_forward.3} parent=11 // pred_check_branch
          %523 = sbr.rel (%p521) target = $region64
        $region63: #{resnet_decoder_forward.3} parent=11 // pred_region
          %525 = vsyncadd [#allocation5], 0
          %s527 = sshll.u32 %s13, 4
          %s528 = int_to_ptr.hbm [resolvable:$true] %s527
          %s529 = sshll.u32 [#allocation22], 4
          %s530 = int_to_ptr.vmem [resolvable:$true] %s529
          %532 = dma.hbm_to_vmem [thread:$0]  %s528, 32, %s530, [#allocation5]
        $region64: #{resnet_decoder_forward.3} parent=11 // pred_fallthru
          _
      $region12: #{resnet_decoder_forward.3} parent=5 // pred_fallthru
        _
      %p533 = scmp.lt.s32.totalorder %s27, 2
      // Predicated region
      $region65: #{resnet_decoder_forward.3} parent=5 // pred_check
        %p534 = pneg %p533
      $region66: #{resnet_decoder_forward.3} parent=5 // pred_check_branch
        %536 = sbr.rel (%p534) target = $region68
      $region67: #{resnet_decoder_forward.3} parent=5 // pred_region
        // Predicated region
        $region69: #{resnet_decoder_forward.3} parent=67 // pred_check
          %p537 = pneg %p299
        $region70: #{resnet_decoder_forward.3} parent=67 // pred_check_branch
          %539 = sbr.rel (%p537) target = $region72
        $region71: #{resnet_decoder_forward.3} parent=67 // pred_region
          %s540 = sand.u32 %s27, 1
          %s541 = scalar_lea.sflag [#allocation3], %s540
          %s542 = sand.u32 %s289, 1
          %s543 = smul.addr %s542, 256
          %s544 = scalar_lea.vmem [#allocation21], %s543
          %546 = vsyncadd %s541, 0
          %s547 = smul.addr %s27, 64
          %s548 = smul.addr %s547, 4
          %s549 = scalar_lea.hbm %s12, %s548
          %s550 = sshll.u32 %s549, 4
          %s551 = int_to_ptr.hbm [resolvable:$true] %s550
          %s552 = sshll.u32 %s544, 4
          %s553 = int_to_ptr.vmem [resolvable:$true] %s552
          %558 = dma.hbm_to_vmem [thread:$0]  %s551, 4096, %s553, %s541, 128, 128, 8
        $region72: #{resnet_decoder_forward.3} parent=67 // pred_fallthru
          _
      $region68: #{resnet_decoder_forward.3} parent=5 // pred_fallthru
        _
      %p559 = scmp.le.s32.totalorder 1, %s27
      %p560 = scmp.lt.s32.totalorder %s27, 3
      %p561 = pnand %p559, %p560
      %p562 = pneg %p561
      // Predicated region
      $region73: #{resnet_decoder_forward.3} parent=5 // pred_check
        _
      $region74: #{resnet_decoder_forward.3} parent=5 // pred_check_branch
        %564 = sbr.rel (%p561) target = $region76
      $region75: #{resnet_decoder_forward.3} parent=5 // pred_region
        %s565 = ssub.s32 %s27, 1
        // Predicated region
        $region77: #{resnet_decoder_forward.3} parent=75 // pred_check
          %p566 = pneg %p48
        $region78: #{resnet_decoder_forward.3} parent=75 // pred_check_branch
          %568 = sbr.rel (%p566) target = $region80
        $region79: #{resnet_decoder_forward.3} parent=75 // pred_region
          %570 = dma.done [#allocation3], 32
        $region80: #{resnet_decoder_forward.3} parent=75 // pred_fallthru
          _
        // Predicated region
        $region81: #{resnet_decoder_forward.3} parent=75 // pred_check
          %p571 = pneg %p69
        $region82: #{resnet_decoder_forward.3} parent=75 // pred_check_branch
          %573 = sbr.rel (%p571) target = $region84
        $region83: #{resnet_decoder_forward.3} parent=75 // pred_region
          %575 = dma.done [#allocation5], 2048
        $region84: #{resnet_decoder_forward.3} parent=75 // pred_fallthru
          _
        // Predicated region
        $region85: #{resnet_decoder_forward.3} parent=75 // pred_check
          %p576 = pneg %p90
        $region86: #{resnet_decoder_forward.3} parent=75 // pred_check_branch
          %578 = sbr.rel (%p576) target = $region88
        $region87: #{resnet_decoder_forward.3} parent=75 // pred_region
          %580 = dma.done [#allocation5], 128
        $region88: #{resnet_decoder_forward.3} parent=75 // pred_fallthru
          _
        // Predicated region
        $region89: #{resnet_decoder_forward.3} parent=75 // pred_check
          %p581 = pneg %p111
        $region90: #{resnet_decoder_forward.3} parent=75 // pred_check_branch
          %583 = sbr.rel (%p581) target = $region92
        $region91: #{resnet_decoder_forward.3} parent=75 // pred_region
          %585 = dma.done [#allocation8], 128
        $region92: #{resnet_decoder_forward.3} parent=75 // pred_fallthru
          _
        // Predicated region
        $region93: #{resnet_decoder_forward.3} parent=75 // pred_check
          %p586 = pneg %p132
        $region94: #{resnet_decoder_forward.3} parent=75 // pred_check_branch
          %588 = sbr.rel (%p586) target = $region96
        $region95: #{resnet_decoder_forward.3} parent=75 // pred_region
          %590 = dma.done [#allocation8], 3072
        $region96: #{resnet_decoder_forward.3} parent=75 // pred_fallthru
          _
        // Predicated region
        $region97: #{resnet_decoder_forward.3} parent=75 // pred_check
          %p591 = pneg %p153
        $region98: #{resnet_decoder_forward.3} parent=75 // pred_check_branch
          %593 = sbr.rel (%p591) target = $region100
        $region99: #{resnet_decoder_forward.3} parent=75 // pred_region
          %595 = dma.done [#allocation11], 16
        $region100: #{resnet_decoder_forward.3} parent=75 // pred_fallthru
          _
        // Predicated region
        $region101: #{resnet_decoder_forward.3} parent=75 // pred_check
          %p596 = pneg %p174
        $region102: #{resnet_decoder_forward.3} parent=75 // pred_check_branch
          %598 = sbr.rel (%p596) target = $region104
        $region103: #{resnet_decoder_forward.3} parent=75 // pred_region
          %600 = dma.done [#allocation11], 1024
        $region104: #{resnet_decoder_forward.3} parent=75 // pred_fallthru
          _
        // Predicated region
        $region105: #{resnet_decoder_forward.3} parent=75 // pred_check
          %p601 = pneg %p195
        $region106: #{resnet_decoder_forward.3} parent=75 // pred_check_branch
          %603 = sbr.rel (%p601) target = $region108
        $region107: #{resnet_decoder_forward.3} parent=75 // pred_region
          %605 = dma.done [#allocation14], 16
        $region108: #{resnet_decoder_forward.3} parent=75 // pred_fallthru
          _
        // Predicated region
        $region109: #{resnet_decoder_forward.3} parent=75 // pred_check
          %p606 = pneg %p216
        $region110: #{resnet_decoder_forward.3} parent=75 // pred_check_branch
          %608 = sbr.rel (%p606) target = $region112
        $region111: #{resnet_decoder_forward.3} parent=75 // pred_region
          %610 = dma.done [#allocation14], 3072
        $region112: #{resnet_decoder_forward.3} parent=75 // pred_fallthru
          _
        // Predicated region
        $region113: #{resnet_decoder_forward.3} parent=75 // pred_check
          %p611 = pneg %p237
        $region114: #{resnet_decoder_forward.3} parent=75 // pred_check_branch
          %613 = sbr.rel (%p611) target = $region116
        $region115: #{resnet_decoder_forward.3} parent=75 // pred_region
          %615 = dma.done [#allocation17], 16
        $region116: #{resnet_decoder_forward.3} parent=75 // pred_fallthru
          _
        // Predicated region
        $region117: #{resnet_decoder_forward.3} parent=75 // pred_check
          %p616 = pneg %p258
        $region118: #{resnet_decoder_forward.3} parent=75 // pred_check_branch
          %618 = sbr.rel (%p616) target = $region120
        $region119: #{resnet_decoder_forward.3} parent=75 // pred_region
          %620 = dma.done [#allocation17], 1024
        $region120: #{resnet_decoder_forward.3} parent=75 // pred_fallthru
          _
        // Predicated region
        $region121: #{resnet_decoder_forward.3} parent=75 // pred_check
          %p621 = pneg %p279
        $region122: #{resnet_decoder_forward.3} parent=75 // pred_check_branch
          %623 = sbr.rel (%p621) target = $region124
        $region123: #{resnet_decoder_forward.3} parent=75 // pred_region
          %625 = dma.done [#allocation20], 16
        $region124: #{resnet_decoder_forward.3} parent=75 // pred_fallthru
          _
        %s626 = sand.u32 %s32, 1
        %s627 = scalar_lea.sflag [#allocation3], %s626
        %s628 = sand.u32 %s292, 1
        %s629 = smul.addr %s628, 256
        %s630 = scalar_lea.vmem [#allocation21], %s629
        // Predicated region
        $region125: #{resnet_decoder_forward.3} parent=75 // pred_check
          %p631 = pneg %p305
        $region126: #{resnet_decoder_forward.3} parent=75 // pred_check_branch
          %633 = sbr.rel (%p631) target = $region128
        $region127: #{resnet_decoder_forward.3} parent=75 // pred_region
          %635 = dma.done %s627, 4096
        $region128: #{resnet_decoder_forward.3} parent=75 // pred_fallthru
          _
        // Predicated region
        $region129: #{resnet_decoder_forward.3} parent=75 // pred_check
          %p636 = pneg %p326
        $region130: #{resnet_decoder_forward.3} parent=75 // pred_check_branch
          %638 = sbr.rel (%p636) target = $region132
        $region131: #{resnet_decoder_forward.3} parent=75 // pred_region
          %640 = dma.done [#allocation5], 32
        $region132: #{resnet_decoder_forward.3} parent=75 // pred_fallthru
          _
        %p641 = pneg %p48
        %p642 = pneg %p45
        %p643 = pneg %p69
        %p644 = pneg %p66
        %p645 = pneg %p90
        %p646 = pneg %p87
        %p647 = pneg %p111
        %p648 = pneg %p108
        %p649 = pneg %p132
        %p650 = pneg %p129
        %p651 = pneg %p153
        %p652 = pneg %p150
        %p653 = pneg %p174
        %p654 = pneg %p171
        %p655 = pneg %p195
        %p656 = pneg %p192
        %p657 = pneg %p216
        %p658 = pneg %p213
        %p659 = pneg %p237
        %p660 = pneg %p234
        %p661 = pneg %p258
        %p662 = pneg %p255
        %p663 = pneg %p279
        %p664 = pneg %p276
        %s665 = sand.u32 %s32, 1
        %s666 = scalar_lea.sflag [#allocation3], %s665
        %s667 = sand.u32 %s292, 1
        %s668 = smul.addr %s667, 256
        %s669 = scalar_lea.vmem [#allocation21], %s668
        %p670 = pneg %p305
        %p671 = pneg %p302
        %p672 = pneg %p326
        %p673 = pneg %p323
        %p674 = pneg %p352
        %p675 = pneg %p349
        %p676 = scmp.lt.s32.totalorder %s32, 1
        %s677 = scalar_select %p676, %s32, 1
        %s678 = smul.addr %s677, 4
        %s679 = smul.addr %s678, 4
        %s680 = scalar_lea.vmem %s14, %s679
        %p681 = scmp.lt.s32.totalorder %s32, 1
        %s682 = scalar_select %p681, %s32, 1
        %s683 = smul.addr %s682, 4
        %s684 = smul.addr %s683, 4
        %s685 = scalar_lea.vmem %s14, %s684
        %v687 = vld [vmem:[#allocation2] sm:$0x3]
        %v688 = vpack.c.bf16 %v687, %v687
        %v689 = vld [vmem:[#allocation4] sm:$0xff]
        %v690 = vld [vmem:[#allocation4 + $0x8] sm:$0xff]
        %v691 = vld [vmem:[#allocation4 + $0x10] sm:$0xff]
        %v692 = vld [vmem:[#allocation4 + $0x18] sm:$0xff]
        %v693 = vld [vmem:[#allocation4 + $0x20] sm:$0xff]
        %v694 = vld [vmem:[#allocation4 + $0x28] sm:$0xff]
        %v695 = vld [vmem:[#allocation4 + $0x30] sm:$0xff]
        %v696 = vld [vmem:[#allocation4 + $0x38] sm:$0xff]
        %v697 = vld [vmem:[#allocation4 + $0x40] sm:$0xff]
        %v698 = vld [vmem:[#allocation4 + $0x48] sm:$0xff]
        %v699 = vld [vmem:[#allocation4 + $0x50] sm:$0xff]
        %v700 = vld [vmem:[#allocation4 + $0x58] sm:$0xff]
        %v701 = vld [vmem:[#allocation4 + $0x60] sm:$0xff]
        %v702 = vld [vmem:[#allocation4 + $0x68] sm:$0xff]
        %v703 = vld [vmem:[#allocation4 + $0x70] sm:$0xff]
        %v704 = vld [vmem:[#allocation4 + $0x78] sm:$0xff]
        %v721 = vunpack.c.l.b16 %v689
        %v722 = vunpack.c.h.b16 %v689
        %v723 = vunpack.c.l.b16 %v690
        %v724 = vunpack.c.h.b16 %v690
        %v725 = vunpack.c.l.b16 %v691
        %v726 = vunpack.c.h.b16 %v691
        %v727 = vunpack.c.l.b16 %v692
        %v728 = vunpack.c.h.b16 %v692
        %v729 = vunpack.c.l.b16 %v693
        %v730 = vunpack.c.h.b16 %v693
        %v731 = vunpack.c.l.b16 %v694
        %v732 = vunpack.c.h.b16 %v694
        %v733 = vunpack.c.l.b16 %v695
        %v734 = vunpack.c.h.b16 %v695
        %v735 = vunpack.c.l.b16 %v696
        %v736 = vunpack.c.h.b16 %v696
        %v737 = vunpack.c.l.b16 %v697
        %v738 = vunpack.c.h.b16 %v697
        %v739 = vunpack.c.l.b16 %v698
        %v740 = vunpack.c.h.b16 %v698
        %v741 = vunpack.c.l.b16 %v699
        %v742 = vunpack.c.h.b16 %v699
        %v743 = vunpack.c.l.b16 %v700
        %v744 = vunpack.c.h.b16 %v700
        %v745 = vunpack.c.l.b16 %v701
        %v746 = vunpack.c.h.b16 %v701
        %v747 = vunpack.c.l.b16 %v702
        %v748 = vunpack.c.h.b16 %v702
        %v749 = vunpack.c.l.b16 %v703
        %v750 = vunpack.c.h.b16 %v703
        %v751 = vunpack.c.l.b16 %v704
        %v752 = vunpack.c.h.b16 %v704
        %v753 = vpack.c.b16 %v729, %v721
        %v754 = vpack.c.b16 %v730, %v722
        %v755 = vpack.c.b16 %v731, %v723
        %v756 = vpack.c.b16 %v732, %v724
        %v757 = vpack.c.b16 %v733, %v725
        %v758 = vpack.c.b16 %v734, %v726
        %v759 = vpack.c.b16 %v735, %v727
        %v760 = vpack.c.b16 %v736, %v728
        %v761 = vpack.c.b16 %v745, %v737
        %v762 = vpack.c.b16 %v746, %v738
        %v763 = vpack.c.b16 %v747, %v739
        %v764 = vpack.c.b16 %v748, %v740
        %v765 = vpack.c.b16 %v749, %v741
        %v766 = vpack.c.b16 %v750, %v742
        %v767 = vpack.c.b16 %v751, %v743
        %v768 = vpack.c.b16 %v752, %v744
        %vm785 = vcmask 261120
        %v787 = vsel %vm785, %v688, 0
        %789 = vmatpush.bf16.msra.mxu0 0
        %790 = vmatpush.bf16.msra.mxu0 0
        %791 = vmatpush.bf16.msra.mxu0 0
        %792 = vmatpush.bf16.msra.mxu0 0
        %793 = vmatpush.bf16.msra.mxu0 0
        %794 = vmatpush.bf16.msra.mxu0 0
        %795 = vmatpush.bf16.msra.mxu0 %v761
        %796 = vmatpush.bf16.msra.mxu0 %v753
        %797 = vmatmul.bf16.gmra.mxu0 %v787
        %v798 = vpop.f32.mrf.mxu0
        %v799 = vadd.f32 0.0, %v798
        %v800 = vpop.f32.mrf.mxu0
        %801 = vdwg.mxu0
        %802 = vmatpush.bf16.msra.mxu0 0
        %803 = vmatpush.bf16.msra.mxu0 0
        %804 = vmatpush.bf16.msra.mxu0 0
        %805 = vmatpush.bf16.msra.mxu0 0
        %806 = vmatpush.bf16.msra.mxu0 0
        %807 = vmatpush.bf16.msra.mxu0 0
        %808 = vmatpush.bf16.msra.mxu0 %v762
        %809 = vmatpush.bf16.msra.mxu0 %v754
        %810 = vmatmul.bf16.gmra.mxu0 %v787
        %v811 = vpop.f32.mrf.mxu0
        %v812 = vadd.f32 0.0, %v811
        %v813 = vpop.f32.mrf.mxu0
        %814 = vdwg.mxu0
        %815 = vmatpush.bf16.msra.mxu0 0
        %816 = vmatpush.bf16.msra.mxu0 0
        %817 = vmatpush.bf16.msra.mxu0 0
        %818 = vmatpush.bf16.msra.mxu0 0
        %819 = vmatpush.bf16.msra.mxu0 0
        %820 = vmatpush.bf16.msra.mxu0 0
        %821 = vmatpush.bf16.msra.mxu0 %v763
        %822 = vmatpush.bf16.msra.mxu0 %v755
        %823 = vmatmul.bf16.gmra.mxu0 %v787
        %v824 = vpop.f32.mrf.mxu0
        %v825 = vadd.f32 0.0, %v824
        %v826 = vpop.f32.mrf.mxu0
        %827 = vdwg.mxu0
        %828 = vmatpush.bf16.msra.mxu0 0
        %829 = vmatpush.bf16.msra.mxu0 0
        %830 = vmatpush.bf16.msra.mxu0 0
        %831 = vmatpush.bf16.msra.mxu0 0
        %832 = vmatpush.bf16.msra.mxu0 0
        %833 = vmatpush.bf16.msra.mxu0 0
        %834 = vmatpush.bf16.msra.mxu0 %v764
        %835 = vmatpush.bf16.msra.mxu0 %v756
        %836 = vmatmul.bf16.gmra.mxu0 %v787
        %v837 = vpop.f32.mrf.mxu0
        %v838 = vadd.f32 0.0, %v837
        %v839 = vpop.f32.mrf.mxu0
        %840 = vdwg.mxu0
        %841 = vmatpush.bf16.msra.mxu0 0
        %842 = vmatpush.bf16.msra.mxu0 0
        %843 = vmatpush.bf16.msra.mxu0 0
        %844 = vmatpush.bf16.msra.mxu0 0
        %845 = vmatpush.bf16.msra.mxu0 0
        %846 = vmatpush.bf16.msra.mxu0 0
        %847 = vmatpush.bf16.msra.mxu0 %v765
        %848 = vmatpush.bf16.msra.mxu0 %v757
        %849 = vmatmul.bf16.gmra.mxu0 %v787
        %v850 = vpop.f32.mrf.mxu0
        %v851 = vadd.f32 0.0, %v850
        %v852 = vpop.f32.mrf.mxu0
        %853 = vdwg.mxu0
        %854 = vmatpush.bf16.msra.mxu0 0
        %855 = vmatpush.bf16.msra.mxu0 0
        %856 = vmatpush.bf16.msra.mxu0 0
        %857 = vmatpush.bf16.msra.mxu0 0
        %858 = vmatpush.bf16.msra.mxu0 0
        %859 = vmatpush.bf16.msra.mxu0 0
        %860 = vmatpush.bf16.msra.mxu0 %v766
        %861 = vmatpush.bf16.msra.mxu0 %v758
        %862 = vmatmul.bf16.gmra.mxu0 %v787
        %v863 = vpop.f32.mrf.mxu0
        %v864 = vadd.f32 0.0, %v863
        %v865 = vpop.f32.mrf.mxu0
        %866 = vdwg.mxu0
        %867 = vmatpush.bf16.msra.mxu0 0
        %868 = vmatpush.bf16.msra.mxu0 0
        %869 = vmatpush.bf16.msra.mxu0 0
        %870 = vmatpush.bf16.msra.mxu0 0
        %871 = vmatpush.bf16.msra.mxu0 0
        %872 = vmatpush.bf16.msra.mxu0 0
        %873 = vmatpush.bf16.msra.mxu0 %v767
        %874 = vmatpush.bf16.msra.mxu0 %v759
        %875 = vmatmul.bf16.gmra.mxu0 %v787
        %v876 = vpop.f32.mrf.mxu0
        %v877 = vadd.f32 0.0, %v876
        %v878 = vpop.f32.mrf.mxu0
        %879 = vdwg.mxu0
        %880 = vmatpush.bf16.msra.mxu0 0
        %881 = vmatpush.bf16.msra.mxu0 0
        %882 = vmatpush.bf16.msra.mxu0 0
        %883 = vmatpush.bf16.msra.mxu0 0
        %884 = vmatpush.bf16.msra.mxu0 0
        %885 = vmatpush.bf16.msra.mxu0 0
        %886 = vmatpush.bf16.msra.mxu0 %v768
        %887 = vmatpush.bf16.msra.mxu0 %v760
        %888 = vmatmul.bf16.gmra.mxu0 %v787
        %v889 = vpop.f32.mrf.mxu0
        %v890 = vadd.f32 0.0, %v889
        %v891 = vpop.f32.mrf.mxu0
        %892 = vdwg.mxu0
        %vm893 = vcmask 1041408
        %v894 = vsel %vm893, %v799, 0.0
        %v895 = vrot.slane %v894, 4
        %v896 = vadd.f32 %v894, %v895
        %v897 = vrot.slane %v896, 2
        %v898 = vadd.f32 %v896, %v897
        %v899 = vrot.slane %v898, 1
        %v900 = vadd.f32 %v898, %v899
        %v901 = vsel %vm893, %v812, 0.0
        %v902 = vrot.slane %v901, 4
        %v903 = vadd.f32 %v901, %v902
        %v904 = vrot.slane %v903, 2
        %v905 = vadd.f32 %v903, %v904
        %v906 = vrot.slane %v905, 1
        %v907 = vadd.f32 %v905, %v906
        %v908 = vsel %vm893, %v825, 0.0
        %v909 = vrot.slane %v908, 4
        %v910 = vadd.f32 %v908, %v909
        %v911 = vrot.slane %v910, 2
        %v912 = vadd.f32 %v910, %v911
        %v913 = vrot.slane %v912, 1
        %v914 = vadd.f32 %v912, %v913
        %v915 = vsel %vm893, %v838, 0.0
        %v916 = vrot.slane %v915, 4
        %v917 = vadd.f32 %v915, %v916
        %v918 = vrot.slane %v917, 2
        %v919 = vadd.f32 %v917, %v918
        %v920 = vrot.slane %v919, 1
        %v921 = vadd.f32 %v919, %v920
        %v922 = vsel %vm893, %v851, 0.0
        %v923 = vrot.slane %v922, 4
        %v924 = vadd.f32 %v922, %v923
        %v925 = vrot.slane %v924, 2
        %v926 = vadd.f32 %v924, %v925
        %v927 = vrot.slane %v926, 1
        %v928 = vadd.f32 %v926, %v927
        %v929 = vsel %vm893, %v864, 0.0
        %v930 = vrot.slane %v929, 4
        %v931 = vadd.f32 %v929, %v930
        %v932 = vrot.slane %v931, 2
        %v933 = vadd.f32 %v931, %v932
        %v934 = vrot.slane %v933, 1
        %v935 = vadd.f32 %v933, %v934
        %v936 = vsel %vm893, %v877, 0.0
        %v937 = vrot.slane %v936, 4
        %v938 = vadd.f32 %v936, %v937
        %v939 = vrot.slane %v938, 2
        %v940 = vadd.f32 %v938, %v939
        %v941 = vrot.slane %v940, 1
        %v942 = vadd.f32 %v940, %v941
        %v943 = vsel %vm893, %v890, 0.0
        %v944 = vrot.slane %v943, 4
        %v945 = vadd.f32 %v943, %v944
        %v946 = vrot.slane %v945, 2
        %v947 = vadd.f32 %v945, %v946
        %v948 = vrot.slane %v947, 1
        %v949 = vadd.f32 %v947, %v948
        %v950 = vrcp.pop 2.0
        %v951 = vmul.f32 2.0, %v950
        %v952 = vsub.f32 1.0, %v951
        %v953 = vmul.f32 %v950, %v952
        %v954 = vadd.f32 %v950, %v953
        %vm955 = vweird.f32 %v950
        %v956 = vsel %vm955, %v950, %v954
        %v957 = vmul.f32 %v900, %v956
        %v958 = vmul.f32 %v907, %v956
        %v959 = vmul.f32 %v914, %v956
        %v960 = vmul.f32 %v921, %v956
        %v961 = vmul.f32 %v928, %v956
        %v962 = vmul.f32 %v935, %v956
        %v963 = vmul.f32 %v942, %v956
        %v964 = vmul.f32 %v949, %v956
        %v965 = vsub.f32 %v799, %v957
        %v966 = vsub.f32 %v812, %v958
        %v967 = vsub.f32 %v825, %v959
        %v968 = vsub.f32 %v838, %v960
        %v969 = vsub.f32 %v851, %v961
        %v970 = vsub.f32 %v864, %v962
        %v971 = vsub.f32 %v877, %v963
        %v972 = vsub.f32 %v890, %v964
        %v973 = vmul.f32 %v965, %v965
        %v974 = vmul.f32 %v966, %v966
        %v975 = vmul.f32 %v967, %v967
        %v976 = vmul.f32 %v968, %v968
        %v977 = vmul.f32 %v969, %v969
        %v978 = vmul.f32 %v970, %v970
        %v979 = vmul.f32 %v971, %v971
        %v980 = vmul.f32 %v972, %v972
        %v981 = vsel %vm893, %v973, 0.0
        %v982 = vrot.slane %v981, 4
        %v983 = vadd.f32 %v981, %v982
        %v984 = vrot.slane %v983, 2
        %v985 = vadd.f32 %v983, %v984
        %v986 = vrot.slane %v985, 1
        %v987 = vadd.f32 %v985, %v986
        %v988 = vsel %vm893, %v974, 0.0
        %v989 = vrot.slane %v988, 4
        %v990 = vadd.f32 %v988, %v989
        %v991 = vrot.slane %v990, 2
        %v992 = vadd.f32 %v990, %v991
        %v993 = vrot.slane %v992, 1
        %v994 = vadd.f32 %v992, %v993
        %v995 = vsel %vm893, %v975, 0.0
        %v996 = vrot.slane %v995, 4
        %v997 = vadd.f32 %v995, %v996
        %v998 = vrot.slane %v997, 2
        %v999 = vadd.f32 %v997, %v998
        %v1000 = vrot.slane %v999, 1
        %v1001 = vadd.f32 %v999, %v1000
        %v1002 = vsel %vm893, %v976, 0.0
        %v1003 = vrot.slane %v1002, 4
        %v1004 = vadd.f32 %v1002, %v1003
        %v1005 = vrot.slane %v1004, 2
        %v1006 = vadd.f32 %v1004, %v1005
        %v1007 = vrot.slane %v1006, 1
        %v1008 = vadd.f32 %v1006, %v1007
        %v1009 = vsel %vm893, %v977, 0.0
        %v1010 = vrot.slane %v1009, 4
        %v1011 = vadd.f32 %v1009, %v1010
        %v1012 = vrot.slane %v1011, 2
        %v1013 = vadd.f32 %v1011, %v1012
        %v1014 = vrot.slane %v1013, 1
        %v1015 = vadd.f32 %v1013, %v1014
        %v1016 = vsel %vm893, %v978, 0.0
        %v1017 = vrot.slane %v1016, 4
        %v1018 = vadd.f32 %v1016, %v1017
        %v1019 = vrot.slane %v1018, 2
        %v1020 = vadd.f32 %v1018, %v1019
        %v1021 = vrot.slane %v1020, 1
        %v1022 = vadd.f32 %v1020, %v1021
        %v1023 = vsel %vm893, %v979, 0.0
        %v1024 = vrot.slane %v1023, 4
        %v1025 = vadd.f32 %v1023, %v1024
        %v1026 = vrot.slane %v1025, 2
        %v1027 = vadd.f32 %v1025, %v1026
        %v1028 = vrot.slane %v1027, 1
        %v1029 = vadd.f32 %v1027, %v1028
        %v1030 = vsel %vm893, %v980, 0.0
        %v1031 = vrot.slane %v1030, 4
        %v1032 = vadd.f32 %v1030, %v1031
        %v1033 = vrot.slane %v1032, 2
        %v1034 = vadd.f32 %v1032, %v1033
        %v1035 = vrot.slane %v1034, 1
        %v1036 = vadd.f32 %v1034, %v1035
        %v1037 = vmul.f32 %v987, %v956
        %v1038 = vmul.f32 %v994, %v956
        %v1039 = vmul.f32 %v1001, %v956
        %v1040 = vmul.f32 %v1008, %v956
        %v1041 = vmul.f32 %v1015, %v956
        %v1042 = vmul.f32 %v1022, %v956
        %v1043 = vmul.f32 %v1029, %v956
        %v1044 = vmul.f32 %v1036, %v956
        %v1045 = vadd.f32 %v1037, 1e-05
        %v1046 = vadd.f32 %v1038, 1e-05
        %v1047 = vadd.f32 %v1039, 1e-05
        %v1048 = vadd.f32 %v1040, 1e-05
        %v1049 = vadd.f32 %v1041, 1e-05
        %v1050 = vadd.f32 %v1042, 1e-05
        %v1051 = vadd.f32 %v1043, 1e-05
        %v1052 = vadd.f32 %v1044, 1e-05
        %v1053 = vrsqrt.pop %v1045
        %v1054 = vmul.f32 %v1053, %v1045
        %v1055 = vmul.f32 %v1054, %v1053
        %v1056 = vmul.f32 0.5, %v1055
        %v1057 = vsub.f32 1.5, %v1056
        %v1058 = vmul.f32 %v1053, %v1057
        %vm1059 = vweird.f32 %v1045
        %vm1060 = vweird.f32 %v1053
        %vm1061 = vmor %vm1059, %vm1060
        %v1062 = vsel %vm1061, %v1053, %v1058
        %v1063 = vrsqrt.pop %v1046
        %v1064 = vmul.f32 %v1063, %v1046
        %v1065 = vmul.f32 %v1064, %v1063
        %v1066 = vmul.f32 0.5, %v1065
        %v1067 = vsub.f32 1.5, %v1066
        %v1068 = vmul.f32 %v1063, %v1067
        %vm1069 = vweird.f32 %v1046
        %vm1070 = vweird.f32 %v1063
        %vm1071 = vmor %vm1069, %vm1070
        %v1072 = vsel %vm1071, %v1063, %v1068
        %v1073 = vrsqrt.pop %v1047
        %v1074 = vmul.f32 %v1073, %v1047
        %v1075 = vmul.f32 %v1074, %v1073
        %v1076 = vmul.f32 0.5, %v1075
        %v1077 = vsub.f32 1.5, %v1076
        %v1078 = vmul.f32 %v1073, %v1077
        %vm1079 = vweird.f32 %v1047
        %vm1080 = vweird.f32 %v1073
        %vm1081 = vmor %vm1079, %vm1080
        %v1082 = vsel %vm1081, %v1073, %v1078
        %v1083 = vrsqrt.pop %v1048
        %v1084 = vmul.f32 %v1083, %v1048
        %v1085 = vmul.f32 %v1084, %v1083
        %v1086 = vmul.f32 0.5, %v1085
        %v1087 = vsub.f32 1.5, %v1086
        %v1088 = vmul.f32 %v1083, %v1087
        %vm1089 = vweird.f32 %v1048
        %vm1090 = vweird.f32 %v1083
        %vm1091 = vmor %vm1089, %vm1090
        %v1092 = vsel %vm1091, %v1083, %v1088
        %v1093 = vrsqrt.pop %v1049
        %v1094 = vmul.f32 %v1093, %v1049
        %v1095 = vmul.f32 %v1094, %v1093
        %v1096 = vmul.f32 0.5, %v1095
        %v1097 = vsub.f32 1.5, %v1096
        %v1098 = vmul.f32 %v1093, %v1097
        %vm1099 = vweird.f32 %v1049
        %vm1100 = vweird.f32 %v1093
        %vm1101 = vmor %vm1099, %vm1100
        %v1102 = vsel %vm1101, %v1093, %v1098
        %v1103 = vrsqrt.pop %v1050
        %v1104 = vmul.f32 %v1103, %v1050
        %v1105 = vmul.f32 %v1104, %v1103
        %v1106 = vmul.f32 0.5, %v1105
        %v1107 = vsub.f32 1.5, %v1106
        %v1108 = vmul.f32 %v1103, %v1107
        %vm1109 = vweird.f32 %v1050
        %vm1110 = vweird.f32 %v1103
        %vm1111 = vmor %vm1109, %vm1110
        %v1112 = vsel %vm1111, %v1103, %v1108
        %v1113 = vrsqrt.pop %v1051
        %v1114 = vmul.f32 %v1113, %v1051
        %v1115 = vmul.f32 %v1114, %v1113
        %v1116 = vmul.f32 0.5, %v1115
        %v1117 = vsub.f32 1.5, %v1116
        %v1118 = vmul.f32 %v1113, %v1117
        %vm1119 = vweird.f32 %v1051
        %vm1120 = vweird.f32 %v1113
        %vm1121 = vmor %vm1119, %vm1120
        %v1122 = vsel %vm1121, %v1113, %v1118
        %v1123 = vrsqrt.pop %v1052
        %v1124 = vmul.f32 %v1123, %v1052
        %v1125 = vmul.f32 %v1124, %v1123
        %v1126 = vmul.f32 0.5, %v1125
        %v1127 = vsub.f32 1.5, %v1126
        %v1128 = vmul.f32 %v1123, %v1127
        %vm1129 = vweird.f32 %v1052
        %vm1130 = vweird.f32 %v1123
        %vm1131 = vmor %vm1129, %vm1130
        %v1132 = vsel %vm1131, %v1123, %v1128
        %v1133 = vmul.f32 %v965, %v1062
        %v1134 = vmul.f32 %v966, %v1072
        %v1135 = vmul.f32 %v967, %v1082
        %v1136 = vmul.f32 %v968, %v1092
        %v1137 = vmul.f32 %v969, %v1102
        %v1138 = vmul.f32 %v970, %v1112
        %v1139 = vmul.f32 %v971, %v1122
        %v1140 = vmul.f32 %v972, %v1132
        %v1141 = vld [vmem:[#allocation6] sm:$0xff]
        %v1143 = vperm.slane %v1141, 0
        %v1144 = vperm.slane %v1141, 1
        %v1145 = vperm.slane %v1141, 2
        %v1146 = vperm.slane %v1141, 3
        %v1147 = vperm.slane %v1141, 4
        %v1148 = vperm.slane %v1141, 5
        %v1149 = vperm.slane %v1141, 6
        %v1150 = vperm.slane %v1141, 7
        %v1159 = vmul.f32 %v1133, %v1143
        %v1160 = vmul.f32 %v1134, %v1144
        %v1161 = vmul.f32 %v1135, %v1145
        %v1162 = vmul.f32 %v1136, %v1146
        %v1163 = vmul.f32 %v1137, %v1147
        %v1164 = vmul.f32 %v1138, %v1148
        %v1165 = vmul.f32 %v1139, %v1149
        %v1166 = vmul.f32 %v1140, %v1150
        %v1167 = vld [vmem:[#allocation7] sm:$0xff]
        %v1169 = vperm.slane %v1167, 0
        %v1170 = vperm.slane %v1167, 1
        %v1171 = vperm.slane %v1167, 2
        %v1172 = vperm.slane %v1167, 3
        %v1173 = vperm.slane %v1167, 4
        %v1174 = vperm.slane %v1167, 5
        %v1175 = vperm.slane %v1167, 6
        %v1176 = vperm.slane %v1167, 7
        %v1185 = vadd.f32 %v1159, %v1169
        %v1186 = vadd.f32 %v1160, %v1170
        %v1187 = vadd.f32 %v1161, %v1171
        %v1188 = vadd.f32 %v1162, %v1172
        %v1189 = vadd.f32 %v1163, %v1173
        %v1190 = vadd.f32 %v1164, %v1174
        %v1191 = vadd.f32 %v1165, %v1175
        %v1192 = vadd.f32 %v1166, %v1176
        %v1193 = vmax.f32 %v1185, 0.0
        %v1194 = vmax.f32 %v1186, 0.0
        %v1195 = vmax.f32 %v1187, 0.0
        %v1196 = vmax.f32 %v1188, 0.0
        %v1197 = vmax.f32 %v1189, 0.0
        %v1198 = vmax.f32 %v1190, 0.0
        %v1199 = vmax.f32 %v1191, 0.0
        %v1200 = vmax.f32 %v1192, 0.0
        %v1202 = vrot.slane %v1194, 6
        %v1205 = vrot.slane %v1195, 4
        %v1208 = vrot.slane %v1196, 2
        %v1211 = vrot.slane %v1198, 6
        %v1214 = vrot.slane %v1199, 4
        %v1217 = vrot.slane %v1200, 2
        %v1219 = vsel %vm893, %v1193, %v1202
        %vm1220 = vcmask 1043456
        %v1221 = vsel %vm1220, %v1219, %v1205
        %vm1222 = vcmask 1045504
        %v1223 = vsel %vm1222, %v1221, %v1208
        %v1224 = vsel %vm893, %v1197, %v1211
        %v1225 = vsel %vm1220, %v1224, %v1214
        %v1226 = vsel %vm1222, %v1225, %v1217
        %v1227 = vmax.f32 %v1223, 0.0
        %v1228 = vmax.f32 %v1226, 0.0
        %v1229 = vpack.c.bf16 %v1227, %v1227
        %v1230 = vpack.c.bf16 %v1228, %v1228
        %v1233 = vunpack.c.l.b16 %v1229
        %v1234 = vunpack.c.l.b16 %v1230
        %v1235 = vpack.c.b16 %v1234, %v1233
        %v1236 = vrot.slane %v1235, 7
        %vm1237 = vcmask 1040384
        %v1240 = vsel %vm1237, 0, %v1236
        %v1242 = vrot.slane %v1235, 1
        %vm1243 = vcmask 1046528
        %v1245 = vsel %vm1243, %v1242, 0
        %v1247 = vld [vmem:[#allocation10] sm:$0x1]
        %v1248 = vld [vmem:[#allocation9] sm:$0xf]
        %v1249 = vld [vmem:[#allocation9 + $0x4] sm:$0xf]
        %v1250 = vld [vmem:[#allocation9 + $0x8] sm:$0xf]
        %v1251 = vld [vmem:[#allocation9 + $0xc] sm:$0xf]
        %v1252 = vld [vmem:[#allocation9 + $0x10] sm:$0xf]
        %v1253 = vld [vmem:[#allocation9 + $0x14] sm:$0xf]
        %v1254 = vld [vmem:[#allocation9 + $0x18] sm:$0xf]
        %v1255 = vld [vmem:[#allocation9 + $0x1c] sm:$0xf]
        %v1256 = vld [vmem:[#allocation9 + $0x20] sm:$0xf]
        %v1257 = vld [vmem:[#allocation9 + $0x24] sm:$0xf]
        %v1258 = vld [vmem:[#allocation9 + $0x28] sm:$0xf]
        %v1259 = vld [vmem:[#allocation9 + $0x2c] sm:$0xf]
        %v1260 = vld [vmem:[#allocation9 + $0x30] sm:$0xf]
        %v1261 = vld [vmem:[#allocation9 + $0x34] sm:$0xf]
        %v1262 = vld [vmem:[#allocation9 + $0x38] sm:$0xf]
        %v1263 = vld [vmem:[#allocation9 + $0x3c] sm:$0xf]
        %v1280 = vunpack.c.l.b16 %v1248
        %v1281 = vunpack.c.l.b16 %v1249
        %v1282 = vunpack.c.l.b16 %v1250
        %v1283 = vunpack.c.l.b16 %v1251
        %v1284 = vunpack.c.l.b16 %v1252
        %v1285 = vunpack.c.l.b16 %v1253
        %v1286 = vunpack.c.l.b16 %v1254
        %v1287 = vunpack.c.l.b16 %v1255
        %v1288 = vunpack.c.l.b16 %v1256
        %v1289 = vunpack.c.l.b16 %v1257
        %v1290 = vunpack.c.l.b16 %v1258
        %v1291 = vunpack.c.l.b16 %v1259
        %v1292 = vunpack.c.l.b16 %v1260
        %v1293 = vunpack.c.l.b16 %v1261
        %v1294 = vunpack.c.l.b16 %v1262
        %v1295 = vunpack.c.l.b16 %v1263
        %v1296 = vpack.c.b16 %v1281, %v1280
        %v1297 = vpack.c.b16 %v1283, %v1282
        %v1298 = vpack.c.b16 %v1285, %v1284
        %v1299 = vpack.c.b16 %v1287, %v1286
        %v1300 = vpack.c.b16 %v1289, %v1288
        %v1301 = vpack.c.b16 %v1291, %v1290
        %v1302 = vpack.c.b16 %v1293, %v1292
        %v1303 = vpack.c.b16 %v1295, %v1294
        %1312 = vmatpush.bf16.msra.mxu0 %v1303
        %1313 = vmatpush.bf16.msra.mxu0 %v1302
        %1314 = vmatpush.bf16.msra.mxu0 %v1301
        %1315 = vmatpush.bf16.msra.mxu0 %v1300
        %1316 = vmatpush.bf16.msra.mxu0 %v1299
        %1317 = vmatpush.bf16.msra.mxu0 %v1298
        %1318 = vmatpush.bf16.msra.mxu0 %v1297
        %1319 = vmatpush.bf16.msra.mxu0 %v1296
        %1320 = vmatmul.bf16.gmra.mxu0 %v1240
        %v1321 = vpop.f32.mrf.mxu0
        %v1322 = vadd.f32 0.0, %v1321
        %v1323 = vpop.f32.mrf.mxu0
        %v1324 = vadd.f32 0.0, %v1323
        %1325 = vdwg.mxu0
        %v1327 = vperm.slane %v1247, 0
        %v1329 = vadd.f32 %v1327, %v1322
        %v1330 = vadd.f32 %v1327, %v1324
        %s1331 = scalar_lea.vmem [#allocation9], 64
        %v1332 = vld [vmem:[%s1331] sm:$0xf]
        %v1333 = vld [vmem:[%s1331 + $0x4] sm:$0xf]
        %v1334 = vld [vmem:[%s1331 + $0x8] sm:$0xf]
        %v1335 = vld [vmem:[%s1331 + $0xc] sm:$0xf]
        %v1336 = vld [vmem:[%s1331 + $0x10] sm:$0xf]
        %v1337 = vld [vmem:[%s1331 + $0x14] sm:$0xf]
        %v1338 = vld [vmem:[%s1331 + $0x18] sm:$0xf]
        %v1339 = vld [vmem:[%s1331 + $0x1c] sm:$0xf]
        %v1340 = vld [vmem:[%s1331 + $0x20] sm:$0xf]
        %v1341 = vld [vmem:[%s1331 + $0x24] sm:$0xf]
        %v1342 = vld [vmem:[%s1331 + $0x28] sm:$0xf]
        %v1343 = vld [vmem:[%s1331 + $0x2c] sm:$0xf]
        %v1344 = vld [vmem:[%s1331 + $0x30] sm:$0xf]
        %v1345 = vld [vmem:[%s1331 + $0x34] sm:$0xf]
        %v1346 = vld [vmem:[%s1331 + $0x38] sm:$0xf]
        %v1347 = vld [vmem:[%s1331 + $0x3c] sm:$0xf]
        %v1365 = vunpack.c.l.b16 %v1332
        %v1366 = vunpack.c.l.b16 %v1333
        %v1367 = vunpack.c.l.b16 %v1334
        %v1368 = vunpack.c.l.b16 %v1335
        %v1369 = vunpack.c.l.b16 %v1336
        %v1370 = vunpack.c.l.b16 %v1337
        %v1371 = vunpack.c.l.b16 %v1338
        %v1372 = vunpack.c.l.b16 %v1339
        %v1373 = vunpack.c.l.b16 %v1340
        %v1374 = vunpack.c.l.b16 %v1341
        %v1375 = vunpack.c.l.b16 %v1342
        %v1376 = vunpack.c.l.b16 %v1343
        %v1377 = vunpack.c.l.b16 %v1344
        %v1378 = vunpack.c.l.b16 %v1345
        %v1379 = vunpack.c.l.b16 %v1346
        %v1380 = vunpack.c.l.b16 %v1347
        %v1381 = vpack.c.b16 %v1366, %v1365
        %v1382 = vpack.c.b16 %v1368, %v1367
        %v1383 = vpack.c.b16 %v1370, %v1369
        %v1384 = vpack.c.b16 %v1372, %v1371
        %v1385 = vpack.c.b16 %v1374, %v1373
        %v1386 = vpack.c.b16 %v1376, %v1375
        %v1387 = vpack.c.b16 %v1378, %v1377
        %v1388 = vpack.c.b16 %v1380, %v1379
        %1397 = vmatpush.bf16.msra.mxu0 %v1388
        %1398 = vmatpush.bf16.msra.mxu0 %v1387
        %1399 = vmatpush.bf16.msra.mxu0 %v1386
        %1400 = vmatpush.bf16.msra.mxu0 %v1385
        %1401 = vmatpush.bf16.msra.mxu0 %v1384
        %1402 = vmatpush.bf16.msra.mxu0 %v1383
        %1403 = vmatpush.bf16.msra.mxu0 %v1382
        %1404 = vmatpush.bf16.msra.mxu0 %v1381
        %1405 = vmatmul.bf16.gmra.mxu0 %v1235
        %v1406 = vpop.f32.mrf.mxu0
        %v1407 = vadd.f32 0.0, %v1406
        %v1408 = vpop.f32.mrf.mxu0
        %v1409 = vadd.f32 0.0, %v1408
        %1410 = vdwg.mxu0
        %v1411 = vadd.f32 %v1329, %v1407
        %v1412 = vadd.f32 %v1330, %v1409
        %s1413 = scalar_lea.vmem [#allocation9], 128
        %v1414 = vld [vmem:[%s1413] sm:$0xf]
        %v1415 = vld [vmem:[%s1413 + $0x4] sm:$0xf]
        %v1416 = vld [vmem:[%s1413 + $0x8] sm:$0xf]
        %v1417 = vld [vmem:[%s1413 + $0xc] sm:$0xf]
        %v1418 = vld [vmem:[%s1413 + $0x10] sm:$0xf]
        %v1419 = vld [vmem:[%s1413 + $0x14] sm:$0xf]
        %v1420 = vld [vmem:[%s1413 + $0x18] sm:$0xf]
        %v1421 = vld [vmem:[%s1413 + $0x1c] sm:$0xf]
        %v1422 = vld [vmem:[%s1413 + $0x20] sm:$0xf]
        %v1423 = vld [vmem:[%s1413 + $0x24] sm:$0xf]
        %v1424 = vld [vmem:[%s1413 + $0x28] sm:$0xf]
        %v1425 = vld [vmem:[%s1413 + $0x2c] sm:$0xf]
        %v1426 = vld [vmem:[%s1413 + $0x30] sm:$0xf]
        %v1427 = vld [vmem:[%s1413 + $0x34] sm:$0xf]
        %v1428 = vld [vmem:[%s1413 + $0x38] sm:$0xf]
        %v1429 = vld [vmem:[%s1413 + $0x3c] sm:$0xf]
        %v1446 = vunpack.c.l.b16 %v1414
        %v1447 = vunpack.c.l.b16 %v1415
        %v1448 = vunpack.c.l.b16 %v1416
        %v1449 = vunpack.c.l.b16 %v1417
        %v1450 = vunpack.c.l.b16 %v1418
        %v1451 = vunpack.c.l.b16 %v1419
        %v1452 = vunpack.c.l.b16 %v1420
        %v1453 = vunpack.c.l.b16 %v1421
        %v1454 = vunpack.c.l.b16 %v1422
        %v1455 = vunpack.c.l.b16 %v1423
        %v1456 = vunpack.c.l.b16 %v1424
        %v1457 = vunpack.c.l.b16 %v1425
        %v1458 = vunpack.c.l.b16 %v1426
        %v1459 = vunpack.c.l.b16 %v1427
        %v1460 = vunpack.c.l.b16 %v1428
        %v1461 = vunpack.c.l.b16 %v1429
        %v1462 = vpack.c.b16 %v1447, %v1446
        %v1463 = vpack.c.b16 %v1449, %v1448
        %v1464 = vpack.c.b16 %v1451, %v1450
        %v1465 = vpack.c.b16 %v1453, %v1452
        %v1466 = vpack.c.b16 %v1455, %v1454
        %v1467 = vpack.c.b16 %v1457, %v1456
        %v1468 = vpack.c.b16 %v1459, %v1458
        %v1469 = vpack.c.b16 %v1461, %v1460
        %1478 = vmatpush.bf16.msra.mxu0 %v1469
        %1479 = vmatpush.bf16.msra.mxu0 %v1468
        %1480 = vmatpush.bf16.msra.mxu0 %v1467
        %1481 = vmatpush.bf16.msra.mxu0 %v1466
        %1482 = vmatpush.bf16.msra.mxu0 %v1465
        %1483 = vmatpush.bf16.msra.mxu0 %v1464
        %1484 = vmatpush.bf16.msra.mxu0 %v1463
        %1485 = vmatpush.bf16.msra.mxu0 %v1462
        %1486 = vmatmul.bf16.gmra.mxu0 %v1245
        %v1487 = vpop.f32.mrf.mxu0
        %v1488 = vadd.f32 0.0, %v1487
        %v1489 = vpop.f32.mrf.mxu0
        %v1490 = vadd.f32 0.0, %v1489
        %1491 = vdwg.mxu0
        %v1492 = vadd.f32 %v1411, %v1488
        %v1493 = vadd.f32 %v1412, %v1490
        %v1494 = vmax.f32 %v1492, 0.0
        %v1495 = vmax.f32 %v1493, 0.0
        %v1496 = vpack.c.bf16 %v1495, %v1494
        %v1497 = vld [vmem:[#allocation12] sm:$0xf]
        %v1498 = vld [vmem:[#allocation12 + $0x4] sm:$0xf]
        %v1499 = vld [vmem:[#allocation12 + $0x8] sm:$0xf]
        %v1500 = vld [vmem:[#allocation12 + $0xc] sm:$0xf]
        %v1501 = vld [vmem:[#allocation12 + $0x10] sm:$0xf]
        %v1502 = vld [vmem:[#allocation12 + $0x14] sm:$0xf]
        %v1503 = vld [vmem:[#allocation12 + $0x18] sm:$0xf]
        %v1504 = vld [vmem:[#allocation12 + $0x1c] sm:$0xf]
        %v1505 = vld [vmem:[#allocation12 + $0x20] sm:$0xf]
        %v1506 = vld [vmem:[#allocation12 + $0x24] sm:$0xf]
        %v1507 = vld [vmem:[#allocation12 + $0x28] sm:$0xf]
        %v1508 = vld [vmem:[#allocation12 + $0x2c] sm:$0xf]
        %v1509 = vld [vmem:[#allocation12 + $0x30] sm:$0xf]
        %v1510 = vld [vmem:[#allocation12 + $0x34] sm:$0xf]
        %v1511 = vld [vmem:[#allocation12 + $0x38] sm:$0xf]
        %v1512 = vld [vmem:[#allocation12 + $0x3c] sm:$0xf]
        %v1513 = vld [vmem:[#allocation13] sm:$0x1]
        %v1515 = vperm.slane %v1513, 0
        %v1533 = vunpack.c.l.b16 %v1497
        %v1534 = vunpack.c.l.b16 %v1498
        %v1535 = vunpack.c.l.b16 %v1499
        %v1536 = vunpack.c.l.b16 %v1500
        %v1537 = vunpack.c.l.b16 %v1501
        %v1538 = vunpack.c.l.b16 %v1502
        %v1539 = vunpack.c.l.b16 %v1503
        %v1540 = vunpack.c.l.b16 %v1504
        %v1541 = vunpack.c.l.b16 %v1505
        %v1542 = vunpack.c.l.b16 %v1506
        %v1543 = vunpack.c.l.b16 %v1507
        %v1544 = vunpack.c.l.b16 %v1508
        %v1545 = vunpack.c.l.b16 %v1509
        %v1546 = vunpack.c.l.b16 %v1510
        %v1547 = vunpack.c.l.b16 %v1511
        %v1548 = vunpack.c.l.b16 %v1512
        %v1549 = vpack.c.b16 %v1534, %v1533
        %v1550 = vpack.c.b16 %v1536, %v1535
        %v1551 = vpack.c.b16 %v1538, %v1537
        %v1552 = vpack.c.b16 %v1540, %v1539
        %v1553 = vpack.c.b16 %v1542, %v1541
        %v1554 = vpack.c.b16 %v1544, %v1543
        %v1555 = vpack.c.b16 %v1546, %v1545
        %v1556 = vpack.c.b16 %v1548, %v1547
        %1565 = vmatpush.bf16.msra.mxu0 %v1556
        %1566 = vmatpush.bf16.msra.mxu0 %v1555
        %1567 = vmatpush.bf16.msra.mxu0 %v1554
        %1568 = vmatpush.bf16.msra.mxu0 %v1553
        %1569 = vmatpush.bf16.msra.mxu0 %v1552
        %1570 = vmatpush.bf16.msra.mxu0 %v1551
        %1571 = vmatpush.bf16.msra.mxu0 %v1550
        %1572 = vmatpush.bf16.msra.mxu0 %v1549
        %1573 = vmatmul.bf16.gmra.mxu0 %v1496
        %v1574 = vpop.f32.mrf.mxu0
        %v1575 = vadd.f32 %v1515, %v1574
        %v1576 = vpop.f32.mrf.mxu0
        %v1577 = vadd.f32 %v1515, %v1576
        %1578 = vdwg.mxu0
        %v1579 = vadd.f32 %v1223, %v1575
        %v1580 = vadd.f32 %v1226, %v1577
        %v1581 = vmax.f32 %v1579, 0.0
        %v1582 = vmax.f32 %v1580, 0.0
        %v1583 = vpack.c.bf16 %v1581, %v1581
        %v1584 = vpack.c.bf16 %v1582, %v1582
        %v1587 = vunpack.c.l.b16 %v1583
        %v1588 = vunpack.c.l.b16 %v1584
        %v1589 = vpack.c.b16 %v1588, %v1587
        %v1590 = vrot.slane %v1589, 7
        %v1592 = vsel %vm1237, 0, %v1590
        %v1594 = vrot.slane %v1589, 1
        %v1596 = vsel %vm1243, %v1594, 0
        %v1598 = vld [vmem:[#allocation16] sm:$0x1]
        %v1599 = vld [vmem:[#allocation15] sm:$0xf]
        %v1600 = vld [vmem:[#allocation15 + $0x4] sm:$0xf]
        %v1601 = vld [vmem:[#allocation15 + $0x8] sm:$0xf]
        %v1602 = vld [vmem:[#allocation15 + $0xc] sm:$0xf]
        %v1603 = vld [vmem:[#allocation15 + $0x10] sm:$0xf]
        %v1604 = vld [vmem:[#allocation15 + $0x14] sm:$0xf]
        %v1605 = vld [vmem:[#allocation15 + $0x18] sm:$0xf]
        %v1606 = vld [vmem:[#allocation15 + $0x1c] sm:$0xf]
        %v1607 = vld [vmem:[#allocation15 + $0x20] sm:$0xf]
        %v1608 = vld [vmem:[#allocation15 + $0x24] sm:$0xf]
        %v1609 = vld [vmem:[#allocation15 + $0x28] sm:$0xf]
        %v1610 = vld [vmem:[#allocation15 + $0x2c] sm:$0xf]
        %v1611 = vld [vmem:[#allocation15 + $0x30] sm:$0xf]
        %v1612 = vld [vmem:[#allocation15 + $0x34] sm:$0xf]
        %v1613 = vld [vmem:[#allocation15 + $0x38] sm:$0xf]
        %v1614 = vld [vmem:[#allocation15 + $0x3c] sm:$0xf]
        %v1631 = vunpack.c.l.b16 %v1599
        %v1632 = vunpack.c.l.b16 %v1600
        %v1633 = vunpack.c.l.b16 %v1601
        %v1634 = vunpack.c.l.b16 %v1602
        %v1635 = vunpack.c.l.b16 %v1603
        %v1636 = vunpack.c.l.b16 %v1604
        %v1637 = vunpack.c.l.b16 %v1605
        %v1638 = vunpack.c.l.b16 %v1606
        %v1639 = vunpack.c.l.b16 %v1607
        %v1640 = vunpack.c.l.b16 %v1608
        %v1641 = vunpack.c.l.b16 %v1609
        %v1642 = vunpack.c.l.b16 %v1610
        %v1643 = vunpack.c.l.b16 %v1611
        %v1644 = vunpack.c.l.b16 %v1612
        %v1645 = vunpack.c.l.b16 %v1613
        %v1646 = vunpack.c.l.b16 %v1614
        %v1647 = vpack.c.b16 %v1632, %v1631
        %v1648 = vpack.c.b16 %v1634, %v1633
        %v1649 = vpack.c.b16 %v1636, %v1635
        %v1650 = vpack.c.b16 %v1638, %v1637
        %v1651 = vpack.c.b16 %v1640, %v1639
        %v1652 = vpack.c.b16 %v1642, %v1641
        %v1653 = vpack.c.b16 %v1644, %v1643
        %v1654 = vpack.c.b16 %v1646, %v1645
        %1663 = vmatpush.bf16.msra.mxu0 %v1654
        %1664 = vmatpush.bf16.msra.mxu0 %v1653
        %1665 = vmatpush.bf16.msra.mxu0 %v1652
        %1666 = vmatpush.bf16.msra.mxu0 %v1651
        %1667 = vmatpush.bf16.msra.mxu0 %v1650
        %1668 = vmatpush.bf16.msra.mxu0 %v1649
        %1669 = vmatpush.bf16.msra.mxu0 %v1648
        %1670 = vmatpush.bf16.msra.mxu0 %v1647
        %1671 = vmatmul.bf16.gmra.mxu0 %v1592
        %v1672 = vpop.f32.mrf.mxu0
        %v1673 = vadd.f32 0.0, %v1672
        %v1674 = vpop.f32.mrf.mxu0
        %v1675 = vadd.f32 0.0, %v1674
        %1676 = vdwg.mxu0
        %v1678 = vperm.slane %v1598, 0
        %v1680 = vadd.f32 %v1678, %v1673
        %v1681 = vadd.f32 %v1678, %v1675
        %s1682 = scalar_lea.vmem [#allocation15], 64
        %v1683 = vld [vmem:[%s1682] sm:$0xf]
        %v1684 = vld [vmem:[%s1682 + $0x4] sm:$0xf]
        %v1685 = vld [vmem:[%s1682 + $0x8] sm:$0xf]
        %v1686 = vld [vmem:[%s1682 + $0xc] sm:$0xf]
        %v1687 = vld [vmem:[%s1682 + $0x10] sm:$0xf]
        %v1688 = vld [vmem:[%s1682 + $0x14] sm:$0xf]
        %v1689 = vld [vmem:[%s1682 + $0x18] sm:$0xf]
        %v1690 = vld [vmem:[%s1682 + $0x1c] sm:$0xf]
        %v1691 = vld [vmem:[%s1682 + $0x20] sm:$0xf]
        %v1692 = vld [vmem:[%s1682 + $0x24] sm:$0xf]
        %v1693 = vld [vmem:[%s1682 + $0x28] sm:$0xf]
        %v1694 = vld [vmem:[%s1682 + $0x2c] sm:$0xf]
        %v1695 = vld [vmem:[%s1682 + $0x30] sm:$0xf]
        %v1696 = vld [vmem:[%s1682 + $0x34] sm:$0xf]
        %v1697 = vld [vmem:[%s1682 + $0x38] sm:$0xf]
        %v1698 = vld [vmem:[%s1682 + $0x3c] sm:$0xf]
        %v1716 = vunpack.c.l.b16 %v1683
        %v1717 = vunpack.c.l.b16 %v1684
        %v1718 = vunpack.c.l.b16 %v1685
        %v1719 = vunpack.c.l.b16 %v1686
        %v1720 = vunpack.c.l.b16 %v1687
        %v1721 = vunpack.c.l.b16 %v1688
        %v1722 = vunpack.c.l.b16 %v1689
        %v1723 = vunpack.c.l.b16 %v1690
        %v1724 = vunpack.c.l.b16 %v1691
        %v1725 = vunpack.c.l.b16 %v1692
        %v1726 = vunpack.c.l.b16 %v1693
        %v1727 = vunpack.c.l.b16 %v1694
        %v1728 = vunpack.c.l.b16 %v1695
        %v1729 = vunpack.c.l.b16 %v1696
        %v1730 = vunpack.c.l.b16 %v1697
        %v1731 = vunpack.c.l.b16 %v1698
        %v1732 = vpack.c.b16 %v1717, %v1716
        %v1733 = vpack.c.b16 %v1719, %v1718
        %v1734 = vpack.c.b16 %v1721, %v1720
        %v1735 = vpack.c.b16 %v1723, %v1722
        %v1736 = vpack.c.b16 %v1725, %v1724
        %v1737 = vpack.c.b16 %v1727, %v1726
        %v1738 = vpack.c.b16 %v1729, %v1728
        %v1739 = vpack.c.b16 %v1731, %v1730
        %1748 = vmatpush.bf16.msra.mxu0 %v1739
        %1749 = vmatpush.bf16.msra.mxu0 %v1738
        %1750 = vmatpush.bf16.msra.mxu0 %v1737
        %1751 = vmatpush.bf16.msra.mxu0 %v1736
        %1752 = vmatpush.bf16.msra.mxu0 %v1735
        %1753 = vmatpush.bf16.msra.mxu0 %v1734
        %1754 = vmatpush.bf16.msra.mxu0 %v1733
        %1755 = vmatpush.bf16.msra.mxu0 %v1732
        %1756 = vmatmul.bf16.gmra.mxu0 %v1589
        %v1757 = vpop.f32.mrf.mxu0
        %v1758 = vadd.f32 0.0, %v1757
        %v1759 = vpop.f32.mrf.mxu0
        %v1760 = vadd.f32 0.0, %v1759
        %1761 = vdwg.mxu0
        %v1762 = vadd.f32 %v1680, %v1758
        %v1763 = vadd.f32 %v1681, %v1760
        %s1764 = scalar_lea.vmem [#allocation15], 128
        %v1765 = vld [vmem:[%s1764] sm:$0xf]
        %v1766 = vld [vmem:[%s1764 + $0x4] sm:$0xf]
        %v1767 = vld [vmem:[%s1764 + $0x8] sm:$0xf]
        %v1768 = vld [vmem:[%s1764 + $0xc] sm:$0xf]
        %v1769 = vld [vmem:[%s1764 + $0x10] sm:$0xf]
        %v1770 = vld [vmem:[%s1764 + $0x14] sm:$0xf]
        %v1771 = vld [vmem:[%s1764 + $0x18] sm:$0xf]
        %v1772 = vld [vmem:[%s1764 + $0x1c] sm:$0xf]
        %v1773 = vld [vmem:[%s1764 + $0x20] sm:$0xf]
        %v1774 = vld [vmem:[%s1764 + $0x24] sm:$0xf]
        %v1775 = vld [vmem:[%s1764 + $0x28] sm:$0xf]
        %v1776 = vld [vmem:[%s1764 + $0x2c] sm:$0xf]
        %v1777 = vld [vmem:[%s1764 + $0x30] sm:$0xf]
        %v1778 = vld [vmem:[%s1764 + $0x34] sm:$0xf]
        %v1779 = vld [vmem:[%s1764 + $0x38] sm:$0xf]
        %v1780 = vld [vmem:[%s1764 + $0x3c] sm:$0xf]
        %v1797 = vunpack.c.l.b16 %v1765
        %v1798 = vunpack.c.l.b16 %v1766
        %v1799 = vunpack.c.l.b16 %v1767
        %v1800 = vunpack.c.l.b16 %v1768
        %v1801 = vunpack.c.l.b16 %v1769
        %v1802 = vunpack.c.l.b16 %v1770
        %v1803 = vunpack.c.l.b16 %v1771
        %v1804 = vunpack.c.l.b16 %v1772
        %v1805 = vunpack.c.l.b16 %v1773
        %v1806 = vunpack.c.l.b16 %v1774
        %v1807 = vunpack.c.l.b16 %v1775
        %v1808 = vunpack.c.l.b16 %v1776
        %v1809 = vunpack.c.l.b16 %v1777
        %v1810 = vunpack.c.l.b16 %v1778
        %v1811 = vunpack.c.l.b16 %v1779
        %v1812 = vunpack.c.l.b16 %v1780
        %v1813 = vpack.c.b16 %v1798, %v1797
        %v1814 = vpack.c.b16 %v1800, %v1799
        %v1815 = vpack.c.b16 %v1802, %v1801
        %v1816 = vpack.c.b16 %v1804, %v1803
        %v1817 = vpack.c.b16 %v1806, %v1805
        %v1818 = vpack.c.b16 %v1808, %v1807
        %v1819 = vpack.c.b16 %v1810, %v1809
        %v1820 = vpack.c.b16 %v1812, %v1811
        %1829 = vmatpush.bf16.msra.mxu0 %v1820
        %1830 = vmatpush.bf16.msra.mxu0 %v1819
        %1831 = vmatpush.bf16.msra.mxu0 %v1818
        %1832 = vmatpush.bf16.msra.mxu0 %v1817
        %1833 = vmatpush.bf16.msra.mxu0 %v1816
        %1834 = vmatpush.bf16.msra.mxu0 %v1815
        %1835 = vmatpush.bf16.msra.mxu0 %v1814
        %1836 = vmatpush.bf16.msra.mxu0 %v1813
        %1837 = vmatmul.bf16.gmra.mxu0 %v1596
        %v1838 = vpop.f32.mrf.mxu0
        %v1839 = vadd.f32 0.0, %v1838
        %v1840 = vpop.f32.mrf.mxu0
        %v1841 = vadd.f32 0.0, %v1840
        %1842 = vdwg.mxu0
        %v1843 = vadd.f32 %v1762, %v1839
        %v1844 = vadd.f32 %v1763, %v1841
        %v1845 = vmax.f32 %v1843, 0.0
        %v1846 = vmax.f32 %v1844, 0.0
        %v1847 = vpack.c.bf16 %v1846, %v1845
        %v1848 = vld [vmem:[#allocation18] sm:$0xf]
        %v1849 = vld [vmem:[#allocation18 + $0x4] sm:$0xf]
        %v1850 = vld [vmem:[#allocation18 + $0x8] sm:$0xf]
        %v1851 = vld [vmem:[#allocation18 + $0xc] sm:$0xf]
        %v1852 = vld [vmem:[#allocation18 + $0x10] sm:$0xf]
        %v1853 = vld [vmem:[#allocation18 + $0x14] sm:$0xf]
        %v1854 = vld [vmem:[#allocation18 + $0x18] sm:$0xf]
        %v1855 = vld [vmem:[#allocation18 + $0x1c] sm:$0xf]
        %v1856 = vld [vmem:[#allocation18 + $0x20] sm:$0xf]
        %v1857 = vld [vmem:[#allocation18 + $0x24] sm:$0xf]
        %v1858 = vld [vmem:[#allocation18 + $0x28] sm:$0xf]
        %v1859 = vld [vmem:[#allocation18 + $0x2c] sm:$0xf]
        %v1860 = vld [vmem:[#allocation18 + $0x30] sm:$0xf]
        %v1861 = vld [vmem:[#allocation18 + $0x34] sm:$0xf]
        %v1862 = vld [vmem:[#allocation18 + $0x38] sm:$0xf]
        %v1863 = vld [vmem:[#allocation18 + $0x3c] sm:$0xf]
        %v1864 = vld [vmem:[#allocation19] sm:$0x1]
        %v1866 = vperm.slane %v1864, 0
        %v1884 = vunpack.c.l.b16 %v1848
        %v1885 = vunpack.c.l.b16 %v1849
        %v1886 = vunpack.c.l.b16 %v1850
        %v1887 = vunpack.c.l.b16 %v1851
        %v1888 = vunpack.c.l.b16 %v1852
        %v1889 = vunpack.c.l.b16 %v1853
        %v1890 = vunpack.c.l.b16 %v1854
        %v1891 = vunpack.c.l.b16 %v1855
        %v1892 = vunpack.c.l.b16 %v1856
        %v1893 = vunpack.c.l.b16 %v1857
        %v1894 = vunpack.c.l.b16 %v1858
        %v1895 = vunpack.c.l.b16 %v1859
        %v1896 = vunpack.c.l.b16 %v1860
        %v1897 = vunpack.c.l.b16 %v1861
        %v1898 = vunpack.c.l.b16 %v1862
        %v1899 = vunpack.c.l.b16 %v1863
        %v1900 = vpack.c.b16 %v1885, %v1884
        %v1901 = vpack.c.b16 %v1887, %v1886
        %v1902 = vpack.c.b16 %v1889, %v1888
        %v1903 = vpack.c.b16 %v1891, %v1890
        %v1904 = vpack.c.b16 %v1893, %v1892
        %v1905 = vpack.c.b16 %v1895, %v1894
        %v1906 = vpack.c.b16 %v1897, %v1896
        %v1907 = vpack.c.b16 %v1899, %v1898
        %1916 = vmatpush.bf16.msra.mxu0 %v1907
        %1917 = vmatpush.bf16.msra.mxu0 %v1906
        %1918 = vmatpush.bf16.msra.mxu0 %v1905
        %1919 = vmatpush.bf16.msra.mxu0 %v1904
        %1920 = vmatpush.bf16.msra.mxu0 %v1903
        %1921 = vmatpush.bf16.msra.mxu0 %v1902
        %1922 = vmatpush.bf16.msra.mxu0 %v1901
        %1923 = vmatpush.bf16.msra.mxu0 %v1900
        %1924 = vmatmul.bf16.gmra.mxu0 %v1847
        %v1925 = vpop.f32.mrf.mxu0
        %v1926 = vadd.f32 %v1866, %v1925
        %v1927 = vpop.f32.mrf.mxu0
        %v1928 = vadd.f32 %v1866, %v1927
        %1929 = vdwg.mxu0
        %v1930 = vadd.f32 %v1579, %v1926
        %v1931 = vadd.f32 %v1580, %v1928
        %v1932 = vmax.f32 %v1930, 0.0
        %v1933 = vmax.f32 %v1931, 0.0
        %v1934 = vpack.c.bf16 %v1932, %v1932
        %v1935 = vpack.c.bf16 %v1933, %v1933
        %v1936 = vld [vmem:[%s630] sm:$0xff]
        %v1937 = vld [vmem:[%s630 + $0x8] sm:$0xff]
        %v1938 = vld [vmem:[%s630 + $0x10] sm:$0xff]
        %v1939 = vld [vmem:[%s630 + $0x18] sm:$0xff]
        %v1940 = vld [vmem:[%s630 + $0x20] sm:$0xff]
        %v1941 = vld [vmem:[%s630 + $0x28] sm:$0xff]
        %v1942 = vld [vmem:[%s630 + $0x30] sm:$0xff]
        %v1943 = vld [vmem:[%s630 + $0x38] sm:$0xff]
        %v1944 = vld [vmem:[%s630 + $0x40] sm:$0xff]
        %v1945 = vld [vmem:[%s630 + $0x48] sm:$0xff]
        %v1946 = vld [vmem:[%s630 + $0x50] sm:$0xff]
        %v1947 = vld [vmem:[%s630 + $0x58] sm:$0xff]
        %v1948 = vld [vmem:[%s630 + $0x60] sm:$0xff]
        %v1949 = vld [vmem:[%s630 + $0x68] sm:$0xff]
        %v1950 = vld [vmem:[%s630 + $0x70] sm:$0xff]
        %v1951 = vld [vmem:[%s630 + $0x78] sm:$0xff]
        %s1952 = scalar_lea.vmem %s630, 128 [#allocation21]
        %v1953 = vld [vmem:[%s1952] sm:$0xff]
        %v1954 = vld [vmem:[%s1952 + $0x8] sm:$0xff]
        %v1955 = vld [vmem:[%s1952 + $0x10] sm:$0xff]
        %v1956 = vld [vmem:[%s1952 + $0x18] sm:$0xff]
        %v1957 = vld [vmem:[%s1952 + $0x20] sm:$0xff]
        %v1958 = vld [vmem:[%s1952 + $0x28] sm:$0xff]
        %v1959 = vld [vmem:[%s1952 + $0x30] sm:$0xff]
        %v1960 = vld [vmem:[%s1952 + $0x38] sm:$0xff]
        %v1961 = vld [vmem:[%s1952 + $0x40] sm:$0xff]
        %v1962 = vld [vmem:[%s1952 + $0x48] sm:$0xff]
        %v1963 = vld [vmem:[%s1952 + $0x50] sm:$0xff]
        %v1964 = vld [vmem:[%s1952 + $0x58] sm:$0xff]
        %v1965 = vld [vmem:[%s1952 + $0x60] sm:$0xff]
        %v1966 = vld [vmem:[%s1952 + $0x68] sm:$0xff]
        %v1967 = vld [vmem:[%s1952 + $0x70] sm:$0xff]
        %v1968 = vld [vmem:[%s1952 + $0x78] sm:$0xff]
        %p1969 = scmp.eq.s32.totalorder %s32, 0
        %v1972 = vunpack.c.l.b16 %v1934
        %v1973 = vunpack.c.l.b16 %v1935
        %v1974 = vpack.c.b16 %v1973, %v1972
        %v1975 = vrot.slane %v1974, 7
        %v1977 = vsel %vm1237, 0, %v1975
        %v1979 = vrot.slane %v1974, 1
        %v1981 = vsel %vm1243, %v1979, 0
        %s1983 = scalar_select %p1969, 1, 0
        %v1984 = vstv %s1983
        %vm1985 = vcmp.eq.s32.totalorder %v1984, 1
        %v1986 = vsel %vm1985, %v1977, %v1981
        %v2003 = vunpack.c.l.b16 %v1953
        %v2004 = vunpack.c.h.b16 %v1953
        %v2005 = vunpack.c.l.b16 %v1954
        %v2006 = vunpack.c.h.b16 %v1954
        %v2007 = vunpack.c.l.b16 %v1955
        %v2008 = vunpack.c.h.b16 %v1955
        %v2009 = vunpack.c.l.b16 %v1956
        %v2010 = vunpack.c.h.b16 %v1956
        %v2011 = vunpack.c.l.b16 %v1957
        %v2012 = vunpack.c.h.b16 %v1957
        %v2013 = vunpack.c.l.b16 %v1958
        %v2014 = vunpack.c.h.b16 %v1958
        %v2015 = vunpack.c.l.b16 %v1959
        %v2016 = vunpack.c.h.b16 %v1959
        %v2017 = vunpack.c.l.b16 %v1960
        %v2018 = vunpack.c.h.b16 %v1960
        %v2019 = vunpack.c.l.b16 %v1961
        %v2020 = vunpack.c.h.b16 %v1961
        %v2021 = vunpack.c.l.b16 %v1962
        %v2022 = vunpack.c.h.b16 %v1962
        %v2023 = vunpack.c.l.b16 %v1963
        %v2024 = vunpack.c.h.b16 %v1963
        %v2025 = vunpack.c.l.b16 %v1964
        %v2026 = vunpack.c.h.b16 %v1964
        %v2027 = vunpack.c.l.b16 %v1965
        %v2028 = vunpack.c.h.b16 %v1965
        %v2029 = vunpack.c.l.b16 %v1966
        %v2030 = vunpack.c.h.b16 %v1966
        %v2031 = vunpack.c.l.b16 %v1967
        %v2032 = vunpack.c.h.b16 %v1967
        %v2033 = vunpack.c.l.b16 %v1968
        %v2034 = vunpack.c.h.b16 %v1968
        %v2035 = vpack.c.b16 %v2005, %v2003
        %v2036 = vpack.c.b16 %v2006, %v2004
        %v2037 = vpack.c.b16 %v2009, %v2007
        %v2038 = vpack.c.b16 %v2010, %v2008
        %v2039 = vpack.c.b16 %v2013, %v2011
        %v2040 = vpack.c.b16 %v2014, %v2012
        %v2041 = vpack.c.b16 %v2017, %v2015
        %v2042 = vpack.c.b16 %v2018, %v2016
        %v2043 = vpack.c.b16 %v2021, %v2019
        %v2044 = vpack.c.b16 %v2022, %v2020
        %v2045 = vpack.c.b16 %v2025, %v2023
        %v2046 = vpack.c.b16 %v2026, %v2024
        %v2047 = vpack.c.b16 %v2029, %v2027
        %v2048 = vpack.c.b16 %v2030, %v2028
        %v2049 = vpack.c.b16 %v2033, %v2031
        %v2050 = vpack.c.b16 %v2034, %v2032
        %2067 = vmatpush.bf16.msra.mxu0 %v2049
        %2068 = vmatpush.bf16.msra.mxu0 %v2047
        %2069 = vmatpush.bf16.msra.mxu0 %v2045
        %2070 = vmatpush.bf16.msra.mxu0 %v2043
        %2071 = vmatpush.bf16.msra.mxu0 %v2041
        %2072 = vmatpush.bf16.msra.mxu0 %v2039
        %2073 = vmatpush.bf16.msra.mxu0 %v2037
        %2074 = vmatpush.bf16.msra.mxu0 %v2035
        %2075 = vmatmul.bf16.gmra.mxu0 %v1986
        %v2076 = vpop.f32.mrf.mxu0
        %v2077 = vadd.f32 0.0, %v2076
        %v2078 = vpop.f32.mrf.mxu0
        %v2079 = vadd.f32 0.0, %v2078
        %2080 = vdwg.mxu0
        %2081 = vmatpush.bf16.msra.mxu0 %v2050
        %2082 = vmatpush.bf16.msra.mxu0 %v2048
        %2083 = vmatpush.bf16.msra.mxu0 %v2046
        %2084 = vmatpush.bf16.msra.mxu0 %v2044
        %2085 = vmatpush.bf16.msra.mxu0 %v2042
        %2086 = vmatpush.bf16.msra.mxu0 %v2040
        %2087 = vmatpush.bf16.msra.mxu0 %v2038
        %2088 = vmatpush.bf16.msra.mxu0 %v2036
        %2089 = vmatmul.bf16.gmra.mxu0 %v1986
        %v2090 = vpop.f32.mrf.mxu0
        %v2091 = vadd.f32 0.0, %v2090
        %v2092 = vpop.f32.mrf.mxu0
        %v2093 = vadd.f32 0.0, %v2092
        %2094 = vdwg.mxu0
        %v2112 = vunpack.c.l.b16 %v1936
        %v2113 = vunpack.c.h.b16 %v1936
        %v2114 = vunpack.c.l.b16 %v1937
        %v2115 = vunpack.c.h.b16 %v1937
        %v2116 = vunpack.c.l.b16 %v1938
        %v2117 = vunpack.c.h.b16 %v1938
        %v2118 = vunpack.c.l.b16 %v1939
        %v2119 = vunpack.c.h.b16 %v1939
        %v2120 = vunpack.c.l.b16 %v1940
        %v2121 = vunpack.c.h.b16 %v1940
        %v2122 = vunpack.c.l.b16 %v1941
        %v2123 = vunpack.c.h.b16 %v1941
        %v2124 = vunpack.c.l.b16 %v1942
        %v2125 = vunpack.c.h.b16 %v1942
        %v2126 = vunpack.c.l.b16 %v1943
        %v2127 = vunpack.c.h.b16 %v1943
        %v2128 = vunpack.c.l.b16 %v1944
        %v2129 = vunpack.c.h.b16 %v1944
        %v2130 = vunpack.c.l.b16 %v1945
        %v2131 = vunpack.c.h.b16 %v1945
        %v2132 = vunpack.c.l.b16 %v1946
        %v2133 = vunpack.c.h.b16 %v1946
        %v2134 = vunpack.c.l.b16 %v1947
        %v2135 = vunpack.c.h.b16 %v1947
        %v2136 = vunpack.c.l.b16 %v1948
        %v2137 = vunpack.c.h.b16 %v1948
        %v2138 = vunpack.c.l.b16 %v1949
        %v2139 = vunpack.c.h.b16 %v1949
        %v2140 = vunpack.c.l.b16 %v1950
        %v2141 = vunpack.c.h.b16 %v1950
        %v2142 = vunpack.c.l.b16 %v1951
        %v2143 = vunpack.c.h.b16 %v1951
        %v2144 = vpack.c.b16 %v2114, %v2112
        %v2145 = vpack.c.b16 %v2115, %v2113
        %v2146 = vpack.c.b16 %v2118, %v2116
        %v2147 = vpack.c.b16 %v2119, %v2117
        %v2148 = vpack.c.b16 %v2122, %v2120
        %v2149 = vpack.c.b16 %v2123, %v2121
        %v2150 = vpack.c.b16 %v2126, %v2124
        %v2151 = vpack.c.b16 %v2127, %v2125
        %v2152 = vpack.c.b16 %v2130, %v2128
        %v2153 = vpack.c.b16 %v2131, %v2129
        %v2154 = vpack.c.b16 %v2134, %v2132
        %v2155 = vpack.c.b16 %v2135, %v2133
        %v2156 = vpack.c.b16 %v2138, %v2136
        %v2157 = vpack.c.b16 %v2139, %v2137
        %v2158 = vpack.c.b16 %v2142, %v2140
        %v2159 = vpack.c.b16 %v2143, %v2141
        %2176 = vmatpush.bf16.msra.mxu0 %v2158
        %2177 = vmatpush.bf16.msra.mxu0 %v2156
        %2178 = vmatpush.bf16.msra.mxu0 %v2154
        %2179 = vmatpush.bf16.msra.mxu0 %v2152
        %2180 = vmatpush.bf16.msra.mxu0 %v2150
        %2181 = vmatpush.bf16.msra.mxu0 %v2148
        %2182 = vmatpush.bf16.msra.mxu0 %v2146
        %2183 = vmatpush.bf16.msra.mxu0 %v2144
        %2184 = vmatmul.bf16.gmra.mxu0 %v1974
        %v2185 = vpop.f32.mrf.mxu0
        %v2186 = vadd.f32 %v2077, %v2185
        %v2187 = vpop.f32.mrf.mxu0
        %v2188 = vadd.f32 %v2079, %v2187
        %2189 = vdwg.mxu0
        %2190 = vmatpush.bf16.msra.mxu0 %v2159
        %2191 = vmatpush.bf16.msra.mxu0 %v2157
        %2192 = vmatpush.bf16.msra.mxu0 %v2155
        %2193 = vmatpush.bf16.msra.mxu0 %v2153
        %2194 = vmatpush.bf16.msra.mxu0 %v2151
        %2195 = vmatpush.bf16.msra.mxu0 %v2149
        %2196 = vmatpush.bf16.msra.mxu0 %v2147
        %2197 = vmatpush.bf16.msra.mxu0 %v2145
        %2198 = vmatmul.bf16.gmra.mxu0 %v1974
        %v2199 = vpop.f32.mrf.mxu0
        %v2200 = vadd.f32 %v2091, %v2199
        %v2201 = vpop.f32.mrf.mxu0
        %v2202 = vadd.f32 %v2093, %v2201
        %2203 = vdwg.mxu0
        %v2204 = vld [vmem:[#allocation22] sm:$0x3]
        %v2206 = vperm.slane %v2204, 0
        %v2207 = vperm.slane %v2204, 1
        %v2210 = vadd.f32 %v2186, %v2206
        %v2211 = vadd.f32 %v2200, %v2207
        %v2212 = vadd.f32 %v2188, %v2206
        %v2213 = vadd.f32 %v2202, %v2207
        %v2214 = vpack.c.bf16 %v2211, %v2210
        %v2215 = vpack.c.bf16 %v2213, %v2212
        %2216 = vst [vmem:[%s685] sm:$0xff] %v2214
        %2217 = vst [vmem:[%s685 + $0x8] sm:$0xff] %v2215
        %p2218 = scmp.lt.s32.totalorder %s32, 1
        %s2219 = scalar_select %p2218, %s32, 1
        %s2220 = smul.addr %s2219, 4
        %s2221 = smul.addr %s2220, 4
        %s2222 = scalar_lea.vmem %s14, %s2221
        // Predicated region
        $region133: #{resnet_decoder_forward.3} parent=75 // pred_check
          %p2223 = pneg %p349
        $region134: #{resnet_decoder_forward.3} parent=75 // pred_check_branch
          %2225 = sbr.rel (%p2223) target = $region136
        $region135: #{resnet_decoder_forward.3} parent=75 // pred_region
          _
        $region136: #{resnet_decoder_forward.3} parent=75 // pred_fallthru
          _
      $region76: #{resnet_decoder_forward.3} parent=5 // pred_fallthru
        _
      %p2226 = scmp.le.s32.totalorder 2, %s27
      // Predicated region
      $region137: #{resnet_decoder_forward.3} parent=5 // pred_check
        %p2227 = pneg %p2226
      $region138: #{resnet_decoder_forward.3} parent=5 // pred_check_branch
        %2229 = sbr.rel (%p2227) target = $region140
      $region139: #{resnet_decoder_forward.3} parent=5 // pred_region
        %s2230 = ssub.s32 %s27, 2
        // Predicated region
        $region141: #{resnet_decoder_forward.3} parent=139 // pred_check
          %p2231 = pneg %p355
        $region142: #{resnet_decoder_forward.3} parent=139 // pred_check_branch
          %2233 = sbr.rel (%p2231) target = $region144
        $region143: #{resnet_decoder_forward.3} parent=139 // pred_region
          %p2234 = scmp.lt.s32.totalorder %s33, 1
          %s2235 = scalar_select %p2234, %s33, 1
          %s2236 = smul.addr %s2235, 4
          %s2237 = smul.addr %s2236, 4
          %s2238 = scalar_lea.vmem %s14, %s2237
        $region144: #{resnet_decoder_forward.3} parent=139 // pred_fallthru
          _
      $region140: #{resnet_decoder_forward.3} parent=5 // pred_fallthru
        _
    $region6: #{resnet_decoder_forward.3} parent=1 // loop_footer
      %s31 = sadd.s32 1, %s27
    $region7: #{resnet_decoder_forward.3} parent=1 // loop_footer_branch
      %26 = sbr.rel target = $region3
    $region8: #{resnet_decoder_forward.3} parent=1 // loop_exit
      _
    %2239 = vsyncpa [#allocation3], 1
    %s2240 = scalar_lea.sflag [#allocation3], 1
    %2241 = vsyncpa %s2240, 1
    %2242 = vsyncpa [#allocation5], 1
    %2243 = vsyncpa [#allocation8], 1
    %2244 = vsyncpa [#allocation11], 1
    %2245 = vsyncpa [#allocation14], 1
    %2246 = vsyncpa [#allocation17], 1
    %2247 = vsyncpa [#allocation20], 1

// kernel: resnet_decoder_forward.5
$region0: #{resnet_decoder_forward.5}
  #allocation0 [shape = 'u32[]', space=smem, size = 0x4, offset = 0x4, fixed_abs, tag = 'smem constant byte address 0x4 - core index']
  #allocation1 [shape = 'u32[72,128]{1,0:T(1,128)}', space=vmem, size = 0x9000, scoped, tag = 'internal scratch']
  %s0 = inlined_call_operand.vmem [shape: bf16[64,512], index: 0, kind: input, shape index: {}]
  %s1 = inlined_call_operand.hbm [shape: bf16[3,512,512], index: 1, kind: input, shape index: {}]
  %s2 = inlined_call_operand.hbm [shape: f32[1,512], index: 2, kind: input, shape index: {}]
  %s3 = inlined_call_operand.hbm [shape: bf16[512,512], index: 3, kind: input, shape index: {}]
  %s4 = inlined_call_operand.hbm [shape: f32[1,512], index: 4, kind: input, shape index: {}]
  %s5 = inlined_call_operand.hbm [shape: bf16[2,2,512,256], index: 5, kind: input, shape index: {}]
  %s6 = inlined_call_operand.hbm [shape: f32[1,256], index: 6, kind: input, shape index: {}]
  %s7 = inlined_call_operand.vmem [shape: f32[2,64,256], index: 7, kind: output, shape index: {}]
  %s8 = sld [smem:[#allocation0]]
  $region85: #{resnet_decoder_forward.5} parent=0
    _
  %s10 = ssub.s32 1, %s8
  %s11 = scalar_select 0, %s10, %s8
  $region1: #{resnet_decoder_forward.5} parent=0
    #allocation2 [shape = 'u8[1572864]{0}', space=vmem, size = 0x180000, scoped, tag = 'input window, operand 1, single buffered']
    #allocation3 [shape = 's32[2]{0}', space=sflag, size = 0x8, scoped, tag = 'scoped memory for resnet_decoder_forward.5']
    #allocation4 [shape = 'u8[2048]{0}', space=vmem, size = 0x800, scoped, tag = 'input window, operand 2, single buffered']
    #allocation5 [shape = 's32[1]{0}', space=sflag, size = 0x4, scoped, tag = 'scoped memory for resnet_decoder_forward.5']
    #allocation6 [shape = 'u8[524288]{0}', space=vmem, size = 0x80000, scoped, tag = 'input window, operand 3, single buffered']
    #allocation7 [shape = 'u8[2048]{0}', space=vmem, size = 0x800, scoped, tag = 'input window, operand 4, single buffered']
    #allocation8 [shape = 's32[1]{0}', space=sflag, size = 0x4, scoped, tag = 'scoped memory for resnet_decoder_forward.5']
    #allocation9 [shape = 'u8[1048576]{0}', space=vmem, size = 0x100000, scoped, tag = 'input window, operand 5']
    #allocation10 [shape = 'u8[1024]{0}', space=vmem, size = 0x400, scoped, tag = 'input window, operand 6, single buffered']
    %12 = vsyncpa [#allocation3], 0
    %13 = vsyncpa [#allocation5], 0
    %14 = vsyncpa [#allocation8], 0
    loop: start=0, step=1, limit=4
    $region2: #{resnet_decoder_forward.5} parent=1 // loop_pre_header
      _
    $region3: #{resnet_decoder_forward.5} parent=1 // loop_header
      %s16 = sphi 0, %s20
      %p17 = scmp.ge.s32.totalorder %s16, 4
      %s24 = sphi 0, %s24
      %s26 = sphi 0, %s24
      %s27 = sphi 0, %s26
      %s41 = sphi 0, %s27
      %s45 = sphi 0, %s45
      %s47 = sphi 0, %s45
      %s48 = sphi 0, %s47
      %s62 = sphi 0, %s48
      %s66 = sphi 0, %s66
      %s68 = sphi 0, %s66
      %s69 = sphi 0, %s68
      %s83 = sphi 0, %s69
      %s87 = sphi 0, %s87
      %s89 = sphi 0, %s87
      %s90 = sphi 0, %s89
      %s104 = sphi 0, %s90
      %s108 = sphi 0, %s108
      %s110 = sphi 0, %s108
      %s111 = sphi 0, %s110
      %s125 = sphi 0, %s111
      %s131 = sphi 0, %s133
      %s134 = sphi 0, %s131
      %s135 = sphi 0, %s134
      %s151 = sphi 0, %s135
      %s155 = sphi 0, %s155
      %s157 = sphi 0, %s155
      %s158 = sphi 0, %s157
      %s172 = sphi 0, %s158
      %s178 = sphi 0, %s180
      %s181 = sphi 0, %s178
      %s182 = sphi 0, %s181
      %s198 = sphi 0, %s182
    $region4: #{resnet_decoder_forward.5} parent=1 // loop_header_branch
      %19 = sbr.rel (%p17) target = $region8
    $region5: #{resnet_decoder_forward.5} parent=1 // loop_body
      %s21 = ssub.s32 %s16, 1
      %s22 = ssub.s32 %s16, 2
      %s23 = sadd.s32 %s16, 1
      %s25 = sadd.s32 %s24, 1
      %p28 = scmp.eq.s32.totalorder %s16, 1
      %p29 = scmp.ne.s32.totalorder %s24, %s26
      %p30 = scmp.eq.s32.totalorder %s16, 0
      %p31 = por %p29, %p30
      %p32 = scmp.ne.s32.totalorder %s24, %s26
      %p33 = scmp.eq.s32.totalorder %s21, 1
      %p34 = por %p32, %p33
      %p35 = scmp.ne.s32.totalorder %s26, %s27
      %p36 = scmp.eq.s32.totalorder %s21, 0
      %p37 = por %p35, %p36
      %p38 = scmp.ne.s32.totalorder %s26, %s27
      %p39 = scmp.eq.s32.totalorder %s22, 1
      %p40 = por %p38, %p39
      %p42 = scmp.ne.s32.totalorder %s27, %s41
      %p43 = scmp.eq.s32.totalorder %s22, 0
      %p44 = por %p42, %p43
      %s46 = sadd.s32 %s45, 1
      %p49 = scmp.eq.s32.totalorder %s16, 1
      %p50 = scmp.ne.s32.totalorder %s45, %s47
      %p51 = scmp.eq.s32.totalorder %s16, 0
      %p52 = por %p50, %p51
      %p53 = scmp.ne.s32.totalorder %s45, %s47
      %p54 = scmp.eq.s32.totalorder %s21, 1
      %p55 = por %p53, %p54
      %p56 = scmp.ne.s32.totalorder %s47, %s48
      %p57 = scmp.eq.s32.totalorder %s21, 0
      %p58 = por %p56, %p57
      %p59 = scmp.ne.s32.totalorder %s47, %s48
      %p60 = scmp.eq.s32.totalorder %s22, 1
      %p61 = por %p59, %p60
      %p63 = scmp.ne.s32.totalorder %s48, %s62
      %p64 = scmp.eq.s32.totalorder %s22, 0
      %p65 = por %p63, %p64
      %s67 = sadd.s32 %s66, 1
      %p70 = scmp.eq.s32.totalorder %s16, 1
      %p71 = scmp.ne.s32.totalorder %s66, %s68
      %p72 = scmp.eq.s32.totalorder %s16, 0
      %p73 = por %p71, %p72
      %p74 = scmp.ne.s32.totalorder %s66, %s68
      %p75 = scmp.eq.s32.totalorder %s21, 1
      %p76 = por %p74, %p75
      %p77 = scmp.ne.s32.totalorder %s68, %s69
      %p78 = scmp.eq.s32.totalorder %s21, 0
      %p79 = por %p77, %p78
      %p80 = scmp.ne.s32.totalorder %s68, %s69
      %p81 = scmp.eq.s32.totalorder %s22, 1
      %p82 = por %p80, %p81
      %p84 = scmp.ne.s32.totalorder %s69, %s83
      %p85 = scmp.eq.s32.totalorder %s22, 0
      %p86 = por %p84, %p85
      %s88 = sadd.s32 %s87, 1
      %p91 = scmp.eq.s32.totalorder %s16, 1
      %p92 = scmp.ne.s32.totalorder %s87, %s89
      %p93 = scmp.eq.s32.totalorder %s16, 0
      %p94 = por %p92, %p93
      %p95 = scmp.ne.s32.totalorder %s87, %s89
      %p96 = scmp.eq.s32.totalorder %s21, 1
      %p97 = por %p95, %p96
      %p98 = scmp.ne.s32.totalorder %s89, %s90
      %p99 = scmp.eq.s32.totalorder %s21, 0
      %p100 = por %p98, %p99
      %p101 = scmp.ne.s32.totalorder %s89, %s90
      %p102 = scmp.eq.s32.totalorder %s22, 1
      %p103 = por %p101, %p102
      %p105 = scmp.ne.s32.totalorder %s90, %s104
      %p106 = scmp.eq.s32.totalorder %s22, 0
      %p107 = por %p105, %p106
      %s109 = sadd.s32 %s108, 1
      %p112 = scmp.eq.s32.totalorder %s16, 1
      %p113 = scmp.ne.s32.totalorder %s108, %s110
      %p114 = scmp.eq.s32.totalorder %s16, 0
      %p115 = por %p113, %p114
      %p116 = scmp.ne.s32.totalorder %s108, %s110
      %p117 = scmp.eq.s32.totalorder %s21, 1
      %p118 = por %p116, %p117
      %p119 = scmp.ne.s32.totalorder %s110, %s111
      %p120 = scmp.eq.s32.totalorder %s21, 0
      %p121 = por %p119, %p120
      %p122 = scmp.ne.s32.totalorder %s110, %s111
      %p123 = scmp.eq.s32.totalorder %s22, 1
      %p124 = por %p122, %p123
      %p126 = scmp.ne.s32.totalorder %s111, %s125
      %p127 = scmp.eq.s32.totalorder %s22, 0
      %p128 = por %p126, %p127
      %s129 = ssub.s32 %s16, %s23
      %p130 = scmp.eq.s32.totalorder %s129, 0
      %s132 = sadd.s32 %s131, 1
      %s133 = scalar_select %p130, %s131, %s132
      %p136 = pneg %p130
      %p137 = scmp.eq.s32.totalorder %s16, 1
      %p138 = por %p136, %p137
      %p139 = scmp.ne.s32.totalorder %s131, %s134
      %p140 = scmp.eq.s32.totalorder %s16, 0
      %p141 = por %p139, %p140
      %p142 = scmp.ne.s32.totalorder %s131, %s134
      %p143 = scmp.eq.s32.totalorder %s21, 1
      %p144 = por %p142, %p143
      %p145 = scmp.ne.s32.totalorder %s134, %s135
      %p146 = scmp.eq.s32.totalorder %s21, 0
      %p147 = por %p145, %p146
      %p148 = scmp.ne.s32.totalorder %s134, %s135
      %p149 = scmp.eq.s32.totalorder %s22, 1
      %p150 = por %p148, %p149
      %p152 = scmp.ne.s32.totalorder %s135, %s151
      %p153 = scmp.eq.s32.totalorder %s22, 0
      %p154 = por %p152, %p153
      %s156 = sadd.s32 %s155, 1
      %p159 = scmp.eq.s32.totalorder %s16, 1
      %p160 = scmp.ne.s32.totalorder %s155, %s157
      %p161 = scmp.eq.s32.totalorder %s16, 0
      %p162 = por %p160, %p161
      %p163 = scmp.ne.s32.totalorder %s155, %s157
      %p164 = scmp.eq.s32.totalorder %s21, 1
      %p165 = por %p163, %p164
      %p166 = scmp.ne.s32.totalorder %s157, %s158
      %p167 = scmp.eq.s32.totalorder %s21, 0
      %p168 = por %p166, %p167
      %p169 = scmp.ne.s32.totalorder %s157, %s158
      %p170 = scmp.eq.s32.totalorder %s22, 1
      %p171 = por %p169, %p170
      %p173 = scmp.ne.s32.totalorder %s158, %s172
      %p174 = scmp.eq.s32.totalorder %s22, 0
      %p175 = por %p173, %p174
      %s176 = ssub.s32 %s16, %s23
      %p177 = scmp.eq.s32.totalorder %s176, 0
      %s179 = sadd.s32 %s178, 1
      %s180 = scalar_select %p177, %s178, %s179
      %p183 = pneg %p177
      %p184 = scmp.eq.s32.totalorder %s16, 1
      %p185 = por %p183, %p184
      %p186 = scmp.ne.s32.totalorder %s178, %s181
      %p187 = scmp.eq.s32.totalorder %s16, 0
      %p188 = por %p186, %p187
      %p189 = scmp.ne.s32.totalorder %s178, %s181
      %p190 = scmp.eq.s32.totalorder %s21, 1
      %p191 = por %p189, %p190
      %p192 = scmp.ne.s32.totalorder %s181, %s182
      %p193 = scmp.eq.s32.totalorder %s21, 0
      %p194 = por %p192, %p193
      %p195 = scmp.ne.s32.totalorder %s181, %s182
      %p196 = scmp.eq.s32.totalorder %s22, 1
      %p197 = por %p195, %p196
      %p199 = scmp.ne.s32.totalorder %s182, %s198
      %p200 = scmp.eq.s32.totalorder %s22, 0
      %p201 = por %p199, %p200
      %p202 = scmp.le.s32.totalorder 1, %s16
      %p203 = scmp.lt.s32.totalorder %s16, 3
      %p204 = pnand %p202, %p203
      %p205 = pneg %p204
      // Predicated region
      $region9: #{resnet_decoder_forward.5} parent=5 // pred_check
        _
      $region10: #{resnet_decoder_forward.5} parent=5 // pred_check_branch
        %207 = sbr.rel (%p204) target = $region12
      $region11: #{resnet_decoder_forward.5} parent=5 // pred_region
        %s208 = ssub.s32 %s16, 1
        // Predicated region
        $region13: #{resnet_decoder_forward.5} parent=11 // pred_check
          %p209 = pneg %p37
        $region14: #{resnet_decoder_forward.5} parent=11 // pred_check_branch
          %211 = sbr.rel (%p209) target = $region16
        $region15: #{resnet_decoder_forward.5} parent=11 // pred_region
          _
        $region16: #{resnet_decoder_forward.5} parent=11 // pred_fallthru
          _
        // Predicated region
        $region17: #{resnet_decoder_forward.5} parent=11 // pred_check
          %p212 = pneg %p58
        $region18: #{resnet_decoder_forward.5} parent=11 // pred_check_branch
          %214 = sbr.rel (%p212) target = $region20
        $region19: #{resnet_decoder_forward.5} parent=11 // pred_region
          %216 = vsyncadd [#allocation3], 0
          %s217 = sshll.u32 %s1, 4
          %s218 = int_to_ptr.hbm [resolvable:$true] %s217
          %s219 = sshll.u32 [#allocation2], 4
          %s220 = int_to_ptr.vmem [resolvable:$true] %s219
          %225 = dma.hbm_to_vmem [thread:$0]  %s218, 49152, %s220, [#allocation3], 256, 256, 16
        $region20: #{resnet_decoder_forward.5} parent=11 // pred_fallthru
          _
        // Predicated region
        $region21: #{resnet_decoder_forward.5} parent=11 // pred_check
          %p226 = pneg %p79
        $region22: #{resnet_decoder_forward.5} parent=11 // pred_check_branch
          %228 = sbr.rel (%p226) target = $region24
        $region23: #{resnet_decoder_forward.5} parent=11 // pred_region
          %230 = vsyncadd [#allocation5], 0
          %s232 = sshll.u32 %s2, 4
          %s233 = int_to_ptr.hbm [resolvable:$true] %s232
          %s234 = sshll.u32 [#allocation4], 4
          %s235 = int_to_ptr.vmem [resolvable:$true] %s234
          %237 = dma.hbm_to_vmem [thread:$0]  %s233, 64, %s235, [#allocation5]
        $region24: #{resnet_decoder_forward.5} parent=11 // pred_fallthru
          _
        // Predicated region
        $region25: #{resnet_decoder_forward.5} parent=11 // pred_check
          %p238 = pneg %p100
        $region26: #{resnet_decoder_forward.5} parent=11 // pred_check_branch
          %240 = sbr.rel (%p238) target = $region28
        $region27: #{resnet_decoder_forward.5} parent=11 // pred_region
          %242 = vsyncadd [#allocation5], 0
          %s243 = sshll.u32 %s3, 4
          %s244 = int_to_ptr.hbm [resolvable:$true] %s243
          %s245 = sshll.u32 [#allocation6], 4
          %s246 = int_to_ptr.vmem [resolvable:$true] %s245
          %251 = dma.hbm_to_vmem [thread:$0]  %s244, 16384, %s246, [#allocation5], 256, 256, 16
        $region28: #{resnet_decoder_forward.5} parent=11 // pred_fallthru
          _
        // Predicated region
        $region29: #{resnet_decoder_forward.5} parent=11 // pred_check
          %p252 = pneg %p121
        $region30: #{resnet_decoder_forward.5} parent=11 // pred_check_branch
          %254 = sbr.rel (%p252) target = $region32
        $region31: #{resnet_decoder_forward.5} parent=11 // pred_region
          %256 = vsyncadd [#allocation8], 0
          %s258 = sshll.u32 %s4, 4
          %s259 = int_to_ptr.hbm [resolvable:$true] %s258
          %s260 = sshll.u32 [#allocation7], 4
          %s261 = int_to_ptr.vmem [resolvable:$true] %s260
          %263 = dma.hbm_to_vmem [thread:$0]  %s259, 64, %s261, [#allocation8]
        $region32: #{resnet_decoder_forward.5} parent=11 // pred_fallthru
          _
        // Predicated region
        $region33: #{resnet_decoder_forward.5} parent=11 // pred_check
          %p264 = pneg %p168
        $region34: #{resnet_decoder_forward.5} parent=11 // pred_check_branch
          %266 = sbr.rel (%p264) target = $region36
        $region35: #{resnet_decoder_forward.5} parent=11 // pred_region
          %268 = vsyncadd [#allocation5], 0
          %s270 = sshll.u32 %s6, 4
          %s271 = int_to_ptr.hbm [resolvable:$true] %s270
          %s272 = sshll.u32 [#allocation10], 4
          %s273 = int_to_ptr.vmem [resolvable:$true] %s272
          %275 = dma.hbm_to_vmem [thread:$0]  %s271, 32, %s273, [#allocation5]
        $region36: #{resnet_decoder_forward.5} parent=11 // pred_fallthru
          _
      $region12: #{resnet_decoder_forward.5} parent=5 // pred_fallthru
        _
      %p276 = scmp.lt.s32.totalorder %s16, 2
      // Predicated region
      $region37: #{resnet_decoder_forward.5} parent=5 // pred_check
        %p277 = pneg %p276
      $region38: #{resnet_decoder_forward.5} parent=5 // pred_check_branch
        %279 = sbr.rel (%p277) target = $region40
      $region39: #{resnet_decoder_forward.5} parent=5 // pred_region
        // Predicated region
        $region41: #{resnet_decoder_forward.5} parent=39 // pred_check
          %p280 = pneg %p141
        $region42: #{resnet_decoder_forward.5} parent=39 // pred_check_branch
          %282 = sbr.rel (%p280) target = $region44
        $region43: #{resnet_decoder_forward.5} parent=39 // pred_region
          %s283 = sand.u32 %s16, 1
          %s284 = scalar_lea.sflag [#allocation3], %s283
          %s285 = sand.u32 %s131, 1
          %s286 = smul.addr %s285, 1024
          %s287 = scalar_lea.vmem [#allocation9], %s286
          %289 = vsyncadd %s284, 0
          %s290 = smul.addr %s16, 256
          %s291 = smul.addr %s290, 4
          %s292 = scalar_lea.hbm %s5, %s291
          %s293 = sshll.u32 %s292, 4
          %s294 = int_to_ptr.hbm [resolvable:$true] %s293
          %s295 = sshll.u32 %s287, 4
          %s296 = int_to_ptr.vmem [resolvable:$true] %s295
          %301 = dma.hbm_to_vmem [thread:$0]  %s294, 16384, %s296, %s284, 128, 128, 8
        $region44: #{resnet_decoder_forward.5} parent=39 // pred_fallthru
          _
      $region40: #{resnet_decoder_forward.5} parent=5 // pred_fallthru
        _
      %p302 = scmp.le.s32.totalorder 1, %s16
      %p303 = scmp.lt.s32.totalorder %s16, 3
      %p304 = pnand %p302, %p303
      %p305 = pneg %p304
      // Predicated region
      $region45: #{resnet_decoder_forward.5} parent=5 // pred_check
        _
      $region46: #{resnet_decoder_forward.5} parent=5 // pred_check_branch
        %307 = sbr.rel (%p304) target = $region48
      $region47: #{resnet_decoder_forward.5} parent=5 // pred_region
        %s308 = ssub.s32 %s16, 1
        // Predicated region
        $region49: #{resnet_decoder_forward.5} parent=47 // pred_check
          %p309 = pneg %p58
        $region50: #{resnet_decoder_forward.5} parent=47 // pred_check_branch
          %311 = sbr.rel (%p309) target = $region52
        $region51: #{resnet_decoder_forward.5} parent=47 // pred_region
          %313 = dma.done [#allocation3], 49152
        $region52: #{resnet_decoder_forward.5} parent=47 // pred_fallthru
          _
        // Predicated region
        $region53: #{resnet_decoder_forward.5} parent=47 // pred_check
          %p314 = pneg %p79
        $region54: #{resnet_decoder_forward.5} parent=47 // pred_check_branch
          %316 = sbr.rel (%p314) target = $region56
        $region55: #{resnet_decoder_forward.5} parent=47 // pred_region
          %318 = dma.done [#allocation5], 64
        $region56: #{resnet_decoder_forward.5} parent=47 // pred_fallthru
          _
        // Predicated region
        $region57: #{resnet_decoder_forward.5} parent=47 // pred_check
          %p319 = pneg %p100
        $region58: #{resnet_decoder_forward.5} parent=47 // pred_check_branch
          %321 = sbr.rel (%p319) target = $region60
        $region59: #{resnet_decoder_forward.5} parent=47 // pred_region
          %323 = dma.done [#allocation5], 16384
        $region60: #{resnet_decoder_forward.5} parent=47 // pred_fallthru
          _
        // Predicated region
        $region61: #{resnet_decoder_forward.5} parent=47 // pred_check
          %p324 = pneg %p121
        $region62: #{resnet_decoder_forward.5} parent=47 // pred_check_branch
          %326 = sbr.rel (%p324) target = $region64
        $region63: #{resnet_decoder_forward.5} parent=47 // pred_region
          %328 = dma.done [#allocation8], 64
        $region64: #{resnet_decoder_forward.5} parent=47 // pred_fallthru
          _
        %s329 = sand.u32 %s21, 1
        %s330 = scalar_lea.sflag [#allocation3], %s329
        %s331 = sand.u32 %s134, 1
        %s332 = smul.addr %s331, 1024
        %s333 = scalar_lea.vmem [#allocation9], %s332
        // Predicated region
        $region65: #{resnet_decoder_forward.5} parent=47 // pred_check
          %p334 = pneg %p147
        $region66: #{resnet_decoder_forward.5} parent=47 // pred_check_branch
          %336 = sbr.rel (%p334) target = $region68
        $region67: #{resnet_decoder_forward.5} parent=47 // pred_region
          %338 = dma.done %s330, 16384
        $region68: #{resnet_decoder_forward.5} parent=47 // pred_fallthru
          _
        // Predicated region
        $region69: #{resnet_decoder_forward.5} parent=47 // pred_check
          %p339 = pneg %p168
        $region70: #{resnet_decoder_forward.5} parent=47 // pred_check_branch
          %341 = sbr.rel (%p339) target = $region72
        $region71: #{resnet_decoder_forward.5} parent=47 // pred_region
          %343 = dma.done [#allocation5], 32
        $region72: #{resnet_decoder_forward.5} parent=47 // pred_fallthru
          _
        %p344 = pneg %p37
        %p345 = pneg %p34
        %p346 = pneg %p58
        %p347 = pneg %p55
        %p348 = pneg %p79
        %p349 = pneg %p76
        %p350 = pneg %p100
        %p351 = pneg %p97
        %p352 = pneg %p121
        %p353 = pneg %p118
        %s354 = sand.u32 %s21, 1
        %s355 = scalar_lea.sflag [#allocation3], %s354
        %s356 = sand.u32 %s134, 1
        %s357 = smul.addr %s356, 1024
        %s358 = scalar_lea.vmem [#allocation9], %s357
        %p359 = pneg %p147
        %p360 = pneg %p144
        %p361 = pneg %p168
        %p362 = pneg %p165
        %p363 = pneg %p194
        %p364 = pneg %p191
        %p365 = scmp.lt.s32.totalorder %s21, 1
        %s366 = scalar_select %p365, %s21, 1
        %s367 = smul.addr %s366, 16
        %s368 = smul.addr %s367, 8
        %s369 = scalar_lea.vmem %s7, %s368
        %p370 = scmp.lt.s32.totalorder %s21, 1
        %s371 = scalar_select %p370, %s21, 1
        %s372 = smul.addr %s371, 16
        %s373 = smul.addr %s372, 8
        %s374 = scalar_lea.vmem %s7, %s373
        %v376 = vld [vmem:[%s0] sm:$0xff]
        %v377 = vld [vmem:[%s0 + $0x8] sm:$0xff]
        %v378 = vld [vmem:[%s0 + $0x10] sm:$0xff]
        %v379 = vld [vmem:[%s0 + $0x18] sm:$0xff]
        %v380 = vld [vmem:[%s0 + $0x20] sm:$0xff]
        %v381 = vld [vmem:[%s0 + $0x28] sm:$0xff]
        %v382 = vld [vmem:[%s0 + $0x30] sm:$0xff]
        %v383 = vld [vmem:[%s0 + $0x38] sm:$0xff]
        %v384 = vld [vmem:[%s0 + $0x40] sm:$0xff]
        %v385 = vld [vmem:[%s0 + $0x48] sm:$0xff]
        %v386 = vld [vmem:[%s0 + $0x50] sm:$0xff]
        %v387 = vld [vmem:[%s0 + $0x58] sm:$0xff]
        %v388 = vld [vmem:[%s0 + $0x60] sm:$0xff]
        %v389 = vld [vmem:[%s0 + $0x68] sm:$0xff]
        %v390 = vld [vmem:[%s0 + $0x70] sm:$0xff]
        %v391 = vld [vmem:[%s0 + $0x78] sm:$0xff]
        %v392 = vunpack.c.l.bf16 %v376
        %v393 = vunpack.c.h.bf16 %v376
        %v394 = vunpack.c.l.bf16 %v377
        %v395 = vunpack.c.h.bf16 %v377
        %v396 = vunpack.c.l.bf16 %v378
        %v397 = vunpack.c.h.bf16 %v378
        %v398 = vunpack.c.l.bf16 %v379
        %v399 = vunpack.c.h.bf16 %v379
        %v400 = vunpack.c.l.bf16 %v380
        %v401 = vunpack.c.h.bf16 %v380
        %v402 = vunpack.c.l.bf16 %v381
        %v403 = vunpack.c.h.bf16 %v381
        %v404 = vunpack.c.l.bf16 %v382
        %v405 = vunpack.c.h.bf16 %v382
        %v406 = vunpack.c.l.bf16 %v383
        %v407 = vunpack.c.h.bf16 %v383
        %v408 = vunpack.c.l.bf16 %v384
        %v409 = vunpack.c.h.bf16 %v384
        %v410 = vunpack.c.l.bf16 %v385
        %v411 = vunpack.c.h.bf16 %v385
        %v412 = vunpack.c.l.bf16 %v386
        %v413 = vunpack.c.h.bf16 %v386
        %v414 = vunpack.c.l.bf16 %v387
        %v415 = vunpack.c.h.bf16 %v387
        %v416 = vunpack.c.l.bf16 %v388
        %v417 = vunpack.c.h.bf16 %v388
        %v418 = vunpack.c.l.bf16 %v389
        %v419 = vunpack.c.h.bf16 %v389
        %v420 = vunpack.c.l.bf16 %v390
        %v421 = vunpack.c.h.bf16 %v390
        %v422 = vunpack.c.l.bf16 %v391
        %v423 = vunpack.c.h.bf16 %v391
        %v424 = vmax.f32 %v392, 0.0
        %v425 = vmax.f32 %v393, 0.0
        %v426 = vmax.f32 %v394, 0.0
        %v427 = vmax.f32 %v395, 0.0
        %v428 = vmax.f32 %v396, 0.0
        %v429 = vmax.f32 %v397, 0.0
        %v430 = vmax.f32 %v398, 0.0
        %v431 = vmax.f32 %v399, 0.0
        %v432 = vmax.f32 %v400, 0.0
        %v433 = vmax.f32 %v401, 0.0
        %v434 = vmax.f32 %v402, 0.0
        %v435 = vmax.f32 %v403, 0.0
        %v436 = vmax.f32 %v404, 0.0
        %v437 = vmax.f32 %v405, 0.0
        %v438 = vmax.f32 %v406, 0.0
        %v439 = vmax.f32 %v407, 0.0
        %v440 = vmax.f32 %v408, 0.0
        %v441 = vmax.f32 %v409, 0.0
        %v442 = vmax.f32 %v410, 0.0
        %v443 = vmax.f32 %v411, 0.0
        %v444 = vmax.f32 %v412, 0.0
        %v445 = vmax.f32 %v413, 0.0
        %v446 = vmax.f32 %v414, 0.0
        %v447 = vmax.f32 %v415, 0.0
        %v448 = vmax.f32 %v416, 0.0
        %v449 = vmax.f32 %v417, 0.0
        %v450 = vmax.f32 %v418, 0.0
        %v451 = vmax.f32 %v419, 0.0
        %v452 = vmax.f32 %v420, 0.0
        %v453 = vmax.f32 %v421, 0.0
        %v454 = vmax.f32 %v422, 0.0
        %v455 = vmax.f32 %v423, 0.0
        %v456 = vpack.c.bf16 %v425, %v424
        %v457 = vpack.c.bf16 %v427, %v426
        %v458 = vpack.c.bf16 %v429, %v428
        %v459 = vpack.c.bf16 %v431, %v430
        %v460 = vpack.c.bf16 %v433, %v432
        %v461 = vpack.c.bf16 %v435, %v434
        %v462 = vpack.c.bf16 %v437, %v436
        %v463 = vpack.c.bf16 %v439, %v438
        %v464 = vpack.c.bf16 %v441, %v440
        %v465 = vpack.c.bf16 %v443, %v442
        %v466 = vpack.c.bf16 %v445, %v444
        %v467 = vpack.c.bf16 %v447, %v446
        %v468 = vpack.c.bf16 %v449, %v448
        %v469 = vpack.c.bf16 %v451, %v450
        %v470 = vpack.c.bf16 %v453, %v452
        %v471 = vpack.c.bf16 %v455, %v454
        %v488 = vunpack.c.l.b16 %v456
        %v489 = vunpack.c.h.b16 %v456
        %v490 = vunpack.c.l.b16 %v457
        %v491 = vunpack.c.h.b16 %v457
        %v492 = vunpack.c.l.b16 %v458
        %v493 = vunpack.c.h.b16 %v458
        %v494 = vunpack.c.l.b16 %v459
        %v495 = vunpack.c.h.b16 %v459
        %v496 = vunpack.c.l.b16 %v460
        %v497 = vunpack.c.h.b16 %v460
        %v498 = vunpack.c.l.b16 %v461
        %v499 = vunpack.c.h.b16 %v461
        %v500 = vunpack.c.l.b16 %v462
        %v501 = vunpack.c.h.b16 %v462
        %v502 = vunpack.c.l.b16 %v463
        %v503 = vunpack.c.h.b16 %v463
        %v504 = vunpack.c.l.b16 %v464
        %v505 = vunpack.c.h.b16 %v464
        %v506 = vunpack.c.l.b16 %v465
        %v507 = vunpack.c.h.b16 %v465
        %v508 = vunpack.c.l.b16 %v466
        %v509 = vunpack.c.h.b16 %v466
        %v510 = vunpack.c.l.b16 %v467
        %v511 = vunpack.c.h.b16 %v467
        %v512 = vunpack.c.l.b16 %v468
        %v513 = vunpack.c.h.b16 %v468
        %v514 = vunpack.c.l.b16 %v469
        %v515 = vunpack.c.h.b16 %v469
        %v516 = vunpack.c.l.b16 %v470
        %v517 = vunpack.c.h.b16 %v470
        %v518 = vunpack.c.l.b16 %v471
        %v519 = vunpack.c.h.b16 %v471
        %v520 = vpack.c.b16 %v492, %v488
        %v521 = vpack.c.b16 %v493, %v489
        %v522 = vpack.c.b16 %v494, %v490
        %v523 = vpack.c.b16 %v495, %v491
        %v524 = vpack.c.b16 %v500, %v496
        %v525 = vpack.c.b16 %v501, %v497
        %v526 = vpack.c.b16 %v502, %v498
        %v527 = vpack.c.b16 %v503, %v499
        %v528 = vpack.c.b16 %v508, %v504
        %v529 = vpack.c.b16 %v509, %v505
        %v530 = vpack.c.b16 %v510, %v506
        %v531 = vpack.c.b16 %v511, %v507
        %v532 = vpack.c.b16 %v516, %v512
        %v533 = vpack.c.b16 %v517, %v513
        %v534 = vpack.c.b16 %v518, %v514
        %v535 = vpack.c.b16 %v519, %v515
        %vm536 = vcmask 1040384
        %v537 = vrot.slane %v520, 7
        %v538 = vrot.slane %v521, 7
        %v539 = vrot.slane %v522, 7
        %v540 = vrot.slane %v523, 7
        %v541 = vrot.slane %v524, 7
        %v542 = vsel %vm536, %v537, %v541
        %v543 = vrot.slane %v525, 7
        %v544 = vsel %vm536, %v538, %v543
        %v545 = vrot.slane %v526, 7
        %v546 = vsel %vm536, %v539, %v545
        %v547 = vrot.slane %v527, 7
        %v548 = vsel %vm536, %v540, %v547
        %v549 = vrot.slane %v528, 7
        %v550 = vsel %vm536, %v541, %v549
        %v551 = vrot.slane %v529, 7
        %v552 = vsel %vm536, %v543, %v551
        %v553 = vrot.slane %v530, 7
        %v554 = vsel %vm536, %v545, %v553
        %v555 = vrot.slane %v531, 7
        %v556 = vsel %vm536, %v547, %v555
        %v557 = vrot.slane %v532, 7
        %v558 = vsel %vm536, %v549, %v557
        %v559 = vrot.slane %v533, 7
        %v560 = vsel %vm536, %v551, %v559
        %v561 = vrot.slane %v534, 7
        %v562 = vsel %vm536, %v553, %v561
        %v563 = vrot.slane %v535, 7
        %v564 = vsel %vm536, %v555, %v563
        %vm577 = vcmask 1040384
        %v580 = vsel %vm577, 0, %v537
        %v583 = vsel %vm577, 0, %v538
        %v586 = vsel %vm577, 0, %v539
        %v589 = vsel %vm577, 0, %v540
        %vm591 = vcmask 1046528
        %v592 = vrot.slane %v520, 1
        %v593 = vrot.slane %v524, 1
        %v594 = vsel %vm591, %v592, %v593
        %v595 = vrot.slane %v521, 1
        %v596 = vrot.slane %v525, 1
        %v597 = vsel %vm591, %v595, %v596
        %v598 = vrot.slane %v522, 1
        %v599 = vrot.slane %v526, 1
        %v600 = vsel %vm591, %v598, %v599
        %v601 = vrot.slane %v523, 1
        %v602 = vrot.slane %v527, 1
        %v603 = vsel %vm591, %v601, %v602
        %v604 = vrot.slane %v528, 1
        %v605 = vsel %vm591, %v593, %v604
        %v606 = vrot.slane %v529, 1
        %v607 = vsel %vm591, %v596, %v606
        %v608 = vrot.slane %v530, 1
        %v609 = vsel %vm591, %v599, %v608
        %v610 = vrot.slane %v531, 1
        %v611 = vsel %vm591, %v602, %v610
        %v612 = vrot.slane %v532, 1
        %v613 = vsel %vm591, %v604, %v612
        %v614 = vrot.slane %v533, 1
        %v615 = vsel %vm591, %v606, %v614
        %v616 = vrot.slane %v534, 1
        %v617 = vsel %vm591, %v608, %v616
        %v618 = vrot.slane %v535, 1
        %v619 = vsel %vm591, %v610, %v618
        %vm632 = vcmask 1046528
        %v634 = vsel %vm632, %v612, 0
        %v637 = vsel %vm632, %v614, 0
        %v640 = vsel %vm632, %v616, 0
        %v643 = vsel %vm632, %v618, 0
        %v645 = vld [vmem:[#allocation4] sm:$0xf]
        %v646 = vld [vmem:[#allocation2] sm:$0xff]
        %v647 = vld [vmem:[#allocation2 + $0x8] sm:$0xff]
        %v648 = vld [vmem:[#allocation2 + $0x10] sm:$0xff]
        %v649 = vld [vmem:[#allocation2 + $0x18] sm:$0xff]
        %v650 = vld [vmem:[#allocation2 + $0x20] sm:$0xff]
        %v651 = vld [vmem:[#allocation2 + $0x28] sm:$0xff]
        %v652 = vld [vmem:[#allocation2 + $0x30] sm:$0xff]
        %v653 = vld [vmem:[#allocation2 + $0x38] sm:$0xff]
        %v654 = vld [vmem:[#allocation2 + $0x40] sm:$0xff]
        %v655 = vld [vmem:[#allocation2 + $0x48] sm:$0xff]
        %v656 = vld [vmem:[#allocation2 + $0x50] sm:$0xff]
        %v657 = vld [vmem:[#allocation2 + $0x58] sm:$0xff]
        %v658 = vld [vmem:[#allocation2 + $0x60] sm:$0xff]
        %v659 = vld [vmem:[#allocation2 + $0x68] sm:$0xff]
        %v660 = vld [vmem:[#allocation2 + $0x70] sm:$0xff]
        %v661 = vld [vmem:[#allocation2 + $0x78] sm:$0xff]
        %v662 = vld [vmem:[#allocation2 + $0x80] sm:$0xff]
        %v663 = vld [vmem:[#allocation2 + $0x88] sm:$0xff]
        %v664 = vld [vmem:[#allocation2 + $0x90] sm:$0xff]
        %v665 = vld [vmem:[#allocation2 + $0x98] sm:$0xff]
        %v666 = vld [vmem:[#allocation2 + $0xa0] sm:$0xff]
        %v667 = vld [vmem:[#allocation2 + $0xa8] sm:$0xff]
        %v668 = vld [vmem:[#allocation2 + $0xb0] sm:$0xff]
        %v669 = vld [vmem:[#allocation2 + $0xb8] sm:$0xff]
        %v670 = vld [vmem:[#allocation2 + $0xc0] sm:$0xff]
        %v671 = vld [vmem:[#allocation2 + $0xc8] sm:$0xff]
        %v672 = vld [vmem:[#allocation2 + $0xd0] sm:$0xff]
        %v673 = vld [vmem:[#allocation2 + $0xd8] sm:$0xff]
        %v674 = vld [vmem:[#allocation2 + $0xe0] sm:$0xff]
        %v675 = vld [vmem:[#allocation2 + $0xe8] sm:$0xff]
        %v676 = vld [vmem:[#allocation2 + $0xf0] sm:$0xff]
        %v677 = vld [vmem:[#allocation2 + $0xf8] sm:$0xff]
        %v678 = vld [vmem:[#allocation2 + $0x100] sm:$0xff]
        %v679 = vld [vmem:[#allocation2 + $0x108] sm:$0xff]
        %v680 = vld [vmem:[#allocation2 + $0x110] sm:$0xff]
        %v681 = vld [vmem:[#allocation2 + $0x118] sm:$0xff]
        %v682 = vld [vmem:[#allocation2 + $0x120] sm:$0xff]
        %v683 = vld [vmem:[#allocation2 + $0x128] sm:$0xff]
        %v684 = vld [vmem:[#allocation2 + $0x130] sm:$0xff]
        %v685 = vld [vmem:[#allocation2 + $0x138] sm:$0xff]
        %v686 = vld [vmem:[#allocation2 + $0x140] sm:$0xff]
        %v687 = vld [vmem:[#allocation2 + $0x148] sm:$0xff]
        %v688 = vld [vmem:[#allocation2 + $0x150] sm:$0xff]
        %v689 = vld [vmem:[#allocation2 + $0x158] sm:$0xff]
        %v690 = vld [vmem:[#allocation2 + $0x160] sm:$0xff]
        %v691 = vld [vmem:[#allocation2 + $0x168] sm:$0xff]
        %v692 = vld [vmem:[#allocation2 + $0x170] sm:$0xff]
        %v693 = vld [vmem:[#allocation2 + $0x178] sm:$0xff]
        %v694 = vld [vmem:[#allocation2 + $0x180] sm:$0xff]
        %v695 = vld [vmem:[#allocation2 + $0x188] sm:$0xff]
        %v696 = vld [vmem:[#allocation2 + $0x190] sm:$0xff]
        %v697 = vld [vmem:[#allocation2 + $0x198] sm:$0xff]
        %v698 = vld [vmem:[#allocation2 + $0x1a0] sm:$0xff]
        %v699 = vld [vmem:[#allocation2 + $0x1a8] sm:$0xff]
        %v700 = vld [vmem:[#allocation2 + $0x1b0] sm:$0xff]
        %v701 = vld [vmem:[#allocation2 + $0x1b8] sm:$0xff]
        %v702 = vld [vmem:[#allocation2 + $0x1c0] sm:$0xff]
        %v703 = vld [vmem:[#allocation2 + $0x1c8] sm:$0xff]
        %v704 = vld [vmem:[#allocation2 + $0x1d0] sm:$0xff]
        %v705 = vld [vmem:[#allocation2 + $0x1d8] sm:$0xff]
        %v706 = vld [vmem:[#allocation2 + $0x1e0] sm:$0xff]
        %v707 = vld [vmem:[#allocation2 + $0x1e8] sm:$0xff]
        %v708 = vld [vmem:[#allocation2 + $0x1f0] sm:$0xff]
        %v709 = vld [vmem:[#allocation2 + $0x1f8] sm:$0xff]
        %v710 = vld [vmem:[#allocation2 + $0x200] sm:$0xff]
        %v711 = vld [vmem:[#allocation2 + $0x208] sm:$0xff]
        %v712 = vld [vmem:[#allocation2 + $0x210] sm:$0xff]
        %v713 = vld [vmem:[#allocation2 + $0x218] sm:$0xff]
        %v714 = vld [vmem:[#allocation2 + $0x220] sm:$0xff]
        %v715 = vld [vmem:[#allocation2 + $0x228] sm:$0xff]
        %v716 = vld [vmem:[#allocation2 + $0x230] sm:$0xff]
        %v717 = vld [vmem:[#allocation2 + $0x238] sm:$0xff]
        %v718 = vld [vmem:[#allocation2 + $0x240] sm:$0xff]
        %v719 = vld [vmem:[#allocation2 + $0x248] sm:$0xff]
        %v720 = vld [vmem:[#allocation2 + $0x250] sm:$0xff]
        %v721 = vld [vmem:[#allocation2 + $0x258] sm:$0xff]
        %v722 = vld [vmem:[#allocation2 + $0x260] sm:$0xff]
        %v723 = vld [vmem:[#allocation2 + $0x268] sm:$0xff]
        %v724 = vld [vmem:[#allocation2 + $0x270] sm:$0xff]
        %v725 = vld [vmem:[#allocation2 + $0x278] sm:$0xff]
        %v726 = vld [vmem:[#allocation2 + $0x280] sm:$0xff]
        %v727 = vld [vmem:[#allocation2 + $0x288] sm:$0xff]
        %v728 = vld [vmem:[#allocation2 + $0x290] sm:$0xff]
        %v729 = vld [vmem:[#allocation2 + $0x298] sm:$0xff]
        %v730 = vld [vmem:[#allocation2 + $0x2a0] sm:$0xff]
        %v731 = vld [vmem:[#allocation2 + $0x2a8] sm:$0xff]
        %v732 = vld [vmem:[#allocation2 + $0x2b0] sm:$0xff]
        %v733 = vld [vmem:[#allocation2 + $0x2b8] sm:$0xff]
        %v734 = vld [vmem:[#allocation2 + $0x2c0] sm:$0xff]
        %v735 = vld [vmem:[#allocation2 + $0x2c8] sm:$0xff]
        %v736 = vld [vmem:[#allocation2 + $0x2d0] sm:$0xff]
        %v737 = vld [vmem:[#allocation2 + $0x2d8] sm:$0xff]
        %v738 = vld [vmem:[#allocation2 + $0x2e0] sm:$0xff]
        %v739 = vld [vmem:[#allocation2 + $0x2e8] sm:$0xff]
        %v740 = vld [vmem:[#allocation2 + $0x2f0] sm:$0xff]
        %v741 = vld [vmem:[#allocation2 + $0x2f8] sm:$0xff]
        %v742 = vld [vmem:[#allocation2 + $0x300] sm:$0xff]
        %v743 = vld [vmem:[#allocation2 + $0x308] sm:$0xff]
        %v744 = vld [vmem:[#allocation2 + $0x310] sm:$0xff]
        %v745 = vld [vmem:[#allocation2 + $0x318] sm:$0xff]
        %v746 = vld [vmem:[#allocation2 + $0x320] sm:$0xff]
        %v747 = vld [vmem:[#allocation2 + $0x328] sm:$0xff]
        %v748 = vld [vmem:[#allocation2 + $0x330] sm:$0xff]
        %v749 = vld [vmem:[#allocation2 + $0x338] sm:$0xff]
        %v750 = vld [vmem:[#allocation2 + $0x340] sm:$0xff]
        %v751 = vld [vmem:[#allocation2 + $0x348] sm:$0xff]
        %v752 = vld [vmem:[#allocation2 + $0x350] sm:$0xff]
        %v753 = vld [vmem:[#allocation2 + $0x358] sm:$0xff]
        %v754 = vld [vmem:[#allocation2 + $0x360] sm:$0xff]
        %v755 = vld [vmem:[#allocation2 + $0x368] sm:$0xff]
        %v756 = vld [vmem:[#allocation2 + $0x370] sm:$0xff]
        %v757 = vld [vmem:[#allocation2 + $0x378] sm:$0xff]
        %v758 = vld [vmem:[#allocation2 + $0x380] sm:$0xff]
        %v759 = vld [vmem:[#allocation2 + $0x388] sm:$0xff]
        %v760 = vld [vmem:[#allocation2 + $0x390] sm:$0xff]
        %v761 = vld [vmem:[#allocation2 + $0x398] sm:$0xff]
        %v762 = vld [vmem:[#allocation2 + $0x3a0] sm:$0xff]
        %v763 = vld [vmem:[#allocation2 + $0x3a8] sm:$0xff]
        %v764 = vld [vmem:[#allocation2 + $0x3b0] sm:$0xff]
        %v765 = vld [vmem:[#allocation2 + $0x3b8] sm:$0xff]
        %v766 = vld [vmem:[#allocation2 + $0x3c0] sm:$0xff]
        %v767 = vld [vmem:[#allocation2 + $0x3c8] sm:$0xff]
        %v768 = vld [vmem:[#allocation2 + $0x3d0] sm:$0xff]
        %v769 = vld [vmem:[#allocation2 + $0x3d8] sm:$0xff]
        %v770 = vld [vmem:[#allocation2 + $0x3e0] sm:$0xff]
        %v771 = vld [vmem:[#allocation2 + $0x3e8] sm:$0xff]
        %v772 = vld [vmem:[#allocation2 + $0x3f0] sm:$0xff]
        %v773 = vld [vmem:[#allocation2 + $0x3f8] sm:$0xff]
        %v902 = vunpack.c.l.b16 %v646
        %v903 = vunpack.c.h.b16 %v646
        %v904 = vunpack.c.l.b16 %v647
        %v905 = vunpack.c.h.b16 %v647
        %v906 = vunpack.c.l.b16 %v648
        %v907 = vunpack.c.h.b16 %v648
        %v908 = vunpack.c.l.b16 %v649
        %v909 = vunpack.c.h.b16 %v649
        %v910 = vunpack.c.l.b16 %v650
        %v911 = vunpack.c.h.b16 %v650
        %v912 = vunpack.c.l.b16 %v651
        %v913 = vunpack.c.h.b16 %v651
        %v914 = vunpack.c.l.b16 %v652
        %v915 = vunpack.c.h.b16 %v652
        %v916 = vunpack.c.l.b16 %v653
        %v917 = vunpack.c.h.b16 %v653
        %v918 = vunpack.c.l.b16 %v654
        %v919 = vunpack.c.h.b16 %v654
        %v920 = vunpack.c.l.b16 %v655
        %v921 = vunpack.c.h.b16 %v655
        %v922 = vunpack.c.l.b16 %v656
        %v923 = vunpack.c.h.b16 %v656
        %v924 = vunpack.c.l.b16 %v657
        %v925 = vunpack.c.h.b16 %v657
        %v926 = vunpack.c.l.b16 %v658
        %v927 = vunpack.c.h.b16 %v658
        %v928 = vunpack.c.l.b16 %v659
        %v929 = vunpack.c.h.b16 %v659
        %v930 = vunpack.c.l.b16 %v660
        %v931 = vunpack.c.h.b16 %v660
        %v932 = vunpack.c.l.b16 %v661
        %v933 = vunpack.c.h.b16 %v661
        %v934 = vunpack.c.l.b16 %v662
        %v935 = vunpack.c.h.b16 %v662
        %v936 = vunpack.c.l.b16 %v663
        %v937 = vunpack.c.h.b16 %v663
        %v938 = vunpack.c.l.b16 %v664
        %v939 = vunpack.c.h.b16 %v664
        %v940 = vunpack.c.l.b16 %v665
        %v941 = vunpack.c.h.b16 %v665
        %v942 = vunpack.c.l.b16 %v666
        %v943 = vunpack.c.h.b16 %v666
        %v944 = vunpack.c.l.b16 %v667
        %v945 = vunpack.c.h.b16 %v667
        %v946 = vunpack.c.l.b16 %v668
        %v947 = vunpack.c.h.b16 %v668
        %v948 = vunpack.c.l.b16 %v669
        %v949 = vunpack.c.h.b16 %v669
        %v950 = vunpack.c.l.b16 %v670
        %v951 = vunpack.c.h.b16 %v670
        %v952 = vunpack.c.l.b16 %v671
        %v953 = vunpack.c.h.b16 %v671
        %v954 = vunpack.c.l.b16 %v672
        %v955 = vunpack.c.h.b16 %v672
        %v956 = vunpack.c.l.b16 %v673
        %v957 = vunpack.c.h.b16 %v673
        %v958 = vunpack.c.l.b16 %v674
        %v959 = vunpack.c.h.b16 %v674
        %v960 = vunpack.c.l.b16 %v675
        %v961 = vunpack.c.h.b16 %v675
        %v962 = vunpack.c.l.b16 %v676
        %v963 = vunpack.c.h.b16 %v676
        %v964 = vunpack.c.l.b16 %v677
        %v965 = vunpack.c.h.b16 %v677
        %v966 = vunpack.c.l.b16 %v678
        %v967 = vunpack.c.h.b16 %v678
        %v968 = vunpack.c.l.b16 %v679
        %v969 = vunpack.c.h.b16 %v679
        %v970 = vunpack.c.l.b16 %v680
        %v971 = vunpack.c.h.b16 %v680
        %v972 = vunpack.c.l.b16 %v681
        %v973 = vunpack.c.h.b16 %v681
        %v974 = vunpack.c.l.b16 %v682
        %v975 = vunpack.c.h.b16 %v682
        %v976 = vunpack.c.l.b16 %v683
        %v977 = vunpack.c.h.b16 %v683
        %v978 = vunpack.c.l.b16 %v684
        %v979 = vunpack.c.h.b16 %v684
        %v980 = vunpack.c.l.b16 %v685
        %v981 = vunpack.c.h.b16 %v685
        %v982 = vunpack.c.l.b16 %v686
        %v983 = vunpack.c.h.b16 %v686
        %v984 = vunpack.c.l.b16 %v687
        %v985 = vunpack.c.h.b16 %v687
        %v986 = vunpack.c.l.b16 %v688
        %v987 = vunpack.c.h.b16 %v688
        %v988 = vunpack.c.l.b16 %v689
        %v989 = vunpack.c.h.b16 %v689
        %v990 = vunpack.c.l.b16 %v690
        %v991 = vunpack.c.h.b16 %v690
        %v992 = vunpack.c.l.b16 %v691
        %v993 = vunpack.c.h.b16 %v691
        %v994 = vunpack.c.l.b16 %v692
        %v995 = vunpack.c.h.b16 %v692
        %v996 = vunpack.c.l.b16 %v693
        %v997 = vunpack.c.h.b16 %v693
        %v998 = vunpack.c.l.b16 %v694
        %v999 = vunpack.c.h.b16 %v694
        %v1000 = vunpack.c.l.b16 %v695
        %v1001 = vunpack.c.h.b16 %v695
        %v1002 = vunpack.c.l.b16 %v696
        %v1003 = vunpack.c.h.b16 %v696
        %v1004 = vunpack.c.l.b16 %v697
        %v1005 = vunpack.c.h.b16 %v697
        %v1006 = vunpack.c.l.b16 %v698
        %v1007 = vunpack.c.h.b16 %v698
        %v1008 = vunpack.c.l.b16 %v699
        %v1009 = vunpack.c.h.b16 %v699
        %v1010 = vunpack.c.l.b16 %v700
        %v1011 = vunpack.c.h.b16 %v700
        %v1012 = vunpack.c.l.b16 %v701
        %v1013 = vunpack.c.h.b16 %v701
        %v1014 = vunpack.c.l.b16 %v702
        %v1015 = vunpack.c.h.b16 %v702
        %v1016 = vunpack.c.l.b16 %v703
        %v1017 = vunpack.c.h.b16 %v703
        %v1018 = vunpack.c.l.b16 %v704
        %v1019 = vunpack.c.h.b16 %v704
        %v1020 = vunpack.c.l.b16 %v705
        %v1021 = vunpack.c.h.b16 %v705
        %v1022 = vunpack.c.l.b16 %v706
        %v1023 = vunpack.c.h.b16 %v706
        %v1024 = vunpack.c.l.b16 %v707
        %v1025 = vunpack.c.h.b16 %v707
        %v1026 = vunpack.c.l.b16 %v708
        %v1027 = vunpack.c.h.b16 %v708
        %v1028 = vunpack.c.l.b16 %v709
        %v1029 = vunpack.c.h.b16 %v709
        %v1030 = vunpack.c.l.b16 %v710
        %v1031 = vunpack.c.h.b16 %v710
        %v1032 = vunpack.c.l.b16 %v711
        %v1033 = vunpack.c.h.b16 %v711
        %v1034 = vunpack.c.l.b16 %v712
        %v1035 = vunpack.c.h.b16 %v712
        %v1036 = vunpack.c.l.b16 %v713
        %v1037 = vunpack.c.h.b16 %v713
        %v1038 = vunpack.c.l.b16 %v714
        %v1039 = vunpack.c.h.b16 %v714
        %v1040 = vunpack.c.l.b16 %v715
        %v1041 = vunpack.c.h.b16 %v715
        %v1042 = vunpack.c.l.b16 %v716
        %v1043 = vunpack.c.h.b16 %v716
        %v1044 = vunpack.c.l.b16 %v717
        %v1045 = vunpack.c.h.b16 %v717
        %v1046 = vunpack.c.l.b16 %v718
        %v1047 = vunpack.c.h.b16 %v718
        %v1048 = vunpack.c.l.b16 %v719
        %v1049 = vunpack.c.h.b16 %v719
        %v1050 = vunpack.c.l.b16 %v720
        %v1051 = vunpack.c.h.b16 %v720
        %v1052 = vunpack.c.l.b16 %v721
        %v1053 = vunpack.c.h.b16 %v721
        %v1054 = vunpack.c.l.b16 %v722
        %v1055 = vunpack.c.h.b16 %v722
        %v1056 = vunpack.c.l.b16 %v723
        %v1057 = vunpack.c.h.b16 %v723
        %v1058 = vunpack.c.l.b16 %v724
        %v1059 = vunpack.c.h.b16 %v724
        %v1060 = vunpack.c.l.b16 %v725
        %v1061 = vunpack.c.h.b16 %v725
        %v1062 = vunpack.c.l.b16 %v726
        %v1063 = vunpack.c.h.b16 %v726
        %v1064 = vunpack.c.l.b16 %v727
        %v1065 = vunpack.c.h.b16 %v727
        %v1066 = vunpack.c.l.b16 %v728
        %v1067 = vunpack.c.h.b16 %v728
        %v1068 = vunpack.c.l.b16 %v729
        %v1069 = vunpack.c.h.b16 %v729
        %v1070 = vunpack.c.l.b16 %v730
        %v1071 = vunpack.c.h.b16 %v730
        %v1072 = vunpack.c.l.b16 %v731
        %v1073 = vunpack.c.h.b16 %v731
        %v1074 = vunpack.c.l.b16 %v732
        %v1075 = vunpack.c.h.b16 %v732
        %v1076 = vunpack.c.l.b16 %v733
        %v1077 = vunpack.c.h.b16 %v733
        %v1078 = vunpack.c.l.b16 %v734
        %v1079 = vunpack.c.h.b16 %v734
        %v1080 = vunpack.c.l.b16 %v735
        %v1081 = vunpack.c.h.b16 %v735
        %v1082 = vunpack.c.l.b16 %v736
        %v1083 = vunpack.c.h.b16 %v736
        %v1084 = vunpack.c.l.b16 %v737
        %v1085 = vunpack.c.h.b16 %v737
        %v1086 = vunpack.c.l.b16 %v738
        %v1087 = vunpack.c.h.b16 %v738
        %v1088 = vunpack.c.l.b16 %v739
        %v1089 = vunpack.c.h.b16 %v739
        %v1090 = vunpack.c.l.b16 %v740
        %v1091 = vunpack.c.h.b16 %v740
        %v1092 = vunpack.c.l.b16 %v741
        %v1093 = vunpack.c.h.b16 %v741
        %v1094 = vunpack.c.l.b16 %v742
        %v1095 = vunpack.c.h.b16 %v742
        %v1096 = vunpack.c.l.b16 %v743
        %v1097 = vunpack.c.h.b16 %v743
        %v1098 = vunpack.c.l.b16 %v744
        %v1099 = vunpack.c.h.b16 %v744
        %v1100 = vunpack.c.l.b16 %v745
        %v1101 = vunpack.c.h.b16 %v745
        %v1102 = vunpack.c.l.b16 %v746
        %v1103 = vunpack.c.h.b16 %v746
        %v1104 = vunpack.c.l.b16 %v747
        %v1105 = vunpack.c.h.b16 %v747
        %v1106 = vunpack.c.l.b16 %v748
        %v1107 = vunpack.c.h.b16 %v748
        %v1108 = vunpack.c.l.b16 %v749
        %v1109 = vunpack.c.h.b16 %v749
        %v1110 = vunpack.c.l.b16 %v750
        %v1111 = vunpack.c.h.b16 %v750
        %v1112 = vunpack.c.l.b16 %v751
        %v1113 = vunpack.c.h.b16 %v751
        %v1114 = vunpack.c.l.b16 %v752
        %v1115 = vunpack.c.h.b16 %v752
        %v1116 = vunpack.c.l.b16 %v753
        %v1117 = vunpack.c.h.b16 %v753
        %v1118 = vunpack.c.l.b16 %v754
        %v1119 = vunpack.c.h.b16 %v754
        %v1120 = vunpack.c.l.b16 %v755
        %v1121 = vunpack.c.h.b16 %v755
        %v1122 = vunpack.c.l.b16 %v756
        %v1123 = vunpack.c.h.b16 %v756
        %v1124 = vunpack.c.l.b16 %v757
        %v1125 = vunpack.c.h.b16 %v757
        %v1126 = vunpack.c.l.b16 %v758
        %v1127 = vunpack.c.h.b16 %v758
        %v1128 = vunpack.c.l.b16 %v759
        %v1129 = vunpack.c.h.b16 %v759
        %v1130 = vunpack.c.l.b16 %v760
        %v1131 = vunpack.c.h.b16 %v760
        %v1132 = vunpack.c.l.b16 %v761
        %v1133 = vunpack.c.h.b16 %v761
        %v1134 = vunpack.c.l.b16 %v762
        %v1135 = vunpack.c.h.b16 %v762
        %v1136 = vunpack.c.l.b16 %v763
        %v1137 = vunpack.c.h.b16 %v763
        %v1138 = vunpack.c.l.b16 %v764
        %v1139 = vunpack.c.h.b16 %v764
        %v1140 = vunpack.c.l.b16 %v765
        %v1141 = vunpack.c.h.b16 %v765
        %v1142 = vunpack.c.l.b16 %v766
        %v1143 = vunpack.c.h.b16 %v766
        %v1144 = vunpack.c.l.b16 %v767
        %v1145 = vunpack.c.h.b16 %v767
        %v1146 = vunpack.c.l.b16 %v768
        %v1147 = vunpack.c.h.b16 %v768
        %v1148 = vunpack.c.l.b16 %v769
        %v1149 = vunpack.c.h.b16 %v769
        %v1150 = vunpack.c.l.b16 %v770
        %v1151 = vunpack.c.h.b16 %v770
        %v1152 = vunpack.c.l.b16 %v771
        %v1153 = vunpack.c.h.b16 %v771
        %v1154 = vunpack.c.l.b16 %v772
        %v1155 = vunpack.c.h.b16 %v772
        %v1156 = vunpack.c.l.b16 %v773
        %v1157 = vunpack.c.h.b16 %v773
        %v1158 = vpack.c.b16 %v906, %v902
        %v1159 = vpack.c.b16 %v907, %v903
        %v1160 = vpack.c.b16 %v908, %v904
        %v1161 = vpack.c.b16 %v909, %v905
        %v1162 = vpack.c.b16 %v914, %v910
        %v1163 = vpack.c.b16 %v915, %v911
        %v1164 = vpack.c.b16 %v916, %v912
        %v1165 = vpack.c.b16 %v917, %v913
        %v1166 = vpack.c.b16 %v922, %v918
        %v1167 = vpack.c.b16 %v923, %v919
        %v1168 = vpack.c.b16 %v924, %v920
        %v1169 = vpack.c.b16 %v925, %v921
        %v1170 = vpack.c.b16 %v930, %v926
        %v1171 = vpack.c.b16 %v931, %v927
        %v1172 = vpack.c.b16 %v932, %v928
        %v1173 = vpack.c.b16 %v933, %v929
        %v1174 = vpack.c.b16 %v938, %v934
        %v1175 = vpack.c.b16 %v939, %v935
        %v1176 = vpack.c.b16 %v940, %v936
        %v1177 = vpack.c.b16 %v941, %v937
        %v1178 = vpack.c.b16 %v946, %v942
        %v1179 = vpack.c.b16 %v947, %v943
        %v1180 = vpack.c.b16 %v948, %v944
        %v1181 = vpack.c.b16 %v949, %v945
        %v1182 = vpack.c.b16 %v954, %v950
        %v1183 = vpack.c.b16 %v955, %v951
        %v1184 = vpack.c.b16 %v956, %v952
        %v1185 = vpack.c.b16 %v957, %v953
        %v1186 = vpack.c.b16 %v962, %v958
        %v1187 = vpack.c.b16 %v963, %v959
        %v1188 = vpack.c.b16 %v964, %v960
        %v1189 = vpack.c.b16 %v965, %v961
        %v1190 = vpack.c.b16 %v970, %v966
        %v1191 = vpack.c.b16 %v971, %v967
        %v1192 = vpack.c.b16 %v972, %v968
        %v1193 = vpack.c.b16 %v973, %v969
        %v1194 = vpack.c.b16 %v978, %v974
        %v1195 = vpack.c.b16 %v979, %v975
        %v1196 = vpack.c.b16 %v980, %v976
        %v1197 = vpack.c.b16 %v981, %v977
        %v1198 = vpack.c.b16 %v986, %v982
        %v1199 = vpack.c.b16 %v987, %v983
        %v1200 = vpack.c.b16 %v988, %v984
        %v1201 = vpack.c.b16 %v989, %v985
        %v1202 = vpack.c.b16 %v994, %v990
        %v1203 = vpack.c.b16 %v995, %v991
        %v1204 = vpack.c.b16 %v996, %v992
        %v1205 = vpack.c.b16 %v997, %v993
        %v1206 = vpack.c.b16 %v1002, %v998
        %v1207 = vpack.c.b16 %v1003, %v999
        %v1208 = vpack.c.b16 %v1004, %v1000
        %v1209 = vpack.c.b16 %v1005, %v1001
        %v1210 = vpack.c.b16 %v1010, %v1006
        %v1211 = vpack.c.b16 %v1011, %v1007
        %v1212 = vpack.c.b16 %v1012, %v1008
        %v1213 = vpack.c.b16 %v1013, %v1009
        %v1214 = vpack.c.b16 %v1018, %v1014
        %v1215 = vpack.c.b16 %v1019, %v1015
        %v1216 = vpack.c.b16 %v1020, %v1016
        %v1217 = vpack.c.b16 %v1021, %v1017
        %v1218 = vpack.c.b16 %v1026, %v1022
        %v1219 = vpack.c.b16 %v1027, %v1023
        %v1220 = vpack.c.b16 %v1028, %v1024
        %v1221 = vpack.c.b16 %v1029, %v1025
        %v1222 = vpack.c.b16 %v1034, %v1030
        %v1223 = vpack.c.b16 %v1035, %v1031
        %v1224 = vpack.c.b16 %v1036, %v1032
        %v1225 = vpack.c.b16 %v1037, %v1033
        %v1226 = vpack.c.b16 %v1042, %v1038
        %v1227 = vpack.c.b16 %v1043, %v1039
        %v1228 = vpack.c.b16 %v1044, %v1040
        %v1229 = vpack.c.b16 %v1045, %v1041
        %v1230 = vpack.c.b16 %v1050, %v1046
        %v1231 = vpack.c.b16 %v1051, %v1047
        %v1232 = vpack.c.b16 %v1052, %v1048
        %v1233 = vpack.c.b16 %v1053, %v1049
        %v1234 = vpack.c.b16 %v1058, %v1054
        %v1235 = vpack.c.b16 %v1059, %v1055
        %v1236 = vpack.c.b16 %v1060, %v1056
        %v1237 = vpack.c.b16 %v1061, %v1057
        %v1238 = vpack.c.b16 %v1066, %v1062
        %v1239 = vpack.c.b16 %v1067, %v1063
        %v1240 = vpack.c.b16 %v1068, %v1064
        %v1241 = vpack.c.b16 %v1069, %v1065
        %v1242 = vpack.c.b16 %v1074, %v1070
        %v1243 = vpack.c.b16 %v1075, %v1071
        %v1244 = vpack.c.b16 %v1076, %v1072
        %v1245 = vpack.c.b16 %v1077, %v1073
        %v1246 = vpack.c.b16 %v1082, %v1078
        %v1247 = vpack.c.b16 %v1083, %v1079
        %v1248 = vpack.c.b16 %v1084, %v1080
        %v1249 = vpack.c.b16 %v1085, %v1081
        %v1250 = vpack.c.b16 %v1090, %v1086
        %v1251 = vpack.c.b16 %v1091, %v1087
        %v1252 = vpack.c.b16 %v1092, %v1088
        %v1253 = vpack.c.b16 %v1093, %v1089
        %v1254 = vpack.c.b16 %v1098, %v1094
        %v1255 = vpack.c.b16 %v1099, %v1095
        %v1256 = vpack.c.b16 %v1100, %v1096
        %v1257 = vpack.c.b16 %v1101, %v1097
        %v1258 = vpack.c.b16 %v1106, %v1102
        %v1259 = vpack.c.b16 %v1107, %v1103
        %v1260 = vpack.c.b16 %v1108, %v1104
        %v1261 = vpack.c.b16 %v1109, %v1105
        %v1262 = vpack.c.b16 %v1114, %v1110
        %v1263 = vpack.c.b16 %v1115, %v1111
        %v1264 = vpack.c.b16 %v1116, %v1112
        %v1265 = vpack.c.b16 %v1117, %v1113
        %v1266 = vpack.c.b16 %v1122, %v1118
        %v1267 = vpack.c.b16 %v1123, %v1119
        %v1268 = vpack.c.b16 %v1124, %v1120
        %v1269 = vpack.c.b16 %v1125, %v1121
        %v1270 = vpack.c.b16 %v1130, %v1126
        %v1271 = vpack.c.b16 %v1131, %v1127
        %v1272 = vpack.c.b16 %v1132, %v1128
        %v1273 = vpack.c.b16 %v1133, %v1129
        %v1274 = vpack.c.b16 %v1138, %v1134
        %v1275 = vpack.c.b16 %v1139, %v1135
        %v1276 = vpack.c.b16 %v1140, %v1136
        %v1277 = vpack.c.b16 %v1141, %v1137
        %v1278 = vpack.c.b16 %v1146, %v1142
        %v1279 = vpack.c.b16 %v1147, %v1143
        %v1280 = vpack.c.b16 %v1148, %v1144
        %v1281 = vpack.c.b16 %v1149, %v1145
        %v1282 = vpack.c.b16 %v1154, %v1150
        %v1283 = vpack.c.b16 %v1155, %v1151
        %v1284 = vpack.c.b16 %v1156, %v1152
        %v1285 = vpack.c.b16 %v1157, %v1153
        %1414 = vmatpush.bf16.msra.mxu0 %v1186
        %1415 = vmatpush.bf16.msra.mxu0 %v1182
        %1416 = vmatpush.bf16.msra.mxu0 %v1178
        %1417 = vmatpush.bf16.msra.mxu0 %v1174
        %1418 = vmatpush.bf16.msra.mxu0 %v1170
        %1419 = vmatpush.bf16.msra.mxu0 %v1166
        %1420 = vmatpush.bf16.msra.mxu0 %v1162
        %1421 = vmatpush.bf16.msra.mxu0 %v1158
        %1422 = vmatmul.bf16.gmra.mxu0 %v580
        %v1423 = vpop.f32.mrf.mxu0
        %v1424 = vadd.f32 0.0, %v1423
        %v1425 = vpop.f32.mrf.mxu0
        %v1426 = vadd.f32 0.0, %v1425
        %1427 = vmatmul.bf16.gmra.mxu0 %v542
        %v1428 = vpop.f32.mrf.mxu0
        %v1429 = vadd.f32 0.0, %v1428
        %v1430 = vpop.f32.mrf.mxu0
        %v1431 = vadd.f32 0.0, %v1430
        %1432 = vmatmul.bf16.gmra.mxu0 %v550
        %v1433 = vpop.f32.mrf.mxu0
        %v1434 = vadd.f32 0.0, %v1433
        %v1435 = vpop.f32.mrf.mxu0
        %v1436 = vadd.f32 0.0, %v1435
        %1437 = vmatmul.bf16.gmra.mxu0 %v558
        %v1438 = vpop.f32.mrf.mxu0
        %v1439 = vadd.f32 0.0, %v1438
        %v1440 = vpop.f32.mrf.mxu0
        %v1441 = vadd.f32 0.0, %v1440
        %1442 = vdwg.mxu0
        %1443 = vmatpush.bf16.msra.mxu0 %v1218
        %1444 = vmatpush.bf16.msra.mxu0 %v1214
        %1445 = vmatpush.bf16.msra.mxu0 %v1210
        %1446 = vmatpush.bf16.msra.mxu0 %v1206
        %1447 = vmatpush.bf16.msra.mxu0 %v1202
        %1448 = vmatpush.bf16.msra.mxu0 %v1198
        %1449 = vmatpush.bf16.msra.mxu0 %v1194
        %1450 = vmatpush.bf16.msra.mxu0 %v1190
        %1451 = vmatmul.bf16.gmra.mxu0 %v583
        %v1452 = vpop.f32.mrf.mxu0
        %v1453 = vadd.f32 %v1424, %v1452
        %v1454 = vpop.f32.mrf.mxu0
        %v1455 = vadd.f32 %v1426, %v1454
        %1456 = vmatmul.bf16.gmra.mxu0 %v544
        %v1457 = vpop.f32.mrf.mxu0
        %v1458 = vadd.f32 %v1429, %v1457
        %v1459 = vpop.f32.mrf.mxu0
        %v1460 = vadd.f32 %v1431, %v1459
        %1461 = vmatmul.bf16.gmra.mxu0 %v552
        %v1462 = vpop.f32.mrf.mxu0
        %v1463 = vadd.f32 %v1434, %v1462
        %v1464 = vpop.f32.mrf.mxu0
        %v1465 = vadd.f32 %v1436, %v1464
        %1466 = vmatmul.bf16.gmra.mxu0 %v560
        %v1467 = vpop.f32.mrf.mxu0
        %v1468 = vadd.f32 %v1439, %v1467
        %v1469 = vpop.f32.mrf.mxu0
        %v1470 = vadd.f32 %v1441, %v1469
        %1471 = vdwg.mxu0
        %1472 = vmatpush.bf16.msra.mxu0 %v1250
        %1473 = vmatpush.bf16.msra.mxu0 %v1246
        %1474 = vmatpush.bf16.msra.mxu0 %v1242
        %1475 = vmatpush.bf16.msra.mxu0 %v1238
        %1476 = vmatpush.bf16.msra.mxu0 %v1234
        %1477 = vmatpush.bf16.msra.mxu0 %v1230
        %1478 = vmatpush.bf16.msra.mxu0 %v1226
        %1479 = vmatpush.bf16.msra.mxu0 %v1222
        %1480 = vmatmul.bf16.gmra.mxu0 %v586
        %v1481 = vpop.f32.mrf.mxu0
        %v1482 = vadd.f32 %v1453, %v1481
        %v1483 = vpop.f32.mrf.mxu0
        %v1484 = vadd.f32 %v1455, %v1483
        %1485 = vmatmul.bf16.gmra.mxu0 %v546
        %v1486 = vpop.f32.mrf.mxu0
        %v1487 = vadd.f32 %v1458, %v1486
        %v1488 = vpop.f32.mrf.mxu0
        %v1489 = vadd.f32 %v1460, %v1488
        %1490 = vmatmul.bf16.gmra.mxu0 %v554
        %v1491 = vpop.f32.mrf.mxu0
        %v1492 = vadd.f32 %v1463, %v1491
        %v1493 = vpop.f32.mrf.mxu0
        %v1494 = vadd.f32 %v1465, %v1493
        %1495 = vmatmul.bf16.gmra.mxu0 %v562
        %v1496 = vpop.f32.mrf.mxu0
        %v1497 = vadd.f32 %v1468, %v1496
        %v1498 = vpop.f32.mrf.mxu0
        %v1499 = vadd.f32 %v1470, %v1498
        %1500 = vdwg.mxu0
        %1501 = vmatpush.bf16.msra.mxu0 %v1282
        %1502 = vmatpush.bf16.msra.mxu0 %v1278
        %1503 = vmatpush.bf16.msra.mxu0 %v1274
        %1504 = vmatpush.bf16.msra.mxu0 %v1270
        %1505 = vmatpush.bf16.msra.mxu0 %v1266
        %1506 = vmatpush.bf16.msra.mxu0 %v1262
        %1507 = vmatpush.bf16.msra.mxu0 %v1258
        %1508 = vmatpush.bf16.msra.mxu0 %v1254
        %1509 = vmatmul.bf16.gmra.mxu0 %v589
        %v1510 = vpop.f32.mrf.mxu0
        %v1511 = vadd.f32 %v1482, %v1510
        %v1512 = vpop.f32.mrf.mxu0
        %v1513 = vadd.f32 %v1484, %v1512
        %1514 = vmatmul.bf16.gmra.mxu0 %v548
        %v1515 = vpop.f32.mrf.mxu0
        %v1516 = vadd.f32 %v1487, %v1515
        %v1517 = vpop.f32.mrf.mxu0
        %v1518 = vadd.f32 %v1489, %v1517
        %1519 = vmatmul.bf16.gmra.mxu0 %v556
        %v1520 = vpop.f32.mrf.mxu0
        %v1521 = vadd.f32 %v1492, %v1520
        %v1522 = vpop.f32.mrf.mxu0
        %v1523 = vadd.f32 %v1494, %v1522
        %1524 = vmatmul.bf16.gmra.mxu0 %v564
        %v1525 = vpop.f32.mrf.mxu0
        %v1526 = vadd.f32 %v1497, %v1525
        %v1527 = vpop.f32.mrf.mxu0
        %v1528 = vadd.f32 %v1499, %v1527
        %1529 = vdwg.mxu0
        %1530 = vmatpush.bf16.msra.mxu0 %v1187
        %1531 = vmatpush.bf16.msra.mxu0 %v1183
        %1532 = vmatpush.bf16.msra.mxu0 %v1179
        %1533 = vmatpush.bf16.msra.mxu0 %v1175
        %1534 = vmatpush.bf16.msra.mxu0 %v1171
        %1535 = vmatpush.bf16.msra.mxu0 %v1167
        %1536 = vmatpush.bf16.msra.mxu0 %v1163
        %1537 = vmatpush.bf16.msra.mxu0 %v1159
        %1538 = vmatmul.bf16.gmra.mxu0 %v580
        %v1539 = vpop.f32.mrf.mxu0
        %v1540 = vadd.f32 0.0, %v1539
        %v1541 = vpop.f32.mrf.mxu0
        %v1542 = vadd.f32 0.0, %v1541
        %1543 = vmatmul.bf16.gmra.mxu0 %v542
        %v1544 = vpop.f32.mrf.mxu0
        %v1545 = vadd.f32 0.0, %v1544
        %v1546 = vpop.f32.mrf.mxu0
        %v1547 = vadd.f32 0.0, %v1546
        %1548 = vmatmul.bf16.gmra.mxu0 %v550
        %v1549 = vpop.f32.mrf.mxu0
        %v1550 = vadd.f32 0.0, %v1549
        %v1551 = vpop.f32.mrf.mxu0
        %v1552 = vadd.f32 0.0, %v1551
        %1553 = vmatmul.bf16.gmra.mxu0 %v558
        %v1554 = vpop.f32.mrf.mxu0
        %v1555 = vadd.f32 0.0, %v1554
        %v1556 = vpop.f32.mrf.mxu0
        %v1557 = vadd.f32 0.0, %v1556
        %1558 = vdwg.mxu0
        %1559 = vmatpush.bf16.msra.mxu0 %v1219
        %1560 = vmatpush.bf16.msra.mxu0 %v1215
        %1561 = vmatpush.bf16.msra.mxu0 %v1211
        %1562 = vmatpush.bf16.msra.mxu0 %v1207
        %1563 = vmatpush.bf16.msra.mxu0 %v1203
        %1564 = vmatpush.bf16.msra.mxu0 %v1199
        %1565 = vmatpush.bf16.msra.mxu0 %v1195
        %1566 = vmatpush.bf16.msra.mxu0 %v1191
        %1567 = vmatmul.bf16.gmra.mxu0 %v583
        %v1568 = vpop.f32.mrf.mxu0
        %v1569 = vadd.f32 %v1540, %v1568
        %v1570 = vpop.f32.mrf.mxu0
        %v1571 = vadd.f32 %v1542, %v1570
        %1572 = vmatmul.bf16.gmra.mxu0 %v544
        %v1573 = vpop.f32.mrf.mxu0
        %v1574 = vadd.f32 %v1545, %v1573
        %v1575 = vpop.f32.mrf.mxu0
        %v1576 = vadd.f32 %v1547, %v1575
        %1577 = vmatmul.bf16.gmra.mxu0 %v552
        %v1578 = vpop.f32.mrf.mxu0
        %v1579 = vadd.f32 %v1550, %v1578
        %v1580 = vpop.f32.mrf.mxu0
        %v1581 = vadd.f32 %v1552, %v1580
        %1582 = vmatmul.bf16.gmra.mxu0 %v560
        %v1583 = vpop.f32.mrf.mxu0
        %v1584 = vadd.f32 %v1555, %v1583
        %v1585 = vpop.f32.mrf.mxu0
        %v1586 = vadd.f32 %v1557, %v1585
        %1587 = vdwg.mxu0
        %1588 = vmatpush.bf16.msra.mxu0 %v1251
        %1589 = vmatpush.bf16.msra.mxu0 %v1247
        %1590 = vmatpush.bf16.msra.mxu0 %v1243
        %1591 = vmatpush.bf16.msra.mxu0 %v1239
        %1592 = vmatpush.bf16.msra.mxu0 %v1235
        %1593 = vmatpush.bf16.msra.mxu0 %v1231
        %1594 = vmatpush.bf16.msra.mxu0 %v1227
        %1595 = vmatpush.bf16.msra.mxu0 %v1223
        %1596 = vmatmul.bf16.gmra.mxu0 %v586
        %v1597 = vpop.f32.mrf.mxu0
        %v1598 = vadd.f32 %v1569, %v1597
        %v1599 = vpop.f32.mrf.mxu0
        %v1600 = vadd.f32 %v1571, %v1599
        %1601 = vmatmul.bf16.gmra.mxu0 %v546
        %v1602 = vpop.f32.mrf.mxu0
        %v1603 = vadd.f32 %v1574, %v1602
        %v1604 = vpop.f32.mrf.mxu0
        %v1605 = vadd.f32 %v1576, %v1604
        %1606 = vmatmul.bf16.gmra.mxu0 %v554
        %v1607 = vpop.f32.mrf.mxu0
        %v1608 = vadd.f32 %v1579, %v1607
        %v1609 = vpop.f32.mrf.mxu0
        %v1610 = vadd.f32 %v1581, %v1609
        %1611 = vmatmul.bf16.gmra.mxu0 %v562
        %v1612 = vpop.f32.mrf.mxu0
        %v1613 = vadd.f32 %v1584, %v1612
        %v1614 = vpop.f32.mrf.mxu0
        %v1615 = vadd.f32 %v1586, %v1614
        %1616 = vdwg.mxu0
        %1617 = vmatpush.bf16.msra.mxu0 %v1283
        %1618 = vmatpush.bf16.msra.mxu0 %v1279
        %1619 = vmatpush.bf16.msra.mxu0 %v1275
        %1620 = vmatpush.bf16.msra.mxu0 %v1271
        %1621 = vmatpush.bf16.msra.mxu0 %v1267
        %1622 = vmatpush.bf16.msra.mxu0 %v1263
        %1623 = vmatpush.bf16.msra.mxu0 %v1259
        %1624 = vmatpush.bf16.msra.mxu0 %v1255
        %1625 = vmatmul.bf16.gmra.mxu0 %v589
        %v1626 = vpop.f32.mrf.mxu0
        %v1627 = vadd.f32 %v1598, %v1626
        %v1628 = vpop.f32.mrf.mxu0
        %v1629 = vadd.f32 %v1600, %v1628
        %1630 = vmatmul.bf16.gmra.mxu0 %v548
        %v1631 = vpop.f32.mrf.mxu0
        %v1632 = vadd.f32 %v1603, %v1631
        %v1633 = vpop.f32.mrf.mxu0
        %v1634 = vadd.f32 %v1605, %v1633
        %1635 = vmatmul.bf16.gmra.mxu0 %v556
        %v1636 = vpop.f32.mrf.mxu0
        %v1637 = vadd.f32 %v1608, %v1636
        %v1638 = vpop.f32.mrf.mxu0
        %v1639 = vadd.f32 %v1610, %v1638
        %1640 = vmatmul.bf16.gmra.mxu0 %v564
        %v1641 = vpop.f32.mrf.mxu0
        %v1642 = vadd.f32 %v1613, %v1641
        %v1643 = vpop.f32.mrf.mxu0
        %v1644 = vadd.f32 %v1615, %v1643
        %1645 = vdwg.mxu0
        %1646 = vmatpush.bf16.msra.mxu0 %v1188
        %1647 = vmatpush.bf16.msra.mxu0 %v1184
        %1648 = vmatpush.bf16.msra.mxu0 %v1180
        %1649 = vmatpush.bf16.msra.mxu0 %v1176
        %1650 = vmatpush.bf16.msra.mxu0 %v1172
        %1651 = vmatpush.bf16.msra.mxu0 %v1168
        %1652 = vmatpush.bf16.msra.mxu0 %v1164
        %1653 = vmatpush.bf16.msra.mxu0 %v1160
        %1654 = vmatmul.bf16.gmra.mxu0 %v580
        %v1655 = vpop.f32.mrf.mxu0
        %v1656 = vadd.f32 0.0, %v1655
        %v1657 = vpop.f32.mrf.mxu0
        %v1658 = vadd.f32 0.0, %v1657
        %1659 = vmatmul.bf16.gmra.mxu0 %v542
        %v1660 = vpop.f32.mrf.mxu0
        %v1661 = vadd.f32 0.0, %v1660
        %v1662 = vpop.f32.mrf.mxu0
        %v1663 = vadd.f32 0.0, %v1662
        %1664 = vmatmul.bf16.gmra.mxu0 %v550
        %v1665 = vpop.f32.mrf.mxu0
        %v1666 = vadd.f32 0.0, %v1665
        %v1667 = vpop.f32.mrf.mxu0
        %v1668 = vadd.f32 0.0, %v1667
        %1669 = vmatmul.bf16.gmra.mxu0 %v558
        %v1670 = vpop.f32.mrf.mxu0
        %v1671 = vadd.f32 0.0, %v1670
        %v1672 = vpop.f32.mrf.mxu0
        %v1673 = vadd.f32 0.0, %v1672
        %1674 = vdwg.mxu0
        %1675 = vmatpush.bf16.msra.mxu0 %v1220
        %1676 = vmatpush.bf16.msra.mxu0 %v1216
        %1677 = vmatpush.bf16.msra.mxu0 %v1212
        %1678 = vmatpush.bf16.msra.mxu0 %v1208
        %1679 = vmatpush.bf16.msra.mxu0 %v1204
        %1680 = vmatpush.bf16.msra.mxu0 %v1200
        %1681 = vmatpush.bf16.msra.mxu0 %v1196
        %1682 = vmatpush.bf16.msra.mxu0 %v1192
        %1683 = vmatmul.bf16.gmra.mxu0 %v583
        %v1684 = vpop.f32.mrf.mxu0
        %v1685 = vadd.f32 %v1656, %v1684
        %v1686 = vpop.f32.mrf.mxu0
        %v1687 = vadd.f32 %v1658, %v1686
        %1688 = vmatmul.bf16.gmra.mxu0 %v544
        %v1689 = vpop.f32.mrf.mxu0
        %v1690 = vadd.f32 %v1661, %v1689
        %v1691 = vpop.f32.mrf.mxu0
        %v1692 = vadd.f32 %v1663, %v1691
        %1693 = vmatmul.bf16.gmra.mxu0 %v552
        %v1694 = vpop.f32.mrf.mxu0
        %v1695 = vadd.f32 %v1666, %v1694
        %v1696 = vpop.f32.mrf.mxu0
        %v1697 = vadd.f32 %v1668, %v1696
        %1698 = vmatmul.bf16.gmra.mxu0 %v560
        %v1699 = vpop.f32.mrf.mxu0
        %v1700 = vadd.f32 %v1671, %v1699
        %v1701 = vpop.f32.mrf.mxu0
        %v1702 = vadd.f32 %v1673, %v1701
        %1703 = vdwg.mxu0
        %1704 = vmatpush.bf16.msra.mxu0 %v1252
        %1705 = vmatpush.bf16.msra.mxu0 %v1248
        %1706 = vmatpush.bf16.msra.mxu0 %v1244
        %1707 = vmatpush.bf16.msra.mxu0 %v1240
        %1708 = vmatpush.bf16.msra.mxu0 %v1236
        %1709 = vmatpush.bf16.msra.mxu0 %v1232
        %1710 = vmatpush.bf16.msra.mxu0 %v1228
        %1711 = vmatpush.bf16.msra.mxu0 %v1224
        %1712 = vmatmul.bf16.gmra.mxu0 %v586
        %v1713 = vpop.f32.mrf.mxu0
        %v1714 = vadd.f32 %v1685, %v1713
        %v1715 = vpop.f32.mrf.mxu0
        %v1716 = vadd.f32 %v1687, %v1715
        %1717 = vmatmul.bf16.gmra.mxu0 %v546
        %v1718 = vpop.f32.mrf.mxu0
        %v1719 = vadd.f32 %v1690, %v1718
        %v1720 = vpop.f32.mrf.mxu0
        %v1721 = vadd.f32 %v1692, %v1720
        %1722 = vmatmul.bf16.gmra.mxu0 %v554
        %v1723 = vpop.f32.mrf.mxu0
        %v1724 = vadd.f32 %v1695, %v1723
        %v1725 = vpop.f32.mrf.mxu0
        %v1726 = vadd.f32 %v1697, %v1725
        %1727 = vmatmul.bf16.gmra.mxu0 %v562
        %v1728 = vpop.f32.mrf.mxu0
        %v1729 = vadd.f32 %v1700, %v1728
        %v1730 = vpop.f32.mrf.mxu0
        %v1731 = vadd.f32 %v1702, %v1730
        %1732 = vdwg.mxu0
        %1733 = vmatpush.bf16.msra.mxu0 %v1284
        %1734 = vmatpush.bf16.msra.mxu0 %v1280
        %1735 = vmatpush.bf16.msra.mxu0 %v1276
        %1736 = vmatpush.bf16.msra.mxu0 %v1272
        %1737 = vmatpush.bf16.msra.mxu0 %v1268
        %1738 = vmatpush.bf16.msra.mxu0 %v1264
        %1739 = vmatpush.bf16.msra.mxu0 %v1260
        %1740 = vmatpush.bf16.msra.mxu0 %v1256
        %1741 = vmatmul.bf16.gmra.mxu0 %v589
        %v1742 = vpop.f32.mrf.mxu0
        %v1743 = vadd.f32 %v1714, %v1742
        %v1744 = vpop.f32.mrf.mxu0
        %v1745 = vadd.f32 %v1716, %v1744
        %1746 = vmatmul.bf16.gmra.mxu0 %v548
        %v1747 = vpop.f32.mrf.mxu0
        %v1748 = vadd.f32 %v1719, %v1747
        %v1749 = vpop.f32.mrf.mxu0
        %v1750 = vadd.f32 %v1721, %v1749
        %1751 = vmatmul.bf16.gmra.mxu0 %v556
        %v1752 = vpop.f32.mrf.mxu0
        %v1753 = vadd.f32 %v1724, %v1752
        %v1754 = vpop.f32.mrf.mxu0
        %v1755 = vadd.f32 %v1726, %v1754
        %1756 = vmatmul.bf16.gmra.mxu0 %v564
        %v1757 = vpop.f32.mrf.mxu0
        %v1758 = vadd.f32 %v1729, %v1757
        %v1759 = vpop.f32.mrf.mxu0
        %v1760 = vadd.f32 %v1731, %v1759
        %1761 = vdwg.mxu0
        %1762 = vmatpush.bf16.msra.mxu0 %v1189
        %1763 = vmatpush.bf16.msra.mxu0 %v1185
        %1764 = vmatpush.bf16.msra.mxu0 %v1181
        %1765 = vmatpush.bf16.msra.mxu0 %v1177
        %1766 = vmatpush.bf16.msra.mxu0 %v1173
        %1767 = vmatpush.bf16.msra.mxu0 %v1169
        %1768 = vmatpush.bf16.msra.mxu0 %v1165
        %1769 = vmatpush.bf16.msra.mxu0 %v1161
        %1770 = vmatmul.bf16.gmra.mxu0 %v580
        %v1771 = vpop.f32.mrf.mxu0
        %v1772 = vadd.f32 0.0, %v1771
        %v1773 = vpop.f32.mrf.mxu0
        %v1774 = vadd.f32 0.0, %v1773
        %1775 = vmatmul.bf16.gmra.mxu0 %v542
        %v1776 = vpop.f32.mrf.mxu0
        %v1777 = vadd.f32 0.0, %v1776
        %v1778 = vpop.f32.mrf.mxu0
        %v1779 = vadd.f32 0.0, %v1778
        %1780 = vmatmul.bf16.gmra.mxu0 %v550
        %v1781 = vpop.f32.mrf.mxu0
        %v1782 = vadd.f32 0.0, %v1781
        %v1783 = vpop.f32.mrf.mxu0
        %v1784 = vadd.f32 0.0, %v1783
        %1785 = vmatmul.bf16.gmra.mxu0 %v558
        %v1786 = vpop.f32.mrf.mxu0
        %v1787 = vadd.f32 0.0, %v1786
        %v1788 = vpop.f32.mrf.mxu0
        %v1789 = vadd.f32 0.0, %v1788
        %1790 = vdwg.mxu0
        %1791 = vmatpush.bf16.msra.mxu0 %v1221
        %1792 = vmatpush.bf16.msra.mxu0 %v1217
        %1793 = vmatpush.bf16.msra.mxu0 %v1213
        %1794 = vmatpush.bf16.msra.mxu0 %v1209
        %1795 = vmatpush.bf16.msra.mxu0 %v1205
        %1796 = vmatpush.bf16.msra.mxu0 %v1201
        %1797 = vmatpush.bf16.msra.mxu0 %v1197
        %1798 = vmatpush.bf16.msra.mxu0 %v1193
        %1799 = vmatmul.bf16.gmra.mxu0 %v583
        %v1800 = vpop.f32.mrf.mxu0
        %v1801 = vadd.f32 %v1772, %v1800
        %v1802 = vpop.f32.mrf.mxu0
        %v1803 = vadd.f32 %v1774, %v1802
        %1804 = vmatmul.bf16.gmra.mxu0 %v544
        %v1805 = vpop.f32.mrf.mxu0
        %v1806 = vadd.f32 %v1777, %v1805
        %v1807 = vpop.f32.mrf.mxu0
        %v1808 = vadd.f32 %v1779, %v1807
        %1809 = vmatmul.bf16.gmra.mxu0 %v552
        %v1810 = vpop.f32.mrf.mxu0
        %v1811 = vadd.f32 %v1782, %v1810
        %v1812 = vpop.f32.mrf.mxu0
        %v1813 = vadd.f32 %v1784, %v1812
        %1814 = vmatmul.bf16.gmra.mxu0 %v560
        %v1815 = vpop.f32.mrf.mxu0
        %v1816 = vadd.f32 %v1787, %v1815
        %v1817 = vpop.f32.mrf.mxu0
        %v1818 = vadd.f32 %v1789, %v1817
        %1819 = vdwg.mxu0
        %1820 = vmatpush.bf16.msra.mxu0 %v1253
        %1821 = vmatpush.bf16.msra.mxu0 %v1249
        %1822 = vmatpush.bf16.msra.mxu0 %v1245
        %1823 = vmatpush.bf16.msra.mxu0 %v1241
        %1824 = vmatpush.bf16.msra.mxu0 %v1237
        %1825 = vmatpush.bf16.msra.mxu0 %v1233
        %1826 = vmatpush.bf16.msra.mxu0 %v1229
        %1827 = vmatpush.bf16.msra.mxu0 %v1225
        %1828 = vmatmul.bf16.gmra.mxu0 %v586
        %v1829 = vpop.f32.mrf.mxu0
        %v1830 = vadd.f32 %v1801, %v1829
        %v1831 = vpop.f32.mrf.mxu0
        %v1832 = vadd.f32 %v1803, %v1831
        %1833 = vmatmul.bf16.gmra.mxu0 %v546
        %v1834 = vpop.f32.mrf.mxu0
        %v1835 = vadd.f32 %v1806, %v1834
        %v1836 = vpop.f32.mrf.mxu0
        %v1837 = vadd.f32 %v1808, %v1836
        %1838 = vmatmul.bf16.gmra.mxu0 %v554
        %v1839 = vpop.f32.mrf.mxu0
        %v1840 = vadd.f32 %v1811, %v1839
        %v1841 = vpop.f32.mrf.mxu0
        %v1842 = vadd.f32 %v1813, %v1841
        %1843 = vmatmul.bf16.gmra.mxu0 %v562
        %v1844 = vpop.f32.mrf.mxu0
        %v1845 = vadd.f32 %v1816, %v1844
        %v1846 = vpop.f32.mrf.mxu0
        %v1847 = vadd.f32 %v1818, %v1846
        %1848 = vdwg.mxu0
        %1849 = vmatpush.bf16.msra.mxu0 %v1285
        %1850 = vmatpush.bf16.msra.mxu0 %v1281
        %1851 = vmatpush.bf16.msra.mxu0 %v1277
        %1852 = vmatpush.bf16.msra.mxu0 %v1273
        %1853 = vmatpush.bf16.msra.mxu0 %v1269
        %1854 = vmatpush.bf16.msra.mxu0 %v1265
        %1855 = vmatpush.bf16.msra.mxu0 %v1261
        %1856 = vmatpush.bf16.msra.mxu0 %v1257
        %1857 = vmatmul.bf16.gmra.mxu0 %v589
        %v1858 = vpop.f32.mrf.mxu0
        %v1859 = vadd.f32 %v1830, %v1858
        %v1860 = vpop.f32.mrf.mxu0
        %v1861 = vadd.f32 %v1832, %v1860
        %1862 = vmatmul.bf16.gmra.mxu0 %v548
        %v1863 = vpop.f32.mrf.mxu0
        %v1864 = vadd.f32 %v1835, %v1863
        %v1865 = vpop.f32.mrf.mxu0
        %v1866 = vadd.f32 %v1837, %v1865
        %1867 = vmatmul.bf16.gmra.mxu0 %v556
        %v1868 = vpop.f32.mrf.mxu0
        %v1869 = vadd.f32 %v1840, %v1868
        %v1870 = vpop.f32.mrf.mxu0
        %v1871 = vadd.f32 %v1842, %v1870
        %1872 = vmatmul.bf16.gmra.mxu0 %v564
        %v1873 = vpop.f32.mrf.mxu0
        %v1874 = vadd.f32 %v1845, %v1873
        %v1875 = vpop.f32.mrf.mxu0
        %v1876 = vadd.f32 %v1847, %v1875
        %1877 = vdwg.mxu0
        %v1879 = vperm.slane %v645, 0
        %v1880 = vperm.slane %v645, 1
        %v1881 = vperm.slane %v645, 2
        %v1882 = vperm.slane %v645, 3
        %v1887 = vadd.f32 %v1879, %v1511
        %v1888 = vadd.f32 %v1880, %v1627
        %v1889 = vadd.f32 %v1881, %v1743
        %v1890 = vadd.f32 %v1882, %v1859
        %v1891 = vadd.f32 %v1879, %v1513
        %v1892 = vadd.f32 %v1880, %v1629
        %v1893 = vadd.f32 %v1881, %v1745
        %v1894 = vadd.f32 %v1882, %v1861
        %v1895 = vadd.f32 %v1879, %v1516
        %v1896 = vadd.f32 %v1880, %v1632
        %v1897 = vadd.f32 %v1881, %v1748
        %v1898 = vadd.f32 %v1882, %v1864
        %v1899 = vadd.f32 %v1879, %v1518
        %v1900 = vadd.f32 %v1880, %v1634
        %v1901 = vadd.f32 %v1881, %v1750
        %v1902 = vadd.f32 %v1882, %v1866
        %v1903 = vadd.f32 %v1879, %v1521
        %v1904 = vadd.f32 %v1880, %v1637
        %v1905 = vadd.f32 %v1881, %v1753
        %v1906 = vadd.f32 %v1882, %v1869
        %v1907 = vadd.f32 %v1879, %v1523
        %v1908 = vadd.f32 %v1880, %v1639
        %v1909 = vadd.f32 %v1881, %v1755
        %v1910 = vadd.f32 %v1882, %v1871
        %v1911 = vadd.f32 %v1879, %v1526
        %v1912 = vadd.f32 %v1880, %v1642
        %v1913 = vadd.f32 %v1881, %v1758
        %v1914 = vadd.f32 %v1882, %v1874
        %v1915 = vadd.f32 %v1879, %v1528
        %v1916 = vadd.f32 %v1880, %v1644
        %v1917 = vadd.f32 %v1881, %v1760
        %v1918 = vadd.f32 %v1882, %v1876
        %s1919 = scalar_lea.vmem [#allocation2], 1024
        %v1920 = vld [vmem:[%s1919] sm:$0xff]
        %v1921 = vld [vmem:[%s1919 + $0x8] sm:$0xff]
        %v1922 = vld [vmem:[%s1919 + $0x10] sm:$0xff]
        %v1923 = vld [vmem:[%s1919 + $0x18] sm:$0xff]
        %v1924 = vld [vmem:[%s1919 + $0x20] sm:$0xff]
        %v1925 = vld [vmem:[%s1919 + $0x28] sm:$0xff]
        %v1926 = vld [vmem:[%s1919 + $0x30] sm:$0xff]
        %v1927 = vld [vmem:[%s1919 + $0x38] sm:$0xff]
        %v1928 = vld [vmem:[%s1919 + $0x40] sm:$0xff]
        %v1929 = vld [vmem:[%s1919 + $0x48] sm:$0xff]
        %v1930 = vld [vmem:[%s1919 + $0x50] sm:$0xff]
        %v1931 = vld [vmem:[%s1919 + $0x58] sm:$0xff]
        %v1932 = vld [vmem:[%s1919 + $0x60] sm:$0xff]
        %v1933 = vld [vmem:[%s1919 + $0x68] sm:$0xff]
        %v1934 = vld [vmem:[%s1919 + $0x70] sm:$0xff]
        %v1935 = vld [vmem:[%s1919 + $0x78] sm:$0xff]
        %v1936 = vld [vmem:[%s1919 + $0x80] sm:$0xff]
        %v1937 = vld [vmem:[%s1919 + $0x88] sm:$0xff]
        %v1938 = vld [vmem:[%s1919 + $0x90] sm:$0xff]
        %v1939 = vld [vmem:[%s1919 + $0x98] sm:$0xff]
        %v1940 = vld [vmem:[%s1919 + $0xa0] sm:$0xff]
        %v1941 = vld [vmem:[%s1919 + $0xa8] sm:$0xff]
        %v1942 = vld [vmem:[%s1919 + $0xb0] sm:$0xff]
        %v1943 = vld [vmem:[%s1919 + $0xb8] sm:$0xff]
        %v1944 = vld [vmem:[%s1919 + $0xc0] sm:$0xff]
        %v1945 = vld [vmem:[%s1919 + $0xc8] sm:$0xff]
        %v1946 = vld [vmem:[%s1919 + $0xd0] sm:$0xff]
        %v1947 = vld [vmem:[%s1919 + $0xd8] sm:$0xff]
        %v1948 = vld [vmem:[%s1919 + $0xe0] sm:$0xff]
        %v1949 = vld [vmem:[%s1919 + $0xe8] sm:$0xff]
        %v1950 = vld [vmem:[%s1919 + $0xf0] sm:$0xff]
        %v1951 = vld [vmem:[%s1919 + $0xf8] sm:$0xff]
        %v1952 = vld [vmem:[%s1919 + $0x100] sm:$0xff]
        %v1953 = vld [vmem:[%s1919 + $0x108] sm:$0xff]
        %v1954 = vld [vmem:[%s1919 + $0x110] sm:$0xff]
        %v1955 = vld [vmem:[%s1919 + $0x118] sm:$0xff]
        %v1956 = vld [vmem:[%s1919 + $0x120] sm:$0xff]
        %v1957 = vld [vmem:[%s1919 + $0x128] sm:$0xff]
        %v1958 = vld [vmem:[%s1919 + $0x130] sm:$0xff]
        %v1959 = vld [vmem:[%s1919 + $0x138] sm:$0xff]
        %v1960 = vld [vmem:[%s1919 + $0x140] sm:$0xff]
        %v1961 = vld [vmem:[%s1919 + $0x148] sm:$0xff]
        %v1962 = vld [vmem:[%s1919 + $0x150] sm:$0xff]
        %v1963 = vld [vmem:[%s1919 + $0x158] sm:$0xff]
        %v1964 = vld [vmem:[%s1919 + $0x160] sm:$0xff]
        %v1965 = vld [vmem:[%s1919 + $0x168] sm:$0xff]
        %v1966 = vld [vmem:[%s1919 + $0x170] sm:$0xff]
        %v1967 = vld [vmem:[%s1919 + $0x178] sm:$0xff]
        %v1968 = vld [vmem:[%s1919 + $0x180] sm:$0xff]
        %v1969 = vld [vmem:[%s1919 + $0x188] sm:$0xff]
        %v1970 = vld [vmem:[%s1919 + $0x190] sm:$0xff]
        %v1971 = vld [vmem:[%s1919 + $0x198] sm:$0xff]
        %v1972 = vld [vmem:[%s1919 + $0x1a0] sm:$0xff]
        %v1973 = vld [vmem:[%s1919 + $0x1a8] sm:$0xff]
        %v1974 = vld [vmem:[%s1919 + $0x1b0] sm:$0xff]
        %v1975 = vld [vmem:[%s1919 + $0x1b8] sm:$0xff]
        %v1976 = vld [vmem:[%s1919 + $0x1c0] sm:$0xff]
        %v1977 = vld [vmem:[%s1919 + $0x1c8] sm:$0xff]
        %v1978 = vld [vmem:[%s1919 + $0x1d0] sm:$0xff]
        %v1979 = vld [vmem:[%s1919 + $0x1d8] sm:$0xff]
        %v1980 = vld [vmem:[%s1919 + $0x1e0] sm:$0xff]
        %v1981 = vld [vmem:[%s1919 + $0x1e8] sm:$0xff]
        %v1982 = vld [vmem:[%s1919 + $0x1f0] sm:$0xff]
        %v1983 = vld [vmem:[%s1919 + $0x1f8] sm:$0xff]
        %v1984 = vld [vmem:[%s1919 + $0x200] sm:$0xff]
        %v1985 = vld [vmem:[%s1919 + $0x208] sm:$0xff]
        %v1986 = vld [vmem:[%s1919 + $0x210] sm:$0xff]
        %v1987 = vld [vmem:[%s1919 + $0x218] sm:$0xff]
        %v1988 = vld [vmem:[%s1919 + $0x220] sm:$0xff]
        %v1989 = vld [vmem:[%s1919 + $0x228] sm:$0xff]
        %v1990 = vld [vmem:[%s1919 + $0x230] sm:$0xff]
        %v1991 = vld [vmem:[%s1919 + $0x238] sm:$0xff]
        %v1992 = vld [vmem:[%s1919 + $0x240] sm:$0xff]
        %v1993 = vld [vmem:[%s1919 + $0x248] sm:$0xff]
        %v1994 = vld [vmem:[%s1919 + $0x250] sm:$0xff]
        %v1995 = vld [vmem:[%s1919 + $0x258] sm:$0xff]
        %v1996 = vld [vmem:[%s1919 + $0x260] sm:$0xff]
        %v1997 = vld [vmem:[%s1919 + $0x268] sm:$0xff]
        %v1998 = vld [vmem:[%s1919 + $0x270] sm:$0xff]
        %v1999 = vld [vmem:[%s1919 + $0x278] sm:$0xff]
        %v2000 = vld [vmem:[%s1919 + $0x280] sm:$0xff]
        %v2001 = vld [vmem:[%s1919 + $0x288] sm:$0xff]
        %v2002 = vld [vmem:[%s1919 + $0x290] sm:$0xff]
        %v2003 = vld [vmem:[%s1919 + $0x298] sm:$0xff]
        %v2004 = vld [vmem:[%s1919 + $0x2a0] sm:$0xff]
        %v2005 = vld [vmem:[%s1919 + $0x2a8] sm:$0xff]
        %v2006 = vld [vmem:[%s1919 + $0x2b0] sm:$0xff]
        %v2007 = vld [vmem:[%s1919 + $0x2b8] sm:$0xff]
        %v2008 = vld [vmem:[%s1919 + $0x2c0] sm:$0xff]
        %v2009 = vld [vmem:[%s1919 + $0x2c8] sm:$0xff]
        %v2010 = vld [vmem:[%s1919 + $0x2d0] sm:$0xff]
        %v2011 = vld [vmem:[%s1919 + $0x2d8] sm:$0xff]
        %v2012 = vld [vmem:[%s1919 + $0x2e0] sm:$0xff]
        %v2013 = vld [vmem:[%s1919 + $0x2e8] sm:$0xff]
        %v2014 = vld [vmem:[%s1919 + $0x2f0] sm:$0xff]
        %v2015 = vld [vmem:[%s1919 + $0x2f8] sm:$0xff]
        %v2016 = vld [vmem:[%s1919 + $0x300] sm:$0xff]
        %v2017 = vld [vmem:[%s1919 + $0x308] sm:$0xff]
        %v2018 = vld [vmem:[%s1919 + $0x310] sm:$0xff]
        %v2019 = vld [vmem:[%s1919 + $0x318] sm:$0xff]
        %v2020 = vld [vmem:[%s1919 + $0x320] sm:$0xff]
        %v2021 = vld [vmem:[%s1919 + $0x328] sm:$0xff]
        %v2022 = vld [vmem:[%s1919 + $0x330] sm:$0xff]
        %v2023 = vld [vmem:[%s1919 + $0x338] sm:$0xff]
        %v2024 = vld [vmem:[%s1919 + $0x340] sm:$0xff]
        %v2025 = vld [vmem:[%s1919 + $0x348] sm:$0xff]
        %v2026 = vld [vmem:[%s1919 + $0x350] sm:$0xff]
        %v2027 = vld [vmem:[%s1919 + $0x358] sm:$0xff]
        %v2028 = vld [vmem:[%s1919 + $0x360] sm:$0xff]
        %v2029 = vld [vmem:[%s1919 + $0x368] sm:$0xff]
        %v2030 = vld [vmem:[%s1919 + $0x370] sm:$0xff]
        %v2031 = vld [vmem:[%s1919 + $0x378] sm:$0xff]
        %v2032 = vld [vmem:[%s1919 + $0x380] sm:$0xff]
        %v2033 = vld [vmem:[%s1919 + $0x388] sm:$0xff]
        %v2034 = vld [vmem:[%s1919 + $0x390] sm:$0xff]
        %v2035 = vld [vmem:[%s1919 + $0x398] sm:$0xff]
        %v2036 = vld [vmem:[%s1919 + $0x3a0] sm:$0xff]
        %v2037 = vld [vmem:[%s1919 + $0x3a8] sm:$0xff]
        %v2038 = vld [vmem:[%s1919 + $0x3b0] sm:$0xff]
        %v2039 = vld [vmem:[%s1919 + $0x3b8] sm:$0xff]
        %v2040 = vld [vmem:[%s1919 + $0x3c0] sm:$0xff]
        %v2041 = vld [vmem:[%s1919 + $0x3c8] sm:$0xff]
        %v2042 = vld [vmem:[%s1919 + $0x3d0] sm:$0xff]
        %v2043 = vld [vmem:[%s1919 + $0x3d8] sm:$0xff]
        %v2044 = vld [vmem:[%s1919 + $0x3e0] sm:$0xff]
        %v2045 = vld [vmem:[%s1919 + $0x3e8] sm:$0xff]
        %v2046 = vld [vmem:[%s1919 + $0x3f0] sm:$0xff]
        %v2047 = vld [vmem:[%s1919 + $0x3f8] sm:$0xff]
        %v2192 = vunpack.c.l.b16 %v1920
        %v2193 = vunpack.c.h.b16 %v1920
        %v2194 = vunpack.c.l.b16 %v1921
        %v2195 = vunpack.c.h.b16 %v1921
        %v2196 = vunpack.c.l.b16 %v1922
        %v2197 = vunpack.c.h.b16 %v1922
        %v2198 = vunpack.c.l.b16 %v1923
        %v2199 = vunpack.c.h.b16 %v1923
        %v2200 = vunpack.c.l.b16 %v1924
        %v2201 = vunpack.c.h.b16 %v1924
        %v2202 = vunpack.c.l.b16 %v1925
        %v2203 = vunpack.c.h.b16 %v1925
        %v2204 = vunpack.c.l.b16 %v1926
        %v2205 = vunpack.c.h.b16 %v1926
        %v2206 = vunpack.c.l.b16 %v1927
        %v2207 = vunpack.c.h.b16 %v1927
        %v2208 = vunpack.c.l.b16 %v1928
        %v2209 = vunpack.c.h.b16 %v1928
        %v2210 = vunpack.c.l.b16 %v1929
        %v2211 = vunpack.c.h.b16 %v1929
        %v2212 = vunpack.c.l.b16 %v1930
        %v2213 = vunpack.c.h.b16 %v1930
        %v2214 = vunpack.c.l.b16 %v1931
        %v2215 = vunpack.c.h.b16 %v1931
        %v2216 = vunpack.c.l.b16 %v1932
        %v2217 = vunpack.c.h.b16 %v1932
        %v2218 = vunpack.c.l.b16 %v1933
        %v2219 = vunpack.c.h.b16 %v1933
        %v2220 = vunpack.c.l.b16 %v1934
        %v2221 = vunpack.c.h.b16 %v1934
        %v2222 = vunpack.c.l.b16 %v1935
        %v2223 = vunpack.c.h.b16 %v1935
        %v2224 = vunpack.c.l.b16 %v1936
        %v2225 = vunpack.c.h.b16 %v1936
        %v2226 = vunpack.c.l.b16 %v1937
        %v2227 = vunpack.c.h.b16 %v1937
        %v2228 = vunpack.c.l.b16 %v1938
        %v2229 = vunpack.c.h.b16 %v1938
        %v2230 = vunpack.c.l.b16 %v1939
        %v2231 = vunpack.c.h.b16 %v1939
        %v2232 = vunpack.c.l.b16 %v1940
        %v2233 = vunpack.c.h.b16 %v1940
        %v2234 = vunpack.c.l.b16 %v1941
        %v2235 = vunpack.c.h.b16 %v1941
        %v2236 = vunpack.c.l.b16 %v1942
        %v2237 = vunpack.c.h.b16 %v1942
        %v2238 = vunpack.c.l.b16 %v1943
        %v2239 = vunpack.c.h.b16 %v1943
        %v2240 = vunpack.c.l.b16 %v1944
        %v2241 = vunpack.c.h.b16 %v1944
        %v2242 = vunpack.c.l.b16 %v1945
        %v2243 = vunpack.c.h.b16 %v1945
        %v2244 = vunpack.c.l.b16 %v1946
        %v2245 = vunpack.c.h.b16 %v1946
        %v2246 = vunpack.c.l.b16 %v1947
        %v2247 = vunpack.c.h.b16 %v1947
        %v2248 = vunpack.c.l.b16 %v1948
        %v2249 = vunpack.c.h.b16 %v1948
        %v2250 = vunpack.c.l.b16 %v1949
        %v2251 = vunpack.c.h.b16 %v1949
        %v2252 = vunpack.c.l.b16 %v1950
        %v2253 = vunpack.c.h.b16 %v1950
        %v2254 = vunpack.c.l.b16 %v1951
        %v2255 = vunpack.c.h.b16 %v1951
        %v2256 = vunpack.c.l.b16 %v1952
        %v2257 = vunpack.c.h.b16 %v1952
        %v2258 = vunpack.c.l.b16 %v1953
        %v2259 = vunpack.c.h.b16 %v1953
        %v2260 = vunpack.c.l.b16 %v1954
        %v2261 = vunpack.c.h.b16 %v1954
        %v2262 = vunpack.c.l.b16 %v1955
        %v2263 = vunpack.c.h.b16 %v1955
        %v2264 = vunpack.c.l.b16 %v1956
        %v2265 = vunpack.c.h.b16 %v1956
        %v2266 = vunpack.c.l.b16 %v1957
        %v2267 = vunpack.c.h.b16 %v1957
        %v2268 = vunpack.c.l.b16 %v1958
        %v2269 = vunpack.c.h.b16 %v1958
        %v2270 = vunpack.c.l.b16 %v1959
        %v2271 = vunpack.c.h.b16 %v1959
        %v2272 = vunpack.c.l.b16 %v1960
        %v2273 = vunpack.c.h.b16 %v1960
        %v2274 = vunpack.c.l.b16 %v1961
        %v2275 = vunpack.c.h.b16 %v1961
        %v2276 = vunpack.c.l.b16 %v1962
        %v2277 = vunpack.c.h.b16 %v1962
        %v2278 = vunpack.c.l.b16 %v1963
        %v2279 = vunpack.c.h.b16 %v1963
        %v2280 = vunpack.c.l.b16 %v1964
        %v2281 = vunpack.c.h.b16 %v1964
        %v2282 = vunpack.c.l.b16 %v1965
        %v2283 = vunpack.c.h.b16 %v1965
        %v2284 = vunpack.c.l.b16 %v1966
        %v2285 = vunpack.c.h.b16 %v1966
        %v2286 = vunpack.c.l.b16 %v1967
        %v2287 = vunpack.c.h.b16 %v1967
        %v2288 = vunpack.c.l.b16 %v1968
        %v2289 = vunpack.c.h.b16 %v1968
        %v2290 = vunpack.c.l.b16 %v1969
        %v2291 = vunpack.c.h.b16 %v1969
        %v2292 = vunpack.c.l.b16 %v1970
        %v2293 = vunpack.c.h.b16 %v1970
        %v2294 = vunpack.c.l.b16 %v1971
        %v2295 = vunpack.c.h.b16 %v1971
        %v2296 = vunpack.c.l.b16 %v1972
        %v2297 = vunpack.c.h.b16 %v1972
        %v2298 = vunpack.c.l.b16 %v1973
        %v2299 = vunpack.c.h.b16 %v1973
        %v2300 = vunpack.c.l.b16 %v1974
        %v2301 = vunpack.c.h.b16 %v1974
        %v2302 = vunpack.c.l.b16 %v1975
        %v2303 = vunpack.c.h.b16 %v1975
        %v2304 = vunpack.c.l.b16 %v1976
        %v2305 = vunpack.c.h.b16 %v1976
        %v2306 = vunpack.c.l.b16 %v1977
        %v2307 = vunpack.c.h.b16 %v1977
        %v2308 = vunpack.c.l.b16 %v1978
        %v2309 = vunpack.c.h.b16 %v1978
        %v2310 = vunpack.c.l.b16 %v1979
        %v2311 = vunpack.c.h.b16 %v1979
        %v2312 = vunpack.c.l.b16 %v1980
        %v2313 = vunpack.c.h.b16 %v1980
        %v2314 = vunpack.c.l.b16 %v1981
        %v2315 = vunpack.c.h.b16 %v1981
        %v2316 = vunpack.c.l.b16 %v1982
        %v2317 = vunpack.c.h.b16 %v1982
        %v2318 = vunpack.c.l.b16 %v1983
        %v2319 = vunpack.c.h.b16 %v1983
        %v2320 = vunpack.c.l.b16 %v1984
        %v2321 = vunpack.c.h.b16 %v1984
        %v2322 = vunpack.c.l.b16 %v1985
        %v2323 = vunpack.c.h.b16 %v1985
        %v2324 = vunpack.c.l.b16 %v1986
        %v2325 = vunpack.c.h.b16 %v1986
        %v2326 = vunpack.c.l.b16 %v1987
        %v2327 = vunpack.c.h.b16 %v1987
        %v2328 = vunpack.c.l.b16 %v1988
        %v2329 = vunpack.c.h.b16 %v1988
        %v2330 = vunpack.c.l.b16 %v1989
        %v2331 = vunpack.c.h.b16 %v1989
        %v2332 = vunpack.c.l.b16 %v1990
        %v2333 = vunpack.c.h.b16 %v1990
        %v2334 = vunpack.c.l.b16 %v1991
        %v2335 = vunpack.c.h.b16 %v1991
        %v2336 = vunpack.c.l.b16 %v1992
        %v2337 = vunpack.c.h.b16 %v1992
        %v2338 = vunpack.c.l.b16 %v1993
        %v2339 = vunpack.c.h.b16 %v1993
        %v2340 = vunpack.c.l.b16 %v1994
        %v2341 = vunpack.c.h.b16 %v1994
        %v2342 = vunpack.c.l.b16 %v1995
        %v2343 = vunpack.c.h.b16 %v1995
        %v2344 = vunpack.c.l.b16 %v1996
        %v2345 = vunpack.c.h.b16 %v1996
        %v2346 = vunpack.c.l.b16 %v1997
        %v2347 = vunpack.c.h.b16 %v1997
        %v2348 = vunpack.c.l.b16 %v1998
        %v2349 = vunpack.c.h.b16 %v1998
        %v2350 = vunpack.c.l.b16 %v1999
        %v2351 = vunpack.c.h.b16 %v1999
        %v2352 = vunpack.c.l.b16 %v2000
        %v2353 = vunpack.c.h.b16 %v2000
        %v2354 = vunpack.c.l.b16 %v2001
        %v2355 = vunpack.c.h.b16 %v2001
        %v2356 = vunpack.c.l.b16 %v2002
        %v2357 = vunpack.c.h.b16 %v2002
        %v2358 = vunpack.c.l.b16 %v2003
        %v2359 = vunpack.c.h.b16 %v2003
        %v2360 = vunpack.c.l.b16 %v2004
        %v2361 = vunpack.c.h.b16 %v2004
        %v2362 = vunpack.c.l.b16 %v2005
        %v2363 = vunpack.c.h.b16 %v2005
        %v2364 = vunpack.c.l.b16 %v2006
        %v2365 = vunpack.c.h.b16 %v2006
        %v2366 = vunpack.c.l.b16 %v2007
        %v2367 = vunpack.c.h.b16 %v2007
        %v2368 = vunpack.c.l.b16 %v2008
        %v2369 = vunpack.c.h.b16 %v2008
        %v2370 = vunpack.c.l.b16 %v2009
        %v2371 = vunpack.c.h.b16 %v2009
        %v2372 = vunpack.c.l.b16 %v2010
        %v2373 = vunpack.c.h.b16 %v2010
        %v2374 = vunpack.c.l.b16 %v2011
        %v2375 = vunpack.c.h.b16 %v2011
        %v2376 = vunpack.c.l.b16 %v2012
        %v2377 = vunpack.c.h.b16 %v2012
        %v2378 = vunpack.c.l.b16 %v2013
        %v2379 = vunpack.c.h.b16 %v2013
        %v2380 = vunpack.c.l.b16 %v2014
        %v2381 = vunpack.c.h.b16 %v2014
        %v2382 = vunpack.c.l.b16 %v2015
        %v2383 = vunpack.c.h.b16 %v2015
        %v2384 = vunpack.c.l.b16 %v2016
        %v2385 = vunpack.c.h.b16 %v2016
        %v2386 = vunpack.c.l.b16 %v2017
        %v2387 = vunpack.c.h.b16 %v2017
        %v2388 = vunpack.c.l.b16 %v2018
        %v2389 = vunpack.c.h.b16 %v2018
        %v2390 = vunpack.c.l.b16 %v2019
        %v2391 = vunpack.c.h.b16 %v2019
        %v2392 = vunpack.c.l.b16 %v2020
        %v2393 = vunpack.c.h.b16 %v2020
        %v2394 = vunpack.c.l.b16 %v2021
        %v2395 = vunpack.c.h.b16 %v2021
        %v2396 = vunpack.c.l.b16 %v2022
        %v2397 = vunpack.c.h.b16 %v2022
        %v2398 = vunpack.c.l.b16 %v2023
        %v2399 = vunpack.c.h.b16 %v2023
        %v2400 = vunpack.c.l.b16 %v2024
        %v2401 = vunpack.c.h.b16 %v2024
        %v2402 = vunpack.c.l.b16 %v2025
        %v2403 = vunpack.c.h.b16 %v2025
        %v2404 = vunpack.c.l.b16 %v2026
        %v2405 = vunpack.c.h.b16 %v2026
        %v2406 = vunpack.c.l.b16 %v2027
        %v2407 = vunpack.c.h.b16 %v2027
        %v2408 = vunpack.c.l.b16 %v2028
        %v2409 = vunpack.c.h.b16 %v2028
        %v2410 = vunpack.c.l.b16 %v2029
        %v2411 = vunpack.c.h.b16 %v2029
        %v2412 = vunpack.c.l.b16 %v2030
        %v2413 = vunpack.c.h.b16 %v2030
        %v2414 = vunpack.c.l.b16 %v2031
        %v2415 = vunpack.c.h.b16 %v2031
        %v2416 = vunpack.c.l.b16 %v2032
        %v2417 = vunpack.c.h.b16 %v2032
        %v2418 = vunpack.c.l.b16 %v2033
        %v2419 = vunpack.c.h.b16 %v2033
        %v2420 = vunpack.c.l.b16 %v2034
        %v2421 = vunpack.c.h.b16 %v2034
        %v2422 = vunpack.c.l.b16 %v2035
        %v2423 = vunpack.c.h.b16 %v2035
        %v2424 = vunpack.c.l.b16 %v2036
        %v2425 = vunpack.c.h.b16 %v2036
        %v2426 = vunpack.c.l.b16 %v2037
        %v2427 = vunpack.c.h.b16 %v2037
        %v2428 = vunpack.c.l.b16 %v2038
        %v2429 = vunpack.c.h.b16 %v2038
        %v2430 = vunpack.c.l.b16 %v2039
        %v2431 = vunpack.c.h.b16 %v2039
        %v2432 = vunpack.c.l.b16 %v2040
        %v2433 = vunpack.c.h.b16 %v2040
        %v2434 = vunpack.c.l.b16 %v2041
        %v2435 = vunpack.c.h.b16 %v2041
        %v2436 = vunpack.c.l.b16 %v2042
        %v2437 = vunpack.c.h.b16 %v2042
        %v2438 = vunpack.c.l.b16 %v2043
        %v2439 = vunpack.c.h.b16 %v2043
        %v2440 = vunpack.c.l.b16 %v2044
        %v2441 = vunpack.c.h.b16 %v2044
        %v2442 = vunpack.c.l.b16 %v2045
        %v2443 = vunpack.c.h.b16 %v2045
        %v2444 = vunpack.c.l.b16 %v2046
        %v2445 = vunpack.c.h.b16 %v2046
        %v2446 = vunpack.c.l.b16 %v2047
        %v2447 = vunpack.c.h.b16 %v2047
        %v2448 = vpack.c.b16 %v2196, %v2192
        %v2449 = vpack.c.b16 %v2197, %v2193
        %v2450 = vpack.c.b16 %v2198, %v2194
        %v2451 = vpack.c.b16 %v2199, %v2195
        %v2452 = vpack.c.b16 %v2204, %v2200
        %v2453 = vpack.c.b16 %v2205, %v2201
        %v2454 = vpack.c.b16 %v2206, %v2202
        %v2455 = vpack.c.b16 %v2207, %v2203
        %v2456 = vpack.c.b16 %v2212, %v2208
        %v2457 = vpack.c.b16 %v2213, %v2209
        %v2458 = vpack.c.b16 %v2214, %v2210
        %v2459 = vpack.c.b16 %v2215, %v2211
        %v2460 = vpack.c.b16 %v2220, %v2216
        %v2461 = vpack.c.b16 %v2221, %v2217
        %v2462 = vpack.c.b16 %v2222, %v2218
        %v2463 = vpack.c.b16 %v2223, %v2219
        %v2464 = vpack.c.b16 %v2228, %v2224
        %v2465 = vpack.c.b16 %v2229, %v2225
        %v2466 = vpack.c.b16 %v2230, %v2226
        %v2467 = vpack.c.b16 %v2231, %v2227
        %v2468 = vpack.c.b16 %v2236, %v2232
        %v2469 = vpack.c.b16 %v2237, %v2233
        %v2470 = vpack.c.b16 %v2238, %v2234
        %v2471 = vpack.c.b16 %v2239, %v2235
        %v2472 = vpack.c.b16 %v2244, %v2240
        %v2473 = vpack.c.b16 %v2245, %v2241
        %v2474 = vpack.c.b16 %v2246, %v2242
        %v2475 = vpack.c.b16 %v2247, %v2243
        %v2476 = vpack.c.b16 %v2252, %v2248
        %v2477 = vpack.c.b16 %v2253, %v2249
        %v2478 = vpack.c.b16 %v2254, %v2250
        %v2479 = vpack.c.b16 %v2255, %v2251
        %v2480 = vpack.c.b16 %v2260, %v2256
        %v2481 = vpack.c.b16 %v2261, %v2257
        %v2482 = vpack.c.b16 %v2262, %v2258
        %v2483 = vpack.c.b16 %v2263, %v2259
        %v2484 = vpack.c.b16 %v2268, %v2264
        %v2485 = vpack.c.b16 %v2269, %v2265
        %v2486 = vpack.c.b16 %v2270, %v2266
        %v2487 = vpack.c.b16 %v2271, %v2267
        %v2488 = vpack.c.b16 %v2276, %v2272
        %v2489 = vpack.c.b16 %v2277, %v2273
        %v2490 = vpack.c.b16 %v2278, %v2274
        %v2491 = vpack.c.b16 %v2279, %v2275
        %v2492 = vpack.c.b16 %v2284, %v2280
        %v2493 = vpack.c.b16 %v2285, %v2281
        %v2494 = vpack.c.b16 %v2286, %v2282
        %v2495 = vpack.c.b16 %v2287, %v2283
        %v2496 = vpack.c.b16 %v2292, %v2288
        %v2497 = vpack.c.b16 %v2293, %v2289
        %v2498 = vpack.c.b16 %v2294, %v2290
        %v2499 = vpack.c.b16 %v2295, %v2291
        %v2500 = vpack.c.b16 %v2300, %v2296
        %v2501 = vpack.c.b16 %v2301, %v2297
        %v2502 = vpack.c.b16 %v2302, %v2298
        %v2503 = vpack.c.b16 %v2303, %v2299
        %v2504 = vpack.c.b16 %v2308, %v2304
        %v2505 = vpack.c.b16 %v2309, %v2305
        %v2506 = vpack.c.b16 %v2310, %v2306
        %v2507 = vpack.c.b16 %v2311, %v2307
        %v2508 = vpack.c.b16 %v2316, %v2312
        %v2509 = vpack.c.b16 %v2317, %v2313
        %v2510 = vpack.c.b16 %v2318, %v2314
        %v2511 = vpack.c.b16 %v2319, %v2315
        %v2512 = vpack.c.b16 %v2324, %v2320
        %v2513 = vpack.c.b16 %v2325, %v2321
        %v2514 = vpack.c.b16 %v2326, %v2322
        %v2515 = vpack.c.b16 %v2327, %v2323
        %v2516 = vpack.c.b16 %v2332, %v2328
        %v2517 = vpack.c.b16 %v2333, %v2329
        %v2518 = vpack.c.b16 %v2334, %v2330
        %v2519 = vpack.c.b16 %v2335, %v2331
        %v2520 = vpack.c.b16 %v2340, %v2336
        %v2521 = vpack.c.b16 %v2341, %v2337
        %v2522 = vpack.c.b16 %v2342, %v2338
        %v2523 = vpack.c.b16 %v2343, %v2339
        %v2524 = vpack.c.b16 %v2348, %v2344
        %v2525 = vpack.c.b16 %v2349, %v2345
        %v2526 = vpack.c.b16 %v2350, %v2346
        %v2527 = vpack.c.b16 %v2351, %v2347
        %v2528 = vpack.c.b16 %v2356, %v2352
        %v2529 = vpack.c.b16 %v2357, %v2353
        %v2530 = vpack.c.b16 %v2358, %v2354
        %v2531 = vpack.c.b16 %v2359, %v2355
        %v2532 = vpack.c.b16 %v2364, %v2360
        %v2533 = vpack.c.b16 %v2365, %v2361
        %v2534 = vpack.c.b16 %v2366, %v2362
        %v2535 = vpack.c.b16 %v2367, %v2363
        %v2536 = vpack.c.b16 %v2372, %v2368
        %v2537 = vpack.c.b16 %v2373, %v2369
        %v2538 = vpack.c.b16 %v2374, %v2370
        %v2539 = vpack.c.b16 %v2375, %v2371
        %v2540 = vpack.c.b16 %v2380, %v2376
        %v2541 = vpack.c.b16 %v2381, %v2377
        %v2542 = vpack.c.b16 %v2382, %v2378
        %v2543 = vpack.c.b16 %v2383, %v2379
        %v2544 = vpack.c.b16 %v2388, %v2384
        %v2545 = vpack.c.b16 %v2389, %v2385
        %v2546 = vpack.c.b16 %v2390, %v2386
        %v2547 = vpack.c.b16 %v2391, %v2387
        %v2548 = vpack.c.b16 %v2396, %v2392
        %v2549 = vpack.c.b16 %v2397, %v2393
        %v2550 = vpack.c.b16 %v2398, %v2394
        %v2551 = vpack.c.b16 %v2399, %v2395
        %v2552 = vpack.c.b16 %v2404, %v2400
        %v2553 = vpack.c.b16 %v2405, %v2401
        %v2554 = vpack.c.b16 %v2406, %v2402
        %v2555 = vpack.c.b16 %v2407, %v2403
        %v2556 = vpack.c.b16 %v2412, %v2408
        %v2557 = vpack.c.b16 %v2413, %v2409
        %v2558 = vpack.c.b16 %v2414, %v2410
        %v2559 = vpack.c.b16 %v2415, %v2411
        %v2560 = vpack.c.b16 %v2420, %v2416
        %v2561 = vpack.c.b16 %v2421, %v2417
        %v2562 = vpack.c.b16 %v2422, %v2418
        %v2563 = vpack.c.b16 %v2423, %v2419
        %v2564 = vpack.c.b16 %v2428, %v2424
        %v2565 = vpack.c.b16 %v2429, %v2425
        %v2566 = vpack.c.b16 %v2430, %v2426
        %v2567 = vpack.c.b16 %v2431, %v2427
        %v2568 = vpack.c.b16 %v2436, %v2432
        %v2569 = vpack.c.b16 %v2437, %v2433
        %v2570 = vpack.c.b16 %v2438, %v2434
        %v2571 = vpack.c.b16 %v2439, %v2435
        %v2572 = vpack.c.b16 %v2444, %v2440
        %v2573 = vpack.c.b16 %v2445, %v2441
        %v2574 = vpack.c.b16 %v2446, %v2442
        %v2575 = vpack.c.b16 %v2447, %v2443
        %2704 = vmatpush.bf16.msra.mxu0 %v2476
        %2705 = vmatpush.bf16.msra.mxu0 %v2472
        %2706 = vmatpush.bf16.msra.mxu0 %v2468
        %2707 = vmatpush.bf16.msra.mxu0 %v2464
        %2708 = vmatpush.bf16.msra.mxu0 %v2460
        %2709 = vmatpush.bf16.msra.mxu0 %v2456
        %2710 = vmatpush.bf16.msra.mxu0 %v2452
        %2711 = vmatpush.bf16.msra.mxu0 %v2448
        %2712 = vmatmul.bf16.gmra.mxu0 %v520
        %v2713 = vpop.f32.mrf.mxu0
        %v2714 = vadd.f32 0.0, %v2713
        %v2715 = vpop.f32.mrf.mxu0
        %v2716 = vadd.f32 0.0, %v2715
        %2717 = vmatmul.bf16.gmra.mxu0 %v524
        %v2718 = vpop.f32.mrf.mxu0
        %v2719 = vadd.f32 0.0, %v2718
        %v2720 = vpop.f32.mrf.mxu0
        %v2721 = vadd.f32 0.0, %v2720
        %2722 = vmatmul.bf16.gmra.mxu0 %v528
        %v2723 = vpop.f32.mrf.mxu0
        %v2724 = vadd.f32 0.0, %v2723
        %v2725 = vpop.f32.mrf.mxu0
        %v2726 = vadd.f32 0.0, %v2725
        %2727 = vmatmul.bf16.gmra.mxu0 %v532
        %v2728 = vpop.f32.mrf.mxu0
        %v2729 = vadd.f32 0.0, %v2728
        %v2730 = vpop.f32.mrf.mxu0
        %v2731 = vadd.f32 0.0, %v2730
        %2732 = vdwg.mxu0
        %2733 = vmatpush.bf16.msra.mxu0 %v2508
        %2734 = vmatpush.bf16.msra.mxu0 %v2504
        %2735 = vmatpush.bf16.msra.mxu0 %v2500
        %2736 = vmatpush.bf16.msra.mxu0 %v2496
        %2737 = vmatpush.bf16.msra.mxu0 %v2492
        %2738 = vmatpush.bf16.msra.mxu0 %v2488
        %2739 = vmatpush.bf16.msra.mxu0 %v2484
        %2740 = vmatpush.bf16.msra.mxu0 %v2480
        %2741 = vmatmul.bf16.gmra.mxu0 %v521
        %v2742 = vpop.f32.mrf.mxu0
        %v2743 = vadd.f32 %v2714, %v2742
        %v2744 = vpop.f32.mrf.mxu0
        %v2745 = vadd.f32 %v2716, %v2744
        %2746 = vmatmul.bf16.gmra.mxu0 %v525
        %v2747 = vpop.f32.mrf.mxu0
        %v2748 = vadd.f32 %v2719, %v2747
        %v2749 = vpop.f32.mrf.mxu0
        %v2750 = vadd.f32 %v2721, %v2749
        %2751 = vmatmul.bf16.gmra.mxu0 %v529
        %v2752 = vpop.f32.mrf.mxu0
        %v2753 = vadd.f32 %v2724, %v2752
        %v2754 = vpop.f32.mrf.mxu0
        %v2755 = vadd.f32 %v2726, %v2754
        %2756 = vmatmul.bf16.gmra.mxu0 %v533
        %v2757 = vpop.f32.mrf.mxu0
        %v2758 = vadd.f32 %v2729, %v2757
        %v2759 = vpop.f32.mrf.mxu0
        %v2760 = vadd.f32 %v2731, %v2759
        %2761 = vdwg.mxu0
        %2762 = vmatpush.bf16.msra.mxu0 %v2540
        %2763 = vmatpush.bf16.msra.mxu0 %v2536
        %2764 = vmatpush.bf16.msra.mxu0 %v2532
        %2765 = vmatpush.bf16.msra.mxu0 %v2528
        %2766 = vmatpush.bf16.msra.mxu0 %v2524
        %2767 = vmatpush.bf16.msra.mxu0 %v2520
        %2768 = vmatpush.bf16.msra.mxu0 %v2516
        %2769 = vmatpush.bf16.msra.mxu0 %v2512
        %2770 = vmatmul.bf16.gmra.mxu0 %v522
        %v2771 = vpop.f32.mrf.mxu0
        %v2772 = vadd.f32 %v2743, %v2771
        %v2773 = vpop.f32.mrf.mxu0
        %v2774 = vadd.f32 %v2745, %v2773
        %2775 = vmatmul.bf16.gmra.mxu0 %v526
        %v2776 = vpop.f32.mrf.mxu0
        %v2777 = vadd.f32 %v2748, %v2776
        %v2778 = vpop.f32.mrf.mxu0
        %v2779 = vadd.f32 %v2750, %v2778
        %2780 = vmatmul.bf16.gmra.mxu0 %v530
        %v2781 = vpop.f32.mrf.mxu0
        %v2782 = vadd.f32 %v2753, %v2781
        %v2783 = vpop.f32.mrf.mxu0
        %v2784 = vadd.f32 %v2755, %v2783
        %2785 = vmatmul.bf16.gmra.mxu0 %v534
        %v2786 = vpop.f32.mrf.mxu0
        %v2787 = vadd.f32 %v2758, %v2786
        %v2788 = vpop.f32.mrf.mxu0
        %v2789 = vadd.f32 %v2760, %v2788
        %2790 = vdwg.mxu0
        %2791 = vmatpush.bf16.msra.mxu0 %v2572
        %2792 = vmatpush.bf16.msra.mxu0 %v2568
        %2793 = vmatpush.bf16.msra.mxu0 %v2564
        %2794 = vmatpush.bf16.msra.mxu0 %v2560
        %2795 = vmatpush.bf16.msra.mxu0 %v2556
        %2796 = vmatpush.bf16.msra.mxu0 %v2552
        %2797 = vmatpush.bf16.msra.mxu0 %v2548
        %2798 = vmatpush.bf16.msra.mxu0 %v2544
        %2799 = vmatmul.bf16.gmra.mxu0 %v523
        %v2800 = vpop.f32.mrf.mxu0
        %v2801 = vadd.f32 %v2772, %v2800
        %v2802 = vpop.f32.mrf.mxu0
        %v2803 = vadd.f32 %v2774, %v2802
        %2804 = vmatmul.bf16.gmra.mxu0 %v527
        %v2805 = vpop.f32.mrf.mxu0
        %v2806 = vadd.f32 %v2777, %v2805
        %v2807 = vpop.f32.mrf.mxu0
        %v2808 = vadd.f32 %v2779, %v2807
        %2809 = vmatmul.bf16.gmra.mxu0 %v531
        %v2810 = vpop.f32.mrf.mxu0
        %v2811 = vadd.f32 %v2782, %v2810
        %v2812 = vpop.f32.mrf.mxu0
        %v2813 = vadd.f32 %v2784, %v2812
        %2814 = vmatmul.bf16.gmra.mxu0 %v535
        %v2815 = vpop.f32.mrf.mxu0
        %v2816 = vadd.f32 %v2787, %v2815
        %v2817 = vpop.f32.mrf.mxu0
        %v2818 = vadd.f32 %v2789, %v2817
        %2819 = vdwg.mxu0
        %2820 = vmatpush.bf16.msra.mxu0 %v2477
        %2821 = vmatpush.bf16.msra.mxu0 %v2473
        %2822 = vmatpush.bf16.msra.mxu0 %v2469
        %2823 = vmatpush.bf16.msra.mxu0 %v2465
        %2824 = vmatpush.bf16.msra.mxu0 %v2461
        %2825 = vmatpush.bf16.msra.mxu0 %v2457
        %2826 = vmatpush.bf16.msra.mxu0 %v2453
        %2827 = vmatpush.bf16.msra.mxu0 %v2449
        %2828 = vmatmul.bf16.gmra.mxu0 %v520
        %v2829 = vpop.f32.mrf.mxu0
        %v2830 = vadd.f32 0.0, %v2829
        %v2831 = vpop.f32.mrf.mxu0
        %v2832 = vadd.f32 0.0, %v2831
        %2833 = vmatmul.bf16.gmra.mxu0 %v524
        %v2834 = vpop.f32.mrf.mxu0
        %v2835 = vadd.f32 0.0, %v2834
        %v2836 = vpop.f32.mrf.mxu0
        %v2837 = vadd.f32 0.0, %v2836
        %2838 = vmatmul.bf16.gmra.mxu0 %v528
        %v2839 = vpop.f32.mrf.mxu0
        %v2840 = vadd.f32 0.0, %v2839
        %v2841 = vpop.f32.mrf.mxu0
        %v2842 = vadd.f32 0.0, %v2841
        %2843 = vmatmul.bf16.gmra.mxu0 %v532
        %v2844 = vpop.f32.mrf.mxu0
        %v2845 = vadd.f32 0.0, %v2844
        %v2846 = vpop.f32.mrf.mxu0
        %v2847 = vadd.f32 0.0, %v2846
        %2848 = vdwg.mxu0
        %2849 = vmatpush.bf16.msra.mxu0 %v2509
        %2850 = vmatpush.bf16.msra.mxu0 %v2505
        %2851 = vmatpush.bf16.msra.mxu0 %v2501
        %2852 = vmatpush.bf16.msra.mxu0 %v2497
        %2853 = vmatpush.bf16.msra.mxu0 %v2493
        %2854 = vmatpush.bf16.msra.mxu0 %v2489
        %2855 = vmatpush.bf16.msra.mxu0 %v2485
        %2856 = vmatpush.bf16.msra.mxu0 %v2481
        %2857 = vmatmul.bf16.gmra.mxu0 %v521
        %v2858 = vpop.f32.mrf.mxu0
        %v2859 = vadd.f32 %v2830, %v2858
        %v2860 = vpop.f32.mrf.mxu0
        %v2861 = vadd.f32 %v2832, %v2860
        %2862 = vmatmul.bf16.gmra.mxu0 %v525
        %v2863 = vpop.f32.mrf.mxu0
        %v2864 = vadd.f32 %v2835, %v2863
        %v2865 = vpop.f32.mrf.mxu0
        %v2866 = vadd.f32 %v2837, %v2865
        %2867 = vmatmul.bf16.gmra.mxu0 %v529
        %v2868 = vpop.f32.mrf.mxu0
        %v2869 = vadd.f32 %v2840, %v2868
        %v2870 = vpop.f32.mrf.mxu0
        %v2871 = vadd.f32 %v2842, %v2870
        %2872 = vmatmul.bf16.gmra.mxu0 %v533
        %v2873 = vpop.f32.mrf.mxu0
        %v2874 = vadd.f32 %v2845, %v2873
        %v2875 = vpop.f32.mrf.mxu0
        %v2876 = vadd.f32 %v2847, %v2875
        %2877 = vdwg.mxu0
        %2878 = vmatpush.bf16.msra.mxu0 %v2541
        %2879 = vmatpush.bf16.msra.mxu0 %v2537
        %2880 = vmatpush.bf16.msra.mxu0 %v2533
        %2881 = vmatpush.bf16.msra.mxu0 %v2529
        %2882 = vmatpush.bf16.msra.mxu0 %v2525
        %2883 = vmatpush.bf16.msra.mxu0 %v2521
        %2884 = vmatpush.bf16.msra.mxu0 %v2517
        %2885 = vmatpush.bf16.msra.mxu0 %v2513
        %2886 = vmatmul.bf16.gmra.mxu0 %v522
        %v2887 = vpop.f32.mrf.mxu0
        %v2888 = vadd.f32 %v2859, %v2887
        %v2889 = vpop.f32.mrf.mxu0
        %v2890 = vadd.f32 %v2861, %v2889
        %2891 = vmatmul.bf16.gmra.mxu0 %v526
        %v2892 = vpop.f32.mrf.mxu0
        %v2893 = vadd.f32 %v2864, %v2892
        %v2894 = vpop.f32.mrf.mxu0
        %v2895 = vadd.f32 %v2866, %v2894
        %2896 = vmatmul.bf16.gmra.mxu0 %v530
        %v2897 = vpop.f32.mrf.mxu0
        %v2898 = vadd.f32 %v2869, %v2897
        %v2899 = vpop.f32.mrf.mxu0
        %v2900 = vadd.f32 %v2871, %v2899
        %2901 = vmatmul.bf16.gmra.mxu0 %v534
        %v2902 = vpop.f32.mrf.mxu0
        %v2903 = vadd.f32 %v2874, %v2902
        %v2904 = vpop.f32.mrf.mxu0
        %v2905 = vadd.f32 %v2876, %v2904
        %2906 = vdwg.mxu0
        %2907 = vmatpush.bf16.msra.mxu0 %v2573
        %2908 = vmatpush.bf16.msra.mxu0 %v2569
        %2909 = vmatpush.bf16.msra.mxu0 %v2565
        %2910 = vmatpush.bf16.msra.mxu0 %v2561
        %2911 = vmatpush.bf16.msra.mxu0 %v2557
        %2912 = vmatpush.bf16.msra.mxu0 %v2553
        %2913 = vmatpush.bf16.msra.mxu0 %v2549
        %2914 = vmatpush.bf16.msra.mxu0 %v2545
        %2915 = vmatmul.bf16.gmra.mxu0 %v523
        %v2916 = vpop.f32.mrf.mxu0
        %v2917 = vadd.f32 %v2888, %v2916
        %v2918 = vpop.f32.mrf.mxu0
        %v2919 = vadd.f32 %v2890, %v2918
        %2920 = vmatmul.bf16.gmra.mxu0 %v527
        %v2921 = vpop.f32.mrf.mxu0
        %v2922 = vadd.f32 %v2893, %v2921
        %v2923 = vpop.f32.mrf.mxu0
        %v2924 = vadd.f32 %v2895, %v2923
        %2925 = vmatmul.bf16.gmra.mxu0 %v531
        %v2926 = vpop.f32.mrf.mxu0
        %v2927 = vadd.f32 %v2898, %v2926
        %v2928 = vpop.f32.mrf.mxu0
        %v2929 = vadd.f32 %v2900, %v2928
        %2930 = vmatmul.bf16.gmra.mxu0 %v535
        %v2931 = vpop.f32.mrf.mxu0
        %v2932 = vadd.f32 %v2903, %v2931
        %v2933 = vpop.f32.mrf.mxu0
        %v2934 = vadd.f32 %v2905, %v2933
        %2935 = vdwg.mxu0
        %2936 = vmatpush.bf16.msra.mxu0 %v2478
        %2937 = vmatpush.bf16.msra.mxu0 %v2474
        %2938 = vmatpush.bf16.msra.mxu0 %v2470
        %2939 = vmatpush.bf16.msra.mxu0 %v2466
        %2940 = vmatpush.bf16.msra.mxu0 %v2462
        %2941 = vmatpush.bf16.msra.mxu0 %v2458
        %2942 = vmatpush.bf16.msra.mxu0 %v2454
        %2943 = vmatpush.bf16.msra.mxu0 %v2450
        %2944 = vmatmul.bf16.gmra.mxu0 %v520
        %v2945 = vpop.f32.mrf.mxu0
        %v2946 = vadd.f32 0.0, %v2945
        %v2947 = vpop.f32.mrf.mxu0
        %v2948 = vadd.f32 0.0, %v2947
        %2949 = vmatmul.bf16.gmra.mxu0 %v524
        %v2950 = vpop.f32.mrf.mxu0
        %v2951 = vadd.f32 0.0, %v2950
        %v2952 = vpop.f32.mrf.mxu0
        %v2953 = vadd.f32 0.0, %v2952
        %2954 = vmatmul.bf16.gmra.mxu0 %v528
        %v2955 = vpop.f32.mrf.mxu0
        %v2956 = vadd.f32 0.0, %v2955
        %v2957 = vpop.f32.mrf.mxu0
        %v2958 = vadd.f32 0.0, %v2957
        %2959 = vmatmul.bf16.gmra.mxu0 %v532
        %v2960 = vpop.f32.mrf.mxu0
        %v2961 = vadd.f32 0.0, %v2960
        %v2962 = vpop.f32.mrf.mxu0
        %v2963 = vadd.f32 0.0, %v2962
        %2964 = vdwg.mxu0
        %2965 = vmatpush.bf16.msra.mxu0 %v2510
        %2966 = vmatpush.bf16.msra.mxu0 %v2506
        %2967 = vmatpush.bf16.msra.mxu0 %v2502
        %2968 = vmatpush.bf16.msra.mxu0 %v2498
        %2969 = vmatpush.bf16.msra.mxu0 %v2494
        %2970 = vmatpush.bf16.msra.mxu0 %v2490
        %2971 = vmatpush.bf16.msra.mxu0 %v2486
        %2972 = vmatpush.bf16.msra.mxu0 %v2482
        %2973 = vmatmul.bf16.gmra.mxu0 %v521
        %v2974 = vpop.f32.mrf.mxu0
        %v2975 = vadd.f32 %v2946, %v2974
        %v2976 = vpop.f32.mrf.mxu0
        %v2977 = vadd.f32 %v2948, %v2976
        %2978 = vmatmul.bf16.gmra.mxu0 %v525
        %v2979 = vpop.f32.mrf.mxu0
        %v2980 = vadd.f32 %v2951, %v2979
        %v2981 = vpop.f32.mrf.mxu0
        %v2982 = vadd.f32 %v2953, %v2981
        %2983 = vmatmul.bf16.gmra.mxu0 %v529
        %v2984 = vpop.f32.mrf.mxu0
        %v2985 = vadd.f32 %v2956, %v2984
        %v2986 = vpop.f32.mrf.mxu0
        %v2987 = vadd.f32 %v2958, %v2986
        %2988 = vmatmul.bf16.gmra.mxu0 %v533
        %v2989 = vpop.f32.mrf.mxu0
        %v2990 = vadd.f32 %v2961, %v2989
        %v2991 = vpop.f32.mrf.mxu0
        %v2992 = vadd.f32 %v2963, %v2991
        %2993 = vdwg.mxu0
        %2994 = vmatpush.bf16.msra.mxu0 %v2542
        %2995 = vmatpush.bf16.msra.mxu0 %v2538
        %2996 = vmatpush.bf16.msra.mxu0 %v2534
        %2997 = vmatpush.bf16.msra.mxu0 %v2530
        %2998 = vmatpush.bf16.msra.mxu0 %v2526
        %2999 = vmatpush.bf16.msra.mxu0 %v2522
        %3000 = vmatpush.bf16.msra.mxu0 %v2518
        %3001 = vmatpush.bf16.msra.mxu0 %v2514
        %3002 = vmatmul.bf16.gmra.mxu0 %v522
        %v3003 = vpop.f32.mrf.mxu0
        %v3004 = vadd.f32 %v2975, %v3003
        %v3005 = vpop.f32.mrf.mxu0
        %v3006 = vadd.f32 %v2977, %v3005
        %3007 = vmatmul.bf16.gmra.mxu0 %v526
        %v3008 = vpop.f32.mrf.mxu0
        %v3009 = vadd.f32 %v2980, %v3008
        %v3010 = vpop.f32.mrf.mxu0
        %v3011 = vadd.f32 %v2982, %v3010
        %3012 = vmatmul.bf16.gmra.mxu0 %v530
        %v3013 = vpop.f32.mrf.mxu0
        %v3014 = vadd.f32 %v2985, %v3013
        %v3015 = vpop.f32.mrf.mxu0
        %v3016 = vadd.f32 %v2987, %v3015
        %3017 = vmatmul.bf16.gmra.mxu0 %v534
        %v3018 = vpop.f32.mrf.mxu0
        %v3019 = vadd.f32 %v2990, %v3018
        %v3020 = vpop.f32.mrf.mxu0
        %v3021 = vadd.f32 %v2992, %v3020
        %3022 = vdwg.mxu0
        %3023 = vmatpush.bf16.msra.mxu0 %v2574
        %3024 = vmatpush.bf16.msra.mxu0 %v2570
        %3025 = vmatpush.bf16.msra.mxu0 %v2566
        %3026 = vmatpush.bf16.msra.mxu0 %v2562
        %3027 = vmatpush.bf16.msra.mxu0 %v2558
        %3028 = vmatpush.bf16.msra.mxu0 %v2554
        %3029 = vmatpush.bf16.msra.mxu0 %v2550
        %3030 = vmatpush.bf16.msra.mxu0 %v2546
        %3031 = vmatmul.bf16.gmra.mxu0 %v523
        %v3032 = vpop.f32.mrf.mxu0
        %v3033 = vadd.f32 %v3004, %v3032
        %v3034 = vpop.f32.mrf.mxu0
        %v3035 = vadd.f32 %v3006, %v3034
        %3036 = vmatmul.bf16.gmra.mxu0 %v527
        %v3037 = vpop.f32.mrf.mxu0
        %v3038 = vadd.f32 %v3009, %v3037
        %v3039 = vpop.f32.mrf.mxu0
        %v3040 = vadd.f32 %v3011, %v3039
        %3041 = vmatmul.bf16.gmra.mxu0 %v531
        %v3042 = vpop.f32.mrf.mxu0
        %v3043 = vadd.f32 %v3014, %v3042
        %v3044 = vpop.f32.mrf.mxu0
        %v3045 = vadd.f32 %v3016, %v3044
        %3046 = vmatmul.bf16.gmra.mxu0 %v535
        %v3047 = vpop.f32.mrf.mxu0
        %v3048 = vadd.f32 %v3019, %v3047
        %v3049 = vpop.f32.mrf.mxu0
        %v3050 = vadd.f32 %v3021, %v3049
        %3051 = vdwg.mxu0
        %3052 = vmatpush.bf16.msra.mxu0 %v2479
        %3053 = vmatpush.bf16.msra.mxu0 %v2475
        %3054 = vmatpush.bf16.msra.mxu0 %v2471
        %3055 = vmatpush.bf16.msra.mxu0 %v2467
        %3056 = vmatpush.bf16.msra.mxu0 %v2463
        %3057 = vmatpush.bf16.msra.mxu0 %v2459
        %3058 = vmatpush.bf16.msra.mxu0 %v2455
        %3059 = vmatpush.bf16.msra.mxu0 %v2451
        %3060 = vmatmul.bf16.gmra.mxu0 %v520
        %v3061 = vpop.f32.mrf.mxu0
        %v3062 = vadd.f32 0.0, %v3061
        %v3063 = vpop.f32.mrf.mxu0
        %v3064 = vadd.f32 0.0, %v3063
        %3065 = vmatmul.bf16.gmra.mxu0 %v524
        %v3066 = vpop.f32.mrf.mxu0
        %v3067 = vadd.f32 0.0, %v3066
        %v3068 = vpop.f32.mrf.mxu0
        %v3069 = vadd.f32 0.0, %v3068
        %3070 = vmatmul.bf16.gmra.mxu0 %v528
        %v3071 = vpop.f32.mrf.mxu0
        %v3072 = vadd.f32 0.0, %v3071
        %v3073 = vpop.f32.mrf.mxu0
        %v3074 = vadd.f32 0.0, %v3073
        %3075 = vmatmul.bf16.gmra.mxu0 %v532
        %v3076 = vpop.f32.mrf.mxu0
        %v3077 = vadd.f32 0.0, %v3076
        %v3078 = vpop.f32.mrf.mxu0
        %v3079 = vadd.f32 0.0, %v3078
        %3080 = vdwg.mxu0
        %3081 = vmatpush.bf16.msra.mxu0 %v2511
        %3082 = vmatpush.bf16.msra.mxu0 %v2507
        %3083 = vmatpush.bf16.msra.mxu0 %v2503
        %3084 = vmatpush.bf16.msra.mxu0 %v2499
        %3085 = vmatpush.bf16.msra.mxu0 %v2495
        %3086 = vmatpush.bf16.msra.mxu0 %v2491
        %3087 = vmatpush.bf16.msra.mxu0 %v2487
        %3088 = vmatpush.bf16.msra.mxu0 %v2483
        %3089 = vmatmul.bf16.gmra.mxu0 %v521
        %v3090 = vpop.f32.mrf.mxu0
        %v3091 = vadd.f32 %v3062, %v3090
        %v3092 = vpop.f32.mrf.mxu0
        %v3093 = vadd.f32 %v3064, %v3092
        %3094 = vmatmul.bf16.gmra.mxu0 %v525
        %v3095 = vpop.f32.mrf.mxu0
        %v3096 = vadd.f32 %v3067, %v3095
        %v3097 = vpop.f32.mrf.mxu0
        %v3098 = vadd.f32 %v3069, %v3097
        %3099 = vmatmul.bf16.gmra.mxu0 %v529
        %v3100 = vpop.f32.mrf.mxu0
        %v3101 = vadd.f32 %v3072, %v3100
        %v3102 = vpop.f32.mrf.mxu0
        %v3103 = vadd.f32 %v3074, %v3102
        %3104 = vmatmul.bf16.gmra.mxu0 %v533
        %v3105 = vpop.f32.mrf.mxu0
        %v3106 = vadd.f32 %v3077, %v3105
        %v3107 = vpop.f32.mrf.mxu0
        %v3108 = vadd.f32 %v3079, %v3107
        %3109 = vdwg.mxu0
        %3110 = vmatpush.bf16.msra.mxu0 %v2543
        %3111 = vmatpush.bf16.msra.mxu0 %v2539
        %3112 = vmatpush.bf16.msra.mxu0 %v2535
        %3113 = vmatpush.bf16.msra.mxu0 %v2531
        %3114 = vmatpush.bf16.msra.mxu0 %v2527
        %3115 = vmatpush.bf16.msra.mxu0 %v2523
        %3116 = vmatpush.bf16.msra.mxu0 %v2519
        %3117 = vmatpush.bf16.msra.mxu0 %v2515
        %3118 = vmatmul.bf16.gmra.mxu0 %v522
        %v3119 = vpop.f32.mrf.mxu0
        %v3120 = vadd.f32 %v3091, %v3119
        %v3121 = vpop.f32.mrf.mxu0
        %v3122 = vadd.f32 %v3093, %v3121
        %3123 = vmatmul.bf16.gmra.mxu0 %v526
        %v3124 = vpop.f32.mrf.mxu0
        %v3125 = vadd.f32 %v3096, %v3124
        %v3126 = vpop.f32.mrf.mxu0
        %v3127 = vadd.f32 %v3098, %v3126
        %3128 = vmatmul.bf16.gmra.mxu0 %v530
        %v3129 = vpop.f32.mrf.mxu0
        %v3130 = vadd.f32 %v3101, %v3129
        %v3131 = vpop.f32.mrf.mxu0
        %v3132 = vadd.f32 %v3103, %v3131
        %3133 = vmatmul.bf16.gmra.mxu0 %v534
        %v3134 = vpop.f32.mrf.mxu0
        %v3135 = vadd.f32 %v3106, %v3134
        %v3136 = vpop.f32.mrf.mxu0
        %v3137 = vadd.f32 %v3108, %v3136
        %3138 = vdwg.mxu0
        %3139 = vmatpush.bf16.msra.mxu0 %v2575
        %3140 = vmatpush.bf16.msra.mxu0 %v2571
        %3141 = vmatpush.bf16.msra.mxu0 %v2567
        %3142 = vmatpush.bf16.msra.mxu0 %v2563
        %3143 = vmatpush.bf16.msra.mxu0 %v2559
        %3144 = vmatpush.bf16.msra.mxu0 %v2555
        %3145 = vmatpush.bf16.msra.mxu0 %v2551
        %3146 = vmatpush.bf16.msra.mxu0 %v2547
        %3147 = vmatmul.bf16.gmra.mxu0 %v523
        %v3148 = vpop.f32.mrf.mxu0
        %v3149 = vadd.f32 %v3120, %v3148
        %v3150 = vpop.f32.mrf.mxu0
        %v3151 = vadd.f32 %v3122, %v3150
        %3152 = vmatmul.bf16.gmra.mxu0 %v527
        %v3153 = vpop.f32.mrf.mxu0
        %v3154 = vadd.f32 %v3125, %v3153
        %v3155 = vpop.f32.mrf.mxu0
        %v3156 = vadd.f32 %v3127, %v3155
        %3157 = vmatmul.bf16.gmra.mxu0 %v531
        %v3158 = vpop.f32.mrf.mxu0
        %v3159 = vadd.f32 %v3130, %v3158
        %v3160 = vpop.f32.mrf.mxu0
        %v3161 = vadd.f32 %v3132, %v3160
        %3162 = vmatmul.bf16.gmra.mxu0 %v535
        %v3163 = vpop.f32.mrf.mxu0
        %v3164 = vadd.f32 %v3135, %v3163
        %v3165 = vpop.f32.mrf.mxu0
        %v3166 = vadd.f32 %v3137, %v3165
        %3167 = vdwg.mxu0
        %v3168 = vadd.f32 %v1887, %v2801
        %v3169 = vadd.f32 %v1888, %v2917
        %v3170 = vadd.f32 %v1889, %v3033
        %v3171 = vadd.f32 %v1890, %v3149
        %v3172 = vadd.f32 %v1891, %v2803
        %v3173 = vadd.f32 %v1892, %v2919
        %v3174 = vadd.f32 %v1893, %v3035
        %v3175 = vadd.f32 %v1894, %v3151
        %v3176 = vadd.f32 %v1895, %v2806
        %v3177 = vadd.f32 %v1896, %v2922
        %v3178 = vadd.f32 %v1897, %v3038
        %v3179 = vadd.f32 %v1898, %v3154
        %v3180 = vadd.f32 %v1899, %v2808
        %v3181 = vadd.f32 %v1900, %v2924
        %v3182 = vadd.f32 %v1901, %v3040
        %v3183 = vadd.f32 %v1902, %v3156
        %v3184 = vadd.f32 %v1903, %v2811
        %v3185 = vadd.f32 %v1904, %v2927
        %v3186 = vadd.f32 %v1905, %v3043
        %v3187 = vadd.f32 %v1906, %v3159
        %v3188 = vadd.f32 %v1907, %v2813
        %v3189 = vadd.f32 %v1908, %v2929
        %v3190 = vadd.f32 %v1909, %v3045
        %v3191 = vadd.f32 %v1910, %v3161
        %v3192 = vadd.f32 %v1911, %v2816
        %v3193 = vadd.f32 %v1912, %v2932
        %v3194 = vadd.f32 %v1913, %v3048
        %v3195 = vadd.f32 %v1914, %v3164
        %v3196 = vadd.f32 %v1915, %v2818
        %v3197 = vadd.f32 %v1916, %v2934
        %v3198 = vadd.f32 %v1917, %v3050
        %v3199 = vadd.f32 %v1918, %v3166
        %s3200 = scalar_lea.vmem [#allocation2], 2048
        %v3201 = vld [vmem:[%s3200] sm:$0xff]
        %v3202 = vld [vmem:[%s3200 + $0x8] sm:$0xff]
        %v3203 = vld [vmem:[%s3200 + $0x10] sm:$0xff]
        %v3204 = vld [vmem:[%s3200 + $0x18] sm:$0xff]
        %v3205 = vld [vmem:[%s3200 + $0x20] sm:$0xff]
        %v3206 = vld [vmem:[%s3200 + $0x28] sm:$0xff]
        %v3207 = vld [vmem:[%s3200 + $0x30] sm:$0xff]
        %v3208 = vld [vmem:[%s3200 + $0x38] sm:$0xff]
        %v3209 = vld [vmem:[%s3200 + $0x40] sm:$0xff]
        %v3210 = vld [vmem:[%s3200 + $0x48] sm:$0xff]
        %v3211 = vld [vmem:[%s3200 + $0x50] sm:$0xff]
        %v3212 = vld [vmem:[%s3200 + $0x58] sm:$0xff]
        %v3213 = vld [vmem:[%s3200 + $0x60] sm:$0xff]
        %v3214 = vld [vmem:[%s3200 + $0x68] sm:$0xff]
        %v3215 = vld [vmem:[%s3200 + $0x70] sm:$0xff]
        %v3216 = vld [vmem:[%s3200 + $0x78] sm:$0xff]
        %v3217 = vld [vmem:[%s3200 + $0x80] sm:$0xff]
        %v3218 = vld [vmem:[%s3200 + $0x88] sm:$0xff]
        %v3219 = vld [vmem:[%s3200 + $0x90] sm:$0xff]
        %v3220 = vld [vmem:[%s3200 + $0x98] sm:$0xff]
        %v3221 = vld [vmem:[%s3200 + $0xa0] sm:$0xff]
        %v3222 = vld [vmem:[%s3200 + $0xa8] sm:$0xff]
        %v3223 = vld [vmem:[%s3200 + $0xb0] sm:$0xff]
        %v3224 = vld [vmem:[%s3200 + $0xb8] sm:$0xff]
        %v3225 = vld [vmem:[%s3200 + $0xc0] sm:$0xff]
        %v3226 = vld [vmem:[%s3200 + $0xc8] sm:$0xff]
        %v3227 = vld [vmem:[%s3200 + $0xd0] sm:$0xff]
        %v3228 = vld [vmem:[%s3200 + $0xd8] sm:$0xff]
        %v3229 = vld [vmem:[%s3200 + $0xe0] sm:$0xff]
        %v3230 = vld [vmem:[%s3200 + $0xe8] sm:$0xff]
        %v3231 = vld [vmem:[%s3200 + $0xf0] sm:$0xff]
        %v3232 = vld [vmem:[%s3200 + $0xf8] sm:$0xff]
        %v3233 = vld [vmem:[%s3200 + $0x100] sm:$0xff]
        %v3234 = vld [vmem:[%s3200 + $0x108] sm:$0xff]
        %v3235 = vld [vmem:[%s3200 + $0x110] sm:$0xff]
        %v3236 = vld [vmem:[%s3200 + $0x118] sm:$0xff]
        %v3237 = vld [vmem:[%s3200 + $0x120] sm:$0xff]
        %v3238 = vld [vmem:[%s3200 + $0x128] sm:$0xff]
        %v3239 = vld [vmem:[%s3200 + $0x130] sm:$0xff]
        %v3240 = vld [vmem:[%s3200 + $0x138] sm:$0xff]
        %v3241 = vld [vmem:[%s3200 + $0x140] sm:$0xff]
        %v3242 = vld [vmem:[%s3200 + $0x148] sm:$0xff]
        %v3243 = vld [vmem:[%s3200 + $0x150] sm:$0xff]
        %v3244 = vld [vmem:[%s3200 + $0x158] sm:$0xff]
        %v3245 = vld [vmem:[%s3200 + $0x160] sm:$0xff]
        %v3246 = vld [vmem:[%s3200 + $0x168] sm:$0xff]
        %v3247 = vld [vmem:[%s3200 + $0x170] sm:$0xff]
        %v3248 = vld [vmem:[%s3200 + $0x178] sm:$0xff]
        %v3249 = vld [vmem:[%s3200 + $0x180] sm:$0xff]
        %v3250 = vld [vmem:[%s3200 + $0x188] sm:$0xff]
        %v3251 = vld [vmem:[%s3200 + $0x190] sm:$0xff]
        %v3252 = vld [vmem:[%s3200 + $0x198] sm:$0xff]
        %v3253 = vld [vmem:[%s3200 + $0x1a0] sm:$0xff]
        %v3254 = vld [vmem:[%s3200 + $0x1a8] sm:$0xff]
        %v3255 = vld [vmem:[%s3200 + $0x1b0] sm:$0xff]
        %v3256 = vld [vmem:[%s3200 + $0x1b8] sm:$0xff]
        %v3257 = vld [vmem:[%s3200 + $0x1c0] sm:$0xff]
        %v3258 = vld [vmem:[%s3200 + $0x1c8] sm:$0xff]
        %v3259 = vld [vmem:[%s3200 + $0x1d0] sm:$0xff]
        %v3260 = vld [vmem:[%s3200 + $0x1d8] sm:$0xff]
        %v3261 = vld [vmem:[%s3200 + $0x1e0] sm:$0xff]
        %v3262 = vld [vmem:[%s3200 + $0x1e8] sm:$0xff]
        %v3263 = vld [vmem:[%s3200 + $0x1f0] sm:$0xff]
        %v3264 = vld [vmem:[%s3200 + $0x1f8] sm:$0xff]
        %v3265 = vld [vmem:[%s3200 + $0x200] sm:$0xff]
        %v3266 = vld [vmem:[%s3200 + $0x208] sm:$0xff]
        %v3267 = vld [vmem:[%s3200 + $0x210] sm:$0xff]
        %v3268 = vld [vmem:[%s3200 + $0x218] sm:$0xff]
        %v3269 = vld [vmem:[%s3200 + $0x220] sm:$0xff]
        %v3270 = vld [vmem:[%s3200 + $0x228] sm:$0xff]
        %v3271 = vld [vmem:[%s3200 + $0x230] sm:$0xff]
        %v3272 = vld [vmem:[%s3200 + $0x238] sm:$0xff]
        %v3273 = vld [vmem:[%s3200 + $0x240] sm:$0xff]
        %v3274 = vld [vmem:[%s3200 + $0x248] sm:$0xff]
        %v3275 = vld [vmem:[%s3200 + $0x250] sm:$0xff]
        %v3276 = vld [vmem:[%s3200 + $0x258] sm:$0xff]
        %v3277 = vld [vmem:[%s3200 + $0x260] sm:$0xff]
        %v3278 = vld [vmem:[%s3200 + $0x268] sm:$0xff]
        %v3279 = vld [vmem:[%s3200 + $0x270] sm:$0xff]
        %v3280 = vld [vmem:[%s3200 + $0x278] sm:$0xff]
        %v3281 = vld [vmem:[%s3200 + $0x280] sm:$0xff]
        %v3282 = vld [vmem:[%s3200 + $0x288] sm:$0xff]
        %v3283 = vld [vmem:[%s3200 + $0x290] sm:$0xff]
        %v3284 = vld [vmem:[%s3200 + $0x298] sm:$0xff]
        %v3285 = vld [vmem:[%s3200 + $0x2a0] sm:$0xff]
        %v3286 = vld [vmem:[%s3200 + $0x2a8] sm:$0xff]
        %v3287 = vld [vmem:[%s3200 + $0x2b0] sm:$0xff]
        %v3288 = vld [vmem:[%s3200 + $0x2b8] sm:$0xff]
        %v3289 = vld [vmem:[%s3200 + $0x2c0] sm:$0xff]
        %v3290 = vld [vmem:[%s3200 + $0x2c8] sm:$0xff]
        %v3291 = vld [vmem:[%s3200 + $0x2d0] sm:$0xff]
        %v3292 = vld [vmem:[%s3200 + $0x2d8] sm:$0xff]
        %v3293 = vld [vmem:[%s3200 + $0x2e0] sm:$0xff]
        %v3294 = vld [vmem:[%s3200 + $0x2e8] sm:$0xff]
        %v3295 = vld [vmem:[%s3200 + $0x2f0] sm:$0xff]
        %v3296 = vld [vmem:[%s3200 + $0x2f8] sm:$0xff]
        %v3297 = vld [vmem:[%s3200 + $0x300] sm:$0xff]
        %v3298 = vld [vmem:[%s3200 + $0x308] sm:$0xff]
        %v3299 = vld [vmem:[%s3200 + $0x310] sm:$0xff]
        %v3300 = vld [vmem:[%s3200 + $0x318] sm:$0xff]
        %v3301 = vld [vmem:[%s3200 + $0x320] sm:$0xff]
        %v3302 = vld [vmem:[%s3200 + $0x328] sm:$0xff]
        %v3303 = vld [vmem:[%s3200 + $0x330] sm:$0xff]
        %v3304 = vld [vmem:[%s3200 + $0x338] sm:$0xff]
        %v3305 = vld [vmem:[%s3200 + $0x340] sm:$0xff]
        %v3306 = vld [vmem:[%s3200 + $0x348] sm:$0xff]
        %v3307 = vld [vmem:[%s3200 + $0x350] sm:$0xff]
        %v3308 = vld [vmem:[%s3200 + $0x358] sm:$0xff]
        %v3309 = vld [vmem:[%s3200 + $0x360] sm:$0xff]
        %v3310 = vld [vmem:[%s3200 + $0x368] sm:$0xff]
        %v3311 = vld [vmem:[%s3200 + $0x370] sm:$0xff]
        %v3312 = vld [vmem:[%s3200 + $0x378] sm:$0xff]
        %v3313 = vld [vmem:[%s3200 + $0x380] sm:$0xff]
        %v3314 = vld [vmem:[%s3200 + $0x388] sm:$0xff]
        %v3315 = vld [vmem:[%s3200 + $0x390] sm:$0xff]
        %v3316 = vld [vmem:[%s3200 + $0x398] sm:$0xff]
        %v3317 = vld [vmem:[%s3200 + $0x3a0] sm:$0xff]
        %v3318 = vld [vmem:[%s3200 + $0x3a8] sm:$0xff]
        %v3319 = vld [vmem:[%s3200 + $0x3b0] sm:$0xff]
        %v3320 = vld [vmem:[%s3200 + $0x3b8] sm:$0xff]
        %v3321 = vld [vmem:[%s3200 + $0x3c0] sm:$0xff]
        %v3322 = vld [vmem:[%s3200 + $0x3c8] sm:$0xff]
        %v3323 = vld [vmem:[%s3200 + $0x3d0] sm:$0xff]
        %v3324 = vld [vmem:[%s3200 + $0x3d8] sm:$0xff]
        %v3325 = vld [vmem:[%s3200 + $0x3e0] sm:$0xff]
        %v3326 = vld [vmem:[%s3200 + $0x3e8] sm:$0xff]
        %v3327 = vld [vmem:[%s3200 + $0x3f0] sm:$0xff]
        %v3328 = vld [vmem:[%s3200 + $0x3f8] sm:$0xff]
        %v3457 = vunpack.c.l.b16 %v3201
        %v3458 = vunpack.c.h.b16 %v3201
        %v3459 = vunpack.c.l.b16 %v3202
        %v3460 = vunpack.c.h.b16 %v3202
        %v3461 = vunpack.c.l.b16 %v3203
        %v3462 = vunpack.c.h.b16 %v3203
        %v3463 = vunpack.c.l.b16 %v3204
        %v3464 = vunpack.c.h.b16 %v3204
        %v3465 = vunpack.c.l.b16 %v3205
        %v3466 = vunpack.c.h.b16 %v3205
        %v3467 = vunpack.c.l.b16 %v3206
        %v3468 = vunpack.c.h.b16 %v3206
        %v3469 = vunpack.c.l.b16 %v3207
        %v3470 = vunpack.c.h.b16 %v3207
        %v3471 = vunpack.c.l.b16 %v3208
        %v3472 = vunpack.c.h.b16 %v3208
        %v3473 = vunpack.c.l.b16 %v3209
        %v3474 = vunpack.c.h.b16 %v3209
        %v3475 = vunpack.c.l.b16 %v3210
        %v3476 = vunpack.c.h.b16 %v3210
        %v3477 = vunpack.c.l.b16 %v3211
        %v3478 = vunpack.c.h.b16 %v3211
        %v3479 = vunpack.c.l.b16 %v3212
        %v3480 = vunpack.c.h.b16 %v3212
        %v3481 = vunpack.c.l.b16 %v3213
        %v3482 = vunpack.c.h.b16 %v3213
        %v3483 = vunpack.c.l.b16 %v3214
        %v3484 = vunpack.c.h.b16 %v3214
        %v3485 = vunpack.c.l.b16 %v3215
        %v3486 = vunpack.c.h.b16 %v3215
        %v3487 = vunpack.c.l.b16 %v3216
        %v3488 = vunpack.c.h.b16 %v3216
        %v3489 = vunpack.c.l.b16 %v3217
        %v3490 = vunpack.c.h.b16 %v3217
        %v3491 = vunpack.c.l.b16 %v3218
        %v3492 = vunpack.c.h.b16 %v3218
        %v3493 = vunpack.c.l.b16 %v3219
        %v3494 = vunpack.c.h.b16 %v3219
        %v3495 = vunpack.c.l.b16 %v3220
        %v3496 = vunpack.c.h.b16 %v3220
        %v3497 = vunpack.c.l.b16 %v3221
        %v3498 = vunpack.c.h.b16 %v3221
        %v3499 = vunpack.c.l.b16 %v3222
        %v3500 = vunpack.c.h.b16 %v3222
        %v3501 = vunpack.c.l.b16 %v3223
        %v3502 = vunpack.c.h.b16 %v3223
        %v3503 = vunpack.c.l.b16 %v3224
        %v3504 = vunpack.c.h.b16 %v3224
        %v3505 = vunpack.c.l.b16 %v3225
        %v3506 = vunpack.c.h.b16 %v3225
        %v3507 = vunpack.c.l.b16 %v3226
        %v3508 = vunpack.c.h.b16 %v3226
        %v3509 = vunpack.c.l.b16 %v3227
        %v3510 = vunpack.c.h.b16 %v3227
        %v3511 = vunpack.c.l.b16 %v3228
        %v3512 = vunpack.c.h.b16 %v3228
        %v3513 = vunpack.c.l.b16 %v3229
        %v3514 = vunpack.c.h.b16 %v3229
        %v3515 = vunpack.c.l.b16 %v3230
        %v3516 = vunpack.c.h.b16 %v3230
        %v3517 = vunpack.c.l.b16 %v3231
        %v3518 = vunpack.c.h.b16 %v3231
        %v3519 = vunpack.c.l.b16 %v3232
        %v3520 = vunpack.c.h.b16 %v3232
        %v3521 = vunpack.c.l.b16 %v3233
        %v3522 = vunpack.c.h.b16 %v3233
        %v3523 = vunpack.c.l.b16 %v3234
        %v3524 = vunpack.c.h.b16 %v3234
        %v3525 = vunpack.c.l.b16 %v3235
        %v3526 = vunpack.c.h.b16 %v3235
        %v3527 = vunpack.c.l.b16 %v3236
        %v3528 = vunpack.c.h.b16 %v3236
        %v3529 = vunpack.c.l.b16 %v3237
        %v3530 = vunpack.c.h.b16 %v3237
        %v3531 = vunpack.c.l.b16 %v3238
        %v3532 = vunpack.c.h.b16 %v3238
        %v3533 = vunpack.c.l.b16 %v3239
        %v3534 = vunpack.c.h.b16 %v3239
        %v3535 = vunpack.c.l.b16 %v3240
        %v3536 = vunpack.c.h.b16 %v3240
        %v3537 = vunpack.c.l.b16 %v3241
        %v3538 = vunpack.c.h.b16 %v3241
        %v3539 = vunpack.c.l.b16 %v3242
        %v3540 = vunpack.c.h.b16 %v3242
        %v3541 = vunpack.c.l.b16 %v3243
        %v3542 = vunpack.c.h.b16 %v3243
        %v3543 = vunpack.c.l.b16 %v3244
        %v3544 = vunpack.c.h.b16 %v3244
        %v3545 = vunpack.c.l.b16 %v3245
        %v3546 = vunpack.c.h.b16 %v3245
        %v3547 = vunpack.c.l.b16 %v3246
        %v3548 = vunpack.c.h.b16 %v3246
        %v3549 = vunpack.c.l.b16 %v3247
        %v3550 = vunpack.c.h.b16 %v3247
        %v3551 = vunpack.c.l.b16 %v3248
        %v3552 = vunpack.c.h.b16 %v3248
        %v3553 = vunpack.c.l.b16 %v3249
        %v3554 = vunpack.c.h.b16 %v3249
        %v3555 = vunpack.c.l.b16 %v3250
        %v3556 = vunpack.c.h.b16 %v3250
        %v3557 = vunpack.c.l.b16 %v3251
        %v3558 = vunpack.c.h.b16 %v3251
        %v3559 = vunpack.c.l.b16 %v3252
        %v3560 = vunpack.c.h.b16 %v3252
        %v3561 = vunpack.c.l.b16 %v3253
        %v3562 = vunpack.c.h.b16 %v3253
        %v3563 = vunpack.c.l.b16 %v3254
        %v3564 = vunpack.c.h.b16 %v3254
        %v3565 = vunpack.c.l.b16 %v3255
        %v3566 = vunpack.c.h.b16 %v3255
        %v3567 = vunpack.c.l.b16 %v3256
        %v3568 = vunpack.c.h.b16 %v3256
        %v3569 = vunpack.c.l.b16 %v3257
        %v3570 = vunpack.c.h.b16 %v3257
        %v3571 = vunpack.c.l.b16 %v3258
        %v3572 = vunpack.c.h.b16 %v3258
        %v3573 = vunpack.c.l.b16 %v3259
        %v3574 = vunpack.c.h.b16 %v3259
        %v3575 = vunpack.c.l.b16 %v3260
        %v3576 = vunpack.c.h.b16 %v3260
        %v3577 = vunpack.c.l.b16 %v3261
        %v3578 = vunpack.c.h.b16 %v3261
        %v3579 = vunpack.c.l.b16 %v3262
        %v3580 = vunpack.c.h.b16 %v3262
        %v3581 = vunpack.c.l.b16 %v3263
        %v3582 = vunpack.c.h.b16 %v3263
        %v3583 = vunpack.c.l.b16 %v3264
        %v3584 = vunpack.c.h.b16 %v3264
        %v3585 = vunpack.c.l.b16 %v3265
        %v3586 = vunpack.c.h.b16 %v3265
        %v3587 = vunpack.c.l.b16 %v3266
        %v3588 = vunpack.c.h.b16 %v3266
        %v3589 = vunpack.c.l.b16 %v3267
        %v3590 = vunpack.c.h.b16 %v3267
        %v3591 = vunpack.c.l.b16 %v3268
        %v3592 = vunpack.c.h.b16 %v3268
        %v3593 = vunpack.c.l.b16 %v3269
        %v3594 = vunpack.c.h.b16 %v3269
        %v3595 = vunpack.c.l.b16 %v3270
        %v3596 = vunpack.c.h.b16 %v3270
        %v3597 = vunpack.c.l.b16 %v3271
        %v3598 = vunpack.c.h.b16 %v3271
        %v3599 = vunpack.c.l.b16 %v3272
        %v3600 = vunpack.c.h.b16 %v3272
        %v3601 = vunpack.c.l.b16 %v3273
        %v3602 = vunpack.c.h.b16 %v3273
        %v3603 = vunpack.c.l.b16 %v3274
        %v3604 = vunpack.c.h.b16 %v3274
        %v3605 = vunpack.c.l.b16 %v3275
        %v3606 = vunpack.c.h.b16 %v3275
        %v3607 = vunpack.c.l.b16 %v3276
        %v3608 = vunpack.c.h.b16 %v3276
        %v3609 = vunpack.c.l.b16 %v3277
        %v3610 = vunpack.c.h.b16 %v3277
        %v3611 = vunpack.c.l.b16 %v3278
        %v3612 = vunpack.c.h.b16 %v3278
        %v3613 = vunpack.c.l.b16 %v3279
        %v3614 = vunpack.c.h.b16 %v3279
        %v3615 = vunpack.c.l.b16 %v3280
        %v3616 = vunpack.c.h.b16 %v3280
        %v3617 = vunpack.c.l.b16 %v3281
        %v3618 = vunpack.c.h.b16 %v3281
        %v3619 = vunpack.c.l.b16 %v3282
        %v3620 = vunpack.c.h.b16 %v3282
        %v3621 = vunpack.c.l.b16 %v3283
        %v3622 = vunpack.c.h.b16 %v3283
        %v3623 = vunpack.c.l.b16 %v3284
        %v3624 = vunpack.c.h.b16 %v3284
        %v3625 = vunpack.c.l.b16 %v3285
        %v3626 = vunpack.c.h.b16 %v3285
        %v3627 = vunpack.c.l.b16 %v3286
        %v3628 = vunpack.c.h.b16 %v3286
        %v3629 = vunpack.c.l.b16 %v3287
        %v3630 = vunpack.c.h.b16 %v3287
        %v3631 = vunpack.c.l.b16 %v3288
        %v3632 = vunpack.c.h.b16 %v3288
        %v3633 = vunpack.c.l.b16 %v3289
        %v3634 = vunpack.c.h.b16 %v3289
        %v3635 = vunpack.c.l.b16 %v3290
        %v3636 = vunpack.c.h.b16 %v3290
        %v3637 = vunpack.c.l.b16 %v3291
        %v3638 = vunpack.c.h.b16 %v3291
        %v3639 = vunpack.c.l.b16 %v3292
        %v3640 = vunpack.c.h.b16 %v3292
        %v3641 = vunpack.c.l.b16 %v3293
        %v3642 = vunpack.c.h.b16 %v3293
        %v3643 = vunpack.c.l.b16 %v3294
        %v3644 = vunpack.c.h.b16 %v3294
        %v3645 = vunpack.c.l.b16 %v3295
        %v3646 = vunpack.c.h.b16 %v3295
        %v3647 = vunpack.c.l.b16 %v3296
        %v3648 = vunpack.c.h.b16 %v3296
        %v3649 = vunpack.c.l.b16 %v3297
        %v3650 = vunpack.c.h.b16 %v3297
        %v3651 = vunpack.c.l.b16 %v3298
        %v3652 = vunpack.c.h.b16 %v3298
        %v3653 = vunpack.c.l.b16 %v3299
        %v3654 = vunpack.c.h.b16 %v3299
        %v3655 = vunpack.c.l.b16 %v3300
        %v3656 = vunpack.c.h.b16 %v3300
        %v3657 = vunpack.c.l.b16 %v3301
        %v3658 = vunpack.c.h.b16 %v3301
        %v3659 = vunpack.c.l.b16 %v3302
        %v3660 = vunpack.c.h.b16 %v3302
        %v3661 = vunpack.c.l.b16 %v3303
        %v3662 = vunpack.c.h.b16 %v3303
        %v3663 = vunpack.c.l.b16 %v3304
        %v3664 = vunpack.c.h.b16 %v3304
        %v3665 = vunpack.c.l.b16 %v3305
        %v3666 = vunpack.c.h.b16 %v3305
        %v3667 = vunpack.c.l.b16 %v3306
        %v3668 = vunpack.c.h.b16 %v3306
        %v3669 = vunpack.c.l.b16 %v3307
        %v3670 = vunpack.c.h.b16 %v3307
        %v3671 = vunpack.c.l.b16 %v3308
        %v3672 = vunpack.c.h.b16 %v3308
        %v3673 = vunpack.c.l.b16 %v3309
        %v3674 = vunpack.c.h.b16 %v3309
        %v3675 = vunpack.c.l.b16 %v3310
        %v3676 = vunpack.c.h.b16 %v3310
        %v3677 = vunpack.c.l.b16 %v3311
        %v3678 = vunpack.c.h.b16 %v3311
        %v3679 = vunpack.c.l.b16 %v3312
        %v3680 = vunpack.c.h.b16 %v3312
        %v3681 = vunpack.c.l.b16 %v3313
        %v3682 = vunpack.c.h.b16 %v3313
        %v3683 = vunpack.c.l.b16 %v3314
        %v3684 = vunpack.c.h.b16 %v3314
        %v3685 = vunpack.c.l.b16 %v3315
        %v3686 = vunpack.c.h.b16 %v3315
        %v3687 = vunpack.c.l.b16 %v3316
        %v3688 = vunpack.c.h.b16 %v3316
        %v3689 = vunpack.c.l.b16 %v3317
        %v3690 = vunpack.c.h.b16 %v3317
        %v3691 = vunpack.c.l.b16 %v3318
        %v3692 = vunpack.c.h.b16 %v3318
        %v3693 = vunpack.c.l.b16 %v3319
        %v3694 = vunpack.c.h.b16 %v3319
        %v3695 = vunpack.c.l.b16 %v3320
        %v3696 = vunpack.c.h.b16 %v3320
        %v3697 = vunpack.c.l.b16 %v3321
        %v3698 = vunpack.c.h.b16 %v3321
        %v3699 = vunpack.c.l.b16 %v3322
        %v3700 = vunpack.c.h.b16 %v3322
        %v3701 = vunpack.c.l.b16 %v3323
        %v3702 = vunpack.c.h.b16 %v3323
        %v3703 = vunpack.c.l.b16 %v3324
        %v3704 = vunpack.c.h.b16 %v3324
        %v3705 = vunpack.c.l.b16 %v3325
        %v3706 = vunpack.c.h.b16 %v3325
        %v3707 = vunpack.c.l.b16 %v3326
        %v3708 = vunpack.c.h.b16 %v3326
        %v3709 = vunpack.c.l.b16 %v3327
        %v3710 = vunpack.c.h.b16 %v3327
        %v3711 = vunpack.c.l.b16 %v3328
        %v3712 = vunpack.c.h.b16 %v3328
        %v3713 = vpack.c.b16 %v3461, %v3457
        %v3714 = vpack.c.b16 %v3462, %v3458
        %v3715 = vpack.c.b16 %v3463, %v3459
        %v3716 = vpack.c.b16 %v3464, %v3460
        %v3717 = vpack.c.b16 %v3469, %v3465
        %v3718 = vpack.c.b16 %v3470, %v3466
        %v3719 = vpack.c.b16 %v3471, %v3467
        %v3720 = vpack.c.b16 %v3472, %v3468
        %v3721 = vpack.c.b16 %v3477, %v3473
        %v3722 = vpack.c.b16 %v3478, %v3474
        %v3723 = vpack.c.b16 %v3479, %v3475
        %v3724 = vpack.c.b16 %v3480, %v3476
        %v3725 = vpack.c.b16 %v3485, %v3481
        %v3726 = vpack.c.b16 %v3486, %v3482
        %v3727 = vpack.c.b16 %v3487, %v3483
        %v3728 = vpack.c.b16 %v3488, %v3484
        %v3729 = vpack.c.b16 %v3493, %v3489
        %v3730 = vpack.c.b16 %v3494, %v3490
        %v3731 = vpack.c.b16 %v3495, %v3491
        %v3732 = vpack.c.b16 %v3496, %v3492
        %v3733 = vpack.c.b16 %v3501, %v3497
        %v3734 = vpack.c.b16 %v3502, %v3498
        %v3735 = vpack.c.b16 %v3503, %v3499
        %v3736 = vpack.c.b16 %v3504, %v3500
        %v3737 = vpack.c.b16 %v3509, %v3505
        %v3738 = vpack.c.b16 %v3510, %v3506
        %v3739 = vpack.c.b16 %v3511, %v3507
        %v3740 = vpack.c.b16 %v3512, %v3508
        %v3741 = vpack.c.b16 %v3517, %v3513
        %v3742 = vpack.c.b16 %v3518, %v3514
        %v3743 = vpack.c.b16 %v3519, %v3515
        %v3744 = vpack.c.b16 %v3520, %v3516
        %v3745 = vpack.c.b16 %v3525, %v3521
        %v3746 = vpack.c.b16 %v3526, %v3522
        %v3747 = vpack.c.b16 %v3527, %v3523
        %v3748 = vpack.c.b16 %v3528, %v3524
        %v3749 = vpack.c.b16 %v3533, %v3529
        %v3750 = vpack.c.b16 %v3534, %v3530
        %v3751 = vpack.c.b16 %v3535, %v3531
        %v3752 = vpack.c.b16 %v3536, %v3532
        %v3753 = vpack.c.b16 %v3541, %v3537
        %v3754 = vpack.c.b16 %v3542, %v3538
        %v3755 = vpack.c.b16 %v3543, %v3539
        %v3756 = vpack.c.b16 %v3544, %v3540
        %v3757 = vpack.c.b16 %v3549, %v3545
        %v3758 = vpack.c.b16 %v3550, %v3546
        %v3759 = vpack.c.b16 %v3551, %v3547
        %v3760 = vpack.c.b16 %v3552, %v3548
        %v3761 = vpack.c.b16 %v3557, %v3553
        %v3762 = vpack.c.b16 %v3558, %v3554
        %v3763 = vpack.c.b16 %v3559, %v3555
        %v3764 = vpack.c.b16 %v3560, %v3556
        %v3765 = vpack.c.b16 %v3565, %v3561
        %v3766 = vpack.c.b16 %v3566, %v3562
        %v3767 = vpack.c.b16 %v3567, %v3563
        %v3768 = vpack.c.b16 %v3568, %v3564
        %v3769 = vpack.c.b16 %v3573, %v3569
        %v3770 = vpack.c.b16 %v3574, %v3570
        %v3771 = vpack.c.b16 %v3575, %v3571
        %v3772 = vpack.c.b16 %v3576, %v3572
        %v3773 = vpack.c.b16 %v3581, %v3577
        %v3774 = vpack.c.b16 %v3582, %v3578
        %v3775 = vpack.c.b16 %v3583, %v3579
        %v3776 = vpack.c.b16 %v3584, %v3580
        %v3777 = vpack.c.b16 %v3589, %v3585
        %v3778 = vpack.c.b16 %v3590, %v3586
        %v3779 = vpack.c.b16 %v3591, %v3587
        %v3780 = vpack.c.b16 %v3592, %v3588
        %v3781 = vpack.c.b16 %v3597, %v3593
        %v3782 = vpack.c.b16 %v3598, %v3594
        %v3783 = vpack.c.b16 %v3599, %v3595
        %v3784 = vpack.c.b16 %v3600, %v3596
        %v3785 = vpack.c.b16 %v3605, %v3601
        %v3786 = vpack.c.b16 %v3606, %v3602
        %v3787 = vpack.c.b16 %v3607, %v3603
        %v3788 = vpack.c.b16 %v3608, %v3604
        %v3789 = vpack.c.b16 %v3613, %v3609
        %v3790 = vpack.c.b16 %v3614, %v3610
        %v3791 = vpack.c.b16 %v3615, %v3611
        %v3792 = vpack.c.b16 %v3616, %v3612
        %v3793 = vpack.c.b16 %v3621, %v3617
        %v3794 = vpack.c.b16 %v3622, %v3618
        %v3795 = vpack.c.b16 %v3623, %v3619
        %v3796 = vpack.c.b16 %v3624, %v3620
        %v3797 = vpack.c.b16 %v3629, %v3625
        %v3798 = vpack.c.b16 %v3630, %v3626
        %v3799 = vpack.c.b16 %v3631, %v3627
        %v3800 = vpack.c.b16 %v3632, %v3628
        %v3801 = vpack.c.b16 %v3637, %v3633
        %v3802 = vpack.c.b16 %v3638, %v3634
        %v3803 = vpack.c.b16 %v3639, %v3635
        %v3804 = vpack.c.b16 %v3640, %v3636
        %v3805 = vpack.c.b16 %v3645, %v3641
        %v3806 = vpack.c.b16 %v3646, %v3642
        %v3807 = vpack.c.b16 %v3647, %v3643
        %v3808 = vpack.c.b16 %v3648, %v3644
        %v3809 = vpack.c.b16 %v3653, %v3649
        %v3810 = vpack.c.b16 %v3654, %v3650
        %v3811 = vpack.c.b16 %v3655, %v3651
        %v3812 = vpack.c.b16 %v3656, %v3652
        %v3813 = vpack.c.b16 %v3661, %v3657
        %v3814 = vpack.c.b16 %v3662, %v3658
        %v3815 = vpack.c.b16 %v3663, %v3659
        %v3816 = vpack.c.b16 %v3664, %v3660
        %v3817 = vpack.c.b16 %v3669, %v3665
        %v3818 = vpack.c.b16 %v3670, %v3666
        %v3819 = vpack.c.b16 %v3671, %v3667
        %v3820 = vpack.c.b16 %v3672, %v3668
        %v3821 = vpack.c.b16 %v3677, %v3673
        %v3822 = vpack.c.b16 %v3678, %v3674
        %v3823 = vpack.c.b16 %v3679, %v3675
        %v3824 = vpack.c.b16 %v3680, %v3676
        %v3825 = vpack.c.b16 %v3685, %v3681
        %v3826 = vpack.c.b16 %v3686, %v3682
        %v3827 = vpack.c.b16 %v3687, %v3683
        %v3828 = vpack.c.b16 %v3688, %v3684
        %v3829 = vpack.c.b16 %v3693, %v3689
        %v3830 = vpack.c.b16 %v3694, %v3690
        %v3831 = vpack.c.b16 %v3695, %v3691
        %v3832 = vpack.c.b16 %v3696, %v3692
        %v3833 = vpack.c.b16 %v3701, %v3697
        %v3834 = vpack.c.b16 %v3702, %v3698
        %v3835 = vpack.c.b16 %v3703, %v3699
        %v3836 = vpack.c.b16 %v3704, %v3700
        %v3837 = vpack.c.b16 %v3709, %v3705
        %v3838 = vpack.c.b16 %v3710, %v3706
        %v3839 = vpack.c.b16 %v3711, %v3707
        %v3840 = vpack.c.b16 %v3712, %v3708
        %3969 = vmatpush.bf16.msra.mxu0 %v3741
        %3970 = vmatpush.bf16.msra.mxu0 %v3737
        %3971 = vmatpush.bf16.msra.mxu0 %v3733
        %3972 = vmatpush.bf16.msra.mxu0 %v3729
        %3973 = vmatpush.bf16.msra.mxu0 %v3725
        %3974 = vmatpush.bf16.msra.mxu0 %v3721
        %3975 = vmatpush.bf16.msra.mxu0 %v3717
        %3976 = vmatpush.bf16.msra.mxu0 %v3713
        %3977 = vmatmul.bf16.gmra.mxu0 %v594
        %v3978 = vpop.f32.mrf.mxu0
        %v3979 = vadd.f32 0.0, %v3978
        %v3980 = vpop.f32.mrf.mxu0
        %v3981 = vadd.f32 0.0, %v3980
        %3982 = vmatmul.bf16.gmra.mxu0 %v605
        %v3983 = vpop.f32.mrf.mxu0
        %v3984 = vadd.f32 0.0, %v3983
        %v3985 = vpop.f32.mrf.mxu0
        %v3986 = vadd.f32 0.0, %v3985
        %3987 = vmatmul.bf16.gmra.mxu0 %v613
        %v3988 = vpop.f32.mrf.mxu0
        %v3989 = vadd.f32 0.0, %v3988
        %v3990 = vpop.f32.mrf.mxu0
        %v3991 = vadd.f32 0.0, %v3990
        %3992 = vmatmul.bf16.gmra.mxu0 %v634
        %v3993 = vpop.f32.mrf.mxu0
        %v3994 = vadd.f32 0.0, %v3993
        %v3995 = vpop.f32.mrf.mxu0
        %v3996 = vadd.f32 0.0, %v3995
        %3997 = vdwg.mxu0
        %3998 = vmatpush.bf16.msra.mxu0 %v3773
        %3999 = vmatpush.bf16.msra.mxu0 %v3769
        %4000 = vmatpush.bf16.msra.mxu0 %v3765
        %4001 = vmatpush.bf16.msra.mxu0 %v3761
        %4002 = vmatpush.bf16.msra.mxu0 %v3757
        %4003 = vmatpush.bf16.msra.mxu0 %v3753
        %4004 = vmatpush.bf16.msra.mxu0 %v3749
        %4005 = vmatpush.bf16.msra.mxu0 %v3745
        %4006 = vmatmul.bf16.gmra.mxu0 %v597
        %v4007 = vpop.f32.mrf.mxu0
        %v4008 = vadd.f32 %v3979, %v4007
        %v4009 = vpop.f32.mrf.mxu0
        %v4010 = vadd.f32 %v3981, %v4009
        %4011 = vmatmul.bf16.gmra.mxu0 %v607
        %v4012 = vpop.f32.mrf.mxu0
        %v4013 = vadd.f32 %v3984, %v4012
        %v4014 = vpop.f32.mrf.mxu0
        %v4015 = vadd.f32 %v3986, %v4014
        %4016 = vmatmul.bf16.gmra.mxu0 %v615
        %v4017 = vpop.f32.mrf.mxu0
        %v4018 = vadd.f32 %v3989, %v4017
        %v4019 = vpop.f32.mrf.mxu0
        %v4020 = vadd.f32 %v3991, %v4019
        %4021 = vmatmul.bf16.gmra.mxu0 %v637
        %v4022 = vpop.f32.mrf.mxu0
        %v4023 = vadd.f32 %v3994, %v4022
        %v4024 = vpop.f32.mrf.mxu0
        %v4025 = vadd.f32 %v3996, %v4024
        %4026 = vdwg.mxu0
        %4027 = vmatpush.bf16.msra.mxu0 %v3805
        %4028 = vmatpush.bf16.msra.mxu0 %v3801
        %4029 = vmatpush.bf16.msra.mxu0 %v3797
        %4030 = vmatpush.bf16.msra.mxu0 %v3793
        %4031 = vmatpush.bf16.msra.mxu0 %v3789
        %4032 = vmatpush.bf16.msra.mxu0 %v3785
        %4033 = vmatpush.bf16.msra.mxu0 %v3781
        %4034 = vmatpush.bf16.msra.mxu0 %v3777
        %4035 = vmatmul.bf16.gmra.mxu0 %v600
        %v4036 = vpop.f32.mrf.mxu0
        %v4037 = vadd.f32 %v4008, %v4036
        %v4038 = vpop.f32.mrf.mxu0
        %v4039 = vadd.f32 %v4010, %v4038
        %4040 = vmatmul.bf16.gmra.mxu0 %v609
        %v4041 = vpop.f32.mrf.mxu0
        %v4042 = vadd.f32 %v4013, %v4041
        %v4043 = vpop.f32.mrf.mxu0
        %v4044 = vadd.f32 %v4015, %v4043
        %4045 = vmatmul.bf16.gmra.mxu0 %v617
        %v4046 = vpop.f32.mrf.mxu0
        %v4047 = vadd.f32 %v4018, %v4046
        %v4048 = vpop.f32.mrf.mxu0
        %v4049 = vadd.f32 %v4020, %v4048
        %4050 = vmatmul.bf16.gmra.mxu0 %v640
        %v4051 = vpop.f32.mrf.mxu0
        %v4052 = vadd.f32 %v4023, %v4051
        %v4053 = vpop.f32.mrf.mxu0
        %v4054 = vadd.f32 %v4025, %v4053
        %4055 = vdwg.mxu0
        %4056 = vmatpush.bf16.msra.mxu0 %v3837
        %4057 = vmatpush.bf16.msra.mxu0 %v3833
        %4058 = vmatpush.bf16.msra.mxu0 %v3829
        %4059 = vmatpush.bf16.msra.mxu0 %v3825
        %4060 = vmatpush.bf16.msra.mxu0 %v3821
        %4061 = vmatpush.bf16.msra.mxu0 %v3817
        %4062 = vmatpush.bf16.msra.mxu0 %v3813
        %4063 = vmatpush.bf16.msra.mxu0 %v3809
        %4064 = vmatmul.bf16.gmra.mxu0 %v603
        %v4065 = vpop.f32.mrf.mxu0
        %v4066 = vadd.f32 %v4037, %v4065
        %v4067 = vpop.f32.mrf.mxu0
        %v4068 = vadd.f32 %v4039, %v4067
        %4069 = vmatmul.bf16.gmra.mxu0 %v611
        %v4070 = vpop.f32.mrf.mxu0
        %v4071 = vadd.f32 %v4042, %v4070
        %v4072 = vpop.f32.mrf.mxu0
        %v4073 = vadd.f32 %v4044, %v4072
        %4074 = vmatmul.bf16.gmra.mxu0 %v619
        %v4075 = vpop.f32.mrf.mxu0
        %v4076 = vadd.f32 %v4047, %v4075
        %v4077 = vpop.f32.mrf.mxu0
        %v4078 = vadd.f32 %v4049, %v4077
        %4079 = vmatmul.bf16.gmra.mxu0 %v643
        %v4080 = vpop.f32.mrf.mxu0
        %v4081 = vadd.f32 %v4052, %v4080
        %v4082 = vpop.f32.mrf.mxu0
        %v4083 = vadd.f32 %v4054, %v4082
        %4084 = vdwg.mxu0
        %4085 = vmatpush.bf16.msra.mxu0 %v3742
        %4086 = vmatpush.bf16.msra.mxu0 %v3738
        %4087 = vmatpush.bf16.msra.mxu0 %v3734
        %4088 = vmatpush.bf16.msra.mxu0 %v3730
        %4089 = vmatpush.bf16.msra.mxu0 %v3726
        %4090 = vmatpush.bf16.msra.mxu0 %v3722
        %4091 = vmatpush.bf16.msra.mxu0 %v3718
        %4092 = vmatpush.bf16.msra.mxu0 %v3714
        %4093 = vmatmul.bf16.gmra.mxu0 %v594
        %v4094 = vpop.f32.mrf.mxu0
        %v4095 = vadd.f32 0.0, %v4094
        %v4096 = vpop.f32.mrf.mxu0
        %v4097 = vadd.f32 0.0, %v4096
        %4098 = vmatmul.bf16.gmra.mxu0 %v605
        %v4099 = vpop.f32.mrf.mxu0
        %v4100 = vadd.f32 0.0, %v4099
        %v4101 = vpop.f32.mrf.mxu0
        %v4102 = vadd.f32 0.0, %v4101
        %4103 = vmatmul.bf16.gmra.mxu0 %v613
        %v4104 = vpop.f32.mrf.mxu0
        %v4105 = vadd.f32 0.0, %v4104
        %v4106 = vpop.f32.mrf.mxu0
        %v4107 = vadd.f32 0.0, %v4106
        %4108 = vmatmul.bf16.gmra.mxu0 %v634
        %v4109 = vpop.f32.mrf.mxu0
        %v4110 = vadd.f32 0.0, %v4109
        %v4111 = vpop.f32.mrf.mxu0
        %v4112 = vadd.f32 0.0, %v4111
        %4113 = vdwg.mxu0
        %4114 = vmatpush.bf16.msra.mxu0 %v3774
        %4115 = vmatpush.bf16.msra.mxu0 %v3770
        %4116 = vmatpush.bf16.msra.mxu0 %v3766
        %4117 = vmatpush.bf16.msra.mxu0 %v3762
        %4118 = vmatpush.bf16.msra.mxu0 %v3758
        %4119 = vmatpush.bf16.msra.mxu0 %v3754
        %4120 = vmatpush.bf16.msra.mxu0 %v3750
        %4121 = vmatpush.bf16.msra.mxu0 %v3746
        %4122 = vmatmul.bf16.gmra.mxu0 %v597
        %v4123 = vpop.f32.mrf.mxu0
        %v4124 = vadd.f32 %v4095, %v4123
        %v4125 = vpop.f32.mrf.mxu0
        %v4126 = vadd.f32 %v4097, %v4125
        %4127 = vmatmul.bf16.gmra.mxu0 %v607
        %v4128 = vpop.f32.mrf.mxu0
        %v4129 = vadd.f32 %v4100, %v4128
        %v4130 = vpop.f32.mrf.mxu0
        %v4131 = vadd.f32 %v4102, %v4130
        %4132 = vmatmul.bf16.gmra.mxu0 %v615
        %v4133 = vpop.f32.mrf.mxu0
        %v4134 = vadd.f32 %v4105, %v4133
        %v4135 = vpop.f32.mrf.mxu0
        %v4136 = vadd.f32 %v4107, %v4135
        %4137 = vmatmul.bf16.gmra.mxu0 %v637
        %v4138 = vpop.f32.mrf.mxu0
        %v4139 = vadd.f32 %v4110, %v4138
        %v4140 = vpop.f32.mrf.mxu0
        %v4141 = vadd.f32 %v4112, %v4140
        %4142 = vdwg.mxu0
        %4143 = vmatpush.bf16.msra.mxu0 %v3806
        %4144 = vmatpush.bf16.msra.mxu0 %v3802
        %4145 = vmatpush.bf16.msra.mxu0 %v3798
        %4146 = vmatpush.bf16.msra.mxu0 %v3794
        %4147 = vmatpush.bf16.msra.mxu0 %v3790
        %4148 = vmatpush.bf16.msra.mxu0 %v3786
        %4149 = vmatpush.bf16.msra.mxu0 %v3782
        %4150 = vmatpush.bf16.msra.mxu0 %v3778
        %4151 = vmatmul.bf16.gmra.mxu0 %v600
        %v4152 = vpop.f32.mrf.mxu0
        %v4153 = vadd.f32 %v4124, %v4152
        %v4154 = vpop.f32.mrf.mxu0
        %v4155 = vadd.f32 %v4126, %v4154
        %4156 = vmatmul.bf16.gmra.mxu0 %v609
        %v4157 = vpop.f32.mrf.mxu0
        %v4158 = vadd.f32 %v4129, %v4157
        %v4159 = vpop.f32.mrf.mxu0
        %v4160 = vadd.f32 %v4131, %v4159
        %4161 = vmatmul.bf16.gmra.mxu0 %v617
        %v4162 = vpop.f32.mrf.mxu0
        %v4163 = vadd.f32 %v4134, %v4162
        %v4164 = vpop.f32.mrf.mxu0
        %v4165 = vadd.f32 %v4136, %v4164
        %4166 = vmatmul.bf16.gmra.mxu0 %v640
        %v4167 = vpop.f32.mrf.mxu0
        %v4168 = vadd.f32 %v4139, %v4167
        %v4169 = vpop.f32.mrf.mxu0
        %v4170 = vadd.f32 %v4141, %v4169
        %4171 = vdwg.mxu0
        %4172 = vmatpush.bf16.msra.mxu0 %v3838
        %4173 = vmatpush.bf16.msra.mxu0 %v3834
        %4174 = vmatpush.bf16.msra.mxu0 %v3830
        %4175 = vmatpush.bf16.msra.mxu0 %v3826
        %4176 = vmatpush.bf16.msra.mxu0 %v3822
        %4177 = vmatpush.bf16.msra.mxu0 %v3818
        %4178 = vmatpush.bf16.msra.mxu0 %v3814
        %4179 = vmatpush.bf16.msra.mxu0 %v3810
        %4180 = vmatmul.bf16.gmra.mxu0 %v603
        %v4181 = vpop.f32.mrf.mxu0
        %v4182 = vadd.f32 %v4153, %v4181
        %v4183 = vpop.f32.mrf.mxu0
        %v4184 = vadd.f32 %v4155, %v4183
        %4185 = vmatmul.bf16.gmra.mxu0 %v611
        %v4186 = vpop.f32.mrf.mxu0
        %v4187 = vadd.f32 %v4158, %v4186
        %v4188 = vpop.f32.mrf.mxu0
        %v4189 = vadd.f32 %v4160, %v4188
        %4190 = vmatmul.bf16.gmra.mxu0 %v619
        %v4191 = vpop.f32.mrf.mxu0
        %v4192 = vadd.f32 %v4163, %v4191
        %v4193 = vpop.f32.mrf.mxu0
        %v4194 = vadd.f32 %v4165, %v4193
        %4195 = vmatmul.bf16.gmra.mxu0 %v643
        %v4196 = vpop.f32.mrf.mxu0
        %v4197 = vadd.f32 %v4168, %v4196
        %v4198 = vpop.f32.mrf.mxu0
        %v4199 = vadd.f32 %v4170, %v4198
        %4200 = vdwg.mxu0
        %4201 = vmatpush.bf16.msra.mxu0 %v3743
        %4202 = vmatpush.bf16.msra.mxu0 %v3739
        %4203 = vmatpush.bf16.msra.mxu0 %v3735
        %4204 = vmatpush.bf16.msra.mxu0 %v3731
        %4205 = vmatpush.bf16.msra.mxu0 %v3727
        %4206 = vmatpush.bf16.msra.mxu0 %v3723
        %4207 = vmatpush.bf16.msra.mxu0 %v3719
        %4208 = vmatpush.bf16.msra.mxu0 %v3715
        %4209 = vmatmul.bf16.gmra.mxu0 %v594
        %v4210 = vpop.f32.mrf.mxu0
        %v4211 = vadd.f32 0.0, %v4210
        %v4212 = vpop.f32.mrf.mxu0
        %v4213 = vadd.f32 0.0, %v4212
        %4214 = vmatmul.bf16.gmra.mxu0 %v605
        %v4215 = vpop.f32.mrf.mxu0
        %v4216 = vadd.f32 0.0, %v4215
        %v4217 = vpop.f32.mrf.mxu0
        %v4218 = vadd.f32 0.0, %v4217
        %4219 = vmatmul.bf16.gmra.mxu0 %v613
        %v4220 = vpop.f32.mrf.mxu0
        %v4221 = vadd.f32 0.0, %v4220
        %v4222 = vpop.f32.mrf.mxu0
        %v4223 = vadd.f32 0.0, %v4222
        %4224 = vmatmul.bf16.gmra.mxu0 %v634
        %v4225 = vpop.f32.mrf.mxu0
        %v4226 = vadd.f32 0.0, %v4225
        %v4227 = vpop.f32.mrf.mxu0
        %v4228 = vadd.f32 0.0, %v4227
        %4229 = vdwg.mxu0
        %4230 = vmatpush.bf16.msra.mxu0 %v3775
        %4231 = vmatpush.bf16.msra.mxu0 %v3771
        %4232 = vmatpush.bf16.msra.mxu0 %v3767
        %4233 = vmatpush.bf16.msra.mxu0 %v3763
        %4234 = vmatpush.bf16.msra.mxu0 %v3759
        %4235 = vmatpush.bf16.msra.mxu0 %v3755
        %4236 = vmatpush.bf16.msra.mxu0 %v3751
        %4237 = vmatpush.bf16.msra.mxu0 %v3747
        %4238 = vmatmul.bf16.gmra.mxu0 %v597
        %v4239 = vpop.f32.mrf.mxu0
        %v4240 = vadd.f32 %v4211, %v4239
        %v4241 = vpop.f32.mrf.mxu0
        %v4242 = vadd.f32 %v4213, %v4241
        %4243 = vmatmul.bf16.gmra.mxu0 %v607
        %v4244 = vpop.f32.mrf.mxu0
        %v4245 = vadd.f32 %v4216, %v4244
        %v4246 = vpop.f32.mrf.mxu0
        %v4247 = vadd.f32 %v4218, %v4246
        %4248 = vmatmul.bf16.gmra.mxu0 %v615
        %v4249 = vpop.f32.mrf.mxu0
        %v4250 = vadd.f32 %v4221, %v4249
        %v4251 = vpop.f32.mrf.mxu0
        %v4252 = vadd.f32 %v4223, %v4251
        %4253 = vmatmul.bf16.gmra.mxu0 %v637
        %v4254 = vpop.f32.mrf.mxu0
        %v4255 = vadd.f32 %v4226, %v4254
        %v4256 = vpop.f32.mrf.mxu0
        %v4257 = vadd.f32 %v4228, %v4256
        %4258 = vdwg.mxu0
        %4259 = vmatpush.bf16.msra.mxu0 %v3807
        %4260 = vmatpush.bf16.msra.mxu0 %v3803
        %4261 = vmatpush.bf16.msra.mxu0 %v3799
        %4262 = vmatpush.bf16.msra.mxu0 %v3795
        %4263 = vmatpush.bf16.msra.mxu0 %v3791
        %4264 = vmatpush.bf16.msra.mxu0 %v3787
        %4265 = vmatpush.bf16.msra.mxu0 %v3783
        %4266 = vmatpush.bf16.msra.mxu0 %v3779
        %4267 = vmatmul.bf16.gmra.mxu0 %v600
        %v4268 = vpop.f32.mrf.mxu0
        %v4269 = vadd.f32 %v4240, %v4268
        %v4270 = vpop.f32.mrf.mxu0
        %v4271 = vadd.f32 %v4242, %v4270
        %4272 = vmatmul.bf16.gmra.mxu0 %v609
        %v4273 = vpop.f32.mrf.mxu0
        %v4274 = vadd.f32 %v4245, %v4273
        %v4275 = vpop.f32.mrf.mxu0
        %v4276 = vadd.f32 %v4247, %v4275
        %4277 = vmatmul.bf16.gmra.mxu0 %v617
        %v4278 = vpop.f32.mrf.mxu0
        %v4279 = vadd.f32 %v4250, %v4278
        %v4280 = vpop.f32.mrf.mxu0
        %v4281 = vadd.f32 %v4252, %v4280
        %4282 = vmatmul.bf16.gmra.mxu0 %v640
        %v4283 = vpop.f32.mrf.mxu0
        %v4284 = vadd.f32 %v4255, %v4283
        %v4285 = vpop.f32.mrf.mxu0
        %v4286 = vadd.f32 %v4257, %v4285
        %4287 = vdwg.mxu0
        %4288 = vmatpush.bf16.msra.mxu0 %v3839
        %4289 = vmatpush.bf16.msra.mxu0 %v3835
        %4290 = vmatpush.bf16.msra.mxu0 %v3831
        %4291 = vmatpush.bf16.msra.mxu0 %v3827
        %4292 = vmatpush.bf16.msra.mxu0 %v3823
        %4293 = vmatpush.bf16.msra.mxu0 %v3819
        %4294 = vmatpush.bf16.msra.mxu0 %v3815
        %4295 = vmatpush.bf16.msra.mxu0 %v3811
        %4296 = vmatmul.bf16.gmra.mxu0 %v603
        %v4297 = vpop.f32.mrf.mxu0
        %v4298 = vadd.f32 %v4269, %v4297
        %v4299 = vpop.f32.mrf.mxu0
        %v4300 = vadd.f32 %v4271, %v4299
        %4301 = vmatmul.bf16.gmra.mxu0 %v611
        %v4302 = vpop.f32.mrf.mxu0
        %v4303 = vadd.f32 %v4274, %v4302
        %v4304 = vpop.f32.mrf.mxu0
        %v4305 = vadd.f32 %v4276, %v4304
        %4306 = vmatmul.bf16.gmra.mxu0 %v619
        %v4307 = vpop.f32.mrf.mxu0
        %v4308 = vadd.f32 %v4279, %v4307
        %v4309 = vpop.f32.mrf.mxu0
        %v4310 = vadd.f32 %v4281, %v4309
        %4311 = vmatmul.bf16.gmra.mxu0 %v643
        %v4312 = vpop.f32.mrf.mxu0
        %v4313 = vadd.f32 %v4284, %v4312
        %v4314 = vpop.f32.mrf.mxu0
        %v4315 = vadd.f32 %v4286, %v4314
        %4316 = vdwg.mxu0
        %4317 = vmatpush.bf16.msra.mxu0 %v3744
        %4318 = vmatpush.bf16.msra.mxu0 %v3740
        %4319 = vmatpush.bf16.msra.mxu0 %v3736
        %4320 = vmatpush.bf16.msra.mxu0 %v3732
        %4321 = vmatpush.bf16.msra.mxu0 %v3728
        %4322 = vmatpush.bf16.msra.mxu0 %v3724
        %4323 = vmatpush.bf16.msra.mxu0 %v3720
        %4324 = vmatpush.bf16.msra.mxu0 %v3716
        %4325 = vmatmul.bf16.gmra.mxu0 %v594
        %v4326 = vpop.f32.mrf.mxu0
        %v4327 = vadd.f32 0.0, %v4326
        %v4328 = vpop.f32.mrf.mxu0
        %v4329 = vadd.f32 0.0, %v4328
        %4330 = vmatmul.bf16.gmra.mxu0 %v605
        %v4331 = vpop.f32.mrf.mxu0
        %v4332 = vadd.f32 0.0, %v4331
        %v4333 = vpop.f32.mrf.mxu0
        %v4334 = vadd.f32 0.0, %v4333
        %4335 = vmatmul.bf16.gmra.mxu0 %v613
        %v4336 = vpop.f32.mrf.mxu0
        %v4337 = vadd.f32 0.0, %v4336
        %v4338 = vpop.f32.mrf.mxu0
        %v4339 = vadd.f32 0.0, %v4338
        %4340 = vmatmul.bf16.gmra.mxu0 %v634
        %v4341 = vpop.f32.mrf.mxu0
        %v4342 = vadd.f32 0.0, %v4341
        %v4343 = vpop.f32.mrf.mxu0
        %v4344 = vadd.f32 0.0, %v4343
        %4345 = vdwg.mxu0
        %4346 = vmatpush.bf16.msra.mxu0 %v3776
        %4347 = vmatpush.bf16.msra.mxu0 %v3772
        %4348 = vmatpush.bf16.msra.mxu0 %v3768
        %4349 = vmatpush.bf16.msra.mxu0 %v3764
        %4350 = vmatpush.bf16.msra.mxu0 %v3760
        %4351 = vmatpush.bf16.msra.mxu0 %v3756
        %4352 = vmatpush.bf16.msra.mxu0 %v3752
        %4353 = vmatpush.bf16.msra.mxu0 %v3748
        %4354 = vmatmul.bf16.gmra.mxu0 %v597
        %v4355 = vpop.f32.mrf.mxu0
        %v4356 = vadd.f32 %v4327, %v4355
        %v4357 = vpop.f32.mrf.mxu0
        %v4358 = vadd.f32 %v4329, %v4357
        %4359 = vmatmul.bf16.gmra.mxu0 %v607
        %v4360 = vpop.f32.mrf.mxu0
        %v4361 = vadd.f32 %v4332, %v4360
        %v4362 = vpop.f32.mrf.mxu0
        %v4363 = vadd.f32 %v4334, %v4362
        %4364 = vmatmul.bf16.gmra.mxu0 %v615
        %v4365 = vpop.f32.mrf.mxu0
        %v4366 = vadd.f32 %v4337, %v4365
        %v4367 = vpop.f32.mrf.mxu0
        %v4368 = vadd.f32 %v4339, %v4367
        %4369 = vmatmul.bf16.gmra.mxu0 %v637
        %v4370 = vpop.f32.mrf.mxu0
        %v4371 = vadd.f32 %v4342, %v4370
        %v4372 = vpop.f32.mrf.mxu0
        %v4373 = vadd.f32 %v4344, %v4372
        %4374 = vdwg.mxu0
        %4375 = vmatpush.bf16.msra.mxu0 %v3808
        %4376 = vmatpush.bf16.msra.mxu0 %v3804
        %4377 = vmatpush.bf16.msra.mxu0 %v3800
        %4378 = vmatpush.bf16.msra.mxu0 %v3796
        %4379 = vmatpush.bf16.msra.mxu0 %v3792
        %4380 = vmatpush.bf16.msra.mxu0 %v3788
        %4381 = vmatpush.bf16.msra.mxu0 %v3784
        %4382 = vmatpush.bf16.msra.mxu0 %v3780
        %4383 = vmatmul.bf16.gmra.mxu0 %v600
        %v4384 = vpop.f32.mrf.mxu0
        %v4385 = vadd.f32 %v4356, %v4384
        %v4386 = vpop.f32.mrf.mxu0
        %v4387 = vadd.f32 %v4358, %v4386
        %4388 = vmatmul.bf16.gmra.mxu0 %v609
        %v4389 = vpop.f32.mrf.mxu0
        %v4390 = vadd.f32 %v4361, %v4389
        %v4391 = vpop.f32.mrf.mxu0
        %v4392 = vadd.f32 %v4363, %v4391
        %4393 = vmatmul.bf16.gmra.mxu0 %v617
        %v4394 = vpop.f32.mrf.mxu0
        %v4395 = vadd.f32 %v4366, %v4394
        %v4396 = vpop.f32.mrf.mxu0
        %v4397 = vadd.f32 %v4368, %v4396
        %4398 = vmatmul.bf16.gmra.mxu0 %v640
        %v4399 = vpop.f32.mrf.mxu0
        %v4400 = vadd.f32 %v4371, %v4399
        %v4401 = vpop.f32.mrf.mxu0
        %v4402 = vadd.f32 %v4373, %v4401
        %4403 = vdwg.mxu0
        %4404 = vmatpush.bf16.msra.mxu0 %v3840
        %4405 = vmatpush.bf16.msra.mxu0 %v3836
        %4406 = vmatpush.bf16.msra.mxu0 %v3832
        %4407 = vmatpush.bf16.msra.mxu0 %v3828
        %4408 = vmatpush.bf16.msra.mxu0 %v3824
        %4409 = vmatpush.bf16.msra.mxu0 %v3820
        %4410 = vmatpush.bf16.msra.mxu0 %v3816
        %4411 = vmatpush.bf16.msra.mxu0 %v3812
        %4412 = vmatmul.bf16.gmra.mxu0 %v603
        %v4413 = vpop.f32.mrf.mxu0
        %v4414 = vadd.f32 %v4385, %v4413
        %v4415 = vpop.f32.mrf.mxu0
        %v4416 = vadd.f32 %v4387, %v4415
        %4417 = vmatmul.bf16.gmra.mxu0 %v611
        %v4418 = vpop.f32.mrf.mxu0
        %v4419 = vadd.f32 %v4390, %v4418
        %v4420 = vpop.f32.mrf.mxu0
        %v4421 = vadd.f32 %v4392, %v4420
        %4422 = vmatmul.bf16.gmra.mxu0 %v619
        %v4423 = vpop.f32.mrf.mxu0
        %v4424 = vadd.f32 %v4395, %v4423
        %v4425 = vpop.f32.mrf.mxu0
        %v4426 = vadd.f32 %v4397, %v4425
        %4427 = vmatmul.bf16.gmra.mxu0 %v643
        %v4428 = vpop.f32.mrf.mxu0
        %v4429 = vadd.f32 %v4400, %v4428
        %v4430 = vpop.f32.mrf.mxu0
        %v4431 = vadd.f32 %v4402, %v4430
        %4432 = vdwg.mxu0
        %v4433 = vadd.f32 %v3168, %v4066
        %v4434 = vadd.f32 %v3169, %v4182
        %v4435 = vadd.f32 %v3170, %v4298
        %v4436 = vadd.f32 %v3171, %v4414
        %v4437 = vadd.f32 %v3172, %v4068
        %v4438 = vadd.f32 %v3173, %v4184
        %v4439 = vadd.f32 %v3174, %v4300
        %v4440 = vadd.f32 %v3175, %v4416
        %v4441 = vadd.f32 %v3176, %v4071
        %v4442 = vadd.f32 %v3177, %v4187
        %v4443 = vadd.f32 %v3178, %v4303
        %v4444 = vadd.f32 %v3179, %v4419
        %v4445 = vadd.f32 %v3180, %v4073
        %v4446 = vadd.f32 %v3181, %v4189
        %v4447 = vadd.f32 %v3182, %v4305
        %v4448 = vadd.f32 %v3183, %v4421
        %v4449 = vadd.f32 %v3184, %v4076
        %v4450 = vadd.f32 %v3185, %v4192
        %v4451 = vadd.f32 %v3186, %v4308
        %v4452 = vadd.f32 %v3187, %v4424
        %v4453 = vadd.f32 %v3188, %v4078
        %v4454 = vadd.f32 %v3189, %v4194
        %v4455 = vadd.f32 %v3190, %v4310
        %v4456 = vadd.f32 %v3191, %v4426
        %v4457 = vadd.f32 %v3192, %v4081
        %v4458 = vadd.f32 %v3193, %v4197
        %v4459 = vadd.f32 %v3194, %v4313
        %v4460 = vadd.f32 %v3195, %v4429
        %v4461 = vadd.f32 %v3196, %v4083
        %v4462 = vadd.f32 %v3197, %v4199
        %v4463 = vadd.f32 %v3198, %v4315
        %v4464 = vadd.f32 %v3199, %v4431
        %v4465 = vmax.f32 %v4433, 0.0
        %v4466 = vmax.f32 %v4434, 0.0
        %v4467 = vmax.f32 %v4435, 0.0
        %v4468 = vmax.f32 %v4436, 0.0
        %v4469 = vmax.f32 %v4437, 0.0
        %v4470 = vmax.f32 %v4438, 0.0
        %v4471 = vmax.f32 %v4439, 0.0
        %v4472 = vmax.f32 %v4440, 0.0
        %v4473 = vmax.f32 %v4441, 0.0
        %v4474 = vmax.f32 %v4442, 0.0
        %v4475 = vmax.f32 %v4443, 0.0
        %v4476 = vmax.f32 %v4444, 0.0
        %v4477 = vmax.f32 %v4445, 0.0
        %v4478 = vmax.f32 %v4446, 0.0
        %v4479 = vmax.f32 %v4447, 0.0
        %v4480 = vmax.f32 %v4448, 0.0
        %v4481 = vmax.f32 %v4449, 0.0
        %v4482 = vmax.f32 %v4450, 0.0
        %v4483 = vmax.f32 %v4451, 0.0
        %v4484 = vmax.f32 %v4452, 0.0
        %v4485 = vmax.f32 %v4453, 0.0
        %v4486 = vmax.f32 %v4454, 0.0
        %v4487 = vmax.f32 %v4455, 0.0
        %v4488 = vmax.f32 %v4456, 0.0
        %v4489 = vmax.f32 %v4457, 0.0
        %v4490 = vmax.f32 %v4458, 0.0
        %v4491 = vmax.f32 %v4459, 0.0
        %v4492 = vmax.f32 %v4460, 0.0
        %v4493 = vmax.f32 %v4461, 0.0
        %v4494 = vmax.f32 %v4462, 0.0
        %v4495 = vmax.f32 %v4463, 0.0
        %v4496 = vmax.f32 %v4464, 0.0
        %v4497 = vpack.c.bf16 %v4469, %v4465
        %v4498 = vpack.c.bf16 %v4470, %v4466
        %v4499 = vpack.c.bf16 %v4471, %v4467
        %v4500 = vpack.c.bf16 %v4472, %v4468
        %v4501 = vpack.c.bf16 %v4477, %v4473
        %v4502 = vpack.c.bf16 %v4478, %v4474
        %v4503 = vpack.c.bf16 %v4479, %v4475
        %v4504 = vpack.c.bf16 %v4480, %v4476
        %v4505 = vpack.c.bf16 %v4485, %v4481
        %v4506 = vpack.c.bf16 %v4486, %v4482
        %v4507 = vpack.c.bf16 %v4487, %v4483
        %v4508 = vpack.c.bf16 %v4488, %v4484
        %v4509 = vpack.c.bf16 %v4493, %v4489
        %v4510 = vpack.c.bf16 %v4494, %v4490
        %v4511 = vpack.c.bf16 %v4495, %v4491
        %v4512 = vpack.c.bf16 %v4496, %v4492
        %v4513 = vld [vmem:[#allocation6] sm:$0xff]
        %v4514 = vld [vmem:[#allocation6 + $0x8] sm:$0xff]
        %v4515 = vld [vmem:[#allocation6 + $0x10] sm:$0xff]
        %v4516 = vld [vmem:[#allocation6 + $0x18] sm:$0xff]
        %v4517 = vld [vmem:[#allocation6 + $0x20] sm:$0xff]
        %v4518 = vld [vmem:[#allocation6 + $0x28] sm:$0xff]
        %v4519 = vld [vmem:[#allocation6 + $0x30] sm:$0xff]
        %v4520 = vld [vmem:[#allocation6 + $0x38] sm:$0xff]
        %v4521 = vld [vmem:[#allocation6 + $0x40] sm:$0xff]
        %v4522 = vld [vmem:[#allocation6 + $0x48] sm:$0xff]
        %v4523 = vld [vmem:[#allocation6 + $0x50] sm:$0xff]
        %v4524 = vld [vmem:[#allocation6 + $0x58] sm:$0xff]
        %v4525 = vld [vmem:[#allocation6 + $0x60] sm:$0xff]
        %v4526 = vld [vmem:[#allocation6 + $0x68] sm:$0xff]
        %v4527 = vld [vmem:[#allocation6 + $0x70] sm:$0xff]
        %v4528 = vld [vmem:[#allocation6 + $0x78] sm:$0xff]
        %v4529 = vld [vmem:[#allocation6 + $0x80] sm:$0xff]
        %v4530 = vld [vmem:[#allocation6 + $0x88] sm:$0xff]
        %v4531 = vld [vmem:[#allocation6 + $0x90] sm:$0xff]
        %v4532 = vld [vmem:[#allocation6 + $0x98] sm:$0xff]
        %v4533 = vld [vmem:[#allocation6 + $0xa0] sm:$0xff]
        %v4534 = vld [vmem:[#allocation6 + $0xa8] sm:$0xff]
        %v4535 = vld [vmem:[#allocation6 + $0xb0] sm:$0xff]
        %v4536 = vld [vmem:[#allocation6 + $0xb8] sm:$0xff]
        %v4537 = vld [vmem:[#allocation6 + $0xc0] sm:$0xff]
        %v4538 = vld [vmem:[#allocation6 + $0xc8] sm:$0xff]
        %v4539 = vld [vmem:[#allocation6 + $0xd0] sm:$0xff]
        %v4540 = vld [vmem:[#allocation6 + $0xd8] sm:$0xff]
        %v4541 = vld [vmem:[#allocation6 + $0xe0] sm:$0xff]
        %v4542 = vld [vmem:[#allocation6 + $0xe8] sm:$0xff]
        %v4543 = vld [vmem:[#allocation6 + $0xf0] sm:$0xff]
        %v4544 = vld [vmem:[#allocation6 + $0xf8] sm:$0xff]
        %v4545 = vld [vmem:[#allocation6 + $0x100] sm:$0xff]
        %v4546 = vld [vmem:[#allocation6 + $0x108] sm:$0xff]
        %v4547 = vld [vmem:[#allocation6 + $0x110] sm:$0xff]
        %v4548 = vld [vmem:[#allocation6 + $0x118] sm:$0xff]
        %v4549 = vld [vmem:[#allocation6 + $0x120] sm:$0xff]
        %v4550 = vld [vmem:[#allocation6 + $0x128] sm:$0xff]
        %v4551 = vld [vmem:[#allocation6 + $0x130] sm:$0xff]
        %v4552 = vld [vmem:[#allocation6 + $0x138] sm:$0xff]
        %v4553 = vld [vmem:[#allocation6 + $0x140] sm:$0xff]
        %v4554 = vld [vmem:[#allocation6 + $0x148] sm:$0xff]
        %v4555 = vld [vmem:[#allocation6 + $0x150] sm:$0xff]
        %v4556 = vld [vmem:[#allocation6 + $0x158] sm:$0xff]
        %v4557 = vld [vmem:[#allocation6 + $0x160] sm:$0xff]
        %v4558 = vld [vmem:[#allocation6 + $0x168] sm:$0xff]
        %v4559 = vld [vmem:[#allocation6 + $0x170] sm:$0xff]
        %v4560 = vld [vmem:[#allocation6 + $0x178] sm:$0xff]
        %v4561 = vld [vmem:[#allocation6 + $0x180] sm:$0xff]
        %v4562 = vld [vmem:[#allocation6 + $0x188] sm:$0xff]
        %v4563 = vld [vmem:[#allocation6 + $0x190] sm:$0xff]
        %v4564 = vld [vmem:[#allocation6 + $0x198] sm:$0xff]
        %v4565 = vld [vmem:[#allocation6 + $0x1a0] sm:$0xff]
        %v4566 = vld [vmem:[#allocation6 + $0x1a8] sm:$0xff]
        %v4567 = vld [vmem:[#allocation6 + $0x1b0] sm:$0xff]
        %v4568 = vld [vmem:[#allocation6 + $0x1b8] sm:$0xff]
        %v4569 = vld [vmem:[#allocation6 + $0x1c0] sm:$0xff]
        %v4570 = vld [vmem:[#allocation6 + $0x1c8] sm:$0xff]
        %v4571 = vld [vmem:[#allocation6 + $0x1d0] sm:$0xff]
        %v4572 = vld [vmem:[#allocation6 + $0x1d8] sm:$0xff]
        %v4573 = vld [vmem:[#allocation6 + $0x1e0] sm:$0xff]
        %v4574 = vld [vmem:[#allocation6 + $0x1e8] sm:$0xff]
        %v4575 = vld [vmem:[#allocation6 + $0x1f0] sm:$0xff]
        %v4576 = vld [vmem:[#allocation6 + $0x1f8] sm:$0xff]
        %v4577 = vld [vmem:[#allocation6 + $0x200] sm:$0xff]
        %v4578 = vld [vmem:[#allocation6 + $0x208] sm:$0xff]
        %v4579 = vld [vmem:[#allocation6 + $0x210] sm:$0xff]
        %v4580 = vld [vmem:[#allocation6 + $0x218] sm:$0xff]
        %v4581 = vld [vmem:[#allocation6 + $0x220] sm:$0xff]
        %v4582 = vld [vmem:[#allocation6 + $0x228] sm:$0xff]
        %v4583 = vld [vmem:[#allocation6 + $0x230] sm:$0xff]
        %v4584 = vld [vmem:[#allocation6 + $0x238] sm:$0xff]
        %v4585 = vld [vmem:[#allocation6 + $0x240] sm:$0xff]
        %v4586 = vld [vmem:[#allocation6 + $0x248] sm:$0xff]
        %v4587 = vld [vmem:[#allocation6 + $0x250] sm:$0xff]
        %v4588 = vld [vmem:[#allocation6 + $0x258] sm:$0xff]
        %v4589 = vld [vmem:[#allocation6 + $0x260] sm:$0xff]
        %v4590 = vld [vmem:[#allocation6 + $0x268] sm:$0xff]
        %v4591 = vld [vmem:[#allocation6 + $0x270] sm:$0xff]
        %v4592 = vld [vmem:[#allocation6 + $0x278] sm:$0xff]
        %v4593 = vld [vmem:[#allocation6 + $0x280] sm:$0xff]
        %v4594 = vld [vmem:[#allocation6 + $0x288] sm:$0xff]
        %v4595 = vld [vmem:[#allocation6 + $0x290] sm:$0xff]
        %v4596 = vld [vmem:[#allocation6 + $0x298] sm:$0xff]
        %v4597 = vld [vmem:[#allocation6 + $0x2a0] sm:$0xff]
        %v4598 = vld [vmem:[#allocation6 + $0x2a8] sm:$0xff]
        %v4599 = vld [vmem:[#allocation6 + $0x2b0] sm:$0xff]
        %v4600 = vld [vmem:[#allocation6 + $0x2b8] sm:$0xff]
        %v4601 = vld [vmem:[#allocation6 + $0x2c0] sm:$0xff]
        %v4602 = vld [vmem:[#allocation6 + $0x2c8] sm:$0xff]
        %v4603 = vld [vmem:[#allocation6 + $0x2d0] sm:$0xff]
        %v4604 = vld [vmem:[#allocation6 + $0x2d8] sm:$0xff]
        %v4605 = vld [vmem:[#allocation6 + $0x2e0] sm:$0xff]
        %v4606 = vld [vmem:[#allocation6 + $0x2e8] sm:$0xff]
        %v4607 = vld [vmem:[#allocation6 + $0x2f0] sm:$0xff]
        %v4608 = vld [vmem:[#allocation6 + $0x2f8] sm:$0xff]
        %v4609 = vld [vmem:[#allocation6 + $0x300] sm:$0xff]
        %v4610 = vld [vmem:[#allocation6 + $0x308] sm:$0xff]
        %v4611 = vld [vmem:[#allocation6 + $0x310] sm:$0xff]
        %v4612 = vld [vmem:[#allocation6 + $0x318] sm:$0xff]
        %v4613 = vld [vmem:[#allocation6 + $0x320] sm:$0xff]
        %v4614 = vld [vmem:[#allocation6 + $0x328] sm:$0xff]
        %v4615 = vld [vmem:[#allocation6 + $0x330] sm:$0xff]
        %v4616 = vld [vmem:[#allocation6 + $0x338] sm:$0xff]
        %v4617 = vld [vmem:[#allocation6 + $0x340] sm:$0xff]
        %v4618 = vld [vmem:[#allocation6 + $0x348] sm:$0xff]
        %v4619 = vld [vmem:[#allocation6 + $0x350] sm:$0xff]
        %v4620 = vld [vmem:[#allocation6 + $0x358] sm:$0xff]
        %v4621 = vld [vmem:[#allocation6 + $0x360] sm:$0xff]
        %v4622 = vld [vmem:[#allocation6 + $0x368] sm:$0xff]
        %v4623 = vld [vmem:[#allocation6 + $0x370] sm:$0xff]
        %v4624 = vld [vmem:[#allocation6 + $0x378] sm:$0xff]
        %v4625 = vld [vmem:[#allocation6 + $0x380] sm:$0xff]
        %v4626 = vld [vmem:[#allocation6 + $0x388] sm:$0xff]
        %v4627 = vld [vmem:[#allocation6 + $0x390] sm:$0xff]
        %v4628 = vld [vmem:[#allocation6 + $0x398] sm:$0xff]
        %v4629 = vld [vmem:[#allocation6 + $0x3a0] sm:$0xff]
        %v4630 = vld [vmem:[#allocation6 + $0x3a8] sm:$0xff]
        %v4631 = vld [vmem:[#allocation6 + $0x3b0] sm:$0xff]
        %v4632 = vld [vmem:[#allocation6 + $0x3b8] sm:$0xff]
        %v4633 = vld [vmem:[#allocation6 + $0x3c0] sm:$0xff]
        %v4634 = vld [vmem:[#allocation6 + $0x3c8] sm:$0xff]
        %v4635 = vld [vmem:[#allocation6 + $0x3d0] sm:$0xff]
        %v4636 = vld [vmem:[#allocation6 + $0x3d8] sm:$0xff]
        %v4637 = vld [vmem:[#allocation6 + $0x3e0] sm:$0xff]
        %v4638 = vld [vmem:[#allocation6 + $0x3e8] sm:$0xff]
        %v4639 = vld [vmem:[#allocation6 + $0x3f0] sm:$0xff]
        %v4640 = vld [vmem:[#allocation6 + $0x3f8] sm:$0xff]
        %v4641 = vld [vmem:[#allocation7] sm:$0xf]
        %v4643 = vperm.slane %v4641, 0
        %v4644 = vperm.slane %v4641, 1
        %v4645 = vperm.slane %v4641, 2
        %v4646 = vperm.slane %v4641, 3
        %v4779 = vunpack.c.l.b16 %v4513
        %v4780 = vunpack.c.h.b16 %v4513
        %v4781 = vunpack.c.l.b16 %v4514
        %v4782 = vunpack.c.h.b16 %v4514
        %v4783 = vunpack.c.l.b16 %v4515
        %v4784 = vunpack.c.h.b16 %v4515
        %v4785 = vunpack.c.l.b16 %v4516
        %v4786 = vunpack.c.h.b16 %v4516
        %v4787 = vunpack.c.l.b16 %v4517
        %v4788 = vunpack.c.h.b16 %v4517
        %v4789 = vunpack.c.l.b16 %v4518
        %v4790 = vunpack.c.h.b16 %v4518
        %v4791 = vunpack.c.l.b16 %v4519
        %v4792 = vunpack.c.h.b16 %v4519
        %v4793 = vunpack.c.l.b16 %v4520
        %v4794 = vunpack.c.h.b16 %v4520
        %v4795 = vunpack.c.l.b16 %v4521
        %v4796 = vunpack.c.h.b16 %v4521
        %v4797 = vunpack.c.l.b16 %v4522
        %v4798 = vunpack.c.h.b16 %v4522
        %v4799 = vunpack.c.l.b16 %v4523
        %v4800 = vunpack.c.h.b16 %v4523
        %v4801 = vunpack.c.l.b16 %v4524
        %v4802 = vunpack.c.h.b16 %v4524
        %v4803 = vunpack.c.l.b16 %v4525
        %v4804 = vunpack.c.h.b16 %v4525
        %v4805 = vunpack.c.l.b16 %v4526
        %v4806 = vunpack.c.h.b16 %v4526
        %v4807 = vunpack.c.l.b16 %v4527
        %v4808 = vunpack.c.h.b16 %v4527
        %v4809 = vunpack.c.l.b16 %v4528
        %v4810 = vunpack.c.h.b16 %v4528
        %v4811 = vunpack.c.l.b16 %v4529
        %v4812 = vunpack.c.h.b16 %v4529
        %v4813 = vunpack.c.l.b16 %v4530
        %v4814 = vunpack.c.h.b16 %v4530
        %v4815 = vunpack.c.l.b16 %v4531
        %v4816 = vunpack.c.h.b16 %v4531
        %v4817 = vunpack.c.l.b16 %v4532
        %v4818 = vunpack.c.h.b16 %v4532
        %v4819 = vunpack.c.l.b16 %v4533
        %v4820 = vunpack.c.h.b16 %v4533
        %v4821 = vunpack.c.l.b16 %v4534
        %v4822 = vunpack.c.h.b16 %v4534
        %v4823 = vunpack.c.l.b16 %v4535
        %v4824 = vunpack.c.h.b16 %v4535
        %v4825 = vunpack.c.l.b16 %v4536
        %v4826 = vunpack.c.h.b16 %v4536
        %v4827 = vunpack.c.l.b16 %v4537
        %v4828 = vunpack.c.h.b16 %v4537
        %v4829 = vunpack.c.l.b16 %v4538
        %v4830 = vunpack.c.h.b16 %v4538
        %v4831 = vunpack.c.l.b16 %v4539
        %v4832 = vunpack.c.h.b16 %v4539
        %v4833 = vunpack.c.l.b16 %v4540
        %v4834 = vunpack.c.h.b16 %v4540
        %v4835 = vunpack.c.l.b16 %v4541
        %v4836 = vunpack.c.h.b16 %v4541
        %v4837 = vunpack.c.l.b16 %v4542
        %v4838 = vunpack.c.h.b16 %v4542
        %v4839 = vunpack.c.l.b16 %v4543
        %v4840 = vunpack.c.h.b16 %v4543
        %v4841 = vunpack.c.l.b16 %v4544
        %v4842 = vunpack.c.h.b16 %v4544
        %v4843 = vunpack.c.l.b16 %v4545
        %v4844 = vunpack.c.h.b16 %v4545
        %v4845 = vunpack.c.l.b16 %v4546
        %v4846 = vunpack.c.h.b16 %v4546
        %v4847 = vunpack.c.l.b16 %v4547
        %v4848 = vunpack.c.h.b16 %v4547
        %v4849 = vunpack.c.l.b16 %v4548
        %v4850 = vunpack.c.h.b16 %v4548
        %v4851 = vunpack.c.l.b16 %v4549
        %v4852 = vunpack.c.h.b16 %v4549
        %v4853 = vunpack.c.l.b16 %v4550
        %v4854 = vunpack.c.h.b16 %v4550
        %v4855 = vunpack.c.l.b16 %v4551
        %v4856 = vunpack.c.h.b16 %v4551
        %v4857 = vunpack.c.l.b16 %v4552
        %v4858 = vunpack.c.h.b16 %v4552
        %v4859 = vunpack.c.l.b16 %v4553
        %v4860 = vunpack.c.h.b16 %v4553
        %v4861 = vunpack.c.l.b16 %v4554
        %v4862 = vunpack.c.h.b16 %v4554
        %v4863 = vunpack.c.l.b16 %v4555
        %v4864 = vunpack.c.h.b16 %v4555
        %v4865 = vunpack.c.l.b16 %v4556
        %v4866 = vunpack.c.h.b16 %v4556
        %v4867 = vunpack.c.l.b16 %v4557
        %v4868 = vunpack.c.h.b16 %v4557
        %v4869 = vunpack.c.l.b16 %v4558
        %v4870 = vunpack.c.h.b16 %v4558
        %v4871 = vunpack.c.l.b16 %v4559
        %v4872 = vunpack.c.h.b16 %v4559
        %v4873 = vunpack.c.l.b16 %v4560
        %v4874 = vunpack.c.h.b16 %v4560
        %v4875 = vunpack.c.l.b16 %v4561
        %v4876 = vunpack.c.h.b16 %v4561
        %v4877 = vunpack.c.l.b16 %v4562
        %v4878 = vunpack.c.h.b16 %v4562
        %v4879 = vunpack.c.l.b16 %v4563
        %v4880 = vunpack.c.h.b16 %v4563
        %v4881 = vunpack.c.l.b16 %v4564
        %v4882 = vunpack.c.h.b16 %v4564
        %v4883 = vunpack.c.l.b16 %v4565
        %v4884 = vunpack.c.h.b16 %v4565
        %v4885 = vunpack.c.l.b16 %v4566
        %v4886 = vunpack.c.h.b16 %v4566
        %v4887 = vunpack.c.l.b16 %v4567
        %v4888 = vunpack.c.h.b16 %v4567
        %v4889 = vunpack.c.l.b16 %v4568
        %v4890 = vunpack.c.h.b16 %v4568
        %v4891 = vunpack.c.l.b16 %v4569
        %v4892 = vunpack.c.h.b16 %v4569
        %v4893 = vunpack.c.l.b16 %v4570
        %v4894 = vunpack.c.h.b16 %v4570
        %v4895 = vunpack.c.l.b16 %v4571
        %v4896 = vunpack.c.h.b16 %v4571
        %v4897 = vunpack.c.l.b16 %v4572
        %v4898 = vunpack.c.h.b16 %v4572
        %v4899 = vunpack.c.l.b16 %v4573
        %v4900 = vunpack.c.h.b16 %v4573
        %v4901 = vunpack.c.l.b16 %v4574
        %v4902 = vunpack.c.h.b16 %v4574
        %v4903 = vunpack.c.l.b16 %v4575
        %v4904 = vunpack.c.h.b16 %v4575
        %v4905 = vunpack.c.l.b16 %v4576
        %v4906 = vunpack.c.h.b16 %v4576
        %v4907 = vunpack.c.l.b16 %v4577
        %v4908 = vunpack.c.h.b16 %v4577
        %v4909 = vunpack.c.l.b16 %v4578
        %v4910 = vunpack.c.h.b16 %v4578
        %v4911 = vunpack.c.l.b16 %v4579
        %v4912 = vunpack.c.h.b16 %v4579
        %v4913 = vunpack.c.l.b16 %v4580
        %v4914 = vunpack.c.h.b16 %v4580
        %v4915 = vunpack.c.l.b16 %v4581
        %v4916 = vunpack.c.h.b16 %v4581
        %v4917 = vunpack.c.l.b16 %v4582
        %v4918 = vunpack.c.h.b16 %v4582
        %v4919 = vunpack.c.l.b16 %v4583
        %v4920 = vunpack.c.h.b16 %v4583
        %v4921 = vunpack.c.l.b16 %v4584
        %v4922 = vunpack.c.h.b16 %v4584
        %v4923 = vunpack.c.l.b16 %v4585
        %v4924 = vunpack.c.h.b16 %v4585
        %v4925 = vunpack.c.l.b16 %v4586
        %v4926 = vunpack.c.h.b16 %v4586
        %v4927 = vunpack.c.l.b16 %v4587
        %v4928 = vunpack.c.h.b16 %v4587
        %v4929 = vunpack.c.l.b16 %v4588
        %v4930 = vunpack.c.h.b16 %v4588
        %v4931 = vunpack.c.l.b16 %v4589
        %v4932 = vunpack.c.h.b16 %v4589
        %v4933 = vunpack.c.l.b16 %v4590
        %v4934 = vunpack.c.h.b16 %v4590
        %v4935 = vunpack.c.l.b16 %v4591
        %v4936 = vunpack.c.h.b16 %v4591
        %v4937 = vunpack.c.l.b16 %v4592
        %v4938 = vunpack.c.h.b16 %v4592
        %v4939 = vunpack.c.l.b16 %v4593
        %v4940 = vunpack.c.h.b16 %v4593
        %v4941 = vunpack.c.l.b16 %v4594
        %v4942 = vunpack.c.h.b16 %v4594
        %v4943 = vunpack.c.l.b16 %v4595
        %v4944 = vunpack.c.h.b16 %v4595
        %v4945 = vunpack.c.l.b16 %v4596
        %v4946 = vunpack.c.h.b16 %v4596
        %v4947 = vunpack.c.l.b16 %v4597
        %v4948 = vunpack.c.h.b16 %v4597
        %v4949 = vunpack.c.l.b16 %v4598
        %v4950 = vunpack.c.h.b16 %v4598
        %v4951 = vunpack.c.l.b16 %v4599
        %v4952 = vunpack.c.h.b16 %v4599
        %v4953 = vunpack.c.l.b16 %v4600
        %v4954 = vunpack.c.h.b16 %v4600
        %v4955 = vunpack.c.l.b16 %v4601
        %v4956 = vunpack.c.h.b16 %v4601
        %v4957 = vunpack.c.l.b16 %v4602
        %v4958 = vunpack.c.h.b16 %v4602
        %v4959 = vunpack.c.l.b16 %v4603
        %v4960 = vunpack.c.h.b16 %v4603
        %v4961 = vunpack.c.l.b16 %v4604
        %v4962 = vunpack.c.h.b16 %v4604
        %v4963 = vunpack.c.l.b16 %v4605
        %v4964 = vunpack.c.h.b16 %v4605
        %v4965 = vunpack.c.l.b16 %v4606
        %v4966 = vunpack.c.h.b16 %v4606
        %v4967 = vunpack.c.l.b16 %v4607
        %v4968 = vunpack.c.h.b16 %v4607
        %v4969 = vunpack.c.l.b16 %v4608
        %v4970 = vunpack.c.h.b16 %v4608
        %v4971 = vunpack.c.l.b16 %v4609
        %v4972 = vunpack.c.h.b16 %v4609
        %v4973 = vunpack.c.l.b16 %v4610
        %v4974 = vunpack.c.h.b16 %v4610
        %v4975 = vunpack.c.l.b16 %v4611
        %v4976 = vunpack.c.h.b16 %v4611
        %v4977 = vunpack.c.l.b16 %v4612
        %v4978 = vunpack.c.h.b16 %v4612
        %v4979 = vunpack.c.l.b16 %v4613
        %v4980 = vunpack.c.h.b16 %v4613
        %v4981 = vunpack.c.l.b16 %v4614
        %v4982 = vunpack.c.h.b16 %v4614
        %v4983 = vunpack.c.l.b16 %v4615
        %v4984 = vunpack.c.h.b16 %v4615
        %v4985 = vunpack.c.l.b16 %v4616
        %v4986 = vunpack.c.h.b16 %v4616
        %v4987 = vunpack.c.l.b16 %v4617
        %v4988 = vunpack.c.h.b16 %v4617
        %v4989 = vunpack.c.l.b16 %v4618
        %v4990 = vunpack.c.h.b16 %v4618
        %v4991 = vunpack.c.l.b16 %v4619
        %v4992 = vunpack.c.h.b16 %v4619
        %v4993 = vunpack.c.l.b16 %v4620
        %v4994 = vunpack.c.h.b16 %v4620
        %v4995 = vunpack.c.l.b16 %v4621
        %v4996 = vunpack.c.h.b16 %v4621
        %v4997 = vunpack.c.l.b16 %v4622
        %v4998 = vunpack.c.h.b16 %v4622
        %v4999 = vunpack.c.l.b16 %v4623
        %v5000 = vunpack.c.h.b16 %v4623
        %v5001 = vunpack.c.l.b16 %v4624
        %v5002 = vunpack.c.h.b16 %v4624
        %v5003 = vunpack.c.l.b16 %v4625
        %v5004 = vunpack.c.h.b16 %v4625
        %v5005 = vunpack.c.l.b16 %v4626
        %v5006 = vunpack.c.h.b16 %v4626
        %v5007 = vunpack.c.l.b16 %v4627
        %v5008 = vunpack.c.h.b16 %v4627
        %v5009 = vunpack.c.l.b16 %v4628
        %v5010 = vunpack.c.h.b16 %v4628
        %v5011 = vunpack.c.l.b16 %v4629
        %v5012 = vunpack.c.h.b16 %v4629
        %v5013 = vunpack.c.l.b16 %v4630
        %v5014 = vunpack.c.h.b16 %v4630
        %v5015 = vunpack.c.l.b16 %v4631
        %v5016 = vunpack.c.h.b16 %v4631
        %v5017 = vunpack.c.l.b16 %v4632
        %v5018 = vunpack.c.h.b16 %v4632
        %v5019 = vunpack.c.l.b16 %v4633
        %v5020 = vunpack.c.h.b16 %v4633
        %v5021 = vunpack.c.l.b16 %v4634
        %v5022 = vunpack.c.h.b16 %v4634
        %v5023 = vunpack.c.l.b16 %v4635
        %v5024 = vunpack.c.h.b16 %v4635
        %v5025 = vunpack.c.l.b16 %v4636
        %v5026 = vunpack.c.h.b16 %v4636
        %v5027 = vunpack.c.l.b16 %v4637
        %v5028 = vunpack.c.h.b16 %v4637
        %v5029 = vunpack.c.l.b16 %v4638
        %v5030 = vunpack.c.h.b16 %v4638
        %v5031 = vunpack.c.l.b16 %v4639
        %v5032 = vunpack.c.h.b16 %v4639
        %v5033 = vunpack.c.l.b16 %v4640
        %v5034 = vunpack.c.h.b16 %v4640
        %v5035 = vpack.c.b16 %v4783, %v4779
        %v5036 = vpack.c.b16 %v4784, %v4780
        %v5037 = vpack.c.b16 %v4785, %v4781
        %v5038 = vpack.c.b16 %v4786, %v4782
        %v5039 = vpack.c.b16 %v4791, %v4787
        %v5040 = vpack.c.b16 %v4792, %v4788
        %v5041 = vpack.c.b16 %v4793, %v4789
        %v5042 = vpack.c.b16 %v4794, %v4790
        %v5043 = vpack.c.b16 %v4799, %v4795
        %v5044 = vpack.c.b16 %v4800, %v4796
        %v5045 = vpack.c.b16 %v4801, %v4797
        %v5046 = vpack.c.b16 %v4802, %v4798
        %v5047 = vpack.c.b16 %v4807, %v4803
        %v5048 = vpack.c.b16 %v4808, %v4804
        %v5049 = vpack.c.b16 %v4809, %v4805
        %v5050 = vpack.c.b16 %v4810, %v4806
        %v5051 = vpack.c.b16 %v4815, %v4811
        %v5052 = vpack.c.b16 %v4816, %v4812
        %v5053 = vpack.c.b16 %v4817, %v4813
        %v5054 = vpack.c.b16 %v4818, %v4814
        %v5055 = vpack.c.b16 %v4823, %v4819
        %v5056 = vpack.c.b16 %v4824, %v4820
        %v5057 = vpack.c.b16 %v4825, %v4821
        %v5058 = vpack.c.b16 %v4826, %v4822
        %v5059 = vpack.c.b16 %v4831, %v4827
        %v5060 = vpack.c.b16 %v4832, %v4828
        %v5061 = vpack.c.b16 %v4833, %v4829
        %v5062 = vpack.c.b16 %v4834, %v4830
        %v5063 = vpack.c.b16 %v4839, %v4835
        %v5064 = vpack.c.b16 %v4840, %v4836
        %v5065 = vpack.c.b16 %v4841, %v4837
        %v5066 = vpack.c.b16 %v4842, %v4838
        %v5067 = vpack.c.b16 %v4847, %v4843
        %v5068 = vpack.c.b16 %v4848, %v4844
        %v5069 = vpack.c.b16 %v4849, %v4845
        %v5070 = vpack.c.b16 %v4850, %v4846
        %v5071 = vpack.c.b16 %v4855, %v4851
        %v5072 = vpack.c.b16 %v4856, %v4852
        %v5073 = vpack.c.b16 %v4857, %v4853
        %v5074 = vpack.c.b16 %v4858, %v4854
        %v5075 = vpack.c.b16 %v4863, %v4859
        %v5076 = vpack.c.b16 %v4864, %v4860
        %v5077 = vpack.c.b16 %v4865, %v4861
        %v5078 = vpack.c.b16 %v4866, %v4862
        %v5079 = vpack.c.b16 %v4871, %v4867
        %v5080 = vpack.c.b16 %v4872, %v4868
        %v5081 = vpack.c.b16 %v4873, %v4869
        %v5082 = vpack.c.b16 %v4874, %v4870
        %v5083 = vpack.c.b16 %v4879, %v4875
        %v5084 = vpack.c.b16 %v4880, %v4876
        %v5085 = vpack.c.b16 %v4881, %v4877
        %v5086 = vpack.c.b16 %v4882, %v4878
        %v5087 = vpack.c.b16 %v4887, %v4883
        %v5088 = vpack.c.b16 %v4888, %v4884
        %v5089 = vpack.c.b16 %v4889, %v4885
        %v5090 = vpack.c.b16 %v4890, %v4886
        %v5091 = vpack.c.b16 %v4895, %v4891
        %v5092 = vpack.c.b16 %v4896, %v4892
        %v5093 = vpack.c.b16 %v4897, %v4893
        %v5094 = vpack.c.b16 %v4898, %v4894
        %v5095 = vpack.c.b16 %v4903, %v4899
        %v5096 = vpack.c.b16 %v4904, %v4900
        %v5097 = vpack.c.b16 %v4905, %v4901
        %v5098 = vpack.c.b16 %v4906, %v4902
        %v5099 = vpack.c.b16 %v4911, %v4907
        %v5100 = vpack.c.b16 %v4912, %v4908
        %v5101 = vpack.c.b16 %v4913, %v4909
        %v5102 = vpack.c.b16 %v4914, %v4910
        %v5103 = vpack.c.b16 %v4919, %v4915
        %v5104 = vpack.c.b16 %v4920, %v4916
        %v5105 = vpack.c.b16 %v4921, %v4917
        %v5106 = vpack.c.b16 %v4922, %v4918
        %v5107 = vpack.c.b16 %v4927, %v4923
        %v5108 = vpack.c.b16 %v4928, %v4924
        %v5109 = vpack.c.b16 %v4929, %v4925
        %v5110 = vpack.c.b16 %v4930, %v4926
        %v5111 = vpack.c.b16 %v4935, %v4931
        %v5112 = vpack.c.b16 %v4936, %v4932
        %v5113 = vpack.c.b16 %v4937, %v4933
        %v5114 = vpack.c.b16 %v4938, %v4934
        %v5115 = vpack.c.b16 %v4943, %v4939
        %v5116 = vpack.c.b16 %v4944, %v4940
        %v5117 = vpack.c.b16 %v4945, %v4941
        %v5118 = vpack.c.b16 %v4946, %v4942
        %v5119 = vpack.c.b16 %v4951, %v4947
        %v5120 = vpack.c.b16 %v4952, %v4948
        %v5121 = vpack.c.b16 %v4953, %v4949
        %v5122 = vpack.c.b16 %v4954, %v4950
        %v5123 = vpack.c.b16 %v4959, %v4955
        %v5124 = vpack.c.b16 %v4960, %v4956
        %v5125 = vpack.c.b16 %v4961, %v4957
        %v5126 = vpack.c.b16 %v4962, %v4958
        %v5127 = vpack.c.b16 %v4967, %v4963
        %v5128 = vpack.c.b16 %v4968, %v4964
        %v5129 = vpack.c.b16 %v4969, %v4965
        %v5130 = vpack.c.b16 %v4970, %v4966
        %v5131 = vpack.c.b16 %v4975, %v4971
        %v5132 = vpack.c.b16 %v4976, %v4972
        %v5133 = vpack.c.b16 %v4977, %v4973
        %v5134 = vpack.c.b16 %v4978, %v4974
        %v5135 = vpack.c.b16 %v4983, %v4979
        %v5136 = vpack.c.b16 %v4984, %v4980
        %v5137 = vpack.c.b16 %v4985, %v4981
        %v5138 = vpack.c.b16 %v4986, %v4982
        %v5139 = vpack.c.b16 %v4991, %v4987
        %v5140 = vpack.c.b16 %v4992, %v4988
        %v5141 = vpack.c.b16 %v4993, %v4989
        %v5142 = vpack.c.b16 %v4994, %v4990
        %v5143 = vpack.c.b16 %v4999, %v4995
        %v5144 = vpack.c.b16 %v5000, %v4996
        %v5145 = vpack.c.b16 %v5001, %v4997
        %v5146 = vpack.c.b16 %v5002, %v4998
        %v5147 = vpack.c.b16 %v5007, %v5003
        %v5148 = vpack.c.b16 %v5008, %v5004
        %v5149 = vpack.c.b16 %v5009, %v5005
        %v5150 = vpack.c.b16 %v5010, %v5006
        %v5151 = vpack.c.b16 %v5015, %v5011
        %v5152 = vpack.c.b16 %v5016, %v5012
        %v5153 = vpack.c.b16 %v5017, %v5013
        %v5154 = vpack.c.b16 %v5018, %v5014
        %v5155 = vpack.c.b16 %v5023, %v5019
        %v5156 = vpack.c.b16 %v5024, %v5020
        %v5157 = vpack.c.b16 %v5025, %v5021
        %v5158 = vpack.c.b16 %v5026, %v5022
        %v5159 = vpack.c.b16 %v5031, %v5027
        %v5160 = vpack.c.b16 %v5032, %v5028
        %v5161 = vpack.c.b16 %v5033, %v5029
        %v5162 = vpack.c.b16 %v5034, %v5030
        %5291 = vmatpush.bf16.msra.mxu0 %v5063
        %5292 = vmatpush.bf16.msra.mxu0 %v5059
        %5293 = vmatpush.bf16.msra.mxu0 %v5055
        %5294 = vmatpush.bf16.msra.mxu0 %v5051
        %5295 = vmatpush.bf16.msra.mxu0 %v5047
        %5296 = vmatpush.bf16.msra.mxu0 %v5043
        %5297 = vmatpush.bf16.msra.mxu0 %v5039
        %5298 = vmatpush.bf16.msra.mxu0 %v5035
        %5299 = vmatmul.bf16.gmra.mxu0 %v4497
        %v5300 = vpop.f32.mrf.mxu0
        %v5301 = vadd.f32 %v4643, %v5300
        %v5302 = vpop.f32.mrf.mxu0
        %v5303 = vadd.f32 %v4643, %v5302
        %5304 = vmatmul.bf16.gmra.mxu0 %v4501
        %v5305 = vpop.f32.mrf.mxu0
        %v5306 = vadd.f32 %v4643, %v5305
        %v5307 = vpop.f32.mrf.mxu0
        %v5308 = vadd.f32 %v4643, %v5307
        %5309 = vmatmul.bf16.gmra.mxu0 %v4505
        %v5310 = vpop.f32.mrf.mxu0
        %v5311 = vadd.f32 %v4643, %v5310
        %v5312 = vpop.f32.mrf.mxu0
        %v5313 = vadd.f32 %v4643, %v5312
        %5314 = vmatmul.bf16.gmra.mxu0 %v4509
        %v5315 = vpop.f32.mrf.mxu0
        %v5316 = vadd.f32 %v4643, %v5315
        %v5317 = vpop.f32.mrf.mxu0
        %v5318 = vadd.f32 %v4643, %v5317
        %5319 = vdwg.mxu0
        %5320 = vmatpush.bf16.msra.mxu0 %v5095
        %5321 = vmatpush.bf16.msra.mxu0 %v5091
        %5322 = vmatpush.bf16.msra.mxu0 %v5087
        %5323 = vmatpush.bf16.msra.mxu0 %v5083
        %5324 = vmatpush.bf16.msra.mxu0 %v5079
        %5325 = vmatpush.bf16.msra.mxu0 %v5075
        %5326 = vmatpush.bf16.msra.mxu0 %v5071
        %5327 = vmatpush.bf16.msra.mxu0 %v5067
        %5328 = vmatmul.bf16.gmra.mxu0 %v4498
        %v5329 = vpop.f32.mrf.mxu0
        %v5330 = vadd.f32 %v5301, %v5329
        %v5331 = vpop.f32.mrf.mxu0
        %v5332 = vadd.f32 %v5303, %v5331
        %5333 = vmatmul.bf16.gmra.mxu0 %v4502
        %v5334 = vpop.f32.mrf.mxu0
        %v5335 = vadd.f32 %v5306, %v5334
        %v5336 = vpop.f32.mrf.mxu0
        %v5337 = vadd.f32 %v5308, %v5336
        %5338 = vmatmul.bf16.gmra.mxu0 %v4506
        %v5339 = vpop.f32.mrf.mxu0
        %v5340 = vadd.f32 %v5311, %v5339
        %v5341 = vpop.f32.mrf.mxu0
        %v5342 = vadd.f32 %v5313, %v5341
        %5343 = vmatmul.bf16.gmra.mxu0 %v4510
        %v5344 = vpop.f32.mrf.mxu0
        %v5345 = vadd.f32 %v5316, %v5344
        %v5346 = vpop.f32.mrf.mxu0
        %v5347 = vadd.f32 %v5318, %v5346
        %5348 = vdwg.mxu0
        %5349 = vmatpush.bf16.msra.mxu0 %v5127
        %5350 = vmatpush.bf16.msra.mxu0 %v5123
        %5351 = vmatpush.bf16.msra.mxu0 %v5119
        %5352 = vmatpush.bf16.msra.mxu0 %v5115
        %5353 = vmatpush.bf16.msra.mxu0 %v5111
        %5354 = vmatpush.bf16.msra.mxu0 %v5107
        %5355 = vmatpush.bf16.msra.mxu0 %v5103
        %5356 = vmatpush.bf16.msra.mxu0 %v5099
        %5357 = vmatmul.bf16.gmra.mxu0 %v4499
        %v5358 = vpop.f32.mrf.mxu0
        %v5359 = vadd.f32 %v5330, %v5358
        %v5360 = vpop.f32.mrf.mxu0
        %v5361 = vadd.f32 %v5332, %v5360
        %5362 = vmatmul.bf16.gmra.mxu0 %v4503
        %v5363 = vpop.f32.mrf.mxu0
        %v5364 = vadd.f32 %v5335, %v5363
        %v5365 = vpop.f32.mrf.mxu0
        %v5366 = vadd.f32 %v5337, %v5365
        %5367 = vmatmul.bf16.gmra.mxu0 %v4507
        %v5368 = vpop.f32.mrf.mxu0
        %v5369 = vadd.f32 %v5340, %v5368
        %v5370 = vpop.f32.mrf.mxu0
        %v5371 = vadd.f32 %v5342, %v5370
        %5372 = vmatmul.bf16.gmra.mxu0 %v4511
        %v5373 = vpop.f32.mrf.mxu0
        %v5374 = vadd.f32 %v5345, %v5373
        %v5375 = vpop.f32.mrf.mxu0
        %v5376 = vadd.f32 %v5347, %v5375
        %5377 = vdwg.mxu0
        %5378 = vmatpush.bf16.msra.mxu0 %v5159
        %5379 = vmatpush.bf16.msra.mxu0 %v5155
        %5380 = vmatpush.bf16.msra.mxu0 %v5151
        %5381 = vmatpush.bf16.msra.mxu0 %v5147
        %5382 = vmatpush.bf16.msra.mxu0 %v5143
        %5383 = vmatpush.bf16.msra.mxu0 %v5139
        %5384 = vmatpush.bf16.msra.mxu0 %v5135
        %5385 = vmatpush.bf16.msra.mxu0 %v5131
        %5386 = vmatmul.bf16.gmra.mxu0 %v4500
        %v5387 = vpop.f32.mrf.mxu0
        %v5388 = vadd.f32 %v5359, %v5387
        %v5389 = vpop.f32.mrf.mxu0
        %v5390 = vadd.f32 %v5361, %v5389
        %5391 = vmatmul.bf16.gmra.mxu0 %v4504
        %v5392 = vpop.f32.mrf.mxu0
        %v5393 = vadd.f32 %v5364, %v5392
        %v5394 = vpop.f32.mrf.mxu0
        %v5395 = vadd.f32 %v5366, %v5394
        %5396 = vmatmul.bf16.gmra.mxu0 %v4508
        %v5397 = vpop.f32.mrf.mxu0
        %v5398 = vadd.f32 %v5369, %v5397
        %v5399 = vpop.f32.mrf.mxu0
        %v5400 = vadd.f32 %v5371, %v5399
        %5401 = vmatmul.bf16.gmra.mxu0 %v4512
        %v5402 = vpop.f32.mrf.mxu0
        %v5403 = vadd.f32 %v5374, %v5402
        %v5404 = vpop.f32.mrf.mxu0
        %v5405 = vadd.f32 %v5376, %v5404
        %5406 = vdwg.mxu0
        %5407 = vmatpush.bf16.msra.mxu0 %v5064
        %5408 = vmatpush.bf16.msra.mxu0 %v5060
        %5409 = vmatpush.bf16.msra.mxu0 %v5056
        %5410 = vmatpush.bf16.msra.mxu0 %v5052
        %5411 = vmatpush.bf16.msra.mxu0 %v5048
        %5412 = vmatpush.bf16.msra.mxu0 %v5044
        %5413 = vmatpush.bf16.msra.mxu0 %v5040
        %5414 = vmatpush.bf16.msra.mxu0 %v5036
        %5415 = vmatmul.bf16.gmra.mxu0 %v4497
        %v5416 = vpop.f32.mrf.mxu0
        %v5417 = vadd.f32 %v4644, %v5416
        %v5418 = vpop.f32.mrf.mxu0
        %v5419 = vadd.f32 %v4644, %v5418
        %5420 = vmatmul.bf16.gmra.mxu0 %v4501
        %v5421 = vpop.f32.mrf.mxu0
        %v5422 = vadd.f32 %v4644, %v5421
        %v5423 = vpop.f32.mrf.mxu0
        %v5424 = vadd.f32 %v4644, %v5423
        %5425 = vmatmul.bf16.gmra.mxu0 %v4505
        %v5426 = vpop.f32.mrf.mxu0
        %v5427 = vadd.f32 %v4644, %v5426
        %v5428 = vpop.f32.mrf.mxu0
        %v5429 = vadd.f32 %v4644, %v5428
        %5430 = vmatmul.bf16.gmra.mxu0 %v4509
        %v5431 = vpop.f32.mrf.mxu0
        %v5432 = vadd.f32 %v4644, %v5431
        %v5433 = vpop.f32.mrf.mxu0
        %v5434 = vadd.f32 %v4644, %v5433
        %5435 = vdwg.mxu0
        %5436 = vmatpush.bf16.msra.mxu0 %v5096
        %5437 = vmatpush.bf16.msra.mxu0 %v5092
        %5438 = vmatpush.bf16.msra.mxu0 %v5088
        %5439 = vmatpush.bf16.msra.mxu0 %v5084
        %5440 = vmatpush.bf16.msra.mxu0 %v5080
        %5441 = vmatpush.bf16.msra.mxu0 %v5076
        %5442 = vmatpush.bf16.msra.mxu0 %v5072
        %5443 = vmatpush.bf16.msra.mxu0 %v5068
        %5444 = vmatmul.bf16.gmra.mxu0 %v4498
        %v5445 = vpop.f32.mrf.mxu0
        %v5446 = vadd.f32 %v5417, %v5445
        %v5447 = vpop.f32.mrf.mxu0
        %v5448 = vadd.f32 %v5419, %v5447
        %5449 = vmatmul.bf16.gmra.mxu0 %v4502
        %v5450 = vpop.f32.mrf.mxu0
        %v5451 = vadd.f32 %v5422, %v5450
        %v5452 = vpop.f32.mrf.mxu0
        %v5453 = vadd.f32 %v5424, %v5452
        %5454 = vmatmul.bf16.gmra.mxu0 %v4506
        %v5455 = vpop.f32.mrf.mxu0
        %v5456 = vadd.f32 %v5427, %v5455
        %v5457 = vpop.f32.mrf.mxu0
        %v5458 = vadd.f32 %v5429, %v5457
        %5459 = vmatmul.bf16.gmra.mxu0 %v4510
        %v5460 = vpop.f32.mrf.mxu0
        %v5461 = vadd.f32 %v5432, %v5460
        %v5462 = vpop.f32.mrf.mxu0
        %v5463 = vadd.f32 %v5434, %v5462
        %5464 = vdwg.mxu0
        %5465 = vmatpush.bf16.msra.mxu0 %v5128
        %5466 = vmatpush.bf16.msra.mxu0 %v5124
        %5467 = vmatpush.bf16.msra.mxu0 %v5120
        %5468 = vmatpush.bf16.msra.mxu0 %v5116
        %5469 = vmatpush.bf16.msra.mxu0 %v5112
        %5470 = vmatpush.bf16.msra.mxu0 %v5108
        %5471 = vmatpush.bf16.msra.mxu0 %v5104
        %5472 = vmatpush.bf16.msra.mxu0 %v5100
        %5473 = vmatmul.bf16.gmra.mxu0 %v4499
        %v5474 = vpop.f32.mrf.mxu0
        %v5475 = vadd.f32 %v5446, %v5474
        %v5476 = vpop.f32.mrf.mxu0
        %v5477 = vadd.f32 %v5448, %v5476
        %5478 = vmatmul.bf16.gmra.mxu0 %v4503
        %v5479 = vpop.f32.mrf.mxu0
        %v5480 = vadd.f32 %v5451, %v5479
        %v5481 = vpop.f32.mrf.mxu0
        %v5482 = vadd.f32 %v5453, %v5481
        %5483 = vmatmul.bf16.gmra.mxu0 %v4507
        %v5484 = vpop.f32.mrf.mxu0
        %v5485 = vadd.f32 %v5456, %v5484
        %v5486 = vpop.f32.mrf.mxu0
        %v5487 = vadd.f32 %v5458, %v5486
        %5488 = vmatmul.bf16.gmra.mxu0 %v4511
        %v5489 = vpop.f32.mrf.mxu0
        %v5490 = vadd.f32 %v5461, %v5489
        %v5491 = vpop.f32.mrf.mxu0
        %v5492 = vadd.f32 %v5463, %v5491
        %5493 = vdwg.mxu0
        %5494 = vmatpush.bf16.msra.mxu0 %v5160
        %5495 = vmatpush.bf16.msra.mxu0 %v5156
        %5496 = vmatpush.bf16.msra.mxu0 %v5152
        %5497 = vmatpush.bf16.msra.mxu0 %v5148
        %5498 = vmatpush.bf16.msra.mxu0 %v5144
        %5499 = vmatpush.bf16.msra.mxu0 %v5140
        %5500 = vmatpush.bf16.msra.mxu0 %v5136
        %5501 = vmatpush.bf16.msra.mxu0 %v5132
        %5502 = vmatmul.bf16.gmra.mxu0 %v4500
        %v5503 = vpop.f32.mrf.mxu0
        %v5504 = vadd.f32 %v5475, %v5503
        %v5505 = vpop.f32.mrf.mxu0
        %v5506 = vadd.f32 %v5477, %v5505
        %5507 = vmatmul.bf16.gmra.mxu0 %v4504
        %v5508 = vpop.f32.mrf.mxu0
        %v5509 = vadd.f32 %v5480, %v5508
        %v5510 = vpop.f32.mrf.mxu0
        %v5511 = vadd.f32 %v5482, %v5510
        %5512 = vmatmul.bf16.gmra.mxu0 %v4508
        %v5513 = vpop.f32.mrf.mxu0
        %v5514 = vadd.f32 %v5485, %v5513
        %v5515 = vpop.f32.mrf.mxu0
        %v5516 = vadd.f32 %v5487, %v5515
        %5517 = vmatmul.bf16.gmra.mxu0 %v4512
        %v5518 = vpop.f32.mrf.mxu0
        %v5519 = vadd.f32 %v5490, %v5518
        %v5520 = vpop.f32.mrf.mxu0
        %v5521 = vadd.f32 %v5492, %v5520
        %5522 = vdwg.mxu0
        %5523 = vmatpush.bf16.msra.mxu0 %v5065
        %5524 = vmatpush.bf16.msra.mxu0 %v5061
        %5525 = vmatpush.bf16.msra.mxu0 %v5057
        %5526 = vmatpush.bf16.msra.mxu0 %v5053
        %5527 = vmatpush.bf16.msra.mxu0 %v5049
        %5528 = vmatpush.bf16.msra.mxu0 %v5045
        %5529 = vmatpush.bf16.msra.mxu0 %v5041
        %5530 = vmatpush.bf16.msra.mxu0 %v5037
        %5531 = vmatmul.bf16.gmra.mxu0 %v4497
        %v5532 = vpop.f32.mrf.mxu0
        %v5533 = vadd.f32 %v4645, %v5532
        %v5534 = vpop.f32.mrf.mxu0
        %v5535 = vadd.f32 %v4645, %v5534
        %5536 = vmatmul.bf16.gmra.mxu0 %v4501
        %v5537 = vpop.f32.mrf.mxu0
        %v5538 = vadd.f32 %v4645, %v5537
        %v5539 = vpop.f32.mrf.mxu0
        %v5540 = vadd.f32 %v4645, %v5539
        %5541 = vmatmul.bf16.gmra.mxu0 %v4505
        %v5542 = vpop.f32.mrf.mxu0
        %v5543 = vadd.f32 %v4645, %v5542
        %v5544 = vpop.f32.mrf.mxu0
        %v5545 = vadd.f32 %v4645, %v5544
        %5546 = vmatmul.bf16.gmra.mxu0 %v4509
        %v5547 = vpop.f32.mrf.mxu0
        %v5548 = vadd.f32 %v4645, %v5547
        %v5549 = vpop.f32.mrf.mxu0
        %v5550 = vadd.f32 %v4645, %v5549
        %5551 = vdwg.mxu0
        %5552 = vmatpush.bf16.msra.mxu0 %v5097
        %5553 = vmatpush.bf16.msra.mxu0 %v5093
        %5554 = vmatpush.bf16.msra.mxu0 %v5089
        %5555 = vmatpush.bf16.msra.mxu0 %v5085
        %5556 = vmatpush.bf16.msra.mxu0 %v5081
        %5557 = vmatpush.bf16.msra.mxu0 %v5077
        %5558 = vmatpush.bf16.msra.mxu0 %v5073
        %5559 = vmatpush.bf16.msra.mxu0 %v5069
        %5560 = vmatmul.bf16.gmra.mxu0 %v4498
        %v5561 = vpop.f32.mrf.mxu0
        %v5562 = vadd.f32 %v5533, %v5561
        %v5563 = vpop.f32.mrf.mxu0
        %v5564 = vadd.f32 %v5535, %v5563
        %5565 = vmatmul.bf16.gmra.mxu0 %v4502
        %v5566 = vpop.f32.mrf.mxu0
        %v5567 = vadd.f32 %v5538, %v5566
        %v5568 = vpop.f32.mrf.mxu0
        %v5569 = vadd.f32 %v5540, %v5568
        %5570 = vmatmul.bf16.gmra.mxu0 %v4506
        %v5571 = vpop.f32.mrf.mxu0
        %v5572 = vadd.f32 %v5543, %v5571
        %v5573 = vpop.f32.mrf.mxu0
        %v5574 = vadd.f32 %v5545, %v5573
        %5575 = vmatmul.bf16.gmra.mxu0 %v4510
        %v5576 = vpop.f32.mrf.mxu0
        %v5577 = vadd.f32 %v5548, %v5576
        %v5578 = vpop.f32.mrf.mxu0
        %v5579 = vadd.f32 %v5550, %v5578
        %5580 = vdwg.mxu0
        %5581 = vmatpush.bf16.msra.mxu0 %v5129
        %5582 = vmatpush.bf16.msra.mxu0 %v5125
        %5583 = vmatpush.bf16.msra.mxu0 %v5121
        %5584 = vmatpush.bf16.msra.mxu0 %v5117
        %5585 = vmatpush.bf16.msra.mxu0 %v5113
        %5586 = vmatpush.bf16.msra.mxu0 %v5109
        %5587 = vmatpush.bf16.msra.mxu0 %v5105
        %5588 = vmatpush.bf16.msra.mxu0 %v5101
        %5589 = vmatmul.bf16.gmra.mxu0 %v4499
        %v5590 = vpop.f32.mrf.mxu0
        %v5591 = vadd.f32 %v5562, %v5590
        %v5592 = vpop.f32.mrf.mxu0
        %v5593 = vadd.f32 %v5564, %v5592
        %5594 = vmatmul.bf16.gmra.mxu0 %v4503
        %v5595 = vpop.f32.mrf.mxu0
        %v5596 = vadd.f32 %v5567, %v5595
        %v5597 = vpop.f32.mrf.mxu0
        %v5598 = vadd.f32 %v5569, %v5597
        %5599 = vmatmul.bf16.gmra.mxu0 %v4507
        %v5600 = vpop.f32.mrf.mxu0
        %v5601 = vadd.f32 %v5572, %v5600
        %v5602 = vpop.f32.mrf.mxu0
        %v5603 = vadd.f32 %v5574, %v5602
        %5604 = vmatmul.bf16.gmra.mxu0 %v4511
        %v5605 = vpop.f32.mrf.mxu0
        %v5606 = vadd.f32 %v5577, %v5605
        %v5607 = vpop.f32.mrf.mxu0
        %v5608 = vadd.f32 %v5579, %v5607
        %5609 = vdwg.mxu0
        %5610 = vmatpush.bf16.msra.mxu0 %v5161
        %5611 = vmatpush.bf16.msra.mxu0 %v5157
        %5612 = vmatpush.bf16.msra.mxu0 %v5153
        %5613 = vmatpush.bf16.msra.mxu0 %v5149
        %5614 = vmatpush.bf16.msra.mxu0 %v5145
        %5615 = vmatpush.bf16.msra.mxu0 %v5141
        %5616 = vmatpush.bf16.msra.mxu0 %v5137
        %5617 = vmatpush.bf16.msra.mxu0 %v5133
        %5618 = vmatmul.bf16.gmra.mxu0 %v4500
        %v5619 = vpop.f32.mrf.mxu0
        %v5620 = vadd.f32 %v5591, %v5619
        %v5621 = vpop.f32.mrf.mxu0
        %v5622 = vadd.f32 %v5593, %v5621
        %5623 = vmatmul.bf16.gmra.mxu0 %v4504
        %v5624 = vpop.f32.mrf.mxu0
        %v5625 = vadd.f32 %v5596, %v5624
        %v5626 = vpop.f32.mrf.mxu0
        %v5627 = vadd.f32 %v5598, %v5626
        %5628 = vmatmul.bf16.gmra.mxu0 %v4508
        %v5629 = vpop.f32.mrf.mxu0
        %v5630 = vadd.f32 %v5601, %v5629
        %v5631 = vpop.f32.mrf.mxu0
        %v5632 = vadd.f32 %v5603, %v5631
        %5633 = vmatmul.bf16.gmra.mxu0 %v4512
        %v5634 = vpop.f32.mrf.mxu0
        %v5635 = vadd.f32 %v5606, %v5634
        %v5636 = vpop.f32.mrf.mxu0
        %v5637 = vadd.f32 %v5608, %v5636
        %5638 = vdwg.mxu0
        %5639 = vmatpush.bf16.msra.mxu0 %v5066
        %5640 = vmatpush.bf16.msra.mxu0 %v5062
        %5641 = vmatpush.bf16.msra.mxu0 %v5058
        %5642 = vmatpush.bf16.msra.mxu0 %v5054
        %5643 = vmatpush.bf16.msra.mxu0 %v5050
        %5644 = vmatpush.bf16.msra.mxu0 %v5046
        %5645 = vmatpush.bf16.msra.mxu0 %v5042
        %5646 = vmatpush.bf16.msra.mxu0 %v5038
        %5647 = vmatmul.bf16.gmra.mxu0 %v4497
        %v5648 = vpop.f32.mrf.mxu0
        %v5649 = vadd.f32 %v4646, %v5648
        %v5650 = vpop.f32.mrf.mxu0
        %v5651 = vadd.f32 %v4646, %v5650
        %5652 = vmatmul.bf16.gmra.mxu0 %v4501
        %v5653 = vpop.f32.mrf.mxu0
        %v5654 = vadd.f32 %v4646, %v5653
        %v5655 = vpop.f32.mrf.mxu0
        %v5656 = vadd.f32 %v4646, %v5655
        %5657 = vmatmul.bf16.gmra.mxu0 %v4505
        %v5658 = vpop.f32.mrf.mxu0
        %v5659 = vadd.f32 %v4646, %v5658
        %v5660 = vpop.f32.mrf.mxu0
        %v5661 = vadd.f32 %v4646, %v5660
        %5662 = vmatmul.bf16.gmra.mxu0 %v4509
        %v5663 = vpop.f32.mrf.mxu0
        %v5664 = vadd.f32 %v4646, %v5663
        %v5665 = vpop.f32.mrf.mxu0
        %v5666 = vadd.f32 %v4646, %v5665
        %5667 = vdwg.mxu0
        %5668 = vmatpush.bf16.msra.mxu0 %v5098
        %5669 = vmatpush.bf16.msra.mxu0 %v5094
        %5670 = vmatpush.bf16.msra.mxu0 %v5090
        %5671 = vmatpush.bf16.msra.mxu0 %v5086
        %5672 = vmatpush.bf16.msra.mxu0 %v5082
        %5673 = vmatpush.bf16.msra.mxu0 %v5078
        %5674 = vmatpush.bf16.msra.mxu0 %v5074
        %5675 = vmatpush.bf16.msra.mxu0 %v5070
        %5676 = vmatmul.bf16.gmra.mxu0 %v4498
        %v5677 = vpop.f32.mrf.mxu0
        %v5678 = vadd.f32 %v5649, %v5677
        %v5679 = vpop.f32.mrf.mxu0
        %v5680 = vadd.f32 %v5651, %v5679
        %5681 = vmatmul.bf16.gmra.mxu0 %v4502
        %v5682 = vpop.f32.mrf.mxu0
        %v5683 = vadd.f32 %v5654, %v5682
        %v5684 = vpop.f32.mrf.mxu0
        %v5685 = vadd.f32 %v5656, %v5684
        %5686 = vmatmul.bf16.gmra.mxu0 %v4506
        %v5687 = vpop.f32.mrf.mxu0
        %v5688 = vadd.f32 %v5659, %v5687
        %v5689 = vpop.f32.mrf.mxu0
        %v5690 = vadd.f32 %v5661, %v5689
        %5691 = vmatmul.bf16.gmra.mxu0 %v4510
        %v5692 = vpop.f32.mrf.mxu0
        %v5693 = vadd.f32 %v5664, %v5692
        %v5694 = vpop.f32.mrf.mxu0
        %v5695 = vadd.f32 %v5666, %v5694
        %5696 = vdwg.mxu0
        %5697 = vmatpush.bf16.msra.mxu0 %v5130
        %5698 = vmatpush.bf16.msra.mxu0 %v5126
        %5699 = vmatpush.bf16.msra.mxu0 %v5122
        %5700 = vmatpush.bf16.msra.mxu0 %v5118
        %5701 = vmatpush.bf16.msra.mxu0 %v5114
        %5702 = vmatpush.bf16.msra.mxu0 %v5110
        %5703 = vmatpush.bf16.msra.mxu0 %v5106
        %5704 = vmatpush.bf16.msra.mxu0 %v5102
        %5705 = vmatmul.bf16.gmra.mxu0 %v4499
        %v5706 = vpop.f32.mrf.mxu0
        %v5707 = vadd.f32 %v5678, %v5706
        %v5708 = vpop.f32.mrf.mxu0
        %v5709 = vadd.f32 %v5680, %v5708
        %5710 = vmatmul.bf16.gmra.mxu0 %v4503
        %v5711 = vpop.f32.mrf.mxu0
        %v5712 = vadd.f32 %v5683, %v5711
        %v5713 = vpop.f32.mrf.mxu0
        %v5714 = vadd.f32 %v5685, %v5713
        %5715 = vmatmul.bf16.gmra.mxu0 %v4507
        %v5716 = vpop.f32.mrf.mxu0
        %v5717 = vadd.f32 %v5688, %v5716
        %v5718 = vpop.f32.mrf.mxu0
        %v5719 = vadd.f32 %v5690, %v5718
        %5720 = vmatmul.bf16.gmra.mxu0 %v4511
        %v5721 = vpop.f32.mrf.mxu0
        %v5722 = vadd.f32 %v5693, %v5721
        %v5723 = vpop.f32.mrf.mxu0
        %v5724 = vadd.f32 %v5695, %v5723
        %5725 = vdwg.mxu0
        %5726 = vmatpush.bf16.msra.mxu0 %v5162
        %5727 = vmatpush.bf16.msra.mxu0 %v5158
        %5728 = vmatpush.bf16.msra.mxu0 %v5154
        %5729 = vmatpush.bf16.msra.mxu0 %v5150
        %5730 = vmatpush.bf16.msra.mxu0 %v5146
        %5731 = vmatpush.bf16.msra.mxu0 %v5142
        %5732 = vmatpush.bf16.msra.mxu0 %v5138
        %5733 = vmatpush.bf16.msra.mxu0 %v5134
        %5734 = vmatmul.bf16.gmra.mxu0 %v4500
        %v5735 = vpop.f32.mrf.mxu0
        %v5736 = vadd.f32 %v5707, %v5735
        %v5737 = vpop.f32.mrf.mxu0
        %v5738 = vadd.f32 %v5709, %v5737
        %5739 = vmatmul.bf16.gmra.mxu0 %v4504
        %v5740 = vpop.f32.mrf.mxu0
        %v5741 = vadd.f32 %v5712, %v5740
        %v5742 = vpop.f32.mrf.mxu0
        %v5743 = vadd.f32 %v5714, %v5742
        %5744 = vmatmul.bf16.gmra.mxu0 %v4508
        %v5745 = vpop.f32.mrf.mxu0
        %v5746 = vadd.f32 %v5717, %v5745
        %v5747 = vpop.f32.mrf.mxu0
        %v5748 = vadd.f32 %v5719, %v5747
        %5749 = vmatmul.bf16.gmra.mxu0 %v4512
        %v5750 = vpop.f32.mrf.mxu0
        %v5751 = vadd.f32 %v5722, %v5750
        %v5752 = vpop.f32.mrf.mxu0
        %v5753 = vadd.f32 %v5724, %v5752
        %5754 = vdwg.mxu0
        %v5755 = vpack.c.bf16 %v5504, %v5388
        %v5756 = vpack.c.bf16 %v5736, %v5620
        %v5757 = vpack.c.bf16 %v5506, %v5390
        %v5758 = vpack.c.bf16 %v5738, %v5622
        %v5759 = vpack.c.bf16 %v5509, %v5393
        %v5760 = vpack.c.bf16 %v5741, %v5625
        %v5761 = vpack.c.bf16 %v5511, %v5395
        %v5762 = vpack.c.bf16 %v5743, %v5627
        %v5763 = vpack.c.bf16 %v5514, %v5398
        %v5764 = vpack.c.bf16 %v5746, %v5630
        %v5765 = vpack.c.bf16 %v5516, %v5400
        %v5766 = vpack.c.bf16 %v5748, %v5632
        %v5767 = vpack.c.bf16 %v5519, %v5403
        %v5768 = vpack.c.bf16 %v5751, %v5635
        %v5769 = vpack.c.bf16 %v5521, %v5405
        %v5770 = vpack.c.bf16 %v5753, %v5637
        %v5771 = vld [vmem:[%s333] sm:$0xff]
        %v5772 = vld [vmem:[%s333 + $0x8] sm:$0xff]
        %v5773 = vld [vmem:[%s333 + $0x10] sm:$0xff]
        %v5774 = vld [vmem:[%s333 + $0x18] sm:$0xff]
        %v5775 = vld [vmem:[%s333 + $0x20] sm:$0xff]
        %v5776 = vld [vmem:[%s333 + $0x28] sm:$0xff]
        %v5777 = vld [vmem:[%s333 + $0x30] sm:$0xff]
        %v5778 = vld [vmem:[%s333 + $0x38] sm:$0xff]
        %v5779 = vld [vmem:[%s333 + $0x40] sm:$0xff]
        %v5780 = vld [vmem:[%s333 + $0x48] sm:$0xff]
        %v5781 = vld [vmem:[%s333 + $0x50] sm:$0xff]
        %v5782 = vld [vmem:[%s333 + $0x58] sm:$0xff]
        %v5783 = vld [vmem:[%s333 + $0x60] sm:$0xff]
        %v5784 = vld [vmem:[%s333 + $0x68] sm:$0xff]
        %v5785 = vld [vmem:[%s333 + $0x70] sm:$0xff]
        %v5786 = vld [vmem:[%s333 + $0x78] sm:$0xff]
        %v5787 = vld [vmem:[%s333 + $0x80] sm:$0xff]
        %v5788 = vld [vmem:[%s333 + $0x88] sm:$0xff]
        %v5789 = vld [vmem:[%s333 + $0x90] sm:$0xff]
        %v5790 = vld [vmem:[%s333 + $0x98] sm:$0xff]
        %v5791 = vld [vmem:[%s333 + $0xa0] sm:$0xff]
        %v5792 = vld [vmem:[%s333 + $0xa8] sm:$0xff]
        %v5793 = vld [vmem:[%s333 + $0xb0] sm:$0xff]
        %v5794 = vld [vmem:[%s333 + $0xb8] sm:$0xff]
        %v5795 = vld [vmem:[%s333 + $0xc0] sm:$0xff]
        %v5796 = vld [vmem:[%s333 + $0xc8] sm:$0xff]
        %v5797 = vld [vmem:[%s333 + $0xd0] sm:$0xff]
        %v5798 = vld [vmem:[%s333 + $0xd8] sm:$0xff]
        %v5799 = vld [vmem:[%s333 + $0xe0] sm:$0xff]
        %v5800 = vld [vmem:[%s333 + $0xe8] sm:$0xff]
        %v5801 = vld [vmem:[%s333 + $0xf0] sm:$0xff]
        %v5802 = vld [vmem:[%s333 + $0xf8] sm:$0xff]
        %v5803 = vld [vmem:[%s333 + $0x100] sm:$0xff]
        %v5804 = vld [vmem:[%s333 + $0x108] sm:$0xff]
        %v5805 = vld [vmem:[%s333 + $0x110] sm:$0xff]
        %v5806 = vld [vmem:[%s333 + $0x118] sm:$0xff]
        %v5807 = vld [vmem:[%s333 + $0x120] sm:$0xff]
        %v5808 = vld [vmem:[%s333 + $0x128] sm:$0xff]
        %v5809 = vld [vmem:[%s333 + $0x130] sm:$0xff]
        %v5810 = vld [vmem:[%s333 + $0x138] sm:$0xff]
        %v5811 = vld [vmem:[%s333 + $0x140] sm:$0xff]
        %v5812 = vld [vmem:[%s333 + $0x148] sm:$0xff]
        %v5813 = vld [vmem:[%s333 + $0x150] sm:$0xff]
        %v5814 = vld [vmem:[%s333 + $0x158] sm:$0xff]
        %v5815 = vld [vmem:[%s333 + $0x160] sm:$0xff]
        %v5816 = vld [vmem:[%s333 + $0x168] sm:$0xff]
        %v5817 = vld [vmem:[%s333 + $0x170] sm:$0xff]
        %v5818 = vld [vmem:[%s333 + $0x178] sm:$0xff]
        %v5819 = vld [vmem:[%s333 + $0x180] sm:$0xff]
        %v5820 = vld [vmem:[%s333 + $0x188] sm:$0xff]
        %v5821 = vld [vmem:[%s333 + $0x190] sm:$0xff]
        %v5822 = vld [vmem:[%s333 + $0x198] sm:$0xff]
        %v5823 = vld [vmem:[%s333 + $0x1a0] sm:$0xff]
        %v5824 = vld [vmem:[%s333 + $0x1a8] sm:$0xff]
        %v5825 = vld [vmem:[%s333 + $0x1b0] sm:$0xff]
        %v5826 = vld [vmem:[%s333 + $0x1b8] sm:$0xff]
        %v5827 = vld [vmem:[%s333 + $0x1c0] sm:$0xff]
        %v5828 = vld [vmem:[%s333 + $0x1c8] sm:$0xff]
        %v5829 = vld [vmem:[%s333 + $0x1d0] sm:$0xff]
        %v5830 = vld [vmem:[%s333 + $0x1d8] sm:$0xff]
        %v5831 = vld [vmem:[%s333 + $0x1e0] sm:$0xff]
        %v5832 = vld [vmem:[%s333 + $0x1e8] sm:$0xff]
        %v5833 = vld [vmem:[%s333 + $0x1f0] sm:$0xff]
        %v5834 = vld [vmem:[%s333 + $0x1f8] sm:$0xff]
        %s5835 = scalar_lea.vmem %s333, 512 [#allocation9]
        %v5836 = vld [vmem:[%s5835] sm:$0xff]
        %v5837 = vld [vmem:[%s5835 + $0x8] sm:$0xff]
        %v5838 = vld [vmem:[%s5835 + $0x10] sm:$0xff]
        %v5839 = vld [vmem:[%s5835 + $0x18] sm:$0xff]
        %v5840 = vld [vmem:[%s5835 + $0x20] sm:$0xff]
        %v5841 = vld [vmem:[%s5835 + $0x28] sm:$0xff]
        %v5842 = vld [vmem:[%s5835 + $0x30] sm:$0xff]
        %v5843 = vld [vmem:[%s5835 + $0x38] sm:$0xff]
        %v5844 = vld [vmem:[%s5835 + $0x40] sm:$0xff]
        %v5845 = vld [vmem:[%s5835 + $0x48] sm:$0xff]
        %v5846 = vld [vmem:[%s5835 + $0x50] sm:$0xff]
        %v5847 = vld [vmem:[%s5835 + $0x58] sm:$0xff]
        %v5848 = vld [vmem:[%s5835 + $0x60] sm:$0xff]
        %v5849 = vld [vmem:[%s5835 + $0x68] sm:$0xff]
        %v5850 = vld [vmem:[%s5835 + $0x70] sm:$0xff]
        %v5851 = vld [vmem:[%s5835 + $0x78] sm:$0xff]
        %v5852 = vld [vmem:[%s5835 + $0x80] sm:$0xff]
        %v5853 = vld [vmem:[%s5835 + $0x88] sm:$0xff]
        %v5854 = vld [vmem:[%s5835 + $0x90] sm:$0xff]
        %v5855 = vld [vmem:[%s5835 + $0x98] sm:$0xff]
        %v5856 = vld [vmem:[%s5835 + $0xa0] sm:$0xff]
        %v5857 = vld [vmem:[%s5835 + $0xa8] sm:$0xff]
        %v5858 = vld [vmem:[%s5835 + $0xb0] sm:$0xff]
        %v5859 = vld [vmem:[%s5835 + $0xb8] sm:$0xff]
        %v5860 = vld [vmem:[%s5835 + $0xc0] sm:$0xff]
        %v5861 = vld [vmem:[%s5835 + $0xc8] sm:$0xff]
        %v5862 = vld [vmem:[%s5835 + $0xd0] sm:$0xff]
        %v5863 = vld [vmem:[%s5835 + $0xd8] sm:$0xff]
        %v5864 = vld [vmem:[%s5835 + $0xe0] sm:$0xff]
        %v5865 = vld [vmem:[%s5835 + $0xe8] sm:$0xff]
        %v5866 = vld [vmem:[%s5835 + $0xf0] sm:$0xff]
        %v5867 = vld [vmem:[%s5835 + $0xf8] sm:$0xff]
        %v5868 = vld [vmem:[%s5835 + $0x100] sm:$0xff]
        %v5869 = vld [vmem:[%s5835 + $0x108] sm:$0xff]
        %v5870 = vld [vmem:[%s5835 + $0x110] sm:$0xff]
        %v5871 = vld [vmem:[%s5835 + $0x118] sm:$0xff]
        %v5872 = vld [vmem:[%s5835 + $0x120] sm:$0xff]
        %v5873 = vld [vmem:[%s5835 + $0x128] sm:$0xff]
        %v5874 = vld [vmem:[%s5835 + $0x130] sm:$0xff]
        %v5875 = vld [vmem:[%s5835 + $0x138] sm:$0xff]
        %v5876 = vld [vmem:[%s5835 + $0x140] sm:$0xff]
        %v5877 = vld [vmem:[%s5835 + $0x148] sm:$0xff]
        %v5878 = vld [vmem:[%s5835 + $0x150] sm:$0xff]
        %v5879 = vld [vmem:[%s5835 + $0x158] sm:$0xff]
        %v5880 = vld [vmem:[%s5835 + $0x160] sm:$0xff]
        %v5881 = vld [vmem:[%s5835 + $0x168] sm:$0xff]
        %v5882 = vld [vmem:[%s5835 + $0x170] sm:$0xff]
        %v5883 = vld [vmem:[%s5835 + $0x178] sm:$0xff]
        %v5884 = vld [vmem:[%s5835 + $0x180] sm:$0xff]
        %v5885 = vld [vmem:[%s5835 + $0x188] sm:$0xff]
        %v5886 = vld [vmem:[%s5835 + $0x190] sm:$0xff]
        %v5887 = vld [vmem:[%s5835 + $0x198] sm:$0xff]
        %v5888 = vld [vmem:[%s5835 + $0x1a0] sm:$0xff]
        %v5889 = vld [vmem:[%s5835 + $0x1a8] sm:$0xff]
        %v5890 = vld [vmem:[%s5835 + $0x1b0] sm:$0xff]
        %v5891 = vld [vmem:[%s5835 + $0x1b8] sm:$0xff]
        %v5892 = vld [vmem:[%s5835 + $0x1c0] sm:$0xff]
        %v5893 = vld [vmem:[%s5835 + $0x1c8] sm:$0xff]
        %v5894 = vld [vmem:[%s5835 + $0x1d0] sm:$0xff]
        %v5895 = vld [vmem:[%s5835 + $0x1d8] sm:$0xff]
        %v5896 = vld [vmem:[%s5835 + $0x1e0] sm:$0xff]
        %v5897 = vld [vmem:[%s5835 + $0x1e8] sm:$0xff]
        %v5898 = vld [vmem:[%s5835 + $0x1f0] sm:$0xff]
        %v5899 = vld [vmem:[%s5835 + $0x1f8] sm:$0xff]
        %p5900 = scmp.eq.s32.totalorder %s21, 0
        %v5917 = vunpack.c.l.b16 %v5755
        %v5918 = vunpack.c.h.b16 %v5755
        %v5919 = vunpack.c.l.b16 %v5756
        %v5920 = vunpack.c.h.b16 %v5756
        %v5921 = vunpack.c.l.b16 %v5757
        %v5922 = vunpack.c.h.b16 %v5757
        %v5923 = vunpack.c.l.b16 %v5758
        %v5924 = vunpack.c.h.b16 %v5758
        %v5925 = vunpack.c.l.b16 %v5759
        %v5926 = vunpack.c.h.b16 %v5759
        %v5927 = vunpack.c.l.b16 %v5760
        %v5928 = vunpack.c.h.b16 %v5760
        %v5929 = vunpack.c.l.b16 %v5761
        %v5930 = vunpack.c.h.b16 %v5761
        %v5931 = vunpack.c.l.b16 %v5762
        %v5932 = vunpack.c.h.b16 %v5762
        %v5933 = vunpack.c.l.b16 %v5763
        %v5934 = vunpack.c.h.b16 %v5763
        %v5935 = vunpack.c.l.b16 %v5764
        %v5936 = vunpack.c.h.b16 %v5764
        %v5937 = vunpack.c.l.b16 %v5765
        %v5938 = vunpack.c.h.b16 %v5765
        %v5939 = vunpack.c.l.b16 %v5766
        %v5940 = vunpack.c.h.b16 %v5766
        %v5941 = vunpack.c.l.b16 %v5767
        %v5942 = vunpack.c.h.b16 %v5767
        %v5943 = vunpack.c.l.b16 %v5768
        %v5944 = vunpack.c.h.b16 %v5768
        %v5945 = vunpack.c.l.b16 %v5769
        %v5946 = vunpack.c.h.b16 %v5769
        %v5947 = vunpack.c.l.b16 %v5770
        %v5948 = vunpack.c.h.b16 %v5770
        %v5949 = vpack.c.b16 %v5921, %v5917
        %v5950 = vpack.c.b16 %v5922, %v5918
        %v5951 = vpack.c.b16 %v5923, %v5919
        %v5952 = vpack.c.b16 %v5924, %v5920
        %v5953 = vpack.c.b16 %v5929, %v5925
        %v5954 = vpack.c.b16 %v5930, %v5926
        %v5955 = vpack.c.b16 %v5931, %v5927
        %v5956 = vpack.c.b16 %v5932, %v5928
        %v5957 = vpack.c.b16 %v5937, %v5933
        %v5958 = vpack.c.b16 %v5938, %v5934
        %v5959 = vpack.c.b16 %v5939, %v5935
        %v5960 = vpack.c.b16 %v5940, %v5936
        %v5961 = vpack.c.b16 %v5945, %v5941
        %v5962 = vpack.c.b16 %v5946, %v5942
        %v5963 = vpack.c.b16 %v5947, %v5943
        %v5964 = vpack.c.b16 %v5948, %v5944
        %v5965 = vrot.slane %v5949, 7
        %v5966 = vrot.slane %v5950, 7
        %v5967 = vrot.slane %v5951, 7
        %v5968 = vrot.slane %v5952, 7
        %v5969 = vrot.slane %v5953, 7
        %v5970 = vsel %vm536, %v5965, %v5969
        %v5971 = vrot.slane %v5954, 7
        %v5972 = vsel %vm536, %v5966, %v5971
        %v5973 = vrot.slane %v5955, 7
        %v5974 = vsel %vm536, %v5967, %v5973
        %v5975 = vrot.slane %v5956, 7
        %v5976 = vsel %vm536, %v5968, %v5975
        %v5977 = vrot.slane %v5957, 7
        %v5978 = vsel %vm536, %v5969, %v5977
        %v5979 = vrot.slane %v5958, 7
        %v5980 = vsel %vm536, %v5971, %v5979
        %v5981 = vrot.slane %v5959, 7
        %v5982 = vsel %vm536, %v5973, %v5981
        %v5983 = vrot.slane %v5960, 7
        %v5984 = vsel %vm536, %v5975, %v5983
        %v5985 = vrot.slane %v5961, 7
        %v5986 = vsel %vm536, %v5977, %v5985
        %v5987 = vrot.slane %v5962, 7
        %v5988 = vsel %vm536, %v5979, %v5987
        %v5989 = vrot.slane %v5963, 7
        %v5990 = vsel %vm536, %v5981, %v5989
        %v5991 = vrot.slane %v5964, 7
        %v5992 = vsel %vm536, %v5983, %v5991
        %v6006 = vsel %vm577, 0, %v5965
        %v6009 = vsel %vm577, 0, %v5966
        %v6012 = vsel %vm577, 0, %v5967
        %v6015 = vsel %vm577, 0, %v5968
        %v6017 = vrot.slane %v5949, 1
        %v6018 = vrot.slane %v5953, 1
        %v6019 = vsel %vm591, %v6017, %v6018
        %v6020 = vrot.slane %v5950, 1
        %v6021 = vrot.slane %v5954, 1
        %v6022 = vsel %vm591, %v6020, %v6021
        %v6023 = vrot.slane %v5951, 1
        %v6024 = vrot.slane %v5955, 1
        %v6025 = vsel %vm591, %v6023, %v6024
        %v6026 = vrot.slane %v5952, 1
        %v6027 = vrot.slane %v5956, 1
        %v6028 = vsel %vm591, %v6026, %v6027
        %v6029 = vrot.slane %v5957, 1
        %v6030 = vsel %vm591, %v6018, %v6029
        %v6031 = vrot.slane %v5958, 1
        %v6032 = vsel %vm591, %v6021, %v6031
        %v6033 = vrot.slane %v5959, 1
        %v6034 = vsel %vm591, %v6024, %v6033
        %v6035 = vrot.slane %v5960, 1
        %v6036 = vsel %vm591, %v6027, %v6035
        %v6037 = vrot.slane %v5961, 1
        %v6038 = vsel %vm591, %v6029, %v6037
        %v6039 = vrot.slane %v5962, 1
        %v6040 = vsel %vm591, %v6031, %v6039
        %v6041 = vrot.slane %v5963, 1
        %v6042 = vsel %vm591, %v6033, %v6041
        %v6043 = vrot.slane %v5964, 1
        %v6044 = vsel %vm591, %v6035, %v6043
        %v6058 = vsel %vm632, %v6037, 0
        %v6061 = vsel %vm632, %v6039, 0
        %v6064 = vsel %vm632, %v6041, 0
        %v6067 = vsel %vm632, %v6043, 0
        %s6069 = scalar_select %p5900, 1, 0
        %v6070 = vstv %s6069
        %vm6071 = vcmp.eq.s32.totalorder %v6070, 1
        %v6072 = vsel %vm6071, %v6006, %v6019
        %v6073 = vsel %vm6071, %v6009, %v6022
        %v6074 = vsel %vm6071, %v6012, %v6025
        %v6075 = vsel %vm6071, %v6015, %v6028
        %v6076 = vsel %vm6071, %v5970, %v6030
        %v6077 = vsel %vm6071, %v5972, %v6032
        %v6078 = vsel %vm6071, %v5974, %v6034
        %v6079 = vsel %vm6071, %v5976, %v6036
        %v6080 = vsel %vm6071, %v5978, %v6038
        %v6081 = vsel %vm6071, %v5980, %v6040
        %v6082 = vsel %vm6071, %v5982, %v6042
        %v6083 = vsel %vm6071, %v5984, %v6044
        %v6084 = vsel %vm6071, %v5986, %v6058
        %v6085 = vsel %vm6071, %v5988, %v6061
        %v6086 = vsel %vm6071, %v5990, %v6064
        %v6087 = vsel %vm6071, %v5992, %v6067
        %v6152 = vunpack.c.l.b16 %v5836
        %v6153 = vunpack.c.h.b16 %v5836
        %v6154 = vunpack.c.l.b16 %v5837
        %v6155 = vunpack.c.h.b16 %v5837
        %v6156 = vunpack.c.l.b16 %v5838
        %v6157 = vunpack.c.h.b16 %v5838
        %v6158 = vunpack.c.l.b16 %v5839
        %v6159 = vunpack.c.h.b16 %v5839
        %v6160 = vunpack.c.l.b16 %v5840
        %v6161 = vunpack.c.h.b16 %v5840
        %v6162 = vunpack.c.l.b16 %v5841
        %v6163 = vunpack.c.h.b16 %v5841
        %v6164 = vunpack.c.l.b16 %v5842
        %v6165 = vunpack.c.h.b16 %v5842
        %v6166 = vunpack.c.l.b16 %v5843
        %v6167 = vunpack.c.h.b16 %v5843
        %v6168 = vunpack.c.l.b16 %v5844
        %v6169 = vunpack.c.h.b16 %v5844
        %v6170 = vunpack.c.l.b16 %v5845
        %v6171 = vunpack.c.h.b16 %v5845
        %v6172 = vunpack.c.l.b16 %v5846
        %v6173 = vunpack.c.h.b16 %v5846
        %v6174 = vunpack.c.l.b16 %v5847
        %v6175 = vunpack.c.h.b16 %v5847
        %v6176 = vunpack.c.l.b16 %v5848
        %v6177 = vunpack.c.h.b16 %v5848
        %v6178 = vunpack.c.l.b16 %v5849
        %v6179 = vunpack.c.h.b16 %v5849
        %v6180 = vunpack.c.l.b16 %v5850
        %v6181 = vunpack.c.h.b16 %v5850
        %v6182 = vunpack.c.l.b16 %v5851
        %v6183 = vunpack.c.h.b16 %v5851
        %v6184 = vunpack.c.l.b16 %v5852
        %v6185 = vunpack.c.h.b16 %v5852
        %v6186 = vunpack.c.l.b16 %v5853
        %v6187 = vunpack.c.h.b16 %v5853
        %v6188 = vunpack.c.l.b16 %v5854
        %v6189 = vunpack.c.h.b16 %v5854
        %v6190 = vunpack.c.l.b16 %v5855
        %v6191 = vunpack.c.h.b16 %v5855
        %v6192 = vunpack.c.l.b16 %v5856
        %v6193 = vunpack.c.h.b16 %v5856
        %v6194 = vunpack.c.l.b16 %v5857
        %v6195 = vunpack.c.h.b16 %v5857
        %v6196 = vunpack.c.l.b16 %v5858
        %v6197 = vunpack.c.h.b16 %v5858
        %v6198 = vunpack.c.l.b16 %v5859
        %v6199 = vunpack.c.h.b16 %v5859
        %v6200 = vunpack.c.l.b16 %v5860
        %v6201 = vunpack.c.h.b16 %v5860
        %v6202 = vunpack.c.l.b16 %v5861
        %v6203 = vunpack.c.h.b16 %v5861
        %v6204 = vunpack.c.l.b16 %v5862
        %v6205 = vunpack.c.h.b16 %v5862
        %v6206 = vunpack.c.l.b16 %v5863
        %v6207 = vunpack.c.h.b16 %v5863
        %v6208 = vunpack.c.l.b16 %v5864
        %v6209 = vunpack.c.h.b16 %v5864
        %v6210 = vunpack.c.l.b16 %v5865
        %v6211 = vunpack.c.h.b16 %v5865
        %v6212 = vunpack.c.l.b16 %v5866
        %v6213 = vunpack.c.h.b16 %v5866
        %v6214 = vunpack.c.l.b16 %v5867
        %v6215 = vunpack.c.h.b16 %v5867
        %v6216 = vunpack.c.l.b16 %v5868
        %v6217 = vunpack.c.h.b16 %v5868
        %v6218 = vunpack.c.l.b16 %v5869
        %v6219 = vunpack.c.h.b16 %v5869
        %v6220 = vunpack.c.l.b16 %v5870
        %v6221 = vunpack.c.h.b16 %v5870
        %v6222 = vunpack.c.l.b16 %v5871
        %v6223 = vunpack.c.h.b16 %v5871
        %v6224 = vunpack.c.l.b16 %v5872
        %v6225 = vunpack.c.h.b16 %v5872
        %v6226 = vunpack.c.l.b16 %v5873
        %v6227 = vunpack.c.h.b16 %v5873
        %v6228 = vunpack.c.l.b16 %v5874
        %v6229 = vunpack.c.h.b16 %v5874
        %v6230 = vunpack.c.l.b16 %v5875
        %v6231 = vunpack.c.h.b16 %v5875
        %v6232 = vunpack.c.l.b16 %v5876
        %v6233 = vunpack.c.h.b16 %v5876
        %v6234 = vunpack.c.l.b16 %v5877
        %v6235 = vunpack.c.h.b16 %v5877
        %v6236 = vunpack.c.l.b16 %v5878
        %v6237 = vunpack.c.h.b16 %v5878
        %v6238 = vunpack.c.l.b16 %v5879
        %v6239 = vunpack.c.h.b16 %v5879
        %v6240 = vunpack.c.l.b16 %v5880
        %v6241 = vunpack.c.h.b16 %v5880
        %v6242 = vunpack.c.l.b16 %v5881
        %v6243 = vunpack.c.h.b16 %v5881
        %v6244 = vunpack.c.l.b16 %v5882
        %v6245 = vunpack.c.h.b16 %v5882
        %v6246 = vunpack.c.l.b16 %v5883
        %v6247 = vunpack.c.h.b16 %v5883
        %v6248 = vunpack.c.l.b16 %v5884
        %v6249 = vunpack.c.h.b16 %v5884
        %v6250 = vunpack.c.l.b16 %v5885
        %v6251 = vunpack.c.h.b16 %v5885
        %v6252 = vunpack.c.l.b16 %v5886
        %v6253 = vunpack.c.h.b16 %v5886
        %v6254 = vunpack.c.l.b16 %v5887
        %v6255 = vunpack.c.h.b16 %v5887
        %v6256 = vunpack.c.l.b16 %v5888
        %v6257 = vunpack.c.h.b16 %v5888
        %v6258 = vunpack.c.l.b16 %v5889
        %v6259 = vunpack.c.h.b16 %v5889
        %v6260 = vunpack.c.l.b16 %v5890
        %v6261 = vunpack.c.h.b16 %v5890
        %v6262 = vunpack.c.l.b16 %v5891
        %v6263 = vunpack.c.h.b16 %v5891
        %v6264 = vunpack.c.l.b16 %v5892
        %v6265 = vunpack.c.h.b16 %v5892
        %v6266 = vunpack.c.l.b16 %v5893
        %v6267 = vunpack.c.h.b16 %v5893
        %v6268 = vunpack.c.l.b16 %v5894
        %v6269 = vunpack.c.h.b16 %v5894
        %v6270 = vunpack.c.l.b16 %v5895
        %v6271 = vunpack.c.h.b16 %v5895
        %v6272 = vunpack.c.l.b16 %v5896
        %v6273 = vunpack.c.h.b16 %v5896
        %v6274 = vunpack.c.l.b16 %v5897
        %v6275 = vunpack.c.h.b16 %v5897
        %v6276 = vunpack.c.l.b16 %v5898
        %v6277 = vunpack.c.h.b16 %v5898
        %v6278 = vunpack.c.l.b16 %v5899
        %v6279 = vunpack.c.h.b16 %v5899
        %v6280 = vpack.c.b16 %v6154, %v6152
        %v6281 = vpack.c.b16 %v6155, %v6153
        %v6282 = vpack.c.b16 %v6158, %v6156
        %v6283 = vpack.c.b16 %v6159, %v6157
        %v6284 = vpack.c.b16 %v6162, %v6160
        %v6285 = vpack.c.b16 %v6163, %v6161
        %v6286 = vpack.c.b16 %v6166, %v6164
        %v6287 = vpack.c.b16 %v6167, %v6165
        %v6288 = vpack.c.b16 %v6170, %v6168
        %v6289 = vpack.c.b16 %v6171, %v6169
        %v6290 = vpack.c.b16 %v6174, %v6172
        %v6291 = vpack.c.b16 %v6175, %v6173
        %v6292 = vpack.c.b16 %v6178, %v6176
        %v6293 = vpack.c.b16 %v6179, %v6177
        %v6294 = vpack.c.b16 %v6182, %v6180
        %v6295 = vpack.c.b16 %v6183, %v6181
        %v6296 = vpack.c.b16 %v6186, %v6184
        %v6297 = vpack.c.b16 %v6187, %v6185
        %v6298 = vpack.c.b16 %v6190, %v6188
        %v6299 = vpack.c.b16 %v6191, %v6189
        %v6300 = vpack.c.b16 %v6194, %v6192
        %v6301 = vpack.c.b16 %v6195, %v6193
        %v6302 = vpack.c.b16 %v6198, %v6196
        %v6303 = vpack.c.b16 %v6199, %v6197
        %v6304 = vpack.c.b16 %v6202, %v6200
        %v6305 = vpack.c.b16 %v6203, %v6201
        %v6306 = vpack.c.b16 %v6206, %v6204
        %v6307 = vpack.c.b16 %v6207, %v6205
        %v6308 = vpack.c.b16 %v6210, %v6208
        %v6309 = vpack.c.b16 %v6211, %v6209
        %v6310 = vpack.c.b16 %v6214, %v6212
        %v6311 = vpack.c.b16 %v6215, %v6213
        %v6312 = vpack.c.b16 %v6218, %v6216
        %v6313 = vpack.c.b16 %v6219, %v6217
        %v6314 = vpack.c.b16 %v6222, %v6220
        %v6315 = vpack.c.b16 %v6223, %v6221
        %v6316 = vpack.c.b16 %v6226, %v6224
        %v6317 = vpack.c.b16 %v6227, %v6225
        %v6318 = vpack.c.b16 %v6230, %v6228
        %v6319 = vpack.c.b16 %v6231, %v6229
        %v6320 = vpack.c.b16 %v6234, %v6232
        %v6321 = vpack.c.b16 %v6235, %v6233
        %v6322 = vpack.c.b16 %v6238, %v6236
        %v6323 = vpack.c.b16 %v6239, %v6237
        %v6324 = vpack.c.b16 %v6242, %v6240
        %v6325 = vpack.c.b16 %v6243, %v6241
        %v6326 = vpack.c.b16 %v6246, %v6244
        %v6327 = vpack.c.b16 %v6247, %v6245
        %v6328 = vpack.c.b16 %v6250, %v6248
        %v6329 = vpack.c.b16 %v6251, %v6249
        %v6330 = vpack.c.b16 %v6254, %v6252
        %v6331 = vpack.c.b16 %v6255, %v6253
        %v6332 = vpack.c.b16 %v6258, %v6256
        %v6333 = vpack.c.b16 %v6259, %v6257
        %v6334 = vpack.c.b16 %v6262, %v6260
        %v6335 = vpack.c.b16 %v6263, %v6261
        %v6336 = vpack.c.b16 %v6266, %v6264
        %v6337 = vpack.c.b16 %v6267, %v6265
        %v6338 = vpack.c.b16 %v6270, %v6268
        %v6339 = vpack.c.b16 %v6271, %v6269
        %v6340 = vpack.c.b16 %v6274, %v6272
        %v6341 = vpack.c.b16 %v6275, %v6273
        %v6342 = vpack.c.b16 %v6278, %v6276
        %v6343 = vpack.c.b16 %v6279, %v6277
        %6408 = vmatpush.bf16.msra.mxu0 %v6294
        %6409 = vmatpush.bf16.msra.mxu0 %v6292
        %6410 = vmatpush.bf16.msra.mxu0 %v6290
        %6411 = vmatpush.bf16.msra.mxu0 %v6288
        %6412 = vmatpush.bf16.msra.mxu0 %v6286
        %6413 = vmatpush.bf16.msra.mxu0 %v6284
        %6414 = vmatpush.bf16.msra.mxu0 %v6282
        %6415 = vmatpush.bf16.msra.mxu0 %v6280
        %6416 = vmatmul.bf16.gmra.mxu0 %v6072
        %v6417 = vpop.f32.mrf.mxu0
        %v6418 = vadd.f32 0.0, %v6417
        %v6419 = vpop.f32.mrf.mxu0
        %v6420 = vadd.f32 0.0, %v6419
        %6421 = vmatmul.bf16.gmra.mxu0 %v6076
        %v6422 = vpop.f32.mrf.mxu0
        %v6423 = vadd.f32 0.0, %v6422
        %v6424 = vpop.f32.mrf.mxu0
        %v6425 = vadd.f32 0.0, %v6424
        %6426 = vmatmul.bf16.gmra.mxu0 %v6080
        %v6427 = vpop.f32.mrf.mxu0
        %v6428 = vadd.f32 0.0, %v6427
        %v6429 = vpop.f32.mrf.mxu0
        %v6430 = vadd.f32 0.0, %v6429
        %6431 = vmatmul.bf16.gmra.mxu0 %v6084
        %v6432 = vpop.f32.mrf.mxu0
        %v6433 = vadd.f32 0.0, %v6432
        %v6434 = vpop.f32.mrf.mxu0
        %v6435 = vadd.f32 0.0, %v6434
        %6436 = vdwg.mxu0
        %6437 = vmatpush.bf16.msra.mxu0 %v6310
        %6438 = vmatpush.bf16.msra.mxu0 %v6308
        %6439 = vmatpush.bf16.msra.mxu0 %v6306
        %6440 = vmatpush.bf16.msra.mxu0 %v6304
        %6441 = vmatpush.bf16.msra.mxu0 %v6302
        %6442 = vmatpush.bf16.msra.mxu0 %v6300
        %6443 = vmatpush.bf16.msra.mxu0 %v6298
        %6444 = vmatpush.bf16.msra.mxu0 %v6296
        %6445 = vmatmul.bf16.gmra.mxu0 %v6073
        %v6446 = vpop.f32.mrf.mxu0
        %v6447 = vadd.f32 %v6418, %v6446
        %v6448 = vpop.f32.mrf.mxu0
        %v6449 = vadd.f32 %v6420, %v6448
        %6450 = vmatmul.bf16.gmra.mxu0 %v6077
        %v6451 = vpop.f32.mrf.mxu0
        %v6452 = vadd.f32 %v6423, %v6451
        %v6453 = vpop.f32.mrf.mxu0
        %v6454 = vadd.f32 %v6425, %v6453
        %6455 = vmatmul.bf16.gmra.mxu0 %v6081
        %v6456 = vpop.f32.mrf.mxu0
        %v6457 = vadd.f32 %v6428, %v6456
        %v6458 = vpop.f32.mrf.mxu0
        %v6459 = vadd.f32 %v6430, %v6458
        %6460 = vmatmul.bf16.gmra.mxu0 %v6085
        %v6461 = vpop.f32.mrf.mxu0
        %v6462 = vadd.f32 %v6433, %v6461
        %v6463 = vpop.f32.mrf.mxu0
        %v6464 = vadd.f32 %v6435, %v6463
        %6465 = vdwg.mxu0
        %6466 = vmatpush.bf16.msra.mxu0 %v6326
        %6467 = vmatpush.bf16.msra.mxu0 %v6324
        %6468 = vmatpush.bf16.msra.mxu0 %v6322
        %6469 = vmatpush.bf16.msra.mxu0 %v6320
        %6470 = vmatpush.bf16.msra.mxu0 %v6318
        %6471 = vmatpush.bf16.msra.mxu0 %v6316
        %6472 = vmatpush.bf16.msra.mxu0 %v6314
        %6473 = vmatpush.bf16.msra.mxu0 %v6312
        %6474 = vmatmul.bf16.gmra.mxu0 %v6074
        %v6475 = vpop.f32.mrf.mxu0
        %v6476 = vadd.f32 %v6447, %v6475
        %v6477 = vpop.f32.mrf.mxu0
        %v6478 = vadd.f32 %v6449, %v6477
        %6479 = vmatmul.bf16.gmra.mxu0 %v6078
        %v6480 = vpop.f32.mrf.mxu0
        %v6481 = vadd.f32 %v6452, %v6480
        %v6482 = vpop.f32.mrf.mxu0
        %v6483 = vadd.f32 %v6454, %v6482
        %6484 = vmatmul.bf16.gmra.mxu0 %v6082
        %v6485 = vpop.f32.mrf.mxu0
        %v6486 = vadd.f32 %v6457, %v6485
        %v6487 = vpop.f32.mrf.mxu0
        %v6488 = vadd.f32 %v6459, %v6487
        %6489 = vmatmul.bf16.gmra.mxu0 %v6086
        %v6490 = vpop.f32.mrf.mxu0
        %v6491 = vadd.f32 %v6462, %v6490
        %v6492 = vpop.f32.mrf.mxu0
        %v6493 = vadd.f32 %v6464, %v6492
        %6494 = vdwg.mxu0
        %6495 = vmatpush.bf16.msra.mxu0 %v6342
        %6496 = vmatpush.bf16.msra.mxu0 %v6340
        %6497 = vmatpush.bf16.msra.mxu0 %v6338
        %6498 = vmatpush.bf16.msra.mxu0 %v6336
        %6499 = vmatpush.bf16.msra.mxu0 %v6334
        %6500 = vmatpush.bf16.msra.mxu0 %v6332
        %6501 = vmatpush.bf16.msra.mxu0 %v6330
        %6502 = vmatpush.bf16.msra.mxu0 %v6328
        %6503 = vmatmul.bf16.gmra.mxu0 %v6075
        %v6504 = vpop.f32.mrf.mxu0
        %v6505 = vadd.f32 %v6476, %v6504
        %v6506 = vpop.f32.mrf.mxu0
        %v6507 = vadd.f32 %v6478, %v6506
        %6508 = vmatmul.bf16.gmra.mxu0 %v6079
        %v6509 = vpop.f32.mrf.mxu0
        %v6510 = vadd.f32 %v6481, %v6509
        %v6511 = vpop.f32.mrf.mxu0
        %v6512 = vadd.f32 %v6483, %v6511
        %6513 = vmatmul.bf16.gmra.mxu0 %v6083
        %v6514 = vpop.f32.mrf.mxu0
        %v6515 = vadd.f32 %v6486, %v6514
        %v6516 = vpop.f32.mrf.mxu0
        %v6517 = vadd.f32 %v6488, %v6516
        %6518 = vmatmul.bf16.gmra.mxu0 %v6087
        %v6519 = vpop.f32.mrf.mxu0
        %v6520 = vadd.f32 %v6491, %v6519
        %v6521 = vpop.f32.mrf.mxu0
        %v6522 = vadd.f32 %v6493, %v6521
        %6523 = vdwg.mxu0
        %6524 = vmatpush.bf16.msra.mxu0 %v6295
        %6525 = vmatpush.bf16.msra.mxu0 %v6293
        %6526 = vmatpush.bf16.msra.mxu0 %v6291
        %6527 = vmatpush.bf16.msra.mxu0 %v6289
        %6528 = vmatpush.bf16.msra.mxu0 %v6287
        %6529 = vmatpush.bf16.msra.mxu0 %v6285
        %6530 = vmatpush.bf16.msra.mxu0 %v6283
        %6531 = vmatpush.bf16.msra.mxu0 %v6281
        %6532 = vmatmul.bf16.gmra.mxu0 %v6072
        %v6533 = vpop.f32.mrf.mxu0
        %v6534 = vadd.f32 0.0, %v6533
        %v6535 = vpop.f32.mrf.mxu0
        %v6536 = vadd.f32 0.0, %v6535
        %6537 = vmatmul.bf16.gmra.mxu0 %v6076
        %v6538 = vpop.f32.mrf.mxu0
        %v6539 = vadd.f32 0.0, %v6538
        %v6540 = vpop.f32.mrf.mxu0
        %v6541 = vadd.f32 0.0, %v6540
        %6542 = vmatmul.bf16.gmra.mxu0 %v6080
        %v6543 = vpop.f32.mrf.mxu0
        %v6544 = vadd.f32 0.0, %v6543
        %v6545 = vpop.f32.mrf.mxu0
        %v6546 = vadd.f32 0.0, %v6545
        %6547 = vmatmul.bf16.gmra.mxu0 %v6084
        %v6548 = vpop.f32.mrf.mxu0
        %v6549 = vadd.f32 0.0, %v6548
        %v6550 = vpop.f32.mrf.mxu0
        %v6551 = vadd.f32 0.0, %v6550
        %6552 = vdwg.mxu0
        %6553 = vmatpush.bf16.msra.mxu0 %v6311
        %6554 = vmatpush.bf16.msra.mxu0 %v6309
        %6555 = vmatpush.bf16.msra.mxu0 %v6307
        %6556 = vmatpush.bf16.msra.mxu0 %v6305
        %6557 = vmatpush.bf16.msra.mxu0 %v6303
        %6558 = vmatpush.bf16.msra.mxu0 %v6301
        %6559 = vmatpush.bf16.msra.mxu0 %v6299
        %6560 = vmatpush.bf16.msra.mxu0 %v6297
        %6561 = vmatmul.bf16.gmra.mxu0 %v6073
        %v6562 = vpop.f32.mrf.mxu0
        %v6563 = vadd.f32 %v6534, %v6562
        %v6564 = vpop.f32.mrf.mxu0
        %v6565 = vadd.f32 %v6536, %v6564
        %6566 = vmatmul.bf16.gmra.mxu0 %v6077
        %v6567 = vpop.f32.mrf.mxu0
        %v6568 = vadd.f32 %v6539, %v6567
        %v6569 = vpop.f32.mrf.mxu0
        %v6570 = vadd.f32 %v6541, %v6569
        %6571 = vmatmul.bf16.gmra.mxu0 %v6081
        %v6572 = vpop.f32.mrf.mxu0
        %v6573 = vadd.f32 %v6544, %v6572
        %v6574 = vpop.f32.mrf.mxu0
        %v6575 = vadd.f32 %v6546, %v6574
        %6576 = vmatmul.bf16.gmra.mxu0 %v6085
        %v6577 = vpop.f32.mrf.mxu0
        %v6578 = vadd.f32 %v6549, %v6577
        %v6579 = vpop.f32.mrf.mxu0
        %v6580 = vadd.f32 %v6551, %v6579
        %6581 = vdwg.mxu0
        %6582 = vmatpush.bf16.msra.mxu0 %v6327
        %6583 = vmatpush.bf16.msra.mxu0 %v6325
        %6584 = vmatpush.bf16.msra.mxu0 %v6323
        %6585 = vmatpush.bf16.msra.mxu0 %v6321
        %6586 = vmatpush.bf16.msra.mxu0 %v6319
        %6587 = vmatpush.bf16.msra.mxu0 %v6317
        %6588 = vmatpush.bf16.msra.mxu0 %v6315
        %6589 = vmatpush.bf16.msra.mxu0 %v6313
        %6590 = vmatmul.bf16.gmra.mxu0 %v6074
        %v6591 = vpop.f32.mrf.mxu0
        %v6592 = vadd.f32 %v6563, %v6591
        %v6593 = vpop.f32.mrf.mxu0
        %v6594 = vadd.f32 %v6565, %v6593
        %6595 = vmatmul.bf16.gmra.mxu0 %v6078
        %v6596 = vpop.f32.mrf.mxu0
        %v6597 = vadd.f32 %v6568, %v6596
        %v6598 = vpop.f32.mrf.mxu0
        %v6599 = vadd.f32 %v6570, %v6598
        %6600 = vmatmul.bf16.gmra.mxu0 %v6082
        %v6601 = vpop.f32.mrf.mxu0
        %v6602 = vadd.f32 %v6573, %v6601
        %v6603 = vpop.f32.mrf.mxu0
        %v6604 = vadd.f32 %v6575, %v6603
        %6605 = vmatmul.bf16.gmra.mxu0 %v6086
        %v6606 = vpop.f32.mrf.mxu0
        %v6607 = vadd.f32 %v6578, %v6606
        %v6608 = vpop.f32.mrf.mxu0
        %v6609 = vadd.f32 %v6580, %v6608
        %6610 = vdwg.mxu0
        %6611 = vmatpush.bf16.msra.mxu0 %v6343
        %6612 = vmatpush.bf16.msra.mxu0 %v6341
        %6613 = vmatpush.bf16.msra.mxu0 %v6339
        %6614 = vmatpush.bf16.msra.mxu0 %v6337
        %6615 = vmatpush.bf16.msra.mxu0 %v6335
        %6616 = vmatpush.bf16.msra.mxu0 %v6333
        %6617 = vmatpush.bf16.msra.mxu0 %v6331
        %6618 = vmatpush.bf16.msra.mxu0 %v6329
        %6619 = vmatmul.bf16.gmra.mxu0 %v6075
        %v6620 = vpop.f32.mrf.mxu0
        %v6621 = vadd.f32 %v6592, %v6620
        %v6622 = vpop.f32.mrf.mxu0
        %v6623 = vadd.f32 %v6594, %v6622
        %6624 = vmatmul.bf16.gmra.mxu0 %v6079
        %v6625 = vpop.f32.mrf.mxu0
        %v6626 = vadd.f32 %v6597, %v6625
        %v6627 = vpop.f32.mrf.mxu0
        %v6628 = vadd.f32 %v6599, %v6627
        %6629 = vmatmul.bf16.gmra.mxu0 %v6083
        %v6630 = vpop.f32.mrf.mxu0
        %v6631 = vadd.f32 %v6602, %v6630
        %v6632 = vpop.f32.mrf.mxu0
        %v6633 = vadd.f32 %v6604, %v6632
        %6634 = vmatmul.bf16.gmra.mxu0 %v6087
        %v6635 = vpop.f32.mrf.mxu0
        %v6636 = vadd.f32 %v6607, %v6635
        %v6637 = vpop.f32.mrf.mxu0
        %v6638 = vadd.f32 %v6609, %v6637
        %6639 = vdwg.mxu0
        %v6720 = vunpack.c.l.b16 %v5771
        %v6721 = vunpack.c.h.b16 %v5771
        %v6722 = vunpack.c.l.b16 %v5772
        %v6723 = vunpack.c.h.b16 %v5772
        %v6724 = vunpack.c.l.b16 %v5773
        %v6725 = vunpack.c.h.b16 %v5773
        %v6726 = vunpack.c.l.b16 %v5774
        %v6727 = vunpack.c.h.b16 %v5774
        %v6728 = vunpack.c.l.b16 %v5775
        %v6729 = vunpack.c.h.b16 %v5775
        %v6730 = vunpack.c.l.b16 %v5776
        %v6731 = vunpack.c.h.b16 %v5776
        %v6732 = vunpack.c.l.b16 %v5777
        %v6733 = vunpack.c.h.b16 %v5777
        %v6734 = vunpack.c.l.b16 %v5778
        %v6735 = vunpack.c.h.b16 %v5778
        %v6736 = vunpack.c.l.b16 %v5779
        %v6737 = vunpack.c.h.b16 %v5779
        %v6738 = vunpack.c.l.b16 %v5780
        %v6739 = vunpack.c.h.b16 %v5780
        %v6740 = vunpack.c.l.b16 %v5781
        %v6741 = vunpack.c.h.b16 %v5781
        %v6742 = vunpack.c.l.b16 %v5782
        %v6743 = vunpack.c.h.b16 %v5782
        %v6744 = vunpack.c.l.b16 %v5783
        %v6745 = vunpack.c.h.b16 %v5783
        %v6746 = vunpack.c.l.b16 %v5784
        %v6747 = vunpack.c.h.b16 %v5784
        %v6748 = vunpack.c.l.b16 %v5785
        %v6749 = vunpack.c.h.b16 %v5785
        %v6750 = vunpack.c.l.b16 %v5786
        %v6751 = vunpack.c.h.b16 %v5786
        %v6752 = vunpack.c.l.b16 %v5787
        %v6753 = vunpack.c.h.b16 %v5787
        %v6754 = vunpack.c.l.b16 %v5788
        %v6755 = vunpack.c.h.b16 %v5788
        %v6756 = vunpack.c.l.b16 %v5789
        %v6757 = vunpack.c.h.b16 %v5789
        %v6758 = vunpack.c.l.b16 %v5790
        %v6759 = vunpack.c.h.b16 %v5790
        %v6760 = vunpack.c.l.b16 %v5791
        %v6761 = vunpack.c.h.b16 %v5791
        %v6762 = vunpack.c.l.b16 %v5792
        %v6763 = vunpack.c.h.b16 %v5792
        %v6764 = vunpack.c.l.b16 %v5793
        %v6765 = vunpack.c.h.b16 %v5793
        %v6766 = vunpack.c.l.b16 %v5794
        %v6767 = vunpack.c.h.b16 %v5794
        %v6768 = vunpack.c.l.b16 %v5795
        %v6769 = vunpack.c.h.b16 %v5795
        %v6770 = vunpack.c.l.b16 %v5796
        %v6771 = vunpack.c.h.b16 %v5796
        %v6772 = vunpack.c.l.b16 %v5797
        %v6773 = vunpack.c.h.b16 %v5797
        %v6774 = vunpack.c.l.b16 %v5798
        %v6775 = vunpack.c.h.b16 %v5798
        %v6776 = vunpack.c.l.b16 %v5799
        %v6777 = vunpack.c.h.b16 %v5799
        %v6778 = vunpack.c.l.b16 %v5800
        %v6779 = vunpack.c.h.b16 %v5800
        %v6780 = vunpack.c.l.b16 %v5801
        %v6781 = vunpack.c.h.b16 %v5801
        %v6782 = vunpack.c.l.b16 %v5802
        %v6783 = vunpack.c.h.b16 %v5802
        %v6784 = vunpack.c.l.b16 %v5803
        %v6785 = vunpack.c.h.b16 %v5803
        %v6786 = vunpack.c.l.b16 %v5804
        %v6787 = vunpack.c.h.b16 %v5804
        %v6788 = vunpack.c.l.b16 %v5805
        %v6789 = vunpack.c.h.b16 %v5805
        %v6790 = vunpack.c.l.b16 %v5806
        %v6791 = vunpack.c.h.b16 %v5806
        %v6792 = vunpack.c.l.b16 %v5807
        %v6793 = vunpack.c.h.b16 %v5807
        %v6794 = vunpack.c.l.b16 %v5808
        %v6795 = vunpack.c.h.b16 %v5808
        %v6796 = vunpack.c.l.b16 %v5809
        %v6797 = vunpack.c.h.b16 %v5809
        %v6798 = vunpack.c.l.b16 %v5810
        %v6799 = vunpack.c.h.b16 %v5810
        %v6800 = vunpack.c.l.b16 %v5811
        %v6801 = vunpack.c.h.b16 %v5811
        %v6802 = vunpack.c.l.b16 %v5812
        %v6803 = vunpack.c.h.b16 %v5812
        %v6804 = vunpack.c.l.b16 %v5813
        %v6805 = vunpack.c.h.b16 %v5813
        %v6806 = vunpack.c.l.b16 %v5814
        %v6807 = vunpack.c.h.b16 %v5814
        %v6808 = vunpack.c.l.b16 %v5815
        %v6809 = vunpack.c.h.b16 %v5815
        %v6810 = vunpack.c.l.b16 %v5816
        %v6811 = vunpack.c.h.b16 %v5816
        %v6812 = vunpack.c.l.b16 %v5817
        %v6813 = vunpack.c.h.b16 %v5817
        %v6814 = vunpack.c.l.b16 %v5818
        %v6815 = vunpack.c.h.b16 %v5818
        %v6816 = vunpack.c.l.b16 %v5819
        %v6817 = vunpack.c.h.b16 %v5819
        %v6818 = vunpack.c.l.b16 %v5820
        %v6819 = vunpack.c.h.b16 %v5820
        %v6820 = vunpack.c.l.b16 %v5821
        %v6821 = vunpack.c.h.b16 %v5821
        %v6822 = vunpack.c.l.b16 %v5822
        %v6823 = vunpack.c.h.b16 %v5822
        %v6824 = vunpack.c.l.b16 %v5823
        %v6825 = vunpack.c.h.b16 %v5823
        %v6826 = vunpack.c.l.b16 %v5824
        %v6827 = vunpack.c.h.b16 %v5824
        %v6828 = vunpack.c.l.b16 %v5825
        %v6829 = vunpack.c.h.b16 %v5825
        %v6830 = vunpack.c.l.b16 %v5826
        %v6831 = vunpack.c.h.b16 %v5826
        %v6832 = vunpack.c.l.b16 %v5827
        %v6833 = vunpack.c.h.b16 %v5827
        %v6834 = vunpack.c.l.b16 %v5828
        %v6835 = vunpack.c.h.b16 %v5828
        %v6836 = vunpack.c.l.b16 %v5829
        %v6837 = vunpack.c.h.b16 %v5829
        %v6838 = vunpack.c.l.b16 %v5830
        %v6839 = vunpack.c.h.b16 %v5830
        %v6840 = vunpack.c.l.b16 %v5831
        %v6841 = vunpack.c.h.b16 %v5831
        %v6842 = vunpack.c.l.b16 %v5832
        %v6843 = vunpack.c.h.b16 %v5832
        %v6844 = vunpack.c.l.b16 %v5833
        %v6845 = vunpack.c.h.b16 %v5833
        %v6846 = vunpack.c.l.b16 %v5834
        %v6847 = vunpack.c.h.b16 %v5834
        %v6848 = vpack.c.b16 %v6722, %v6720
        %v6849 = vpack.c.b16 %v6723, %v6721
        %v6850 = vpack.c.b16 %v6726, %v6724
        %v6851 = vpack.c.b16 %v6727, %v6725
        %v6852 = vpack.c.b16 %v6730, %v6728
        %v6853 = vpack.c.b16 %v6731, %v6729
        %v6854 = vpack.c.b16 %v6734, %v6732
        %v6855 = vpack.c.b16 %v6735, %v6733
        %v6856 = vpack.c.b16 %v6738, %v6736
        %v6857 = vpack.c.b16 %v6739, %v6737
        %v6858 = vpack.c.b16 %v6742, %v6740
        %v6859 = vpack.c.b16 %v6743, %v6741
        %v6860 = vpack.c.b16 %v6746, %v6744
        %v6861 = vpack.c.b16 %v6747, %v6745
        %v6862 = vpack.c.b16 %v6750, %v6748
        %v6863 = vpack.c.b16 %v6751, %v6749
        %v6864 = vpack.c.b16 %v6754, %v6752
        %v6865 = vpack.c.b16 %v6755, %v6753
        %v6866 = vpack.c.b16 %v6758, %v6756
        %v6867 = vpack.c.b16 %v6759, %v6757
        %v6868 = vpack.c.b16 %v6762, %v6760
        %v6869 = vpack.c.b16 %v6763, %v6761
        %v6870 = vpack.c.b16 %v6766, %v6764
        %v6871 = vpack.c.b16 %v6767, %v6765
        %v6872 = vpack.c.b16 %v6770, %v6768
        %v6873 = vpack.c.b16 %v6771, %v6769
        %v6874 = vpack.c.b16 %v6774, %v6772
        %v6875 = vpack.c.b16 %v6775, %v6773
        %v6876 = vpack.c.b16 %v6778, %v6776
        %v6877 = vpack.c.b16 %v6779, %v6777
        %v6878 = vpack.c.b16 %v6782, %v6780
        %v6879 = vpack.c.b16 %v6783, %v6781
        %v6880 = vpack.c.b16 %v6786, %v6784
        %v6881 = vpack.c.b16 %v6787, %v6785
        %v6882 = vpack.c.b16 %v6790, %v6788
        %v6883 = vpack.c.b16 %v6791, %v6789
        %v6884 = vpack.c.b16 %v6794, %v6792
        %v6885 = vpack.c.b16 %v6795, %v6793
        %v6886 = vpack.c.b16 %v6798, %v6796
        %v6887 = vpack.c.b16 %v6799, %v6797
        %v6888 = vpack.c.b16 %v6802, %v6800
        %v6889 = vpack.c.b16 %v6803, %v6801
        %v6890 = vpack.c.b16 %v6806, %v6804
        %v6891 = vpack.c.b16 %v6807, %v6805
        %v6892 = vpack.c.b16 %v6810, %v6808
        %v6893 = vpack.c.b16 %v6811, %v6809
        %v6894 = vpack.c.b16 %v6814, %v6812
        %v6895 = vpack.c.b16 %v6815, %v6813
        %v6896 = vpack.c.b16 %v6818, %v6816
        %v6897 = vpack.c.b16 %v6819, %v6817
        %v6898 = vpack.c.b16 %v6822, %v6820
        %v6899 = vpack.c.b16 %v6823, %v6821
        %v6900 = vpack.c.b16 %v6826, %v6824
        %v6901 = vpack.c.b16 %v6827, %v6825
        %v6902 = vpack.c.b16 %v6830, %v6828
        %v6903 = vpack.c.b16 %v6831, %v6829
        %v6904 = vpack.c.b16 %v6834, %v6832
        %v6905 = vpack.c.b16 %v6835, %v6833
        %v6906 = vpack.c.b16 %v6838, %v6836
        %v6907 = vpack.c.b16 %v6839, %v6837
        %v6908 = vpack.c.b16 %v6842, %v6840
        %v6909 = vpack.c.b16 %v6843, %v6841
        %v6910 = vpack.c.b16 %v6846, %v6844
        %v6911 = vpack.c.b16 %v6847, %v6845
        %6976 = vmatpush.bf16.msra.mxu0 %v6862
        %6977 = vmatpush.bf16.msra.mxu0 %v6860
        %6978 = vmatpush.bf16.msra.mxu0 %v6858
        %6979 = vmatpush.bf16.msra.mxu0 %v6856
        %6980 = vmatpush.bf16.msra.mxu0 %v6854
        %6981 = vmatpush.bf16.msra.mxu0 %v6852
        %6982 = vmatpush.bf16.msra.mxu0 %v6850
        %6983 = vmatpush.bf16.msra.mxu0 %v6848
        %6984 = vmatmul.bf16.gmra.mxu0 %v5949
        %v6985 = vpop.f32.mrf.mxu0
        %v6986 = vadd.f32 %v6505, %v6985
        %v6987 = vpop.f32.mrf.mxu0
        %v6988 = vadd.f32 %v6507, %v6987
        %6989 = vmatmul.bf16.gmra.mxu0 %v5953
        %v6990 = vpop.f32.mrf.mxu0
        %v6991 = vadd.f32 %v6510, %v6990
        %v6992 = vpop.f32.mrf.mxu0
        %v6993 = vadd.f32 %v6512, %v6992
        %6994 = vmatmul.bf16.gmra.mxu0 %v5957
        %v6995 = vpop.f32.mrf.mxu0
        %v6996 = vadd.f32 %v6515, %v6995
        %v6997 = vpop.f32.mrf.mxu0
        %v6998 = vadd.f32 %v6517, %v6997
        %6999 = vmatmul.bf16.gmra.mxu0 %v5961
        %v7000 = vpop.f32.mrf.mxu0
        %v7001 = vadd.f32 %v6520, %v7000
        %v7002 = vpop.f32.mrf.mxu0
        %v7003 = vadd.f32 %v6522, %v7002
        %7004 = vdwg.mxu0
        %7005 = vmatpush.bf16.msra.mxu0 %v6878
        %7006 = vmatpush.bf16.msra.mxu0 %v6876
        %7007 = vmatpush.bf16.msra.mxu0 %v6874
        %7008 = vmatpush.bf16.msra.mxu0 %v6872
        %7009 = vmatpush.bf16.msra.mxu0 %v6870
        %7010 = vmatpush.bf16.msra.mxu0 %v6868
        %7011 = vmatpush.bf16.msra.mxu0 %v6866
        %7012 = vmatpush.bf16.msra.mxu0 %v6864
        %7013 = vmatmul.bf16.gmra.mxu0 %v5950
        %v7014 = vpop.f32.mrf.mxu0
        %v7015 = vadd.f32 %v6986, %v7014
        %v7016 = vpop.f32.mrf.mxu0
        %v7017 = vadd.f32 %v6988, %v7016
        %7018 = vmatmul.bf16.gmra.mxu0 %v5954
        %v7019 = vpop.f32.mrf.mxu0
        %v7020 = vadd.f32 %v6991, %v7019
        %v7021 = vpop.f32.mrf.mxu0
        %v7022 = vadd.f32 %v6993, %v7021
        %7023 = vmatmul.bf16.gmra.mxu0 %v5958
        %v7024 = vpop.f32.mrf.mxu0
        %v7025 = vadd.f32 %v6996, %v7024
        %v7026 = vpop.f32.mrf.mxu0
        %v7027 = vadd.f32 %v6998, %v7026
        %7028 = vmatmul.bf16.gmra.mxu0 %v5962
        %v7029 = vpop.f32.mrf.mxu0
        %v7030 = vadd.f32 %v7001, %v7029
        %v7031 = vpop.f32.mrf.mxu0
        %v7032 = vadd.f32 %v7003, %v7031
        %7033 = vdwg.mxu0
        %7034 = vmatpush.bf16.msra.mxu0 %v6894
        %7035 = vmatpush.bf16.msra.mxu0 %v6892
        %7036 = vmatpush.bf16.msra.mxu0 %v6890
        %7037 = vmatpush.bf16.msra.mxu0 %v6888
        %7038 = vmatpush.bf16.msra.mxu0 %v6886
        %7039 = vmatpush.bf16.msra.mxu0 %v6884
        %7040 = vmatpush.bf16.msra.mxu0 %v6882
        %7041 = vmatpush.bf16.msra.mxu0 %v6880
        %7042 = vmatmul.bf16.gmra.mxu0 %v5951
        %v7043 = vpop.f32.mrf.mxu0
        %v7044 = vadd.f32 %v7015, %v7043
        %v7045 = vpop.f32.mrf.mxu0
        %v7046 = vadd.f32 %v7017, %v7045
        %7047 = vmatmul.bf16.gmra.mxu0 %v5955
        %v7048 = vpop.f32.mrf.mxu0
        %v7049 = vadd.f32 %v7020, %v7048
        %v7050 = vpop.f32.mrf.mxu0
        %v7051 = vadd.f32 %v7022, %v7050
        %7052 = vmatmul.bf16.gmra.mxu0 %v5959
        %v7053 = vpop.f32.mrf.mxu0
        %v7054 = vadd.f32 %v7025, %v7053
        %v7055 = vpop.f32.mrf.mxu0
        %v7056 = vadd.f32 %v7027, %v7055
        %7057 = vmatmul.bf16.gmra.mxu0 %v5963
        %v7058 = vpop.f32.mrf.mxu0
        %v7059 = vadd.f32 %v7030, %v7058
        %v7060 = vpop.f32.mrf.mxu0
        %v7061 = vadd.f32 %v7032, %v7060
        %7062 = vdwg.mxu0
        %7063 = vmatpush.bf16.msra.mxu0 %v6910
        %7064 = vmatpush.bf16.msra.mxu0 %v6908
        %7065 = vmatpush.bf16.msra.mxu0 %v6906
        %7066 = vmatpush.bf16.msra.mxu0 %v6904
        %7067 = vmatpush.bf16.msra.mxu0 %v6902
        %7068 = vmatpush.bf16.msra.mxu0 %v6900
        %7069 = vmatpush.bf16.msra.mxu0 %v6898
        %7070 = vmatpush.bf16.msra.mxu0 %v6896
        %7071 = vmatmul.bf16.gmra.mxu0 %v5952
        %v7072 = vpop.f32.mrf.mxu0
        %v7073 = vadd.f32 %v7044, %v7072
        %v7074 = vpop.f32.mrf.mxu0
        %v7075 = vadd.f32 %v7046, %v7074
        %7076 = vmatmul.bf16.gmra.mxu0 %v5956
        %v7077 = vpop.f32.mrf.mxu0
        %v7078 = vadd.f32 %v7049, %v7077
        %v7079 = vpop.f32.mrf.mxu0
        %v7080 = vadd.f32 %v7051, %v7079
        %7081 = vmatmul.bf16.gmra.mxu0 %v5960
        %v7082 = vpop.f32.mrf.mxu0
        %v7083 = vadd.f32 %v7054, %v7082
        %v7084 = vpop.f32.mrf.mxu0
        %v7085 = vadd.f32 %v7056, %v7084
        %7086 = vmatmul.bf16.gmra.mxu0 %v5964
        %v7087 = vpop.f32.mrf.mxu0
        %v7088 = vadd.f32 %v7059, %v7087
        %v7089 = vpop.f32.mrf.mxu0
        %v7090 = vadd.f32 %v7061, %v7089
        %7091 = vdwg.mxu0
        %7092 = vmatpush.bf16.msra.mxu0 %v6863
        %7093 = vmatpush.bf16.msra.mxu0 %v6861
        %7094 = vmatpush.bf16.msra.mxu0 %v6859
        %7095 = vmatpush.bf16.msra.mxu0 %v6857
        %7096 = vmatpush.bf16.msra.mxu0 %v6855
        %7097 = vmatpush.bf16.msra.mxu0 %v6853
        %7098 = vmatpush.bf16.msra.mxu0 %v6851
        %7099 = vmatpush.bf16.msra.mxu0 %v6849
        %7100 = vmatmul.bf16.gmra.mxu0 %v5949
        %v7101 = vpop.f32.mrf.mxu0
        %v7102 = vadd.f32 %v6621, %v7101
        %v7103 = vpop.f32.mrf.mxu0
        %v7104 = vadd.f32 %v6623, %v7103
        %7105 = vmatmul.bf16.gmra.mxu0 %v5953
        %v7106 = vpop.f32.mrf.mxu0
        %v7107 = vadd.f32 %v6626, %v7106
        %v7108 = vpop.f32.mrf.mxu0
        %v7109 = vadd.f32 %v6628, %v7108
        %7110 = vmatmul.bf16.gmra.mxu0 %v5957
        %v7111 = vpop.f32.mrf.mxu0
        %v7112 = vadd.f32 %v6631, %v7111
        %v7113 = vpop.f32.mrf.mxu0
        %v7114 = vadd.f32 %v6633, %v7113
        %7115 = vmatmul.bf16.gmra.mxu0 %v5961
        %v7116 = vpop.f32.mrf.mxu0
        %v7117 = vadd.f32 %v6636, %v7116
        %v7118 = vpop.f32.mrf.mxu0
        %v7119 = vadd.f32 %v6638, %v7118
        %7120 = vdwg.mxu0
        %7121 = vmatpush.bf16.msra.mxu0 %v6879
        %7122 = vmatpush.bf16.msra.mxu0 %v6877
        %7123 = vmatpush.bf16.msra.mxu0 %v6875
        %7124 = vmatpush.bf16.msra.mxu0 %v6873
        %7125 = vmatpush.bf16.msra.mxu0 %v6871
        %7126 = vmatpush.bf16.msra.mxu0 %v6869
        %7127 = vmatpush.bf16.msra.mxu0 %v6867
        %7128 = vmatpush.bf16.msra.mxu0 %v6865
        %7129 = vmatmul.bf16.gmra.mxu0 %v5950
        %v7130 = vpop.f32.mrf.mxu0
        %v7131 = vadd.f32 %v7102, %v7130
        %v7132 = vpop.f32.mrf.mxu0
        %v7133 = vadd.f32 %v7104, %v7132
        %7134 = vmatmul.bf16.gmra.mxu0 %v5954
        %v7135 = vpop.f32.mrf.mxu0
        %v7136 = vadd.f32 %v7107, %v7135
        %v7137 = vpop.f32.mrf.mxu0
        %v7138 = vadd.f32 %v7109, %v7137
        %7139 = vmatmul.bf16.gmra.mxu0 %v5958
        %v7140 = vpop.f32.mrf.mxu0
        %v7141 = vadd.f32 %v7112, %v7140
        %v7142 = vpop.f32.mrf.mxu0
        %v7143 = vadd.f32 %v7114, %v7142
        %7144 = vmatmul.bf16.gmra.mxu0 %v5962
        %v7145 = vpop.f32.mrf.mxu0
        %v7146 = vadd.f32 %v7117, %v7145
        %v7147 = vpop.f32.mrf.mxu0
        %v7148 = vadd.f32 %v7119, %v7147
        %7149 = vdwg.mxu0
        %7150 = vmatpush.bf16.msra.mxu0 %v6895
        %7151 = vmatpush.bf16.msra.mxu0 %v6893
        %7152 = vmatpush.bf16.msra.mxu0 %v6891
        %7153 = vmatpush.bf16.msra.mxu0 %v6889
        %7154 = vmatpush.bf16.msra.mxu0 %v6887
        %7155 = vmatpush.bf16.msra.mxu0 %v6885
        %7156 = vmatpush.bf16.msra.mxu0 %v6883
        %7157 = vmatpush.bf16.msra.mxu0 %v6881
        %7158 = vmatmul.bf16.gmra.mxu0 %v5951
        %v7159 = vpop.f32.mrf.mxu0
        %v7160 = vadd.f32 %v7131, %v7159
        %v7161 = vpop.f32.mrf.mxu0
        %v7162 = vadd.f32 %v7133, %v7161
        %7163 = vmatmul.bf16.gmra.mxu0 %v5955
        %v7164 = vpop.f32.mrf.mxu0
        %v7165 = vadd.f32 %v7136, %v7164
        %v7166 = vpop.f32.mrf.mxu0
        %v7167 = vadd.f32 %v7138, %v7166
        %7168 = vmatmul.bf16.gmra.mxu0 %v5959
        %v7169 = vpop.f32.mrf.mxu0
        %v7170 = vadd.f32 %v7141, %v7169
        %v7171 = vpop.f32.mrf.mxu0
        %v7172 = vadd.f32 %v7143, %v7171
        %7173 = vmatmul.bf16.gmra.mxu0 %v5963
        %v7174 = vpop.f32.mrf.mxu0
        %v7175 = vadd.f32 %v7146, %v7174
        %v7176 = vpop.f32.mrf.mxu0
        %v7177 = vadd.f32 %v7148, %v7176
        %7178 = vdwg.mxu0
        %7179 = vmatpush.bf16.msra.mxu0 %v6911
        %7180 = vmatpush.bf16.msra.mxu0 %v6909
        %7181 = vmatpush.bf16.msra.mxu0 %v6907
        %7182 = vmatpush.bf16.msra.mxu0 %v6905
        %7183 = vmatpush.bf16.msra.mxu0 %v6903
        %7184 = vmatpush.bf16.msra.mxu0 %v6901
        %7185 = vmatpush.bf16.msra.mxu0 %v6899
        %7186 = vmatpush.bf16.msra.mxu0 %v6897
        %7187 = vmatmul.bf16.gmra.mxu0 %v5952
        %v7188 = vpop.f32.mrf.mxu0
        %v7189 = vadd.f32 %v7160, %v7188
        %v7190 = vpop.f32.mrf.mxu0
        %v7191 = vadd.f32 %v7162, %v7190
        %7192 = vmatmul.bf16.gmra.mxu0 %v5956
        %v7193 = vpop.f32.mrf.mxu0
        %v7194 = vadd.f32 %v7165, %v7193
        %v7195 = vpop.f32.mrf.mxu0
        %v7196 = vadd.f32 %v7167, %v7195
        %7197 = vmatmul.bf16.gmra.mxu0 %v5960
        %v7198 = vpop.f32.mrf.mxu0
        %v7199 = vadd.f32 %v7170, %v7198
        %v7200 = vpop.f32.mrf.mxu0
        %v7201 = vadd.f32 %v7172, %v7200
        %7202 = vmatmul.bf16.gmra.mxu0 %v5964
        %v7203 = vpop.f32.mrf.mxu0
        %v7204 = vadd.f32 %v7175, %v7203
        %v7205 = vpop.f32.mrf.mxu0
        %v7206 = vadd.f32 %v7177, %v7205
        %7207 = vdwg.mxu0
        %v7208 = vld [vmem:[#allocation10] sm:$0x3]
        %v7210 = vperm.slane %v7208, 0
        %v7211 = vperm.slane %v7208, 1
        %v7214 = vadd.f32 %v7073, %v7210
        %v7215 = vadd.f32 %v7189, %v7211
        %v7216 = vadd.f32 %v7075, %v7210
        %v7217 = vadd.f32 %v7191, %v7211
        %v7218 = vadd.f32 %v7078, %v7210
        %v7219 = vadd.f32 %v7194, %v7211
        %v7220 = vadd.f32 %v7080, %v7210
        %v7221 = vadd.f32 %v7196, %v7211
        %v7222 = vadd.f32 %v7083, %v7210
        %v7223 = vadd.f32 %v7199, %v7211
        %v7224 = vadd.f32 %v7085, %v7210
        %v7225 = vadd.f32 %v7201, %v7211
        %v7226 = vadd.f32 %v7088, %v7210
        %v7227 = vadd.f32 %v7204, %v7211
        %v7228 = vadd.f32 %v7090, %v7210
        %v7229 = vadd.f32 %v7206, %v7211
        %7230 = vst [vmem:[%s374] sm:$0xff] %v7214
        %7231 = vst [vmem:[%s374 + $0x8] sm:$0xff] %v7215
        %7232 = vst [vmem:[%s374 + $0x10] sm:$0xff] %v7216
        %7233 = vst [vmem:[%s374 + $0x18] sm:$0xff] %v7217
        %7234 = vst [vmem:[%s374 + $0x20] sm:$0xff] %v7218
        %7235 = vst [vmem:[%s374 + $0x28] sm:$0xff] %v7219
        %7236 = vst [vmem:[%s374 + $0x30] sm:$0xff] %v7220
        %7237 = vst [vmem:[%s374 + $0x38] sm:$0xff] %v7221
        %7238 = vst [vmem:[%s374 + $0x40] sm:$0xff] %v7222
        %7239 = vst [vmem:[%s374 + $0x48] sm:$0xff] %v7223
        %7240 = vst [vmem:[%s374 + $0x50] sm:$0xff] %v7224
        %7241 = vst [vmem:[%s374 + $0x58] sm:$0xff] %v7225
        %7242 = vst [vmem:[%s374 + $0x60] sm:$0xff] %v7226
        %7243 = vst [vmem:[%s374 + $0x68] sm:$0xff] %v7227
        %7244 = vst [vmem:[%s374 + $0x70] sm:$0xff] %v7228
        %7245 = vst [vmem:[%s374 + $0x78] sm:$0xff] %v7229
        %p7246 = scmp.lt.s32.totalorder %s21, 1
        %s7247 = scalar_select %p7246, %s21, 1
        %s7248 = smul.addr %s7247, 16
        %s7249 = smul.addr %s7248, 8
        %s7250 = scalar_lea.vmem %s7, %s7249
        // Predicated region
        $region73: #{resnet_decoder_forward.5} parent=47 // pred_check
          %p7251 = pneg %p191
        $region74: #{resnet_decoder_forward.5} parent=47 // pred_check_branch
          %7253 = sbr.rel (%p7251) target = $region76
        $region75: #{resnet_decoder_forward.5} parent=47 // pred_region
          _
        $region76: #{resnet_decoder_forward.5} parent=47 // pred_fallthru
          _
      $region48: #{resnet_decoder_forward.5} parent=5 // pred_fallthru
        _
      %p7254 = scmp.le.s32.totalorder 2, %s16
      // Predicated region
      $region77: #{resnet_decoder_forward.5} parent=5 // pred_check
        %p7255 = pneg %p7254
      $region78: #{resnet_decoder_forward.5} parent=5 // pred_check_branch
        %7257 = sbr.rel (%p7255) target = $region80
      $region79: #{resnet_decoder_forward.5} parent=5 // pred_region
        %s7258 = ssub.s32 %s16, 2
        // Predicated region
        $region81: #{resnet_decoder_forward.5} parent=79 // pred_check
          %p7259 = pneg %p197
        $region82: #{resnet_decoder_forward.5} parent=79 // pred_check_branch
          %7261 = sbr.rel (%p7259) target = $region84
        $region83: #{resnet_decoder_forward.5} parent=79 // pred_region
          %p7262 = scmp.lt.s32.totalorder %s22, 1
          %s7263 = scalar_select %p7262, %s22, 1
          %s7264 = smul.addr %s7263, 16
          %s7265 = smul.addr %s7264, 8
          %s7266 = scalar_lea.vmem %s7, %s7265
        $region84: #{resnet_decoder_forward.5} parent=79 // pred_fallthru
          _
      $region80: #{resnet_decoder_forward.5} parent=5 // pred_fallthru
        _
    $region6: #{resnet_decoder_forward.5} parent=1 // loop_footer
      %s20 = sadd.s32 1, %s16
    $region7: #{resnet_decoder_forward.5} parent=1 // loop_footer_branch
      %15 = sbr.rel target = $region3
    $region8: #{resnet_decoder_forward.5} parent=1 // loop_exit
      _
    %7267 = vsyncpa [#allocation3], 1
    %s7268 = scalar_lea.sflag [#allocation3], 1
    %7269 = vsyncpa %s7268, 1
    %7270 = vsyncpa [#allocation5], 1
    %7271 = vsyncpa [#allocation8], 1

</llo_original>
